<compile_context>
chip_gen: v7x
topology: tpu7x:2x2x1
jax: 0.10.0
libtpu: 0.0.40
codegen_flags: <defaults>
</compile_context>

<pallas_src>
import numpy as np
import jax
import jax.numpy as jnp
from jax.experimental import pallas as pl
from jax.experimental.pallas import tpu as pltpu

H = W = 28                 # MNIST spatial size implied by fc in_features = 14*14*32
K = 5                      # conv kernel size
PAD = K // 2               # conv padding = 2
C_OUT = 32
POOL = 2
PH = PW = H // POOL        # 14 pooled rows / cols
WPAD = W + 2 * PAD         # 32 padded width
K_ROWS = K * WPAD          # 160 contraction dim: (kh, w_in)
N_W = PW * C_OUT           # 448 lanes: (wp, c)
FC_IN = PH * N_W           # 6272
N_CLASSES = 10
N_PAD = 128                # FC output padded to a full lane group
BN_EPS = 1e-5

TB_MAX = 256               # batch rows per grid step
VMEM_LIMIT = 48 * 1024 * 1024


def _round_up(n, m):
    return ((n + m - 1) // m) * m


# ------------------------------ Pallas kernel -------------------------------

def _cnn_fused_kernel(x_ref, te_ref, to_ref, shift_ref, fcw_ref, fcb_ref, out_ref):
    # x_ref:     (2*PH, TB, 160) bf16  conv rows; row-parity di major, hp minor
    # te_ref:    (160, 448)      bf16  banded conv weight, pool-col parity dj=0
    # to_ref:    (160, 448)      bf16  banded conv weight, pool-col parity dj=1
    # shift_ref: (1, 448)        f32   folded conv bias + BN shift (per (wp,c))
    # fcw_ref:   (PH, 448, 128)  bf16  FC weight, per pooled row hp
    # fcb_ref:   (1, 128)        f32   FC bias (padded 10 -> 128)
    # out_ref:   (TB, 128)       f32   logits (padded)
    te = te_ref[...]
    to = to_ref[...]
    shift = shift_ref[...]
    logits = None
    for hp in range(PH):
        xe = x_ref[hp]            # (TB, 160)  pool-row parity di = 0
        xo = x_ref[PH + hp]       # (TB, 160)  pool-row parity di = 1
        # 4 pool candidates = (row parity) x (col parity); BN scale already in te/to.
        y = jnp.maximum(
            jnp.maximum(jnp.dot(xe, te, preferred_element_type=jnp.float32),
                        jnp.dot(xe, to, preferred_element_type=jnp.float32)),
            jnp.maximum(jnp.dot(xo, te, preferred_element_type=jnp.float32),
                        jnp.dot(xo, to, preferred_element_type=jnp.float32)))
        # shift + ReLU once, after the pool max (exact: shift is per-lane const).
        act = jnp.maximum(y + shift, 0.0).astype(jnp.bfloat16)     # (TB, 448)
        part = jnp.dot(act, fcw_ref[hp], preferred_element_type=jnp.float32)
        logits = part if logits is None else logits + part
    out_ref[...] = logits + fcb_ref[...]


def _cnn_fused(rows, te, to, shift, fcw, fcb, tb, b_pad):
    return pl.pallas_call(
        _cnn_fused_kernel,
        out_shape=jax.ShapeDtypeStruct((b_pad, N_PAD), jnp.float32),
        grid=(b_pad // tb,),
        in_specs=[
            pl.BlockSpec((POOL * PH, tb, K_ROWS), lambda i: (0, i, 0)),
            pl.BlockSpec((K_ROWS, N_W), lambda i: (0, 0)),       # resident
            pl.BlockSpec((K_ROWS, N_W), lambda i: (0, 0)),       # resident
            pl.BlockSpec((1, N_W), lambda i: (0, 0)),            # resident
            pl.BlockSpec((PH, N_W, N_PAD), lambda i: (0, 0, 0)), # resident
            pl.BlockSpec((1, N_PAD), lambda i: (0, 0)),          # resident
        ],
        out_specs=pl.BlockSpec((tb, N_PAD), lambda i: (i, 0)),
        compiler_params=pltpu.CompilerParams(
            dimension_semantics=("parallel",),
            vmem_limit_bytes=VMEM_LIMIT),
    )(rows, te, to, shift, fcw, fcb)


# ------------------------------ glue (plain JAX) ----------------------------

def _pick_batch_tiling(batch):
    """Tile so there are always >=2 grid steps (v7x megacore), tile % 8 == 0."""
    tb = min(TB_MAX, max(8, _round_up((batch + 1) // 2, 8)))
    b_pad = max(_round_up(batch, tb), 2 * tb)
    return tb, b_pad


def _build_conv_rows(x, b_pad):
    """x: (B, 1, 28, 28) f32 -> (2*PH, b_pad, 160) bf16 conv-row tensor.

    rows[di*PH + hp, b, kh*32 + w_in] = x_padded[b, 2*hp + di + kh, w_in]
    Built from 10 static strided slices of the zero-padded image (no gather).
    """
    batch = x.shape[0]
    xp = jnp.pad(x[:, 0], ((0, b_pad - batch), (PAD, PAD), (PAD, PAD)))  # (b_pad,32,32)
    slabs = []
    for di in range(POOL):
        per_kh = [xp[:, di + kh: di + kh + 2 * (PH - 1) + 1: 2, :]      # (b_pad,14,32)
                  for kh in range(K)]
        s = jnp.stack(per_kh, axis=2)                                    # (b_pad,14,5,32)
        slabs.append(s.reshape(b_pad, PH, K_ROWS))
    rows = jnp.stack(slabs, axis=0)                                      # (2,b_pad,14,160)
    rows = jnp.transpose(rows, (0, 2, 1, 3))                             # (2,14,b_pad,160)
    return rows.reshape(POOL * PH, b_pad, K_ROWS).astype(jnp.bfloat16)


def init_params(key):
    k1, k2, k3, k4 = jax.random.split(key, 4)
    return dict(
        conv_w=jax.random.normal(k1, (C_OUT, 1, K, K), jnp.float32) * 0.1,
        conv_b=jax.random.normal(k2, (C_OUT,), jnp.float32) * 0.1,
        bn_gamma=jnp.ones((C_OUT,), jnp.float32),
        bn_beta=jnp.zeros((C_OUT,), jnp.float32),
        bn_mean=jnp.zeros((C_OUT,), jnp.float32),
        bn_var=jnp.ones((C_OUT,), jnp.float32),
        fc_w=jax.random.normal(k3, (N_CLASSES, FC_IN), jnp.float32) * 0.01,
        fc_b=jax.random.normal(k4, (N_CLASSES,), jnp.float32) * 0.01,
    )


def _band_weight(w_scaled, dj):
    """(32,5,5) scaled conv weight -> (160, 448) banded matmul weight for
    pool-column parity dj: T[kh*32+w_in, wp*32+c] = w[c,kh,w_in-2*wp-dj]."""
    placement = np.zeros((K, WPAD, PW), np.float32)      # (kw, w_in, wp)
    for kw in range(K):
        for wp in range(PW):
            placement[kw, 2 * wp + dj + kw, wp] = 1.0
    t = jnp.einsum("chk,kwp->hwpc", w_scaled, jnp.asarray(placement))  # (5,32,14,32)
    return t.reshape(K_ROWS, N_W).astype(jnp.bfloat16)


def prepare_params(params):
    """One-time weight prep, hoisted out of the per-call path."""
    scale = params["bn_gamma"] / jnp.sqrt(params["bn_var"] + BN_EPS)
    shift = (params["bn_beta"] - params["bn_mean"] * scale
             + params["conv_b"] * scale)
    # Fold BN scale into the conv weight (must happen before the pool max).
    w_scaled = params["conv_w"][:, 0] * scale[:, None, None]           # (32,5,5)
    te = _band_weight(w_scaled, 0)
    to = _band_weight(w_scaled, 1)
    shift448 = jnp.tile(shift, PW).reshape(1, N_W).astype(jnp.float32)  # (wp,c) layout
    # FC weight: PyTorch flattens (c, h, w); activations are rows=hp, lanes=(wp,c).
    fcw = params["fc_w"].reshape(N_CLASSES, C_OUT, PH, PW)
    fcw = jnp.transpose(fcw, (2, 3, 1, 0)).reshape(PH, N_W, N_CLASSES)
    fcw = jnp.pad(fcw, ((0, 0), (0, 0), (0, N_PAD - N_CLASSES))).astype(jnp.bfloat16)
    fcb = jnp.pad(params["fc_b"], (0, N_PAD - N_CLASSES)).reshape(1, N_PAD)
    return dict(te=te, to=to, shift=shift448, fcw=fcw, fcb=fcb.astype(jnp.float32))


@jax.jit
def cnn_forward(x, prep):
    x = x.astype(jnp.float32)
    batch = x.shape[0]
    tb, b_pad = _pick_batch_tiling(batch)
    rows = _build_conv_rows(x, b_pad)                      # (28, b_pad, 160) bf16
    logits = _cnn_fused(rows, prep["te"], prep["to"], prep["shift"],
                        prep["fcw"], prep["fcb"], tb, b_pad)
    return logits[:batch, :N_CLASSES]


def cnn_reference(x, params):
    """Pure-JAX/XLA reference for correctness check."""
    x = x.astype(jnp.float32)
    y = jax.lax.conv_general_dilated(
        x, params["conv_w"], window_strides=(1, 1), padding=((PAD, PAD), (PAD, PAD)),
        dimension_numbers=("NCHW", "OIHW", "NCHW"))
    y = y + params["conv_b"][None, :, None, None]
    scale = params["bn_gamma"] / jnp.sqrt(params["bn_var"] + BN_EPS)
    y = ((y - params["bn_mean"][None, :, None, None])
         * scale[None, :, None, None] + params["bn_beta"][None, :, None, None])
    y = jnp.maximum(y, 0.0)
    y = jax.lax.reduce_window(y, -jnp.inf, jax.lax.max,
                              (1, 1, 2, 2), (1, 1, 2, 2), "VALID")
    y = y.reshape(x.shape[0], -1)
    return y @ params["fc_w"].T + params["fc_b"]


if __name__ == "__main__":
    key = jax.random.PRNGKey(0)
    kx, kp = jax.random.split(key)
    params = init_params(kp)
    prep = prepare_params(params)
    x = jax.random.normal(kx, (2, 1, H, W), jnp.float32)    # (B=2, C=1, 28, 28) NCHW

    out = cnn_forward(x, prep)
    out = jax.block_until_ready(out)
    assert out.shape == (2, N_CLASSES) and out.dtype == jnp.float32

    ref = jax.block_until_ready(cnn_reference(x, params))
    # Conv and FC matmuls use bf16 MXU inputs with f32 accumulation, so compare
    # with a bf16-appropriate tolerance (image + activations + weights rounded).
    err = jnp.max(jnp.abs(out - ref))
    assert jnp.allclose(out, ref, atol=2e-2, rtol=2e-2), f"mismatch: max abs err {err}"

    print("KERNEL_OK")
</pallas_src>

<mosaic_0001>
module attributes {stable_mosaic.version = 11 : i64} {
  func.func @_cnn_fused_kernel(%arg0: i32, %arg1: memref<28x8x160xbf16, #tpu.memory_space<vmem>>, %arg2: memref<160x448xbf16, #tpu.memory_space<vmem>>, %arg3: memref<160x448xbf16, #tpu.memory_space<vmem>>, %arg4: memref<1x448xf32, #tpu.memory_space<vmem>>, %arg5: memref<14x448x128xbf16, #tpu.memory_space<vmem>>, %arg6: memref<1x128xf32, #tpu.memory_space<vmem>>, %arg7: memref<8x128xf32, #tpu.memory_space<vmem>>) attributes {dimension_semantics = [#tpu.dimension_semantics<parallel>], iteration_bounds = array<i64: 2>, scalar_prefetch = 0 : i64, scratch_operands = 0 : i64, tpu.core_type = #tpu.core_type<tc>, window_params = [{transform_indices = @transform_0, window_bounds = array<i64: 28, 8, 160>}, {pipeline_mode = #tpu.pipeline_mode<synchronous>, transform_indices = @transform_1, window_bounds = array<i64: 160, 448>}, {pipeline_mode = #tpu.pipeline_mode<synchronous>, transform_indices = @transform_2, window_bounds = array<i64: 160, 448>}, {pipeline_mode = #tpu.pipeline_mode<synchronous>, transform_indices = @transform_3, window_bounds = array<i64: 1, 448>}, {pipeline_mode = #tpu.pipeline_mode<synchronous>, transform_indices = @transform_4, window_bounds = array<i64: 14, 448, 128>}, {pipeline_mode = #tpu.pipeline_mode<synchronous>, transform_indices = @transform_5, window_bounds = array<i64: 1, 128>}, {transform_indices = @transform_6, window_bounds = array<i64: 8, 128>}]} {
    %c0 = arith.constant 0 : index
    %c0_0 = arith.constant 0 : index
    %0 = vector.load %arg2[%c0, %c0_0] : memref<160x448xbf16, #tpu.memory_space<vmem>>, vector<160x448xbf16>
    %c0_1 = arith.constant 0 : index
    %c0_2 = arith.constant 0 : index
    %1 = vector.load %arg3[%c0_1, %c0_2] : memref<160x448xbf16, #tpu.memory_space<vmem>>, vector<160x448xbf16>
    %c0_3 = arith.constant 0 : index
    %c0_4 = arith.constant 0 : index
    %2 = vector.load %arg4[%c0_3, %c0_4] : memref<1x448xf32, #tpu.memory_space<vmem>>, vector<1x448xf32>
    %c0_5 = arith.constant 0 : index
    %c0_6 = arith.constant 0 : index
    %c0_7 = arith.constant 0 : index
    %3 = vector.load %arg1[%c0_5, %c0_6, %c0_7] : memref<28x8x160xbf16, #tpu.memory_space<vmem>>, vector<1x8x160xbf16>
    %4 = vector.shape_cast %3 : vector<1x8x160xbf16> to vector<8x160xbf16>
    %c14 = arith.constant 14 : index
    %c0_8 = arith.constant 0 : index
    %c0_9 = arith.constant 0 : index
    %5 = vector.load %arg1[%c14, %c0_8, %c0_9] : memref<28x8x160xbf16, #tpu.memory_space<vmem>>, vector<1x8x160xbf16>
    %6 = vector.shape_cast %5 : vector<1x8x160xbf16> to vector<8x160xbf16>
    %cst = arith.constant dense<0.000000e+00> : vector<8x448xf32>
    %7 = tpu.matmul %4, %0, %cst {dimension_numbers = #tpu.dot_dimension_numbers<[1], [0], [0], [1], [0, 0, 1, 1], [], []>} : vector<8x160xbf16>, vector<160x448xbf16>, vector<8x448xf32> -> vector<8x448xf32>
    %cst_10 = arith.constant dense<0.000000e+00> : vector<8x448xf32>
    %8 = tpu.matmul %4, %1, %cst_10 {dimension_numbers = #tpu.dot_dimension_numbers<[1], [0], [0], [1], [0, 0, 1, 1], [], []>} : vector<8x160xbf16>, vector<160x448xbf16>, vector<8x448xf32> -> vector<8x448xf32>
    %9 = arith.maximumf %7, %8 : vector<8x448xf32>
    %cst_11 = arith.constant dense<0.000000e+00> : vector<8x448xf32>
    %10 = tpu.matmul %6, %0, %cst_11 {dimension_numbers = #tpu.dot_dimension_numbers<[1], [0], [0], [1], [0, 0, 1, 1], [], []>} : vector<8x160xbf16>, vector<160x448xbf16>, vector<8x448xf32> -> vector<8x448xf32>
    %cst_12 = arith.constant dense<0.000000e+00> : vector<8x448xf32>
    %11 = tpu.matmul %6, %1, %cst_12 {dimension_numbers = #tpu.dot_dimension_numbers<[1], [0], [0], [1], [0, 0, 1, 1], [], []>} : vector<8x160xbf16>, vector<160x448xbf16>, vector<8x448xf32> -> vector<8x448xf32>
    %12 = arith.maximumf %10, %11 : vector<8x448xf32>
    %13 = arith.maximumf %9, %12 : vector<8x448xf32>
    %14 = vector.broadcast %2 : vector<1x448xf32> to vector<8x448xf32>
    %15 = arith.addf %13, %14 : vector<8x448xf32>
    %cst_13 = arith.constant 0.000000e+00 : f32
    %16 = vector.broadcast %cst_13 : f32 to vector<8x448xf32>
    %17 = arith.maximumf %15, %16 : vector<8x448xf32>
    %18 = arith.truncf %17 : vector<8x448xf32> to vector<8x448xbf16>
    %c0_14 = arith.constant 0 : index
    %c0_15 = arith.constant 0 : index
    %c0_16 = arith.constant 0 : index
    %19 = vector.load %arg5[%c0_14, %c0_15, %c0_16] : memref<14x448x128xbf16, #tpu.memory_space<vmem>>, vector<1x448x128xbf16>
    %20 = vector.shape_cast %19 : vector<1x448x128xbf16> to vector<448x128xbf16>
    %cst_17 = arith.constant dense<0.000000e+00> : vector<8x128xf32>
    %21 = tpu.matmul %18, %20, %cst_17 {dimension_numbers = #tpu.dot_dimension_numbers<[1], [0], [0], [1], [0, 0, 1, 1], [], []>} : vector<8x448xbf16>, vector<448x128xbf16>, vector<8x128xf32> -> vector<8x128xf32>
    %c1 = arith.constant 1 : index
    %c0_18 = arith.constant 0 : index
    %c0_19 = arith.constant 0 : index
    %22 = vector.load %arg1[%c1, %c0_18, %c0_19] : memref<28x8x160xbf16, #tpu.memory_space<vmem>>, vector<1x8x160xbf16>
    %23 = vector.shape_cast %22 : vector<1x8x160xbf16> to vector<8x160xbf16>
    %c15 = arith.constant 15 : index
    %c0_20 = arith.constant 0 : index
    %c0_21 = arith.constant 0 : index
    %24 = vector.load %arg1[%c15, %c0_20, %c0_21] : memref<28x8x160xbf16, #tpu.memory_space<vmem>>, vector<1x8x160xbf16>
    %25 = vector.shape_cast %24 : vector<1x8x160xbf16> to vector<8x160xbf16>
    %cst_22 = arith.constant dense<0.000000e+00> : vector<8x448xf32>
    %26 = tpu.matmul %23, %0, %cst_22 {dimension_numbers = #tpu.dot_dimension_numbers<[1], [0], [0], [1], [0, 0, 1, 1], [], []>} : vector<8x160xbf16>, vector<160x448xbf16>, vector<8x448xf32> -> vector<8x448xf32>
    %cst_23 = arith.constant dense<0.000000e+00> : vector<8x448xf32>
    %27 = tpu.matmul %23, %1, %cst_23 {dimension_numbers = #tpu.dot_dimension_numbers<[1], [0], [0], [1], [0, 0, 1, 1], [], []>} : vector<8x160xbf16>, vector<160x448xbf16>, vector<8x448xf32> -> vector<8x448xf32>
    %28 = arith.maximumf %26, %27 : vector<8x448xf32>
    %cst_24 = arith.constant dense<0.000000e+00> : vector<8x448xf32>
    %29 = tpu.matmul %25, %0, %cst_24 {dimension_numbers = #tpu.dot_dimension_numbers<[1], [0], [0], [1], [0, 0, 1, 1], [], []>} : vector<8x160xbf16>, vector<160x448xbf16>, vector<8x448xf32> -> vector<8x448xf32>
    %cst_25 = arith.constant dense<0.000000e+00> : vector<8x448xf32>
    %30 = tpu.matmul %25, %1, %cst_25 {dimension_numbers = #tpu.dot_dimension_numbers<[1], [0], [0], [1], [0, 0, 1, 1], [], []>} : vector<8x160xbf16>, vector<160x448xbf16>, vector<8x448xf32> -> vector<8x448xf32>
    %31 = arith.maximumf %29, %30 : vector<8x448xf32>
    %32 = arith.maximumf %28, %31 : vector<8x448xf32>
    %33 = vector.broadcast %2 : vector<1x448xf32> to vector<8x448xf32>
    %34 = arith.addf %32, %33 : vector<8x448xf32>
    %cst_26 = arith.constant 0.000000e+00 : f32
    %35 = vector.broadcast %cst_26 : f32 to vector<8x448xf32>
    %36 = arith.maximumf %34, %35 : vector<8x448xf32>
    %37 = arith.truncf %36 : vector<8x448xf32> to vector<8x448xbf16>
    %c1_27 = arith.constant 1 : index
    %c0_28 = arith.constant 0 : index
    %c0_29 = arith.constant 0 : index
    %38 = vector.load %arg5[%c1_27, %c0_28, %c0_29] : memref<14x448x128xbf16, #tpu.memory_space<vmem>>, vector<1x448x128xbf16>
    %39 = vector.shape_cast %38 : vector<1x448x128xbf16> to vector<448x128xbf16>
    %cst_30 = arith.constant dense<0.000000e+00> : vector<8x128xf32>
    %40 = tpu.matmul %37, %39, %cst_30 {dimension_numbers = #tpu.dot_dimension_numbers<[1], [0], [0], [1], [0, 0, 1, 1], [], []>} : vector<8x448xbf16>, vector<448x128xbf16>, vector<8x128xf32> -> vector<8x128xf32>
    %41 = arith.addf %21, %40 : vector<8x128xf32>
    %c2 = arith.constant 2 : index
    %c0_31 = arith.constant 0 : index
    %c0_32 = arith.constant 0 : index
    %42 = vector.load %arg1[%c2, %c0_31, %c0_32] : memref<28x8x160xbf16, #tpu.memory_space<vmem>>, vector<1x8x160xbf16>
    %43 = vector.shape_cast %42 : vector<1x8x160xbf16> to vector<8x160xbf16>
    %c16 = arith.constant 16 : index
    %c0_33 = arith.constant 0 : index
    %c0_34 = arith.constant 0 : index
    %44 = vector.load %arg1[%c16, %c0_33, %c0_34] : memref<28x8x160xbf16, #tpu.memory_space<vmem>>, vector<1x8x160xbf16>
    %45 = vector.shape_cast %44 : vector<1x8x160xbf16> to vector<8x160xbf16>
    %cst_35 = arith.constant dense<0.000000e+00> : vector<8x448xf32>
    %46 = tpu.matmul %43, %0, %cst_35 {dimension_numbers = #tpu.dot_dimension_numbers<[1], [0], [0], [1], [0, 0, 1, 1], [], []>} : vector<8x160xbf16>, vector<160x448xbf16>, vector<8x448xf32> -> vector<8x448xf32>
    %cst_36 = arith.constant dense<0.000000e+00> : vector<8x448xf32>
    %47 = tpu.matmul %43, %1, %cst_36 {dimension_numbers = #tpu.dot_dimension_numbers<[1], [0], [0], [1], [0, 0, 1, 1], [], []>} : vector<8x160xbf16>, vector<160x448xbf16>, vector<8x448xf32> -> vector<8x448xf32>
    %48 = arith.maximumf %46, %47 : vector<8x448xf32>
    %cst_37 = arith.constant dense<0.000000e+00> : vector<8x448xf32>
    %49 = tpu.matmul %45, %0, %cst_37 {dimension_numbers = #tpu.dot_dimension_numbers<[1], [0], [0], [1], [0, 0, 1, 1], [], []>} : vector<8x160xbf16>, vector<160x448xbf16>, vector<8x448xf32> -> vector<8x448xf32>
    %cst_38 = arith.constant dense<0.000000e+00> : vector<8x448xf32>
    %50 = tpu.matmul %45, %1, %cst_38 {dimension_numbers = #tpu.dot_dimension_numbers<[1], [0], [0], [1], [0, 0, 1, 1], [], []>} : vector<8x160xbf16>, vector<160x448xbf16>, vector<8x448xf32> -> vector<8x448xf32>
    %51 = arith.maximumf %49, %50 : vector<8x448xf32>
    %52 = arith.maximumf %48, %51 : vector<8x448xf32>
    %53 = vector.broadcast %2 : vector<1x448xf32> to vector<8x448xf32>
    %54 = arith.addf %52, %53 : vector<8x448xf32>
    %cst_39 = arith.constant 0.000000e+00 : f32
    %55 = vector.broadcast %cst_39 : f32 to vector<8x448xf32>
    %56 = arith.maximumf %54, %55 : vector<8x448xf32>
    %57 = arith.truncf %56 : vector<8x448xf32> to vector<8x448xbf16>
    %c2_40 = arith.constant 2 : index
    %c0_41 = arith.constant 0 : index
    %c0_42 = arith.constant 0 : index
    %58 = vector.load %arg5[%c2_40, %c0_41, %c0_42] : memref<14x448x128xbf16, #tpu.memory_space<vmem>>, vector<1x448x128xbf16>
    %59 = vector.shape_cast %58 : vector<1x448x128xbf16> to vector<448x128xbf16>
    %cst_43 = arith.constant dense<0.000000e+00> : vector<8x128xf32>
    %60 = tpu.matmul %57, %59, %cst_43 {dimension_numbers = #tpu.dot_dimension_numbers<[1], [0], [0], [1], [0, 0, 1, 1], [], []>} : vector<8x448xbf16>, vector<448x128xbf16>, vector<8x128xf32> -> vector<8x128xf32>
    %61 = arith.addf %41, %60 : vector<8x128xf32>
    %c3 = arith.constant 3 : index
    %c0_44 = arith.constant 0 : index
    %c0_45 = arith.constant 0 : index
    %62 = vector.load %arg1[%c3, %c0_44, %c0_45] : memref<28x8x160xbf16, #tpu.memory_space<vmem>>, vector<1x8x160xbf16>
    %63 = vector.shape_cast %62 : vector<1x8x160xbf16> to vector<8x160xbf16>
    %c17 = arith.constant 17 : index
    %c0_46 = arith.constant 0 : index
    %c0_47 = arith.constant 0 : index
    %64 = vector.load %arg1[%c17, %c0_46, %c0_47] : memref<28x8x160xbf16, #tpu.memory_space<vmem>>, vector<1x8x160xbf16>
    %65 = vector.shape_cast %64 : vector<1x8x160xbf16> to vector<8x160xbf16>
    %cst_48 = arith.constant dense<0.000000e+00> : vector<8x448xf32>
    %66 = tpu.matmul %63, %0, %cst_48 {dimension_numbers = #tpu.dot_dimension_numbers<[1], [0], [0], [1], [0, 0, 1, 1], [], []>} : vector<8x160xbf16>, vector<160x448xbf16>, vector<8x448xf32> -> vector<8x448xf32>
    %cst_49 = arith.constant dense<0.000000e+00> : vector<8x448xf32>
    %67 = tpu.matmul %63, %1, %cst_49 {dimension_numbers = #tpu.dot_dimension_numbers<[1], [0], [0], [1], [0, 0, 1, 1], [], []>} : vector<8x160xbf16>, vector<160x448xbf16>, vector<8x448xf32> -> vector<8x448xf32>
    %68 = arith.maximumf %66, %67 : vector<8x448xf32>
    %cst_50 = arith.constant dense<0.000000e+00> : vector<8x448xf32>
    %69 = tpu.matmul %65, %0, %cst_50 {dimension_numbers = #tpu.dot_dimension_numbers<[1], [0], [0], [1], [0, 0, 1, 1], [], []>} : vector<8x160xbf16>, vector<160x448xbf16>, vector<8x448xf32> -> vector<8x448xf32>
    %cst_51 = arith.constant dense<0.000000e+00> : vector<8x448xf32>
    %70 = tpu.matmul %65, %1, %cst_51 {dimension_numbers = #tpu.dot_dimension_numbers<[1], [0], [0], [1], [0, 0, 1, 1], [], []>} : vector<8x160xbf16>, vector<160x448xbf16>, vector<8x448xf32> -> vector<8x448xf32>
    %71 = arith.maximumf %69, %70 : vector<8x448xf32>
    %72 = arith.maximumf %68, %71 : vector<8x448xf32>
    %73 = vector.broadcast %2 : vector<1x448xf32> to vector<8x448xf32>
    %74 = arith.addf %72, %73 : vector<8x448xf32>
    %cst_52 = arith.constant 0.000000e+00 : f32
    %75 = vector.broadcast %cst_52 : f32 to vector<8x448xf32>
    %76 = arith.maximumf %74, %75 : vector<8x448xf32>
    %77 = arith.truncf %76 : vector<8x448xf32> to vector<8x448xbf16>
    %c3_53 = arith.constant 3 : index
    %c0_54 = arith.constant 0 : index
    %c0_55 = arith.constant 0 : index
    %78 = vector.load %arg5[%c3_53, %c0_54, %c0_55] : memref<14x448x128xbf16, #tpu.memory_space<vmem>>, vector<1x448x128xbf16>
    %79 = vector.shape_cast %78 : vector<1x448x128xbf16> to vector<448x128xbf16>
    %cst_56 = arith.constant dense<0.000000e+00> : vector<8x128xf32>
    %80 = tpu.matmul %77, %79, %cst_56 {dimension_numbers = #tpu.dot_dimension_numbers<[1], [0], [0], [1], [0, 0, 1, 1], [], []>} : vector<8x448xbf16>, vector<448x128xbf16>, vector<8x128xf32> -> vector<8x128xf32>
    %81 = arith.addf %61, %80 : vector<8x128xf32>
    %c4 = arith.constant 4 : index
    %c0_57 = arith.constant 0 : index
    %c0_58 = arith.constant 0 : index
    %82 = vector.load %arg1[%c4, %c0_57, %c0_58] : memref<28x8x160xbf16, #tpu.memory_space<vmem>>, vector<1x8x160xbf16>
    %83 = vector.shape_cast %82 : vector<1x8x160xbf16> to vector<8x160xbf16>
    %c18 = arith.constant 18 : index
    %c0_59 = arith.constant 0 : index
    %c0_60 = arith.constant 0 : index
    %84 = vector.load %arg1[%c18, %c0_59, %c0_60] : memref<28x8x160xbf16, #tpu.memory_space<vmem>>, vector<1x8x160xbf16>
    %85 = vector.shape_cast %84 : vector<1x8x160xbf16> to vector<8x160xbf16>
    %cst_61 = arith.constant dense<0.000000e+00> : vector<8x448xf32>
    %86 = tpu.matmul %83, %0, %cst_61 {dimension_numbers = #tpu.dot_dimension_numbers<[1], [0], [0], [1], [0, 0, 1, 1], [], []>} : vector<8x160xbf16>, vector<160x448xbf16>, vector<8x448xf32> -> vector<8x448xf32>
    %cst_62 = arith.constant dense<0.000000e+00> : vector<8x448xf32>
    %87 = tpu.matmul %83, %1, %cst_62 {dimension_numbers = #tpu.dot_dimension_numbers<[1], [0], [0], [1], [0, 0, 1, 1], [], []>} : vector<8x160xbf16>, vector<160x448xbf16>, vector<8x448xf32> -> vector<8x448xf32>
    %88 = arith.maximumf %86, %87 : vector<8x448xf32>
    %cst_63 = arith.constant dense<0.000000e+00> : vector<8x448xf32>
    %89 = tpu.matmul %85, %0, %cst_63 {dimension_numbers = #tpu.dot_dimension_numbers<[1], [0], [0], [1], [0, 0, 1, 1], [], []>} : vector<8x160xbf16>, vector<160x448xbf16>, vector<8x448xf32> -> vector<8x448xf32>
    %cst_64 = arith.constant dense<0.000000e+00> : vector<8x448xf32>
    %90 = tpu.matmul %85, %1, %cst_64 {dimension_numbers = #tpu.dot_dimension_numbers<[1], [0], [0], [1], [0, 0, 1, 1], [], []>} : vector<8x160xbf16>, vector<160x448xbf16>, vector<8x448xf32> -> vector<8x448xf32>
    %91 = arith.maximumf %89, %90 : vector<8x448xf32>
    %92 = arith.maximumf %88, %91 : vector<8x448xf32>
    %93 = vector.broadcast %2 : vector<1x448xf32> to vector<8x448xf32>
    %94 = arith.addf %92, %93 : vector<8x448xf32>
    %cst_65 = arith.constant 0.000000e+00 : f32
    %95 = vector.broadcast %cst_65 : f32 to vector<8x448xf32>
    %96 = arith.maximumf %94, %95 : vector<8x448xf32>
    %97 = arith.truncf %96 : vector<8x448xf32> to vector<8x448xbf16>
    %c4_66 = arith.constant 4 : index
    %c0_67 = arith.constant 0 : index
    %c0_68 = arith.constant 0 : index
    %98 = vector.load %arg5[%c4_66, %c0_67, %c0_68] : memref<14x448x128xbf16, #tpu.memory_space<vmem>>, vector<1x448x128xbf16>
    %99 = vector.shape_cast %98 : vector<1x448x128xbf16> to vector<448x128xbf16>
    %cst_69 = arith.constant dense<0.000000e+00> : vector<8x128xf32>
    %100 = tpu.matmul %97, %99, %cst_69 {dimension_numbers = #tpu.dot_dimension_numbers<[1], [0], [0], [1], [0, 0, 1, 1], [], []>} : vector<8x448xbf16>, vector<448x128xbf16>, vector<8x128xf32> -> vector<8x128xf32>
    %101 = arith.addf %81, %100 : vector<8x128xf32>
    %c5 = arith.constant 5 : index
    %c0_70 = arith.constant 0 : index
    %c0_71 = arith.constant 0 : index
    %102 = vector.load %arg1[%c5, %c0_70, %c0_71] : memref<28x8x160xbf16, #tpu.memory_space<vmem>>, vector<1x8x160xbf16>
    %103 = vector.shape_cast %102 : vector<1x8x160xbf16> to vector<8x160xbf16>
    %c19 = arith.constant 19 : index
    %c0_72 = arith.constant 0 : index
    %c0_73 = arith.constant 0 : index
    %104 = vector.load %arg1[%c19, %c0_72, %c0_73] : memref<28x8x160xbf16, #tpu.memory_space<vmem>>, vector<1x8x160xbf16>
    %105 = vector.shape_cast %104 : vector<1x8x160xbf16> to vector<8x160xbf16>
    %cst_74 = arith.constant dense<0.000000e+00> : vector<8x448xf32>
    %106 = tpu.matmul %103, %0, %cst_74 {dimension_numbers = #tpu.dot_dimension_numbers<[1], [0], [0], [1], [0, 0, 1, 1], [], []>} : vector<8x160xbf16>, vector<160x448xbf16>, vector<8x448xf32> -> vector<8x448xf32>
    %cst_75 = arith.constant dense<0.000000e+00> : vector<8x448xf32>
    %107 = tpu.matmul %103, %1, %cst_75 {dimension_numbers = #tpu.dot_dimension_numbers<[1], [0], [0], [1], [0, 0, 1, 1], [], []>} : vector<8x160xbf16>, vector<160x448xbf16>, vector<8x448xf32> -> vector<8x448xf32>
    %108 = arith.maximumf %106, %107 : vector<8x448xf32>
    %cst_76 = arith.constant dense<0.000000e+00> : vector<8x448xf32>
    %109 = tpu.matmul %105, %0, %cst_76 {dimension_numbers = #tpu.dot_dimension_numbers<[1], [0], [0], [1], [0, 0, 1, 1], [], []>} : vector<8x160xbf16>, vector<160x448xbf16>, vector<8x448xf32> -> vector<8x448xf32>
    %cst_77 = arith.constant dense<0.000000e+00> : vector<8x448xf32>
    %110 = tpu.matmul %105, %1, %cst_77 {dimension_numbers = #tpu.dot_dimension_numbers<[1], [0], [0], [1], [0, 0, 1, 1], [], []>} : vector<8x160xbf16>, vector<160x448xbf16>, vector<8x448xf32> -> vector<8x448xf32>
    %111 = arith.maximumf %109, %110 : vector<8x448xf32>
    %112 = arith.maximumf %108, %111 : vector<8x448xf32>
    %113 = vector.broadcast %2 : vector<1x448xf32> to vector<8x448xf32>
    %114 = arith.addf %112, %113 : vector<8x448xf32>
    %cst_78 = arith.constant 0.000000e+00 : f32
    %115 = vector.broadcast %cst_78 : f32 to vector<8x448xf32>
    %116 = arith.maximumf %114, %115 : vector<8x448xf32>
    %117 = arith.truncf %116 : vector<8x448xf32> to vector<8x448xbf16>
    %c5_79 = arith.constant 5 : index
    %c0_80 = arith.constant 0 : index
    %c0_81 = arith.constant 0 : index
    %118 = vector.load %arg5[%c5_79, %c0_80, %c0_81] : memref<14x448x128xbf16, #tpu.memory_space<vmem>>, vector<1x448x128xbf16>
    %119 = vector.shape_cast %118 : vector<1x448x128xbf16> to vector<448x128xbf16>
    %cst_82 = arith.constant dense<0.000000e+00> : vector<8x128xf32>
    %120 = tpu.matmul %117, %119, %cst_82 {dimension_numbers = #tpu.dot_dimension_numbers<[1], [0], [0], [1], [0, 0, 1, 1], [], []>} : vector<8x448xbf16>, vector<448x128xbf16>, vector<8x128xf32> -> vector<8x128xf32>
    %121 = arith.addf %101, %120 : vector<8x128xf32>
    %c6 = arith.constant 6 : index
    %c0_83 = arith.constant 0 : index
    %c0_84 = arith.constant 0 : index
    %122 = vector.load %arg1[%c6, %c0_83, %c0_84] : memref<28x8x160xbf16, #tpu.memory_space<vmem>>, vector<1x8x160xbf16>
    %123 = vector.shape_cast %122 : vector<1x8x160xbf16> to vector<8x160xbf16>
    %c20 = arith.constant 20 : index
    %c0_85 = arith.constant 0 : index
    %c0_86 = arith.constant 0 : index
    %124 = vector.load %arg1[%c20, %c0_85, %c0_86] : memref<28x8x160xbf16, #tpu.memory_space<vmem>>, vector<1x8x160xbf16>
    %125 = vector.shape_cast %124 : vector<1x8x160xbf16> to vector<8x160xbf16>
    %cst_87 = arith.constant dense<0.000000e+00> : vector<8x448xf32>
    %126 = tpu.matmul %123, %0, %cst_87 {dimension_numbers = #tpu.dot_dimension_numbers<[1], [0], [0], [1], [0, 0, 1, 1], [], []>} : vector<8x160xbf16>, vector<160x448xbf16>, vector<8x448xf32> -> vector<8x448xf32>
    %cst_88 = arith.constant dense<0.000000e+00> : vector<8x448xf32>
    %127 = tpu.matmul %123, %1, %cst_88 {dimension_numbers = #tpu.dot_dimension_numbers<[1], [0], [0], [1], [0, 0, 1, 1], [], []>} : vector<8x160xbf16>, vector<160x448xbf16>, vector<8x448xf32> -> vector<8x448xf32>
    %128 = arith.maximumf %126, %127 : vector<8x448xf32>
    %cst_89 = arith.constant dense<0.000000e+00> : vector<8x448xf32>
    %129 = tpu.matmul %125, %0, %cst_89 {dimension_numbers = #tpu.dot_dimension_numbers<[1], [0], [0], [1], [0, 0, 1, 1], [], []>} : vector<8x160xbf16>, vector<160x448xbf16>, vector<8x448xf32> -> vector<8x448xf32>
    %cst_90 = arith.constant dense<0.000000e+00> : vector<8x448xf32>
    %130 = tpu.matmul %125, %1, %cst_90 {dimension_numbers = #tpu.dot_dimension_numbers<[1], [0], [0], [1], [0, 0, 1, 1], [], []>} : vector<8x160xbf16>, vector<160x448xbf16>, vector<8x448xf32> -> vector<8x448xf32>
    %131 = arith.maximumf %129, %130 : vector<8x448xf32>
    %132 = arith.maximumf %128, %131 : vector<8x448xf32>
    %133 = vector.broadcast %2 : vector<1x448xf32> to vector<8x448xf32>
    %134 = arith.addf %132, %133 : vector<8x448xf32>
    %cst_91 = arith.constant 0.000000e+00 : f32
    %135 = vector.broadcast %cst_91 : f32 to vector<8x448xf32>
    %136 = arith.maximumf %134, %135 : vector<8x448xf32>
    %137 = arith.truncf %136 : vector<8x448xf32> to vector<8x448xbf16>
    %c6_92 = arith.constant 6 : index
    %c0_93 = arith.constant 0 : index
    %c0_94 = arith.constant 0 : index
    %138 = vector.load %arg5[%c6_92, %c0_93, %c0_94] : memref<14x448x128xbf16, #tpu.memory_space<vmem>>, vector<1x448x128xbf16>
    %139 = vector.shape_cast %138 : vector<1x448x128xbf16> to vector<448x128xbf16>
    %cst_95 = arith.constant dense<0.000000e+00> : vector<8x128xf32>
    %140 = tpu.matmul %137, %139, %cst_95 {dimension_numbers = #tpu.dot_dimension_numbers<[1], [0], [0], [1], [0, 0, 1, 1], [], []>} : vector<8x448xbf16>, vector<448x128xbf16>, vector<8x128xf32> -> vector<8x128xf32>
    %141 = arith.addf %121, %140 : vector<8x128xf32>
    %c7 = arith.constant 7 : index
    %c0_96 = arith.constant 0 : index
    %c0_97 = arith.constant 0 : index
    %142 = vector.load %arg1[%c7, %c0_96, %c0_97] : memref<28x8x160xbf16, #tpu.memory_space<vmem>>, vector<1x8x160xbf16>
    %143 = vector.shape_cast %142 : vector<1x8x160xbf16> to vector<8x160xbf16>
    %c21 = arith.constant 21 : index
    %c0_98 = arith.constant 0 : index
    %c0_99 = arith.constant 0 : index
    %144 = vector.load %arg1[%c21, %c0_98, %c0_99] : memref<28x8x160xbf16, #tpu.memory_space<vmem>>, vector<1x8x160xbf16>
    %145 = vector.shape_cast %144 : vector<1x8x160xbf16> to vector<8x160xbf16>
    %cst_100 = arith.constant dense<0.000000e+00> : vector<8x448xf32>
    %146 = tpu.matmul %143, %0, %cst_100 {dimension_numbers = #tpu.dot_dimension_numbers<[1], [0], [0], [1], [0, 0, 1, 1], [], []>} : vector<8x160xbf16>, vector<160x448xbf16>, vector<8x448xf32> -> vector<8x448xf32>
    %cst_101 = arith.constant dense<0.000000e+00> : vector<8x448xf32>
    %147 = tpu.matmul %143, %1, %cst_101 {dimension_numbers = #tpu.dot_dimension_numbers<[1], [0], [0], [1], [0, 0, 1, 1], [], []>} : vector<8x160xbf16>, vector<160x448xbf16>, vector<8x448xf32> -> vector<8x448xf32>
    %148 = arith.maximumf %146, %147 : vector<8x448xf32>
    %cst_102 = arith.constant dense<0.000000e+00> : vector<8x448xf32>
    %149 = tpu.matmul %145, %0, %cst_102 {dimension_numbers = #tpu.dot_dimension_numbers<[1], [0], [0], [1], [0, 0, 1, 1], [], []>} : vector<8x160xbf16>, vector<160x448xbf16>, vector<8x448xf32> -> vector<8x448xf32>
    %cst_103 = arith.constant dense<0.000000e+00> : vector<8x448xf32>
    %150 = tpu.matmul %145, %1, %cst_103 {dimension_numbers = #tpu.dot_dimension_numbers<[1], [0], [0], [1], [0, 0, 1, 1], [], []>} : vector<8x160xbf16>, vector<160x448xbf16>, vector<8x448xf32> -> vector<8x448xf32>
    %151 = arith.maximumf %149, %150 : vector<8x448xf32>
    %152 = arith.maximumf %148, %151 : vector<8x448xf32>
    %153 = vector.broadcast %2 : vector<1x448xf32> to vector<8x448xf32>
    %154 = arith.addf %152, %153 : vector<8x448xf32>
    %cst_104 = arith.constant 0.000000e+00 : f32
    %155 = vector.broadcast %cst_104 : f32 to vector<8x448xf32>
    %156 = arith.maximumf %154, %155 : vector<8x448xf32>
    %157 = arith.truncf %156 : vector<8x448xf32> to vector<8x448xbf16>
    %c7_105 = arith.constant 7 : index
    %c0_106 = arith.constant 0 : index
    %c0_107 = arith.constant 0 : index
    %158 = vector.load %arg5[%c7_105, %c0_106, %c0_107] : memref<14x448x128xbf16, #tpu.memory_space<vmem>>, vector<1x448x128xbf16>
    %159 = vector.shape_cast %158 : vector<1x448x128xbf16> to vector<448x128xbf16>
    %cst_108 = arith.constant dense<0.000000e+00> : vector<8x128xf32>
    %160 = tpu.matmul %157, %159, %cst_108 {dimension_numbers = #tpu.dot_dimension_numbers<[1], [0], [0], [1], [0, 0, 1, 1], [], []>} : vector<8x448xbf16>, vector<448x128xbf16>, vector<8x128xf32> -> vector<8x128xf32>
    %161 = arith.addf %141, %160 : vector<8x128xf32>
    %c8 = arith.constant 8 : index
    %c0_109 = arith.constant 0 : index
    %c0_110 = arith.constant 0 : index
    %162 = vector.load %arg1[%c8, %c0_109, %c0_110] : memref<28x8x160xbf16, #tpu.memory_space<vmem>>, vector<1x8x160xbf16>
    %163 = vector.shape_cast %162 : vector<1x8x160xbf16> to vector<8x160xbf16>
    %c22 = arith.constant 22 : index
    %c0_111 = arith.constant 0 : index
    %c0_112 = arith.constant 0 : index
    %164 = vector.load %arg1[%c22, %c0_111, %c0_112] : memref<28x8x160xbf16, #tpu.memory_space<vmem>>, vector<1x8x160xbf16>
    %165 = vector.shape_cast %164 : vector<1x8x160xbf16> to vector<8x160xbf16>
    %cst_113 = arith.constant dense<0.000000e+00> : vector<8x448xf32>
    %166 = tpu.matmul %163, %0, %cst_113 {dimension_numbers = #tpu.dot_dimension_numbers<[1], [0], [0], [1], [0, 0, 1, 1], [], []>} : vector<8x160xbf16>, vector<160x448xbf16>, vector<8x448xf32> -> vector<8x448xf32>
    %cst_114 = arith.constant dense<0.000000e+00> : vector<8x448xf32>
    %167 = tpu.matmul %163, %1, %cst_114 {dimension_numbers = #tpu.dot_dimension_numbers<[1], [0], [0], [1], [0, 0, 1, 1], [], []>} : vector<8x160xbf16>, vector<160x448xbf16>, vector<8x448xf32> -> vector<8x448xf32>
    %168 = arith.maximumf %166, %167 : vector<8x448xf32>
    %cst_115 = arith.constant dense<0.000000e+00> : vector<8x448xf32>
    %169 = tpu.matmul %165, %0, %cst_115 {dimension_numbers = #tpu.dot_dimension_numbers<[1], [0], [0], [1], [0, 0, 1, 1], [], []>} : vector<8x160xbf16>, vector<160x448xbf16>, vector<8x448xf32> -> vector<8x448xf32>
    %cst_116 = arith.constant dense<0.000000e+00> : vector<8x448xf32>
    %170 = tpu.matmul %165, %1, %cst_116 {dimension_numbers = #tpu.dot_dimension_numbers<[1], [0], [0], [1], [0, 0, 1, 1], [], []>} : vector<8x160xbf16>, vector<160x448xbf16>, vector<8x448xf32> -> vector<8x448xf32>
    %171 = arith.maximumf %169, %170 : vector<8x448xf32>
    %172 = arith.maximumf %168, %171 : vector<8x448xf32>
    %173 = vector.broadcast %2 : vector<1x448xf32> to vector<8x448xf32>
    %174 = arith.addf %172, %173 : vector<8x448xf32>
    %cst_117 = arith.constant 0.000000e+00 : f32
    %175 = vector.broadcast %cst_117 : f32 to vector<8x448xf32>
    %176 = arith.maximumf %174, %175 : vector<8x448xf32>
    %177 = arith.truncf %176 : vector<8x448xf32> to vector<8x448xbf16>
    %c8_118 = arith.constant 8 : index
    %c0_119 = arith.constant 0 : index
    %c0_120 = arith.constant 0 : index
    %178 = vector.load %arg5[%c8_118, %c0_119, %c0_120] : memref<14x448x128xbf16, #tpu.memory_space<vmem>>, vector<1x448x128xbf16>
    %179 = vector.shape_cast %178 : vector<1x448x128xbf16> to vector<448x128xbf16>
    %cst_121 = arith.constant dense<0.000000e+00> : vector<8x128xf32>
    %180 = tpu.matmul %177, %179, %cst_121 {dimension_numbers = #tpu.dot_dimension_numbers<[1], [0], [0], [1], [0, 0, 1, 1], [], []>} : vector<8x448xbf16>, vector<448x128xbf16>, vector<8x128xf32> -> vector<8x128xf32>
    %181 = arith.addf %161, %180 : vector<8x128xf32>
    %c9 = arith.constant 9 : index
    %c0_122 = arith.constant 0 : index
    %c0_123 = arith.constant 0 : index
    %182 = vector.load %arg1[%c9, %c0_122, %c0_123] : memref<28x8x160xbf16, #tpu.memory_space<vmem>>, vector<1x8x160xbf16>
    %183 = vector.shape_cast %182 : vector<1x8x160xbf16> to vector<8x160xbf16>
    %c23 = arith.constant 23 : index
    %c0_124 = arith.constant 0 : index
    %c0_125 = arith.constant 0 : index
    %184 = vector.load %arg1[%c23, %c0_124, %c0_125] : memref<28x8x160xbf16, #tpu.memory_space<vmem>>, vector<1x8x160xbf16>
    %185 = vector.shape_cast %184 : vector<1x8x160xbf16> to vector<8x160xbf16>
    %cst_126 = arith.constant dense<0.000000e+00> : vector<8x448xf32>
    %186 = tpu.matmul %183, %0, %cst_126 {dimension_numbers = #tpu.dot_dimension_numbers<[1], [0], [0], [1], [0, 0, 1, 1], [], []>} : vector<8x160xbf16>, vector<160x448xbf16>, vector<8x448xf32> -> vector<8x448xf32>
    %cst_127 = arith.constant dense<0.000000e+00> : vector<8x448xf32>
    %187 = tpu.matmul %183, %1, %cst_127 {dimension_numbers = #tpu.dot_dimension_numbers<[1], [0], [0], [1], [0, 0, 1, 1], [], []>} : vector<8x160xbf16>, vector<160x448xbf16>, vector<8x448xf32> -> vector<8x448xf32>
    %188 = arith.maximumf %186, %187 : vector<8x448xf32>
    %cst_128 = arith.constant dense<0.000000e+00> : vector<8x448xf32>
    %189 = tpu.matmul %185, %0, %cst_128 {dimension_numbers = #tpu.dot_dimension_numbers<[1], [0], [0], [1], [0, 0, 1, 1], [], []>} : vector<8x160xbf16>, vector<160x448xbf16>, vector<8x448xf32> -> vector<8x448xf32>
    %cst_129 = arith.constant dense<0.000000e+00> : vector<8x448xf32>
    %190 = tpu.matmul %185, %1, %cst_129 {dimension_numbers = #tpu.dot_dimension_numbers<[1], [0], [0], [1], [0, 0, 1, 1], [], []>} : vector<8x160xbf16>, vector<160x448xbf16>, vector<8x448xf32> -> vector<8x448xf32>
    %191 = arith.maximumf %189, %190 : vector<8x448xf32>
    %192 = arith.maximumf %188, %191 : vector<8x448xf32>
    %193 = vector.broadcast %2 : vector<1x448xf32> to vector<8x448xf32>
    %194 = arith.addf %192, %193 : vector<8x448xf32>
    %cst_130 = arith.constant 0.000000e+00 : f32
    %195 = vector.broadcast %cst_130 : f32 to vector<8x448xf32>
    %196 = arith.maximumf %194, %195 : vector<8x448xf32>
    %197 = arith.truncf %196 : vector<8x448xf32> to vector<8x448xbf16>
    %c9_131 = arith.constant 9 : index
    %c0_132 = arith.constant 0 : index
    %c0_133 = arith.constant 0 : index
    %198 = vector.load %arg5[%c9_131, %c0_132, %c0_133] : memref<14x448x128xbf16, #tpu.memory_space<vmem>>, vector<1x448x128xbf16>
    %199 = vector.shape_cast %198 : vector<1x448x128xbf16> to vector<448x128xbf16>
    %cst_134 = arith.constant dense<0.000000e+00> : vector<8x128xf32>
    %200 = tpu.matmul %197, %199, %cst_134 {dimension_numbers = #tpu.dot_dimension_numbers<[1], [0], [0], [1], [0, 0, 1, 1], [], []>} : vector<8x448xbf16>, vector<448x128xbf16>, vector<8x128xf32> -> vector<8x128xf32>
    %201 = arith.addf %181, %200 : vector<8x128xf32>
    %c10 = arith.constant 10 : index
    %c0_135 = arith.constant 0 : index
    %c0_136 = arith.constant 0 : index
    %202 = vector.load %arg1[%c10, %c0_135, %c0_136] : memref<28x8x160xbf16, #tpu.memory_space<vmem>>, vector<1x8x160xbf16>
    %203 = vector.shape_cast %202 : vector<1x8x160xbf16> to vector<8x160xbf16>
    %c24 = arith.constant 24 : index
    %c0_137 = arith.constant 0 : index
    %c0_138 = arith.constant 0 : index
    %204 = vector.load %arg1[%c24, %c0_137, %c0_138] : memref<28x8x160xbf16, #tpu.memory_space<vmem>>, vector<1x8x160xbf16>
    %205 = vector.shape_cast %204 : vector<1x8x160xbf16> to vector<8x160xbf16>
    %cst_139 = arith.constant dense<0.000000e+00> : vector<8x448xf32>
    %206 = tpu.matmul %203, %0, %cst_139 {dimension_numbers = #tpu.dot_dimension_numbers<[1], [0], [0], [1], [0, 0, 1, 1], [], []>} : vector<8x160xbf16>, vector<160x448xbf16>, vector<8x448xf32> -> vector<8x448xf32>
    %cst_140 = arith.constant dense<0.000000e+00> : vector<8x448xf32>
    %207 = tpu.matmul %203, %1, %cst_140 {dimension_numbers = #tpu.dot_dimension_numbers<[1], [0], [0], [1], [0, 0, 1, 1], [], []>} : vector<8x160xbf16>, vector<160x448xbf16>, vector<8x448xf32> -> vector<8x448xf32>
    %208 = arith.maximumf %206, %207 : vector<8x448xf32>
    %cst_141 = arith.constant dense<0.000000e+00> : vector<8x448xf32>
    %209 = tpu.matmul %205, %0, %cst_141 {dimension_numbers = #tpu.dot_dimension_numbers<[1], [0], [0], [1], [0, 0, 1, 1], [], []>} : vector<8x160xbf16>, vector<160x448xbf16>, vector<8x448xf32> -> vector<8x448xf32>
    %cst_142 = arith.constant dense<0.000000e+00> : vector<8x448xf32>
    %210 = tpu.matmul %205, %1, %cst_142 {dimension_numbers = #tpu.dot_dimension_numbers<[1], [0], [0], [1], [0, 0, 1, 1], [], []>} : vector<8x160xbf16>, vector<160x448xbf16>, vector<8x448xf32> -> vector<8x448xf32>
    %211 = arith.maximumf %209, %210 : vector<8x448xf32>
    %212 = arith.maximumf %208, %211 : vector<8x448xf32>
    %213 = vector.broadcast %2 : vector<1x448xf32> to vector<8x448xf32>
    %214 = arith.addf %212, %213 : vector<8x448xf32>
    %cst_143 = arith.constant 0.000000e+00 : f32
    %215 = vector.broadcast %cst_143 : f32 to vector<8x448xf32>
    %216 = arith.maximumf %214, %215 : vector<8x448xf32>
    %217 = arith.truncf %216 : vector<8x448xf32> to vector<8x448xbf16>
    %c10_144 = arith.constant 10 : index
    %c0_145 = arith.constant 0 : index
    %c0_146 = arith.constant 0 : index
    %218 = vector.load %arg5[%c10_144, %c0_145, %c0_146] : memref<14x448x128xbf16, #tpu.memory_space<vmem>>, vector<1x448x128xbf16>
    %219 = vector.shape_cast %218 : vector<1x448x128xbf16> to vector<448x128xbf16>
    %cst_147 = arith.constant dense<0.000000e+00> : vector<8x128xf32>
    %220 = tpu.matmul %217, %219, %cst_147 {dimension_numbers = #tpu.dot_dimension_numbers<[1], [0], [0], [1], [0, 0, 1, 1], [], []>} : vector<8x448xbf16>, vector<448x128xbf16>, vector<8x128xf32> -> vector<8x128xf32>
    %221 = arith.addf %201, %220 : vector<8x128xf32>
    %c11 = arith.constant 11 : index
    %c0_148 = arith.constant 0 : index
    %c0_149 = arith.constant 0 : index
    %222 = vector.load %arg1[%c11, %c0_148, %c0_149] : memref<28x8x160xbf16, #tpu.memory_space<vmem>>, vector<1x8x160xbf16>
    %223 = vector.shape_cast %222 : vector<1x8x160xbf16> to vector<8x160xbf16>
    %c25 = arith.constant 25 : index
    %c0_150 = arith.constant 0 : index
    %c0_151 = arith.constant 0 : index
    %224 = vector.load %arg1[%c25, %c0_150, %c0_151] : memref<28x8x160xbf16, #tpu.memory_space<vmem>>, vector<1x8x160xbf16>
    %225 = vector.shape_cast %224 : vector<1x8x160xbf16> to vector<8x160xbf16>
    %cst_152 = arith.constant dense<0.000000e+00> : vector<8x448xf32>
    %226 = tpu.matmul %223, %0, %cst_152 {dimension_numbers = #tpu.dot_dimension_numbers<[1], [0], [0], [1], [0, 0, 1, 1], [], []>} : vector<8x160xbf16>, vector<160x448xbf16>, vector<8x448xf32> -> vector<8x448xf32>
    %cst_153 = arith.constant dense<0.000000e+00> : vector<8x448xf32>
    %227 = tpu.matmul %223, %1, %cst_153 {dimension_numbers = #tpu.dot_dimension_numbers<[1], [0], [0], [1], [0, 0, 1, 1], [], []>} : vector<8x160xbf16>, vector<160x448xbf16>, vector<8x448xf32> -> vector<8x448xf32>
    %228 = arith.maximumf %226, %227 : vector<8x448xf32>
    %cst_154 = arith.constant dense<0.000000e+00> : vector<8x448xf32>
    %229 = tpu.matmul %225, %0, %cst_154 {dimension_numbers = #tpu.dot_dimension_numbers<[1], [0], [0], [1], [0, 0, 1, 1], [], []>} : vector<8x160xbf16>, vector<160x448xbf16>, vector<8x448xf32> -> vector<8x448xf32>
    %cst_155 = arith.constant dense<0.000000e+00> : vector<8x448xf32>
    %230 = tpu.matmul %225, %1, %cst_155 {dimension_numbers = #tpu.dot_dimension_numbers<[1], [0], [0], [1], [0, 0, 1, 1], [], []>} : vector<8x160xbf16>, vector<160x448xbf16>, vector<8x448xf32> -> vector<8x448xf32>
    %231 = arith.maximumf %229, %230 : vector<8x448xf32>
    %232 = arith.maximumf %228, %231 : vector<8x448xf32>
    %233 = vector.broadcast %2 : vector<1x448xf32> to vector<8x448xf32>
    %234 = arith.addf %232, %233 : vector<8x448xf32>
    %cst_156 = arith.constant 0.000000e+00 : f32
    %235 = vector.broadcast %cst_156 : f32 to vector<8x448xf32>
    %236 = arith.maximumf %234, %235 : vector<8x448xf32>
    %237 = arith.truncf %236 : vector<8x448xf32> to vector<8x448xbf16>
    %c11_157 = arith.constant 11 : index
    %c0_158 = arith.constant 0 : index
    %c0_159 = arith.constant 0 : index
    %238 = vector.load %arg5[%c11_157, %c0_158, %c0_159] : memref<14x448x128xbf16, #tpu.memory_space<vmem>>, vector<1x448x128xbf16>
    %239 = vector.shape_cast %238 : vector<1x448x128xbf16> to vector<448x128xbf16>
    %cst_160 = arith.constant dense<0.000000e+00> : vector<8x128xf32>
    %240 = tpu.matmul %237, %239, %cst_160 {dimension_numbers = #tpu.dot_dimension_numbers<[1], [0], [0], [1], [0, 0, 1, 1], [], []>} : vector<8x448xbf16>, vector<448x128xbf16>, vector<8x128xf32> -> vector<8x128xf32>
    %241 = arith.addf %221, %240 : vector<8x128xf32>
    %c12 = arith.constant 12 : index
    %c0_161 = arith.constant 0 : index
    %c0_162 = arith.constant 0 : index
    %242 = vector.load %arg1[%c12, %c0_161, %c0_162] : memref<28x8x160xbf16, #tpu.memory_space<vmem>>, vector<1x8x160xbf16>
    %243 = vector.shape_cast %242 : vector<1x8x160xbf16> to vector<8x160xbf16>
    %c26 = arith.constant 26 : index
    %c0_163 = arith.constant 0 : index
    %c0_164 = arith.constant 0 : index
    %244 = vector.load %arg1[%c26, %c0_163, %c0_164] : memref<28x8x160xbf16, #tpu.memory_space<vmem>>, vector<1x8x160xbf16>
    %245 = vector.shape_cast %244 : vector<1x8x160xbf16> to vector<8x160xbf16>
    %cst_165 = arith.constant dense<0.000000e+00> : vector<8x448xf32>
    %246 = tpu.matmul %243, %0, %cst_165 {dimension_numbers = #tpu.dot_dimension_numbers<[1], [0], [0], [1], [0, 0, 1, 1], [], []>} : vector<8x160xbf16>, vector<160x448xbf16>, vector<8x448xf32> -> vector<8x448xf32>
    %cst_166 = arith.constant dense<0.000000e+00> : vector<8x448xf32>
    %247 = tpu.matmul %243, %1, %cst_166 {dimension_numbers = #tpu.dot_dimension_numbers<[1], [0], [0], [1], [0, 0, 1, 1], [], []>} : vector<8x160xbf16>, vector<160x448xbf16>, vector<8x448xf32> -> vector<8x448xf32>
    %248 = arith.maximumf %246, %247 : vector<8x448xf32>
    %cst_167 = arith.constant dense<0.000000e+00> : vector<8x448xf32>
    %249 = tpu.matmul %245, %0, %cst_167 {dimension_numbers = #tpu.dot_dimension_numbers<[1], [0], [0], [1], [0, 0, 1, 1], [], []>} : vector<8x160xbf16>, vector<160x448xbf16>, vector<8x448xf32> -> vector<8x448xf32>
    %cst_168 = arith.constant dense<0.000000e+00> : vector<8x448xf32>
    %250 = tpu.matmul %245, %1, %cst_168 {dimension_numbers = #tpu.dot_dimension_numbers<[1], [0], [0], [1], [0, 0, 1, 1], [], []>} : vector<8x160xbf16>, vector<160x448xbf16>, vector<8x448xf32> -> vector<8x448xf32>
    %251 = arith.maximumf %249, %250 : vector<8x448xf32>
    %252 = arith.maximumf %248, %251 : vector<8x448xf32>
    %253 = vector.broadcast %2 : vector<1x448xf32> to vector<8x448xf32>
    %254 = arith.addf %252, %253 : vector<8x448xf32>
    %cst_169 = arith.constant 0.000000e+00 : f32
    %255 = vector.broadcast %cst_169 : f32 to vector<8x448xf32>
    %256 = arith.maximumf %254, %255 : vector<8x448xf32>
    %257 = arith.truncf %256 : vector<8x448xf32> to vector<8x448xbf16>
    %c12_170 = arith.constant 12 : index
    %c0_171 = arith.constant 0 : index
    %c0_172 = arith.constant 0 : index
    %258 = vector.load %arg5[%c12_170, %c0_171, %c0_172] : memref<14x448x128xbf16, #tpu.memory_space<vmem>>, vector<1x448x128xbf16>
    %259 = vector.shape_cast %258 : vector<1x448x128xbf16> to vector<448x128xbf16>
    %cst_173 = arith.constant dense<0.000000e+00> : vector<8x128xf32>
    %260 = tpu.matmul %257, %259, %cst_173 {dimension_numbers = #tpu.dot_dimension_numbers<[1], [0], [0], [1], [0, 0, 1, 1], [], []>} : vector<8x448xbf16>, vector<448x128xbf16>, vector<8x128xf32> -> vector<8x128xf32>
    %261 = arith.addf %241, %260 : vector<8x128xf32>
    %c13 = arith.constant 13 : index
    %c0_174 = arith.constant 0 : index
    %c0_175 = arith.constant 0 : index
    %262 = vector.load %arg1[%c13, %c0_174, %c0_175] : memref<28x8x160xbf16, #tpu.memory_space<vmem>>, vector<1x8x160xbf16>
    %263 = vector.shape_cast %262 : vector<1x8x160xbf16> to vector<8x160xbf16>
    %c27 = arith.constant 27 : index
    %c0_176 = arith.constant 0 : index
    %c0_177 = arith.constant 0 : index
    %264 = vector.load %arg1[%c27, %c0_176, %c0_177] : memref<28x8x160xbf16, #tpu.memory_space<vmem>>, vector<1x8x160xbf16>
    %265 = vector.shape_cast %264 : vector<1x8x160xbf16> to vector<8x160xbf16>
    %cst_178 = arith.constant dense<0.000000e+00> : vector<8x448xf32>
    %266 = tpu.matmul %263, %0, %cst_178 {dimension_numbers = #tpu.dot_dimension_numbers<[1], [0], [0], [1], [0, 0, 1, 1], [], []>} : vector<8x160xbf16>, vector<160x448xbf16>, vector<8x448xf32> -> vector<8x448xf32>
    %cst_179 = arith.constant dense<0.000000e+00> : vector<8x448xf32>
    %267 = tpu.matmul %263, %1, %cst_179 {dimension_numbers = #tpu.dot_dimension_numbers<[1], [0], [0], [1], [0, 0, 1, 1], [], []>} : vector<8x160xbf16>, vector<160x448xbf16>, vector<8x448xf32> -> vector<8x448xf32>
    %268 = arith.maximumf %266, %267 : vector<8x448xf32>
    %cst_180 = arith.constant dense<0.000000e+00> : vector<8x448xf32>
    %269 = tpu.matmul %265, %0, %cst_180 {dimension_numbers = #tpu.dot_dimension_numbers<[1], [0], [0], [1], [0, 0, 1, 1], [], []>} : vector<8x160xbf16>, vector<160x448xbf16>, vector<8x448xf32> -> vector<8x448xf32>
    %cst_181 = arith.constant dense<0.000000e+00> : vector<8x448xf32>
    %270 = tpu.matmul %265, %1, %cst_181 {dimension_numbers = #tpu.dot_dimension_numbers<[1], [0], [0], [1], [0, 0, 1, 1], [], []>} : vector<8x160xbf16>, vector<160x448xbf16>, vector<8x448xf32> -> vector<8x448xf32>
    %271 = arith.maximumf %269, %270 : vector<8x448xf32>
    %272 = arith.maximumf %268, %271 : vector<8x448xf32>
    %273 = vector.broadcast %2 : vector<1x448xf32> to vector<8x448xf32>
    %274 = arith.addf %272, %273 : vector<8x448xf32>
    %cst_182 = arith.constant 0.000000e+00 : f32
    %275 = vector.broadcast %cst_182 : f32 to vector<8x448xf32>
    %276 = arith.maximumf %274, %275 : vector<8x448xf32>
    %277 = arith.truncf %276 : vector<8x448xf32> to vector<8x448xbf16>
    %c13_183 = arith.constant 13 : index
    %c0_184 = arith.constant 0 : index
    %c0_185 = arith.constant 0 : index
    %278 = vector.load %arg5[%c13_183, %c0_184, %c0_185] : memref<14x448x128xbf16, #tpu.memory_space<vmem>>, vector<1x448x128xbf16>
    %279 = vector.shape_cast %278 : vector<1x448x128xbf16> to vector<448x128xbf16>
    %cst_186 = arith.constant dense<0.000000e+00> : vector<8x128xf32>
    %280 = tpu.matmul %277, %279, %cst_186 {dimension_numbers = #tpu.dot_dimension_numbers<[1], [0], [0], [1], [0, 0, 1, 1], [], []>} : vector<8x448xbf16>, vector<448x128xbf16>, vector<8x128xf32> -> vector<8x128xf32>
    %281 = arith.addf %261, %280 : vector<8x128xf32>
    %c0_187 = arith.constant 0 : index
    %c0_188 = arith.constant 0 : index
    %282 = vector.load %arg6[%c0_187, %c0_188] : memref<1x128xf32, #tpu.memory_space<vmem>>, vector<1x128xf32>
    %283 = vector.broadcast %282 : vector<1x128xf32> to vector<8x128xf32>
    %284 = arith.addf %281, %283 : vector<8x128xf32>
    %c0_189 = arith.constant 0 : index
    %c0_190 = arith.constant 0 : index
    %285 = vector.load %arg7[%c0_189, %c0_190] : memref<8x128xf32, #tpu.memory_space<vmem>>, vector<8x128xf32>
    tpu.vector_store %arg7[%c0_189, %c0_190], %284 {strides = array<i32>} : memref<8x128xf32, #tpu.memory_space<vmem>>, vector<8x128xf32>,
    return
  }
  func.func @transform_0(%arg0: i32) -> (i32, i32, i32) {
    %c0_i32 = arith.constant 0 : i32
    %c0_i32_0 = arith.constant 0 : i32
    %c0_i32_1 = arith.constant 0 : i32
    return %c0_i32, %arg0, %c0_i32_0 : i32, i32, i32
  }
  func.func @transform_1(%arg0: i32) -> (i32, i32) {
    %c0_i32 = arith.constant 0 : i32
    %c0_i32_0 = arith.constant 0 : i32
    %c0_i32_1 = arith.constant 0 : i32
    return %c0_i32, %c0_i32_0 : i32, i32
  }
  func.func @transform_2(%arg0: i32) -> (i32, i32) {
    %c0_i32 = arith.constant 0 : i32
    %c0_i32_0 = arith.constant 0 : i32
    %c0_i32_1 = arith.constant 0 : i32
    return %c0_i32, %c0_i32_0 : i32, i32
  }
  func.func @transform_3(%arg0: i32) -> (i32, i32) {
    %c0_i32 = arith.constant 0 : i32
    %c0_i32_0 = arith.constant 0 : i32
    %c0_i32_1 = arith.constant 0 : i32
    return %c0_i32, %c0_i32_0 : i32, i32
  }
  func.func @transform_4(%arg0: i32) -> (i32, i32, i32) {
    %c0_i32 = arith.constant 0 : i32
    %c0_i32_0 = arith.constant 0 : i32
    %c0_i32_1 = arith.constant 0 : i32
    %c0_i32_2 = arith.constant 0 : i32
    return %c0_i32, %c0_i32_0, %c0_i32_1 : i32, i32, i32
  }
  func.func @transform_5(%arg0: i32) -> (i32, i32) {
    %c0_i32 = arith.constant 0 : i32
    %c0_i32_0 = arith.constant 0 : i32
    %c0_i32_1 = arith.constant 0 : i32
    return %c0_i32, %c0_i32_0 : i32, i32
  }
  func.func @transform_6(%arg0: i32) -> (i32, i32) {
    %c0_i32 = arith.constant 0 : i32
    %c0_i32_0 = arith.constant 0 : i32
    return %arg0, %c0_i32 : i32, i32
  }
}

</mosaic_0001>

<llo_original>
// kernel: cnn_forward.1
$region0: #{cnn_forward.1}
  #allocation0 [shape = 'u32[]', space=smem, size = 0x4, offset = 0x4, fixed_abs, tag = 'smem constant byte address 0x4 - core index']
  #allocation1 [shape = 'u32[144,128]{1,0:T(1,128)}', space=vmem, size = 0x12000, scoped, tag = 'internal scratch']
  %s0 = inlined_call_operand.vmem [shape: bf16[28,16,160], index: 0, kind: input, shape index: {}]
  %s1 = inlined_call_operand.vmem [shape: bf16[160,448], index: 1, kind: input, shape index: {}]
  %s2 = inlined_call_operand.vmem [shape: bf16[160,448], index: 2, kind: input, shape index: {}]
  %s3 = inlined_call_operand.vmem [shape: f32[1,448], index: 3, kind: input, shape index: {}]
  %s4 = inlined_call_operand.vmem [shape: bf16[14,448,128], index: 4, kind: input, shape index: {}]
  %s5 = inlined_call_operand.vmem [shape: f32[1,128], index: 5, kind: input, shape index: {}]
  %s6 = inlined_call_operand.vmem [shape: f32[16,128], index: 6, kind: output, shape index: {}]
  %s7 = sld [smem:[#allocation0]]
  $region95: #{cnn_forward.1} parent=0
    _
  %s9 = ssub.s32 1, %s7
  %s10 = scalar_select 0, %s9, %s7
  $region1: #{cnn_forward.1} parent=0
    #allocation2 [shape = 'u8[229376]{0}', space=vmem, size = 0x38000, scoped, tag = 'input window, operand 0']
    loop: start=0, step=1, limit=4
    $region2: #{cnn_forward.1} parent=1 // loop_pre_header
      _
    $region3: #{cnn_forward.1} parent=1 // loop_header
      %s12 = sphi 0, %s16
      %p13 = scmp.ge.s32.totalorder %s12, 4
      %s22 = sphi 0, %s24
      %s25 = sphi 0, %s22
      %s26 = sphi 0, %s25
      %s42 = sphi 0, %s26
      %s46 = sphi 0, %s46
      %s48 = sphi 0, %s46
      %s49 = sphi 0, %s48
      %s63 = sphi 0, %s49
      %s67 = sphi 0, %s67
      %s69 = sphi 0, %s67
      %s70 = sphi 0, %s69
      %s84 = sphi 0, %s70
      %s88 = sphi 0, %s88
      %s90 = sphi 0, %s88
      %s91 = sphi 0, %s90
      %s105 = sphi 0, %s91
      %s109 = sphi 0, %s109
      %s111 = sphi 0, %s109
      %s112 = sphi 0, %s111
      %s126 = sphi 0, %s112
      %s130 = sphi 0, %s130
      %s132 = sphi 0, %s130
      %s133 = sphi 0, %s132
      %s147 = sphi 0, %s133
      %s153 = sphi 0, %s155
      %s156 = sphi 0, %s153
      %s157 = sphi 0, %s156
      %s173 = sphi 0, %s157
    $region4: #{cnn_forward.1} parent=1 // loop_header_branch
      %15 = sbr.rel (%p13) target = $region8
    $region5: #{cnn_forward.1} parent=1 // loop_body
      %s17 = ssub.s32 %s12, 1
      %s18 = ssub.s32 %s12, 2
      %s19 = sadd.s32 %s12, 1
      %s20 = ssub.s32 %s12, %s19
      %p21 = scmp.eq.s32.totalorder %s20, 0
      %s23 = sadd.s32 %s22, 1
      %s24 = scalar_select %p21, %s22, %s23
      %p27 = pneg %p21
      %p28 = scmp.eq.s32.totalorder %s12, 1
      %p29 = por %p27, %p28
      %p30 = scmp.ne.s32.totalorder %s22, %s25
      %p31 = scmp.eq.s32.totalorder %s12, 0
      %p32 = por %p30, %p31
      %p33 = scmp.ne.s32.totalorder %s22, %s25
      %p34 = scmp.eq.s32.totalorder %s17, 1
      %p35 = por %p33, %p34
      %p36 = scmp.ne.s32.totalorder %s25, %s26
      %p37 = scmp.eq.s32.totalorder %s17, 0
      %p38 = por %p36, %p37
      %p39 = scmp.ne.s32.totalorder %s25, %s26
      %p40 = scmp.eq.s32.totalorder %s18, 1
      %p41 = por %p39, %p40
      %p43 = scmp.ne.s32.totalorder %s26, %s42
      %p44 = scmp.eq.s32.totalorder %s18, 0
      %p45 = por %p43, %p44
      %s47 = sadd.s32 %s46, 1
      %p50 = scmp.eq.s32.totalorder %s12, 1
      %p51 = scmp.ne.s32.totalorder %s46, %s48
      %p52 = scmp.eq.s32.totalorder %s12, 0
      %p53 = por %p51, %p52
      %p54 = scmp.ne.s32.totalorder %s46, %s48
      %p55 = scmp.eq.s32.totalorder %s17, 1
      %p56 = por %p54, %p55
      %p57 = scmp.ne.s32.totalorder %s48, %s49
      %p58 = scmp.eq.s32.totalorder %s17, 0
      %p59 = por %p57, %p58
      %p60 = scmp.ne.s32.totalorder %s48, %s49
      %p61 = scmp.eq.s32.totalorder %s18, 1
      %p62 = por %p60, %p61
      %p64 = scmp.ne.s32.totalorder %s49, %s63
      %p65 = scmp.eq.s32.totalorder %s18, 0
      %p66 = por %p64, %p65
      %s68 = sadd.s32 %s67, 1
      %p71 = scmp.eq.s32.totalorder %s12, 1
      %p72 = scmp.ne.s32.totalorder %s67, %s69
      %p73 = scmp.eq.s32.totalorder %s12, 0
      %p74 = por %p72, %p73
      %p75 = scmp.ne.s32.totalorder %s67, %s69
      %p76 = scmp.eq.s32.totalorder %s17, 1
      %p77 = por %p75, %p76
      %p78 = scmp.ne.s32.totalorder %s69, %s70
      %p79 = scmp.eq.s32.totalorder %s17, 0
      %p80 = por %p78, %p79
      %p81 = scmp.ne.s32.totalorder %s69, %s70
      %p82 = scmp.eq.s32.totalorder %s18, 1
      %p83 = por %p81, %p82
      %p85 = scmp.ne.s32.totalorder %s70, %s84
      %p86 = scmp.eq.s32.totalorder %s18, 0
      %p87 = por %p85, %p86
      %s89 = sadd.s32 %s88, 1
      %p92 = scmp.eq.s32.totalorder %s12, 1
      %p93 = scmp.ne.s32.totalorder %s88, %s90
      %p94 = scmp.eq.s32.totalorder %s12, 0
      %p95 = por %p93, %p94
      %p96 = scmp.ne.s32.totalorder %s88, %s90
      %p97 = scmp.eq.s32.totalorder %s17, 1
      %p98 = por %p96, %p97
      %p99 = scmp.ne.s32.totalorder %s90, %s91
      %p100 = scmp.eq.s32.totalorder %s17, 0
      %p101 = por %p99, %p100
      %p102 = scmp.ne.s32.totalorder %s90, %s91
      %p103 = scmp.eq.s32.totalorder %s18, 1
      %p104 = por %p102, %p103
      %p106 = scmp.ne.s32.totalorder %s91, %s105
      %p107 = scmp.eq.s32.totalorder %s18, 0
      %p108 = por %p106, %p107
      %s110 = sadd.s32 %s109, 1
      %p113 = scmp.eq.s32.totalorder %s12, 1
      %p114 = scmp.ne.s32.totalorder %s109, %s111
      %p115 = scmp.eq.s32.totalorder %s12, 0
      %p116 = por %p114, %p115
      %p117 = scmp.ne.s32.totalorder %s109, %s111
      %p118 = scmp.eq.s32.totalorder %s17, 1
      %p119 = por %p117, %p118
      %p120 = scmp.ne.s32.totalorder %s111, %s112
      %p121 = scmp.eq.s32.totalorder %s17, 0
      %p122 = por %p120, %p121
      %p123 = scmp.ne.s32.totalorder %s111, %s112
      %p124 = scmp.eq.s32.totalorder %s18, 1
      %p125 = por %p123, %p124
      %p127 = scmp.ne.s32.totalorder %s112, %s126
      %p128 = scmp.eq.s32.totalorder %s18, 0
      %p129 = por %p127, %p128
      %s131 = sadd.s32 %s130, 1
      %p134 = scmp.eq.s32.totalorder %s12, 1
      %p135 = scmp.ne.s32.totalorder %s130, %s132
      %p136 = scmp.eq.s32.totalorder %s12, 0
      %p137 = por %p135, %p136
      %p138 = scmp.ne.s32.totalorder %s130, %s132
      %p139 = scmp.eq.s32.totalorder %s17, 1
      %p140 = por %p138, %p139
      %p141 = scmp.ne.s32.totalorder %s132, %s133
      %p142 = scmp.eq.s32.totalorder %s17, 0
      %p143 = por %p141, %p142
      %p144 = scmp.ne.s32.totalorder %s132, %s133
      %p145 = scmp.eq.s32.totalorder %s18, 1
      %p146 = por %p144, %p145
      %p148 = scmp.ne.s32.totalorder %s133, %s147
      %p149 = scmp.eq.s32.totalorder %s18, 0
      %p150 = por %p148, %p149
      %s151 = ssub.s32 %s12, %s19
      %p152 = scmp.eq.s32.totalorder %s151, 0
      %s154 = sadd.s32 %s153, 1
      %s155 = scalar_select %p152, %s153, %s154
      %p158 = pneg %p152
      %p159 = scmp.eq.s32.totalorder %s12, 1
      %p160 = por %p158, %p159
      %p161 = scmp.ne.s32.totalorder %s153, %s156
      %p162 = scmp.eq.s32.totalorder %s12, 0
      %p163 = por %p161, %p162
      %p164 = scmp.ne.s32.totalorder %s153, %s156
      %p165 = scmp.eq.s32.totalorder %s17, 1
      %p166 = por %p164, %p165
      %p167 = scmp.ne.s32.totalorder %s156, %s157
      %p168 = scmp.eq.s32.totalorder %s17, 0
      %p169 = por %p167, %p168
      %p170 = scmp.ne.s32.totalorder %s156, %s157
      %p171 = scmp.eq.s32.totalorder %s18, 1
      %p172 = por %p170, %p171
      %p174 = scmp.ne.s32.totalorder %s157, %s173
      %p175 = scmp.eq.s32.totalorder %s18, 0
      %p176 = por %p174, %p175
      %p177 = scmp.le.s32.totalorder 1, %s12
      %p178 = scmp.lt.s32.totalorder %s12, 3
      %p179 = pnand %p177, %p178
      %p180 = pneg %p179
      // Predicated region
      $region9: #{cnn_forward.1} parent=5 // pred_check
        _
      $region10: #{cnn_forward.1} parent=5 // pred_check_branch
        %182 = sbr.rel (%p179) target = $region12
      $region11: #{cnn_forward.1} parent=5 // pred_region
        %s183 = ssub.s32 %s12, 1
        // Predicated region
        $region13: #{cnn_forward.1} parent=11 // pred_check
          %p184 = pneg %p59
        $region14: #{cnn_forward.1} parent=11 // pred_check_branch
          %186 = sbr.rel (%p184) target = $region16
        $region15: #{cnn_forward.1} parent=11 // pred_region
          _
        $region16: #{cnn_forward.1} parent=11 // pred_fallthru
          _
        // Predicated region
        $region17: #{cnn_forward.1} parent=11 // pred_check
          %p187 = pneg %p80
        $region18: #{cnn_forward.1} parent=11 // pred_check_branch
          %189 = sbr.rel (%p187) target = $region20
        $region19: #{cnn_forward.1} parent=11 // pred_region
          _
        $region20: #{cnn_forward.1} parent=11 // pred_fallthru
          _
        // Predicated region
        $region21: #{cnn_forward.1} parent=11 // pred_check
          %p190 = pneg %p101
        $region22: #{cnn_forward.1} parent=11 // pred_check_branch
          %192 = sbr.rel (%p190) target = $region24
        $region23: #{cnn_forward.1} parent=11 // pred_region
          _
        $region24: #{cnn_forward.1} parent=11 // pred_fallthru
          _
        // Predicated region
        $region25: #{cnn_forward.1} parent=11 // pred_check
          %p193 = pneg %p122
        $region26: #{cnn_forward.1} parent=11 // pred_check_branch
          %195 = sbr.rel (%p193) target = $region28
        $region27: #{cnn_forward.1} parent=11 // pred_region
          _
        $region28: #{cnn_forward.1} parent=11 // pred_fallthru
          _
        // Predicated region
        $region29: #{cnn_forward.1} parent=11 // pred_check
          %p196 = pneg %p143
        $region30: #{cnn_forward.1} parent=11 // pred_check_branch
          %198 = sbr.rel (%p196) target = $region32
        $region31: #{cnn_forward.1} parent=11 // pred_region
          _
        $region32: #{cnn_forward.1} parent=11 // pred_fallthru
          _
      $region12: #{cnn_forward.1} parent=5 // pred_fallthru
        _
      %p199 = scmp.lt.s32.totalorder %s12, 2
      // Predicated region
      $region33: #{cnn_forward.1} parent=5 // pred_check
        %p200 = pneg %p199
      $region34: #{cnn_forward.1} parent=5 // pred_check_branch
        %202 = sbr.rel (%p200) target = $region36
      $region35: #{cnn_forward.1} parent=5 // pred_region
        // Predicated region
        $region37: #{cnn_forward.1} parent=35 // pred_check
          %p203 = pneg %p32
        $region38: #{cnn_forward.1} parent=35 // pred_check_branch
          %205 = sbr.rel (%p203) target = $region40
        $region39: #{cnn_forward.1} parent=35 // pred_region
          %s206 = sand.u32 %s22, 1
          %s207 = sand.u32 %s22, 1
          %s208 = smul.addr %s207, 224
          %s209 = scalar_lea.vmem [#allocation2], %s208
          %s210 = smul.addr %s12, 2
          %s211 = smul.addr %s210, 4
          %s212 = scalar_lea.vmem %s0, %s211
          // Predicated region
          $region41: #{cnn_forward.1} parent=39 // pred_check
            _
          $region42: #{cnn_forward.1} parent=39 // pred_check_branch
            %214 = sbr.rel (0) target = $region44
          $region43: #{cnn_forward.1} parent=39 // pred_region
            // Predicated region
            $region45: #{cnn_forward.1} parent=43 // pred_check
              _
            $region46: #{cnn_forward.1} parent=43 // pred_check_branch
              %216 = sbr.rel (0) target = $region48
            $region47: #{cnn_forward.1} parent=43 // pred_region
              // Predicated region
              $region60: #{cnn_forward.1} parent=47 // pred_check
                _
              $region61: #{cnn_forward.1} parent=47 // pred_check_branch
                %285 = sbr.rel (0) target = $region63
              $region62: #{cnn_forward.1} parent=47 // pred_region
                loop: start=0, step=1, limit=1
                $region64: #{cnn_forward.1} parent=62 // loop_pre_header
                  _
                $region65: #{cnn_forward.1} parent=62 // loop_header
                  %s287 = sphi 0, %s291
                  %p288 = scmp.ge.s32.totalorder %s287, 1
                  %s292 = sphi %s212, %s212
                  %s293 = sphi %s209, %s209
                $region66: #{cnn_forward.1} parent=62 // loop_header_branch
                  %290 = sbr.rel (%p288) target = $region70
                $region67: #{cnn_forward.1} parent=62 // loop_body
                  %v294 = vld [vmem:[%s292] sm:$0xff]
                  %295 = vst [vmem:[%s293] sm:$0xff] %v294
                  %v296 = vld [vmem:[%s292 + $0x10] sm:$0xff]
                  %297 = vst [vmem:[%s293 + $0x8] sm:$0xff] %v296
                  %v298 = vld [vmem:[%s292 + $0x20] sm:$0xff]
                  %299 = vst [vmem:[%s293 + $0x10] sm:$0xff] %v298
                  %v300 = vld [vmem:[%s292 + $0x30] sm:$0xff]
                  %301 = vst [vmem:[%s293 + $0x18] sm:$0xff] %v300
                  %v302 = vld [vmem:[%s292 + $0x40] sm:$0xff]
                  %303 = vst [vmem:[%s293 + $0x20] sm:$0xff] %v302
                  %v304 = vld [vmem:[%s292 + $0x50] sm:$0xff]
                  %305 = vst [vmem:[%s293 + $0x28] sm:$0xff] %v304
                  %v306 = vld [vmem:[%s292 + $0x60] sm:$0xff]
                  %307 = vst [vmem:[%s293 + $0x30] sm:$0xff] %v306
                  %v308 = vld [vmem:[%s292 + $0x70] sm:$0xff]
                  %309 = vst [vmem:[%s293 + $0x38] sm:$0xff] %v308
                  %v310 = vld [vmem:[%s292 + $0x80] sm:$0xff]
                  %311 = vst [vmem:[%s293 + $0x40] sm:$0xff] %v310
                  %v312 = vld [vmem:[%s292 + $0x90] sm:$0xff]
                  %313 = vst [vmem:[%s293 + $0x48] sm:$0xff] %v312
                  %v314 = vld [vmem:[%s292 + $0xa0] sm:$0xff]
                  %315 = vst [vmem:[%s293 + $0x50] sm:$0xff] %v314
                  %v316 = vld [vmem:[%s292 + $0xb0] sm:$0xff]
                  %317 = vst [vmem:[%s293 + $0x58] sm:$0xff] %v316
                  %v318 = vld [vmem:[%s292 + $0xc0] sm:$0xff]
                  %319 = vst [vmem:[%s293 + $0x60] sm:$0xff] %v318
                  %v320 = vld [vmem:[%s292 + $0xd0] sm:$0xff]
                  %321 = vst [vmem:[%s293 + $0x68] sm:$0xff] %v320
                  %v322 = vld [vmem:[%s292 + $0xe0] sm:$0xff]
                  %323 = vst [vmem:[%s293 + $0x70] sm:$0xff] %v322
                  %v324 = vld [vmem:[%s292 + $0xf0] sm:$0xff]
                  %325 = vst [vmem:[%s293 + $0x78] sm:$0xff] %v324
                  %v326 = vld [vmem:[%s292 + $0x100] sm:$0xff]
                  %327 = vst [vmem:[%s293 + $0x80] sm:$0xff] %v326
                  %v328 = vld [vmem:[%s292 + $0x110] sm:$0xff]
                  %329 = vst [vmem:[%s293 + $0x88] sm:$0xff] %v328
                  %v330 = vld [vmem:[%s292 + $0x120] sm:$0xff]
                  %331 = vst [vmem:[%s293 + $0x90] sm:$0xff] %v330
                  %v332 = vld [vmem:[%s292 + $0x130] sm:$0xff]
                  %333 = vst [vmem:[%s293 + $0x98] sm:$0xff] %v332
                  %v334 = vld [vmem:[%s292 + $0x140] sm:$0xff]
                  %335 = vst [vmem:[%s293 + $0xa0] sm:$0xff] %v334
                  %v336 = vld [vmem:[%s292 + $0x150] sm:$0xff]
                  %337 = vst [vmem:[%s293 + $0xa8] sm:$0xff] %v336
                  %v338 = vld [vmem:[%s292 + $0x160] sm:$0xff]
                  %339 = vst [vmem:[%s293 + $0xb0] sm:$0xff] %v338
                  %v340 = vld [vmem:[%s292 + $0x170] sm:$0xff]
                  %341 = vst [vmem:[%s293 + $0xb8] sm:$0xff] %v340
                  %v342 = vld [vmem:[%s292 + $0x180] sm:$0xff]
                  %343 = vst [vmem:[%s293 + $0xc0] sm:$0xff] %v342
                  %v344 = vld [vmem:[%s292 + $0x190] sm:$0xff]
                  %345 = vst [vmem:[%s293 + $0xc8] sm:$0xff] %v344
                  %v346 = vld [vmem:[%s292 + $0x1a0] sm:$0xff]
                  %347 = vst [vmem:[%s293 + $0xd0] sm:$0xff] %v346
                  %v348 = vld [vmem:[%s292 + $0x1b0] sm:$0xff]
                  %349 = vst [vmem:[%s293 + $0xd8] sm:$0xff] %v348
                $region68: #{cnn_forward.1} parent=62 // loop_footer
                  %s291 = sadd.s32 1, %s287
                $region69: #{cnn_forward.1} parent=62 // loop_footer_branch
                  %286 = sbr.rel target = $region65
                $region70: #{cnn_forward.1} parent=62 // loop_exit
                  _
              $region63: #{cnn_forward.1} parent=47 // pred_fallthru
                _
              // Predicated region
              $region71: #{cnn_forward.1} parent=47 // pred_check
                _
              $region72: #{cnn_forward.1} parent=47 // pred_check_branch
                %351 = sbr.rel target = $region74
              $region73: #{cnn_forward.1} parent=47 // pred_region
                _
              $region74: #{cnn_forward.1} parent=47 // pred_fallthru
                _
            $region48: #{cnn_forward.1} parent=43 // pred_fallthru
              _
            // Predicated region
            $region49: #{cnn_forward.1} parent=43 // pred_check
              _
            $region50: #{cnn_forward.1} parent=43 // pred_check_branch
              %218 = sbr.rel target = $region52
            $region51: #{cnn_forward.1} parent=43 // pred_region
              loop: start=0, step=1, limit=1
              $region53: #{cnn_forward.1} parent=51 // loop_pre_header
                _
              $region54: #{cnn_forward.1} parent=51 // loop_header
                %s221 = sphi 0, %s225
                %p222 = scmp.ge.s32.totalorder %s221, 1
                %s226 = sphi %s212, %s212
                %s227 = sphi %s209, %s209
              $region55: #{cnn_forward.1} parent=51 // loop_header_branch
                %224 = sbr.rel (%p222) target = $region59
              $region56: #{cnn_forward.1} parent=51 // loop_body
                %v228 = vld [vmem:[%s226] sm:$0xff]
                %229 = vst [vmem:[%s227] sm:$0xff] %v228
                %v230 = vld [vmem:[%s226 + $0x10] sm:$0xff]
                %231 = vst [vmem:[%s227 + $0x8] sm:$0xff] %v230
                %v232 = vld [vmem:[%s226 + $0x20] sm:$0xff]
                %233 = vst [vmem:[%s227 + $0x10] sm:$0xff] %v232
                %v234 = vld [vmem:[%s226 + $0x30] sm:$0xff]
                %235 = vst [vmem:[%s227 + $0x18] sm:$0xff] %v234
                %v236 = vld [vmem:[%s226 + $0x40] sm:$0xff]
                %237 = vst [vmem:[%s227 + $0x20] sm:$0xff] %v236
                %v238 = vld [vmem:[%s226 + $0x50] sm:$0xff]
                %239 = vst [vmem:[%s227 + $0x28] sm:$0xff] %v238
                %v240 = vld [vmem:[%s226 + $0x60] sm:$0xff]
                %241 = vst [vmem:[%s227 + $0x30] sm:$0xff] %v240
                %v242 = vld [vmem:[%s226 + $0x70] sm:$0xff]
                %243 = vst [vmem:[%s227 + $0x38] sm:$0xff] %v242
                %v244 = vld [vmem:[%s226 + $0x80] sm:$0xff]
                %245 = vst [vmem:[%s227 + $0x40] sm:$0xff] %v244
                %v246 = vld [vmem:[%s226 + $0x90] sm:$0xff]
                %247 = vst [vmem:[%s227 + $0x48] sm:$0xff] %v246
                %v248 = vld [vmem:[%s226 + $0xa0] sm:$0xff]
                %249 = vst [vmem:[%s227 + $0x50] sm:$0xff] %v248
                %v250 = vld [vmem:[%s226 + $0xb0] sm:$0xff]
                %251 = vst [vmem:[%s227 + $0x58] sm:$0xff] %v250
                %v252 = vld [vmem:[%s226 + $0xc0] sm:$0xff]
                %253 = vst [vmem:[%s227 + $0x60] sm:$0xff] %v252
                %v254 = vld [vmem:[%s226 + $0xd0] sm:$0xff]
                %255 = vst [vmem:[%s227 + $0x68] sm:$0xff] %v254
                %v256 = vld [vmem:[%s226 + $0xe0] sm:$0xff]
                %257 = vst [vmem:[%s227 + $0x70] sm:$0xff] %v256
                %v258 = vld [vmem:[%s226 + $0xf0] sm:$0xff]
                %259 = vst [vmem:[%s227 + $0x78] sm:$0xff] %v258
                %v260 = vld [vmem:[%s226 + $0x100] sm:$0xff]
                %261 = vst [vmem:[%s227 + $0x80] sm:$0xff] %v260
                %v262 = vld [vmem:[%s226 + $0x110] sm:$0xff]
                %263 = vst [vmem:[%s227 + $0x88] sm:$0xff] %v262
                %v264 = vld [vmem:[%s226 + $0x120] sm:$0xff]
                %265 = vst [vmem:[%s227 + $0x90] sm:$0xff] %v264
                %v266 = vld [vmem:[%s226 + $0x130] sm:$0xff]
                %267 = vst [vmem:[%s227 + $0x98] sm:$0xff] %v266
                %v268 = vld [vmem:[%s226 + $0x140] sm:$0xff]
                %269 = vst [vmem:[%s227 + $0xa0] sm:$0xff] %v268
                %v270 = vld [vmem:[%s226 + $0x150] sm:$0xff]
                %271 = vst [vmem:[%s227 + $0xa8] sm:$0xff] %v270
                %v272 = vld [vmem:[%s226 + $0x160] sm:$0xff]
                %273 = vst [vmem:[%s227 + $0xb0] sm:$0xff] %v272
                %v274 = vld [vmem:[%s226 + $0x170] sm:$0xff]
                %275 = vst [vmem:[%s227 + $0xb8] sm:$0xff] %v274
                %v276 = vld [vmem:[%s226 + $0x180] sm:$0xff]
                %277 = vst [vmem:[%s227 + $0xc0] sm:$0xff] %v276
                %v278 = vld [vmem:[%s226 + $0x190] sm:$0xff]
                %279 = vst [vmem:[%s227 + $0xc8] sm:$0xff] %v278
                %v280 = vld [vmem:[%s226 + $0x1a0] sm:$0xff]
                %281 = vst [vmem:[%s227 + $0xd0] sm:$0xff] %v280
                %v282 = vld [vmem:[%s226 + $0x1b0] sm:$0xff]
                %283 = vst [vmem:[%s227 + $0xd8] sm:$0xff] %v282
              $region57: #{cnn_forward.1} parent=51 // loop_footer
                %s225 = sadd.s32 1, %s221
              $region58: #{cnn_forward.1} parent=51 // loop_footer_branch
                %220 = sbr.rel target = $region54
              $region59: #{cnn_forward.1} parent=51 // loop_exit
                _
            $region52: #{cnn_forward.1} parent=43 // pred_fallthru
              _
          $region44: #{cnn_forward.1} parent=39 // pred_fallthru
            _
          %352 = vnop
        $region40: #{cnn_forward.1} parent=35 // pred_fallthru
          _
      $region36: #{cnn_forward.1} parent=5 // pred_fallthru
        _
      %p353 = scmp.le.s32.totalorder 1, %s12
      %p354 = scmp.lt.s32.totalorder %s12, 3
      %p355 = pnand %p353, %p354
      %p356 = pneg %p355
      // Predicated region
      $region75: #{cnn_forward.1} parent=5 // pred_check
        _
      $region76: #{cnn_forward.1} parent=5 // pred_check_branch
        %358 = sbr.rel (%p355) target = $region78
      $region77: #{cnn_forward.1} parent=5 // pred_region
        %s359 = ssub.s32 %s12, 1
        %s360 = sand.u32 %s25, 1
        %s361 = sand.u32 %s25, 1
        %s362 = smul.addr %s361, 224
        %s363 = scalar_lea.vmem [#allocation2], %s362
        // Predicated region
        $region79: #{cnn_forward.1} parent=77 // pred_check
          %p364 = pneg %p38
        $region80: #{cnn_forward.1} parent=77 // pred_check_branch
          %366 = sbr.rel (%p364) target = $region82
        $region81: #{cnn_forward.1} parent=77 // pred_region
          _
        $region82: #{cnn_forward.1} parent=77 // pred_fallthru
          _
        %s367 = sand.u32 %s25, 1
        %s368 = sand.u32 %s25, 1
        %s369 = smul.addr %s368, 224
        %s370 = scalar_lea.vmem [#allocation2], %s369
        %p371 = pneg %p38
        %p372 = pneg %p35
        %p373 = pneg %p59
        %p374 = pneg %p56
        %p375 = pneg %p80
        %p376 = pneg %p77
        %p377 = pneg %p101
        %p378 = pneg %p98
        %p379 = pneg %p122
        %p380 = pneg %p119
        %p381 = pneg %p143
        %p382 = pneg %p140
        %p383 = pneg %p169
        %p384 = pneg %p166
        %p385 = scmp.lt.s32.totalorder %s17, 1
        %s386 = scalar_select %p385, %s17, 1
        %s387 = smul.addr %s386, 8
        %s388 = scalar_lea.vmem %s6, %s387
        %p389 = scmp.lt.s32.totalorder %s17, 1
        %s390 = scalar_select %p389, %s17, 1
        %s391 = smul.addr %s390, 8
        %s392 = scalar_lea.vmem %s6, %s391
        %v394 = vld [vmem:[%s1] sm:$0xff]
        %v395 = vld [vmem:[%s1 + $0x8] sm:$0xff]
        %v396 = vld [vmem:[%s1 + $0x10] sm:$0xff]
        %v397 = vld [vmem:[%s1 + $0x18] sm:$0xff]
        %v398 = vld [vmem:[%s1 + $0x20] sm:$0xff]
        %v399 = vld [vmem:[%s1 + $0x28] sm:$0xff]
        %v400 = vld [vmem:[%s1 + $0x30] sm:$0xff]
        %v401 = vld [vmem:[%s1 + $0x38] sm:$0xff]
        %v402 = vld [vmem:[%s1 + $0x40] sm:$0xff]
        %v403 = vld [vmem:[%s1 + $0x48] sm:$0xff]
        %v404 = vld [vmem:[%s1 + $0x50] sm:$0xff]
        %v405 = vld [vmem:[%s1 + $0x58] sm:$0xff]
        %v406 = vld [vmem:[%s1 + $0x60] sm:$0xff]
        %v407 = vld [vmem:[%s1 + $0x68] sm:$0xff]
        %v408 = vld [vmem:[%s1 + $0x70] sm:$0xff]
        %v409 = vld [vmem:[%s1 + $0x78] sm:$0xff]
        %v410 = vld [vmem:[%s1 + $0x80] sm:$0xff]
        %v411 = vld [vmem:[%s1 + $0x88] sm:$0xff]
        %v412 = vld [vmem:[%s1 + $0x90] sm:$0xff]
        %v413 = vld [vmem:[%s1 + $0x98] sm:$0xff]
        %v414 = vld [vmem:[%s1 + $0xa0] sm:$0xff]
        %v415 = vld [vmem:[%s1 + $0xa8] sm:$0xff]
        %v416 = vld [vmem:[%s1 + $0xb0] sm:$0xff]
        %v417 = vld [vmem:[%s1 + $0xb8] sm:$0xff]
        %v418 = vld [vmem:[%s1 + $0xc0] sm:$0xff]
        %v419 = vld [vmem:[%s1 + $0xc8] sm:$0xff]
        %v420 = vld [vmem:[%s1 + $0xd0] sm:$0xff]
        %v421 = vld [vmem:[%s1 + $0xd8] sm:$0xff]
        %v422 = vld [vmem:[%s1 + $0xe0] sm:$0xff]
        %v423 = vld [vmem:[%s1 + $0xe8] sm:$0xff]
        %v424 = vld [vmem:[%s1 + $0xf0] sm:$0xff]
        %v425 = vld [vmem:[%s1 + $0xf8] sm:$0xff]
        %v426 = vld [vmem:[%s1 + $0x100] sm:$0xff]
        %v427 = vld [vmem:[%s1 + $0x108] sm:$0xff]
        %v428 = vld [vmem:[%s1 + $0x110] sm:$0xff]
        %v429 = vld [vmem:[%s1 + $0x118] sm:$0xff]
        %v430 = vld [vmem:[%s1 + $0x120] sm:$0xff]
        %v431 = vld [vmem:[%s1 + $0x128] sm:$0xff]
        %v432 = vld [vmem:[%s1 + $0x130] sm:$0xff]
        %v433 = vld [vmem:[%s1 + $0x138] sm:$0xff]
        %v434 = vld [vmem:[%s2] sm:$0xff]
        %v435 = vld [vmem:[%s2 + $0x8] sm:$0xff]
        %v436 = vld [vmem:[%s2 + $0x10] sm:$0xff]
        %v437 = vld [vmem:[%s2 + $0x18] sm:$0xff]
        %v438 = vld [vmem:[%s2 + $0x20] sm:$0xff]
        %v439 = vld [vmem:[%s2 + $0x28] sm:$0xff]
        %v440 = vld [vmem:[%s2 + $0x30] sm:$0xff]
        %v441 = vld [vmem:[%s2 + $0x38] sm:$0xff]
        %v442 = vld [vmem:[%s2 + $0x40] sm:$0xff]
        %v443 = vld [vmem:[%s2 + $0x48] sm:$0xff]
        %v444 = vld [vmem:[%s2 + $0x50] sm:$0xff]
        %v445 = vld [vmem:[%s2 + $0x58] sm:$0xff]
        %v446 = vld [vmem:[%s2 + $0x60] sm:$0xff]
        %v447 = vld [vmem:[%s2 + $0x68] sm:$0xff]
        %v448 = vld [vmem:[%s2 + $0x70] sm:$0xff]
        %v449 = vld [vmem:[%s2 + $0x78] sm:$0xff]
        %v450 = vld [vmem:[%s2 + $0x80] sm:$0xff]
        %v451 = vld [vmem:[%s2 + $0x88] sm:$0xff]
        %v452 = vld [vmem:[%s2 + $0x90] sm:$0xff]
        %v453 = vld [vmem:[%s2 + $0x98] sm:$0xff]
        %v454 = vld [vmem:[%s2 + $0xa0] sm:$0xff]
        %v455 = vld [vmem:[%s2 + $0xa8] sm:$0xff]
        %v456 = vld [vmem:[%s2 + $0xb0] sm:$0xff]
        %v457 = vld [vmem:[%s2 + $0xb8] sm:$0xff]
        %v458 = vld [vmem:[%s2 + $0xc0] sm:$0xff]
        %v459 = vld [vmem:[%s2 + $0xc8] sm:$0xff]
        %v460 = vld [vmem:[%s2 + $0xd0] sm:$0xff]
        %v461 = vld [vmem:[%s2 + $0xd8] sm:$0xff]
        %v462 = vld [vmem:[%s2 + $0xe0] sm:$0xff]
        %v463 = vld [vmem:[%s2 + $0xe8] sm:$0xff]
        %v464 = vld [vmem:[%s2 + $0xf0] sm:$0xff]
        %v465 = vld [vmem:[%s2 + $0xf8] sm:$0xff]
        %v466 = vld [vmem:[%s2 + $0x100] sm:$0xff]
        %v467 = vld [vmem:[%s2 + $0x108] sm:$0xff]
        %v468 = vld [vmem:[%s2 + $0x110] sm:$0xff]
        %v469 = vld [vmem:[%s2 + $0x118] sm:$0xff]
        %v470 = vld [vmem:[%s2 + $0x120] sm:$0xff]
        %v471 = vld [vmem:[%s2 + $0x128] sm:$0xff]
        %v472 = vld [vmem:[%s2 + $0x130] sm:$0xff]
        %v473 = vld [vmem:[%s2 + $0x138] sm:$0xff]
        %v474 = vld [vmem:[%s3] sm:$0xf]
        %v475 = vld [vmem:[%s363] sm:$0xff]
        %s476 = scalar_lea.vmem %s363, 112 [#allocation2]
        %v477 = vld [vmem:[%s476] sm:$0xff]
        %v479 = vunpack.c.l.b16 %v475
        %v480 = vunpack.c.h.b16 %v475
        %v481 = vpack.c.b16 %v479, %v479
        %v482 = vpack.c.b16 %v480, %v480
        %v524 = vunpack.c.l.b16 %v394
        %v525 = vunpack.c.h.b16 %v394
        %v526 = vunpack.c.l.b16 %v395
        %v527 = vunpack.c.h.b16 %v395
        %v528 = vunpack.c.l.b16 %v396
        %v529 = vunpack.c.h.b16 %v396
        %v530 = vunpack.c.l.b16 %v397
        %v531 = vunpack.c.h.b16 %v397
        %v532 = vunpack.c.l.b16 %v398
        %v533 = vunpack.c.h.b16 %v398
        %v534 = vunpack.c.l.b16 %v399
        %v535 = vunpack.c.h.b16 %v399
        %v536 = vunpack.c.l.b16 %v400
        %v537 = vunpack.c.h.b16 %v400
        %v538 = vunpack.c.l.b16 %v401
        %v539 = vunpack.c.h.b16 %v401
        %v540 = vunpack.c.l.b16 %v402
        %v541 = vunpack.c.h.b16 %v402
        %v542 = vunpack.c.l.b16 %v403
        %v543 = vunpack.c.h.b16 %v403
        %v544 = vunpack.c.l.b16 %v404
        %v545 = vunpack.c.h.b16 %v404
        %v546 = vunpack.c.l.b16 %v405
        %v547 = vunpack.c.h.b16 %v405
        %v548 = vunpack.c.l.b16 %v406
        %v549 = vunpack.c.h.b16 %v406
        %v550 = vunpack.c.l.b16 %v407
        %v551 = vunpack.c.h.b16 %v407
        %v552 = vunpack.c.l.b16 %v408
        %v553 = vunpack.c.h.b16 %v408
        %v554 = vunpack.c.l.b16 %v409
        %v555 = vunpack.c.h.b16 %v409
        %v556 = vunpack.c.l.b16 %v410
        %v557 = vunpack.c.h.b16 %v410
        %v558 = vunpack.c.l.b16 %v411
        %v559 = vunpack.c.h.b16 %v411
        %v560 = vunpack.c.l.b16 %v412
        %v561 = vunpack.c.h.b16 %v412
        %v562 = vunpack.c.l.b16 %v413
        %v563 = vunpack.c.h.b16 %v413
        %v564 = vunpack.c.l.b16 %v414
        %v565 = vunpack.c.h.b16 %v414
        %v566 = vunpack.c.l.b16 %v415
        %v567 = vunpack.c.h.b16 %v415
        %v568 = vunpack.c.l.b16 %v416
        %v569 = vunpack.c.h.b16 %v416
        %v570 = vunpack.c.l.b16 %v417
        %v571 = vunpack.c.h.b16 %v417
        %v572 = vunpack.c.l.b16 %v418
        %v573 = vunpack.c.h.b16 %v418
        %v574 = vunpack.c.l.b16 %v419
        %v575 = vunpack.c.h.b16 %v419
        %v576 = vunpack.c.l.b16 %v420
        %v577 = vunpack.c.h.b16 %v420
        %v578 = vunpack.c.l.b16 %v421
        %v579 = vunpack.c.h.b16 %v421
        %v580 = vunpack.c.l.b16 %v422
        %v581 = vunpack.c.h.b16 %v422
        %v582 = vunpack.c.l.b16 %v423
        %v583 = vunpack.c.h.b16 %v423
        %v584 = vunpack.c.l.b16 %v424
        %v585 = vunpack.c.h.b16 %v424
        %v586 = vunpack.c.l.b16 %v425
        %v587 = vunpack.c.h.b16 %v425
        %v588 = vunpack.c.l.b16 %v426
        %v589 = vunpack.c.h.b16 %v426
        %v590 = vunpack.c.l.b16 %v427
        %v591 = vunpack.c.h.b16 %v427
        %v592 = vunpack.c.l.b16 %v428
        %v593 = vunpack.c.h.b16 %v428
        %v594 = vunpack.c.l.b16 %v429
        %v595 = vunpack.c.h.b16 %v429
        %v596 = vunpack.c.l.b16 %v430
        %v597 = vunpack.c.h.b16 %v430
        %v598 = vunpack.c.l.b16 %v431
        %v599 = vunpack.c.h.b16 %v431
        %v600 = vunpack.c.l.b16 %v432
        %v601 = vunpack.c.h.b16 %v432
        %v602 = vunpack.c.l.b16 %v433
        %v603 = vunpack.c.h.b16 %v433
        %v604 = vpack.c.b16 %v528, %v524
        %v605 = vpack.c.b16 %v529, %v525
        %v606 = vpack.c.b16 %v530, %v526
        %v607 = vpack.c.b16 %v531, %v527
        %v608 = vpack.c.b16 %v536, %v532
        %v609 = vpack.c.b16 %v537, %v533
        %v610 = vpack.c.b16 %v538, %v534
        %v611 = vpack.c.b16 %v539, %v535
        %v612 = vpack.c.b16 %v544, %v540
        %v613 = vpack.c.b16 %v545, %v541
        %v614 = vpack.c.b16 %v546, %v542
        %v615 = vpack.c.b16 %v547, %v543
        %v616 = vpack.c.b16 %v552, %v548
        %v617 = vpack.c.b16 %v553, %v549
        %v618 = vpack.c.b16 %v554, %v550
        %v619 = vpack.c.b16 %v555, %v551
        %v620 = vpack.c.b16 %v560, %v556
        %v621 = vpack.c.b16 %v561, %v557
        %v622 = vpack.c.b16 %v562, %v558
        %v623 = vpack.c.b16 %v563, %v559
        %v624 = vpack.c.b16 %v568, %v564
        %v625 = vpack.c.b16 %v569, %v565
        %v626 = vpack.c.b16 %v570, %v566
        %v627 = vpack.c.b16 %v571, %v567
        %v628 = vpack.c.b16 %v576, %v572
        %v629 = vpack.c.b16 %v577, %v573
        %v630 = vpack.c.b16 %v578, %v574
        %v631 = vpack.c.b16 %v579, %v575
        %v632 = vpack.c.b16 %v584, %v580
        %v633 = vpack.c.b16 %v585, %v581
        %v634 = vpack.c.b16 %v586, %v582
        %v635 = vpack.c.b16 %v587, %v583
        %v636 = vpack.c.b16 %v592, %v588
        %v637 = vpack.c.b16 %v593, %v589
        %v638 = vpack.c.b16 %v594, %v590
        %v639 = vpack.c.b16 %v595, %v591
        %v640 = vpack.c.b16 %v600, %v596
        %v641 = vpack.c.b16 %v601, %v597
        %v642 = vpack.c.b16 %v602, %v598
        %v643 = vpack.c.b16 %v603, %v599
        %vm684 = vcmask 261120
        %v686 = vsel %vm684, %v482, 0
        %688 = vmatprep.subr.bf16.mxu0 %v605
        %689 = vmatpush1.bf16.msra.mxu0 %v604
        %690 = vmatprep.subr.bf16.mxu0 %v609
        %691 = vmatpush1.bf16.msra.mxu0 %v608
        %692 = vmatprep.subr.bf16.mxu0 %v613
        %693 = vmatpush1.bf16.msra.mxu0 %v612
        %694 = vmatprep.subr.bf16.mxu0 %v617
        %695 = vmatpush1.bf16.msra.mxu0 %v616
        %696 = vmatprep.subr.bf16.mxu0 %v621
        %697 = vmatpush1.bf16.msra.mxu0 %v620
        %698 = vmatprep.subr.bf16.mxu0 %v625
        %699 = vmatpush1.bf16.msra.mxu0 %v624
        %700 = vmatprep.subr.bf16.mxu0 %v629
        %701 = vmatpush1.bf16.msra.mxu0 %v628
        %702 = vmatprep.subr.bf16.mxu0 %v633
        %703 = vmatpush1.bf16.msra.mxu0 %v632
        %704 = vmatprep.subr.bf16.mxu0 %v637
        %705 = vmatpush1.bf16.msra.mxu0 %v636
        %706 = vmatprep.subr.bf16.mxu0 %v641
        %707 = vmatpush1.bf16.msra.mxu0 %v640
        %708 = vmatprep.subr.bf16.mxu0 0
        %709 = vmatpush1.bf16.msra.mxu0 0
        %710 = vmatprep.subr.bf16.mxu0 0
        %711 = vmatpush1.bf16.msra.mxu0 0
        %712 = vmatprep.subr.bf16.mxu0 0
        %713 = vmatpush1.bf16.msra.mxu0 0
        %714 = vmatprep.subr.bf16.mxu0 0
        %715 = vmatpush1.bf16.msra.mxu0 0
        %716 = vmatprep.subr.bf16.mxu0 0
        %717 = vmatpush1.bf16.msra.mxu0 0
        %718 = vmatprep.subr.bf16.mxu0 0
        %719 = vmatpush1.bf16.msra.mxu0 0
        %720 = vmatprep.mubr.bf16.mxu0 %v686
        %721 = vmatmul.mubr.bf16.gmra.mrb[0].mxu0 %v481
        %v722 = vpop.f32.mrb[0].mxu0
        %v723 = vadd.f32 0.0, %v722
        %v724 = vpop.f32.mrb[0].mxu0
        %v725 = vadd.f32 0.0, %v724
        %v726 = vpop.f32.mrb[0].mxu0
        %v727 = vpop.f32.mrb[0].mxu0
        %728 = vdwg.mxu0
        %729 = vmatprep.subr.bf16.mxu0 %v607
        %730 = vmatpush1.bf16.msra.mxu0 %v606
        %731 = vmatprep.subr.bf16.mxu0 %v611
        %732 = vmatpush1.bf16.msra.mxu0 %v610
        %733 = vmatprep.subr.bf16.mxu0 %v615
        %734 = vmatpush1.bf16.msra.mxu0 %v614
        %735 = vmatprep.subr.bf16.mxu0 %v619
        %736 = vmatpush1.bf16.msra.mxu0 %v618
        %737 = vmatprep.subr.bf16.mxu0 %v623
        %738 = vmatpush1.bf16.msra.mxu0 %v622
        %739 = vmatprep.subr.bf16.mxu0 %v627
        %740 = vmatpush1.bf16.msra.mxu0 %v626
        %741 = vmatprep.subr.bf16.mxu0 %v631
        %742 = vmatpush1.bf16.msra.mxu0 %v630
        %743 = vmatprep.subr.bf16.mxu0 %v635
        %744 = vmatpush1.bf16.msra.mxu0 %v634
        %745 = vmatprep.subr.bf16.mxu0 %v639
        %746 = vmatpush1.bf16.msra.mxu0 %v638
        %747 = vmatprep.subr.bf16.mxu0 %v643
        %748 = vmatpush1.bf16.msra.mxu0 %v642
        %749 = vmatprep.subr.bf16.mxu0 0
        %750 = vmatpush1.bf16.msra.mxu0 0
        %751 = vmatprep.subr.bf16.mxu0 0
        %752 = vmatpush1.bf16.msra.mxu0 0
        %753 = vmatprep.subr.bf16.mxu0 0
        %754 = vmatpush1.bf16.msra.mxu0 0
        %755 = vmatprep.subr.bf16.mxu0 0
        %756 = vmatpush1.bf16.msra.mxu0 0
        %757 = vmatprep.subr.bf16.mxu0 0
        %758 = vmatpush1.bf16.msra.mxu0 0
        %759 = vmatprep.subr.bf16.mxu0 0
        %760 = vmatpush1.bf16.msra.mxu0 0
        %761 = vmatprep.mubr.bf16.mxu0 %v686
        %762 = vmatmul.mubr.bf16.gmra.mrb[0].mxu0 %v481
        %v763 = vpop.f32.mrb[0].mxu0
        %v764 = vadd.f32 0.0, %v763
        %v765 = vpop.f32.mrb[0].mxu0
        %v766 = vadd.f32 0.0, %v765
        %v767 = vpop.f32.mrb[0].mxu0
        %v768 = vpop.f32.mrb[0].mxu0
        %769 = vdwg.mxu0
        %v810 = vunpack.c.l.b16 %v434
        %v811 = vunpack.c.h.b16 %v434
        %v812 = vunpack.c.l.b16 %v435
        %v813 = vunpack.c.h.b16 %v435
        %v814 = vunpack.c.l.b16 %v436
        %v815 = vunpack.c.h.b16 %v436
        %v816 = vunpack.c.l.b16 %v437
        %v817 = vunpack.c.h.b16 %v437
        %v818 = vunpack.c.l.b16 %v438
        %v819 = vunpack.c.h.b16 %v438
        %v820 = vunpack.c.l.b16 %v439
        %v821 = vunpack.c.h.b16 %v439
        %v822 = vunpack.c.l.b16 %v440
        %v823 = vunpack.c.h.b16 %v440
        %v824 = vunpack.c.l.b16 %v441
        %v825 = vunpack.c.h.b16 %v441
        %v826 = vunpack.c.l.b16 %v442
        %v827 = vunpack.c.h.b16 %v442
        %v828 = vunpack.c.l.b16 %v443
        %v829 = vunpack.c.h.b16 %v443
        %v830 = vunpack.c.l.b16 %v444
        %v831 = vunpack.c.h.b16 %v444
        %v832 = vunpack.c.l.b16 %v445
        %v833 = vunpack.c.h.b16 %v445
        %v834 = vunpack.c.l.b16 %v446
        %v835 = vunpack.c.h.b16 %v446
        %v836 = vunpack.c.l.b16 %v447
        %v837 = vunpack.c.h.b16 %v447
        %v838 = vunpack.c.l.b16 %v448
        %v839 = vunpack.c.h.b16 %v448
        %v840 = vunpack.c.l.b16 %v449
        %v841 = vunpack.c.h.b16 %v449
        %v842 = vunpack.c.l.b16 %v450
        %v843 = vunpack.c.h.b16 %v450
        %v844 = vunpack.c.l.b16 %v451
        %v845 = vunpack.c.h.b16 %v451
        %v846 = vunpack.c.l.b16 %v452
        %v847 = vunpack.c.h.b16 %v452
        %v848 = vunpack.c.l.b16 %v453
        %v849 = vunpack.c.h.b16 %v453
        %v850 = vunpack.c.l.b16 %v454
        %v851 = vunpack.c.h.b16 %v454
        %v852 = vunpack.c.l.b16 %v455
        %v853 = vunpack.c.h.b16 %v455
        %v854 = vunpack.c.l.b16 %v456
        %v855 = vunpack.c.h.b16 %v456
        %v856 = vunpack.c.l.b16 %v457
        %v857 = vunpack.c.h.b16 %v457
        %v858 = vunpack.c.l.b16 %v458
        %v859 = vunpack.c.h.b16 %v458
        %v860 = vunpack.c.l.b16 %v459
        %v861 = vunpack.c.h.b16 %v459
        %v862 = vunpack.c.l.b16 %v460
        %v863 = vunpack.c.h.b16 %v460
        %v864 = vunpack.c.l.b16 %v461
        %v865 = vunpack.c.h.b16 %v461
        %v866 = vunpack.c.l.b16 %v462
        %v867 = vunpack.c.h.b16 %v462
        %v868 = vunpack.c.l.b16 %v463
        %v869 = vunpack.c.h.b16 %v463
        %v870 = vunpack.c.l.b16 %v464
        %v871 = vunpack.c.h.b16 %v464
        %v872 = vunpack.c.l.b16 %v465
        %v873 = vunpack.c.h.b16 %v465
        %v874 = vunpack.c.l.b16 %v466
        %v875 = vunpack.c.h.b16 %v466
        %v876 = vunpack.c.l.b16 %v467
        %v877 = vunpack.c.h.b16 %v467
        %v878 = vunpack.c.l.b16 %v468
        %v879 = vunpack.c.h.b16 %v468
        %v880 = vunpack.c.l.b16 %v469
        %v881 = vunpack.c.h.b16 %v469
        %v882 = vunpack.c.l.b16 %v470
        %v883 = vunpack.c.h.b16 %v470
        %v884 = vunpack.c.l.b16 %v471
        %v885 = vunpack.c.h.b16 %v471
        %v886 = vunpack.c.l.b16 %v472
        %v887 = vunpack.c.h.b16 %v472
        %v888 = vunpack.c.l.b16 %v473
        %v889 = vunpack.c.h.b16 %v473
        %v890 = vpack.c.b16 %v814, %v810
        %v891 = vpack.c.b16 %v815, %v811
        %v892 = vpack.c.b16 %v816, %v812
        %v893 = vpack.c.b16 %v817, %v813
        %v894 = vpack.c.b16 %v822, %v818
        %v895 = vpack.c.b16 %v823, %v819
        %v896 = vpack.c.b16 %v824, %v820
        %v897 = vpack.c.b16 %v825, %v821
        %v898 = vpack.c.b16 %v830, %v826
        %v899 = vpack.c.b16 %v831, %v827
        %v900 = vpack.c.b16 %v832, %v828
        %v901 = vpack.c.b16 %v833, %v829
        %v902 = vpack.c.b16 %v838, %v834
        %v903 = vpack.c.b16 %v839, %v835
        %v904 = vpack.c.b16 %v840, %v836
        %v905 = vpack.c.b16 %v841, %v837
        %v906 = vpack.c.b16 %v846, %v842
        %v907 = vpack.c.b16 %v847, %v843
        %v908 = vpack.c.b16 %v848, %v844
        %v909 = vpack.c.b16 %v849, %v845
        %v910 = vpack.c.b16 %v854, %v850
        %v911 = vpack.c.b16 %v855, %v851
        %v912 = vpack.c.b16 %v856, %v852
        %v913 = vpack.c.b16 %v857, %v853
        %v914 = vpack.c.b16 %v862, %v858
        %v915 = vpack.c.b16 %v863, %v859
        %v916 = vpack.c.b16 %v864, %v860
        %v917 = vpack.c.b16 %v865, %v861
        %v918 = vpack.c.b16 %v870, %v866
        %v919 = vpack.c.b16 %v871, %v867
        %v920 = vpack.c.b16 %v872, %v868
        %v921 = vpack.c.b16 %v873, %v869
        %v922 = vpack.c.b16 %v878, %v874
        %v923 = vpack.c.b16 %v879, %v875
        %v924 = vpack.c.b16 %v880, %v876
        %v925 = vpack.c.b16 %v881, %v877
        %v926 = vpack.c.b16 %v886, %v882
        %v927 = vpack.c.b16 %v887, %v883
        %v928 = vpack.c.b16 %v888, %v884
        %v929 = vpack.c.b16 %v889, %v885
        %970 = vmatprep.subr.bf16.mxu0 %v891
        %971 = vmatpush1.bf16.msra.mxu0 %v890
        %972 = vmatprep.subr.bf16.mxu0 %v895
        %973 = vmatpush1.bf16.msra.mxu0 %v894
        %974 = vmatprep.subr.bf16.mxu0 %v899
        %975 = vmatpush1.bf16.msra.mxu0 %v898
        %976 = vmatprep.subr.bf16.mxu0 %v903
        %977 = vmatpush1.bf16.msra.mxu0 %v902
        %978 = vmatprep.subr.bf16.mxu0 %v907
        %979 = vmatpush1.bf16.msra.mxu0 %v906
        %980 = vmatprep.subr.bf16.mxu0 %v911
        %981 = vmatpush1.bf16.msra.mxu0 %v910
        %982 = vmatprep.subr.bf16.mxu0 %v915
        %983 = vmatpush1.bf16.msra.mxu0 %v914
        %984 = vmatprep.subr.bf16.mxu0 %v919
        %985 = vmatpush1.bf16.msra.mxu0 %v918
        %986 = vmatprep.subr.bf16.mxu0 %v923
        %987 = vmatpush1.bf16.msra.mxu0 %v922
        %988 = vmatprep.subr.bf16.mxu0 %v927
        %989 = vmatpush1.bf16.msra.mxu0 %v926
        %990 = vmatprep.subr.bf16.mxu0 0
        %991 = vmatpush1.bf16.msra.mxu0 0
        %992 = vmatprep.subr.bf16.mxu0 0
        %993 = vmatpush1.bf16.msra.mxu0 0
        %994 = vmatprep.subr.bf16.mxu0 0
        %995 = vmatpush1.bf16.msra.mxu0 0
        %996 = vmatprep.subr.bf16.mxu0 0
        %997 = vmatpush1.bf16.msra.mxu0 0
        %998 = vmatprep.subr.bf16.mxu0 0
        %999 = vmatpush1.bf16.msra.mxu0 0
        %1000 = vmatprep.subr.bf16.mxu0 0
        %1001 = vmatpush1.bf16.msra.mxu0 0
        %1002 = vmatprep.mubr.bf16.mxu0 %v686
        %1003 = vmatmul.mubr.bf16.gmra.mrb[0].mxu0 %v481
        %v1004 = vpop.f32.mrb[0].mxu0
        %v1005 = vadd.f32 0.0, %v1004
        %v1006 = vpop.f32.mrb[0].mxu0
        %v1007 = vadd.f32 0.0, %v1006
        %v1008 = vpop.f32.mrb[0].mxu0
        %v1009 = vpop.f32.mrb[0].mxu0
        %1010 = vdwg.mxu0
        %1011 = vmatprep.subr.bf16.mxu0 %v893
        %1012 = vmatpush1.bf16.msra.mxu0 %v892
        %1013 = vmatprep.subr.bf16.mxu0 %v897
        %1014 = vmatpush1.bf16.msra.mxu0 %v896
        %1015 = vmatprep.subr.bf16.mxu0 %v901
        %1016 = vmatpush1.bf16.msra.mxu0 %v900
        %1017 = vmatprep.subr.bf16.mxu0 %v905
        %1018 = vmatpush1.bf16.msra.mxu0 %v904
        %1019 = vmatprep.subr.bf16.mxu0 %v909
        %1020 = vmatpush1.bf16.msra.mxu0 %v908
        %1021 = vmatprep.subr.bf16.mxu0 %v913
        %1022 = vmatpush1.bf16.msra.mxu0 %v912
        %1023 = vmatprep.subr.bf16.mxu0 %v917
        %1024 = vmatpush1.bf16.msra.mxu0 %v916
        %1025 = vmatprep.subr.bf16.mxu0 %v921
        %1026 = vmatpush1.bf16.msra.mxu0 %v920
        %1027 = vmatprep.subr.bf16.mxu0 %v925
        %1028 = vmatpush1.bf16.msra.mxu0 %v924
        %1029 = vmatprep.subr.bf16.mxu0 %v929
        %1030 = vmatpush1.bf16.msra.mxu0 %v928
        %1031 = vmatprep.subr.bf16.mxu0 0
        %1032 = vmatpush1.bf16.msra.mxu0 0
        %1033 = vmatprep.subr.bf16.mxu0 0
        %1034 = vmatpush1.bf16.msra.mxu0 0
        %1035 = vmatprep.subr.bf16.mxu0 0
        %1036 = vmatpush1.bf16.msra.mxu0 0
        %1037 = vmatprep.subr.bf16.mxu0 0
        %1038 = vmatpush1.bf16.msra.mxu0 0
        %1039 = vmatprep.subr.bf16.mxu0 0
        %1040 = vmatpush1.bf16.msra.mxu0 0
        %1041 = vmatprep.subr.bf16.mxu0 0
        %1042 = vmatpush1.bf16.msra.mxu0 0
        %1043 = vmatprep.mubr.bf16.mxu0 %v686
        %1044 = vmatmul.mubr.bf16.gmra.mrb[0].mxu0 %v481
        %v1045 = vpop.f32.mrb[0].mxu0
        %v1046 = vadd.f32 0.0, %v1045
        %v1047 = vpop.f32.mrb[0].mxu0
        %v1048 = vadd.f32 0.0, %v1047
        %v1049 = vpop.f32.mrb[0].mxu0
        %v1050 = vpop.f32.mrb[0].mxu0
        %1051 = vdwg.mxu0
        %v1052 = vmax.f32 %v723, %v1005
        %v1053 = vmax.f32 %v725, %v1007
        %v1054 = vmax.f32 %v764, %v1046
        %v1055 = vmax.f32 %v766, %v1048
        %v1057 = vunpack.c.l.b16 %v477
        %v1058 = vunpack.c.h.b16 %v477
        %v1059 = vpack.c.b16 %v1057, %v1057
        %v1060 = vpack.c.b16 %v1058, %v1058
        %v1063 = vsel %vm684, %v1060, 0
        %1065 = vmatprep.subr.bf16.mxu0 %v605
        %1066 = vmatpush1.bf16.msra.mxu0 %v604
        %1067 = vmatprep.subr.bf16.mxu0 %v609
        %1068 = vmatpush1.bf16.msra.mxu0 %v608
        %1069 = vmatprep.subr.bf16.mxu0 %v613
        %1070 = vmatpush1.bf16.msra.mxu0 %v612
        %1071 = vmatprep.subr.bf16.mxu0 %v617
        %1072 = vmatpush1.bf16.msra.mxu0 %v616
        %1073 = vmatprep.subr.bf16.mxu0 %v621
        %1074 = vmatpush1.bf16.msra.mxu0 %v620
        %1075 = vmatprep.subr.bf16.mxu0 %v625
        %1076 = vmatpush1.bf16.msra.mxu0 %v624
        %1077 = vmatprep.subr.bf16.mxu0 %v629
        %1078 = vmatpush1.bf16.msra.mxu0 %v628
        %1079 = vmatprep.subr.bf16.mxu0 %v633
        %1080 = vmatpush1.bf16.msra.mxu0 %v632
        %1081 = vmatprep.subr.bf16.mxu0 %v637
        %1082 = vmatpush1.bf16.msra.mxu0 %v636
        %1083 = vmatprep.subr.bf16.mxu0 %v641
        %1084 = vmatpush1.bf16.msra.mxu0 %v640
        %1085 = vmatprep.subr.bf16.mxu0 0
        %1086 = vmatpush1.bf16.msra.mxu0 0
        %1087 = vmatprep.subr.bf16.mxu0 0
        %1088 = vmatpush1.bf16.msra.mxu0 0
        %1089 = vmatprep.subr.bf16.mxu0 0
        %1090 = vmatpush1.bf16.msra.mxu0 0
        %1091 = vmatprep.subr.bf16.mxu0 0
        %1092 = vmatpush1.bf16.msra.mxu0 0
        %1093 = vmatprep.subr.bf16.mxu0 0
        %1094 = vmatpush1.bf16.msra.mxu0 0
        %1095 = vmatprep.subr.bf16.mxu0 0
        %1096 = vmatpush1.bf16.msra.mxu0 0
        %1097 = vmatprep.mubr.bf16.mxu0 %v1063
        %1098 = vmatmul.mubr.bf16.gmra.mrb[0].mxu0 %v1059
        %v1099 = vpop.f32.mrb[0].mxu0
        %v1100 = vadd.f32 0.0, %v1099
        %v1101 = vpop.f32.mrb[0].mxu0
        %v1102 = vadd.f32 0.0, %v1101
        %v1103 = vpop.f32.mrb[0].mxu0
        %v1104 = vpop.f32.mrb[0].mxu0
        %1105 = vdwg.mxu0
        %1106 = vmatprep.subr.bf16.mxu0 %v607
        %1107 = vmatpush1.bf16.msra.mxu0 %v606
        %1108 = vmatprep.subr.bf16.mxu0 %v611
        %1109 = vmatpush1.bf16.msra.mxu0 %v610
        %1110 = vmatprep.subr.bf16.mxu0 %v615
        %1111 = vmatpush1.bf16.msra.mxu0 %v614
        %1112 = vmatprep.subr.bf16.mxu0 %v619
        %1113 = vmatpush1.bf16.msra.mxu0 %v618
        %1114 = vmatprep.subr.bf16.mxu0 %v623
        %1115 = vmatpush1.bf16.msra.mxu0 %v622
        %1116 = vmatprep.subr.bf16.mxu0 %v627
        %1117 = vmatpush1.bf16.msra.mxu0 %v626
        %1118 = vmatprep.subr.bf16.mxu0 %v631
        %1119 = vmatpush1.bf16.msra.mxu0 %v630
        %1120 = vmatprep.subr.bf16.mxu0 %v635
        %1121 = vmatpush1.bf16.msra.mxu0 %v634
        %1122 = vmatprep.subr.bf16.mxu0 %v639
        %1123 = vmatpush1.bf16.msra.mxu0 %v638
        %1124 = vmatprep.subr.bf16.mxu0 %v643
        %1125 = vmatpush1.bf16.msra.mxu0 %v642
        %1126 = vmatprep.subr.bf16.mxu0 0
        %1127 = vmatpush1.bf16.msra.mxu0 0
        %1128 = vmatprep.subr.bf16.mxu0 0
        %1129 = vmatpush1.bf16.msra.mxu0 0
        %1130 = vmatprep.subr.bf16.mxu0 0
        %1131 = vmatpush1.bf16.msra.mxu0 0
        %1132 = vmatprep.subr.bf16.mxu0 0
        %1133 = vmatpush1.bf16.msra.mxu0 0
        %1134 = vmatprep.subr.bf16.mxu0 0
        %1135 = vmatpush1.bf16.msra.mxu0 0
        %1136 = vmatprep.subr.bf16.mxu0 0
        %1137 = vmatpush1.bf16.msra.mxu0 0
        %1138 = vmatprep.mubr.bf16.mxu0 %v1063
        %1139 = vmatmul.mubr.bf16.gmra.mrb[0].mxu0 %v1059
        %v1140 = vpop.f32.mrb[0].mxu0
        %v1141 = vadd.f32 0.0, %v1140
        %v1142 = vpop.f32.mrb[0].mxu0
        %v1143 = vadd.f32 0.0, %v1142
        %v1144 = vpop.f32.mrb[0].mxu0
        %v1145 = vpop.f32.mrb[0].mxu0
        %1146 = vdwg.mxu0
        %1147 = vmatprep.subr.bf16.mxu0 %v891
        %1148 = vmatpush1.bf16.msra.mxu0 %v890
        %1149 = vmatprep.subr.bf16.mxu0 %v895
        %1150 = vmatpush1.bf16.msra.mxu0 %v894
        %1151 = vmatprep.subr.bf16.mxu0 %v899
        %1152 = vmatpush1.bf16.msra.mxu0 %v898
        %1153 = vmatprep.subr.bf16.mxu0 %v903
        %1154 = vmatpush1.bf16.msra.mxu0 %v902
        %1155 = vmatprep.subr.bf16.mxu0 %v907
        %1156 = vmatpush1.bf16.msra.mxu0 %v906
        %1157 = vmatprep.subr.bf16.mxu0 %v911
        %1158 = vmatpush1.bf16.msra.mxu0 %v910
        %1159 = vmatprep.subr.bf16.mxu0 %v915
        %1160 = vmatpush1.bf16.msra.mxu0 %v914
        %1161 = vmatprep.subr.bf16.mxu0 %v919
        %1162 = vmatpush1.bf16.msra.mxu0 %v918
        %1163 = vmatprep.subr.bf16.mxu0 %v923
        %1164 = vmatpush1.bf16.msra.mxu0 %v922
        %1165 = vmatprep.subr.bf16.mxu0 %v927
        %1166 = vmatpush1.bf16.msra.mxu0 %v926
        %1167 = vmatprep.subr.bf16.mxu0 0
        %1168 = vmatpush1.bf16.msra.mxu0 0
        %1169 = vmatprep.subr.bf16.mxu0 0
        %1170 = vmatpush1.bf16.msra.mxu0 0
        %1171 = vmatprep.subr.bf16.mxu0 0
        %1172 = vmatpush1.bf16.msra.mxu0 0
        %1173 = vmatprep.subr.bf16.mxu0 0
        %1174 = vmatpush1.bf16.msra.mxu0 0
        %1175 = vmatprep.subr.bf16.mxu0 0
        %1176 = vmatpush1.bf16.msra.mxu0 0
        %1177 = vmatprep.subr.bf16.mxu0 0
        %1178 = vmatpush1.bf16.msra.mxu0 0
        %1179 = vmatprep.mubr.bf16.mxu0 %v1063
        %1180 = vmatmul.mubr.bf16.gmra.mrb[0].mxu0 %v1059
        %v1181 = vpop.f32.mrb[0].mxu0
        %v1182 = vadd.f32 0.0, %v1181
        %v1183 = vpop.f32.mrb[0].mxu0
        %v1184 = vadd.f32 0.0, %v1183
        %v1185 = vpop.f32.mrb[0].mxu0
        %v1186 = vpop.f32.mrb[0].mxu0
        %1187 = vdwg.mxu0
        %1188 = vmatprep.subr.bf16.mxu0 %v893
        %1189 = vmatpush1.bf16.msra.mxu0 %v892
        %1190 = vmatprep.subr.bf16.mxu0 %v897
        %1191 = vmatpush1.bf16.msra.mxu0 %v896
        %1192 = vmatprep.subr.bf16.mxu0 %v901
        %1193 = vmatpush1.bf16.msra.mxu0 %v900
        %1194 = vmatprep.subr.bf16.mxu0 %v905
        %1195 = vmatpush1.bf16.msra.mxu0 %v904
        %1196 = vmatprep.subr.bf16.mxu0 %v909
        %1197 = vmatpush1.bf16.msra.mxu0 %v908
        %1198 = vmatprep.subr.bf16.mxu0 %v913
        %1199 = vmatpush1.bf16.msra.mxu0 %v912
        %1200 = vmatprep.subr.bf16.mxu0 %v917
        %1201 = vmatpush1.bf16.msra.mxu0 %v916
        %1202 = vmatprep.subr.bf16.mxu0 %v921
        %1203 = vmatpush1.bf16.msra.mxu0 %v920
        %1204 = vmatprep.subr.bf16.mxu0 %v925
        %1205 = vmatpush1.bf16.msra.mxu0 %v924
        %1206 = vmatprep.subr.bf16.mxu0 %v929
        %1207 = vmatpush1.bf16.msra.mxu0 %v928
        %1208 = vmatprep.subr.bf16.mxu0 0
        %1209 = vmatpush1.bf16.msra.mxu0 0
        %1210 = vmatprep.subr.bf16.mxu0 0
        %1211 = vmatpush1.bf16.msra.mxu0 0
        %1212 = vmatprep.subr.bf16.mxu0 0
        %1213 = vmatpush1.bf16.msra.mxu0 0
        %1214 = vmatprep.subr.bf16.mxu0 0
        %1215 = vmatpush1.bf16.msra.mxu0 0
        %1216 = vmatprep.subr.bf16.mxu0 0
        %1217 = vmatpush1.bf16.msra.mxu0 0
        %1218 = vmatprep.subr.bf16.mxu0 0
        %1219 = vmatpush1.bf16.msra.mxu0 0
        %1220 = vmatprep.mubr.bf16.mxu0 %v1063
        %1221 = vmatmul.mubr.bf16.gmra.mrb[0].mxu0 %v1059
        %v1222 = vpop.f32.mrb[0].mxu0
        %v1223 = vadd.f32 0.0, %v1222
        %v1224 = vpop.f32.mrb[0].mxu0
        %v1225 = vadd.f32 0.0, %v1224
        %v1226 = vpop.f32.mrb[0].mxu0
        %v1227 = vpop.f32.mrb[0].mxu0
        %1228 = vdwg.mxu0
        %v1229 = vmax.f32 %v1100, %v1182
        %v1230 = vmax.f32 %v1102, %v1184
        %v1231 = vmax.f32 %v1141, %v1223
        %v1232 = vmax.f32 %v1143, %v1225
        %v1233 = vmax.f32 %v1052, %v1229
        %v1234 = vmax.f32 %v1053, %v1230
        %v1235 = vmax.f32 %v1054, %v1231
        %v1236 = vmax.f32 %v1055, %v1232
        %v1238 = vlaneseq
        %v1239 = vshrl.u32 %v1238, 7
        %v1240 = vsub.s32 0, %v1239
        %v1241 = vrot.slane %v474, %v1240
        %v1242 = vlaneseq
        %v1243 = vshrl.u32 %v1242, 7
        %v1244 = vsub.s32 1, %v1243
        %v1245 = vrot.slane %v474, %v1244
        %v1246 = vlaneseq
        %v1247 = vshrl.u32 %v1246, 7
        %v1248 = vsub.s32 2, %v1247
        %v1249 = vrot.slane %v474, %v1248
        %v1250 = vlaneseq
        %v1251 = vshrl.u32 %v1250, 7
        %v1252 = vsub.s32 3, %v1251
        %v1253 = vrot.slane %v474, %v1252
        %v1258 = vadd.f32 %v1233, %v1241
        %v1259 = vadd.f32 %v1234, %v1245
        %v1260 = vadd.f32 %v1235, %v1249
        %v1261 = vadd.f32 %v1236, %v1253
        %v1262 = vmax.f32 %v1258, 0.0
        %v1263 = vmax.f32 %v1259, 0.0
        %v1264 = vmax.f32 %v1260, 0.0
        %v1265 = vmax.f32 %v1261, 0.0
        %v1266 = vpack.c.bf16 %v1262, %v1262
        %v1267 = vpack.c.bf16 %v1263, %v1263
        %v1268 = vpack.c.bf16 %v1264, %v1264
        %v1269 = vpack.c.bf16 %v1265, %v1265
        %v1270 = vld [vmem:[%s4] sm:$0xf]
        %v1271 = vld [vmem:[%s4 + $0x4] sm:$0xf]
        %v1272 = vld [vmem:[%s4 + $0x8] sm:$0xf]
        %v1273 = vld [vmem:[%s4 + $0xc] sm:$0xf]
        %v1274 = vld [vmem:[%s4 + $0x10] sm:$0xf]
        %v1275 = vld [vmem:[%s4 + $0x14] sm:$0xf]
        %v1276 = vld [vmem:[%s4 + $0x18] sm:$0xf]
        %v1277 = vld [vmem:[%s4 + $0x1c] sm:$0xf]
        %v1278 = vld [vmem:[%s4 + $0x20] sm:$0xf]
        %v1279 = vld [vmem:[%s4 + $0x24] sm:$0xf]
        %v1280 = vld [vmem:[%s4 + $0x28] sm:$0xf]
        %v1281 = vld [vmem:[%s4 + $0x2c] sm:$0xf]
        %v1282 = vld [vmem:[%s4 + $0x30] sm:$0xf]
        %v1283 = vld [vmem:[%s4 + $0x34] sm:$0xf]
        %v1284 = vld [vmem:[%s4 + $0x38] sm:$0xf]
        %v1285 = vld [vmem:[%s4 + $0x3c] sm:$0xf]
        %v1286 = vld [vmem:[%s4 + $0x40] sm:$0xf]
        %v1287 = vld [vmem:[%s4 + $0x44] sm:$0xf]
        %v1288 = vld [vmem:[%s4 + $0x48] sm:$0xf]
        %v1289 = vld [vmem:[%s4 + $0x4c] sm:$0xf]
        %v1290 = vld [vmem:[%s4 + $0x50] sm:$0xf]
        %v1291 = vld [vmem:[%s4 + $0x54] sm:$0xf]
        %v1292 = vld [vmem:[%s4 + $0x58] sm:$0xf]
        %v1293 = vld [vmem:[%s4 + $0x5c] sm:$0xf]
        %v1294 = vld [vmem:[%s4 + $0x60] sm:$0xf]
        %v1295 = vld [vmem:[%s4 + $0x64] sm:$0xf]
        %v1296 = vld [vmem:[%s4 + $0x68] sm:$0xf]
        %v1297 = vld [vmem:[%s4 + $0x6c] sm:$0xf]
        %v1298 = vld [vmem:[%s4 + $0x70] sm:$0xf]
        %v1299 = vld [vmem:[%s4 + $0x74] sm:$0xf]
        %v1300 = vld [vmem:[%s4 + $0x78] sm:$0xf]
        %v1301 = vld [vmem:[%s4 + $0x7c] sm:$0xf]
        %v1302 = vld [vmem:[%s4 + $0x80] sm:$0xf]
        %v1303 = vld [vmem:[%s4 + $0x84] sm:$0xf]
        %v1304 = vld [vmem:[%s4 + $0x88] sm:$0xf]
        %v1305 = vld [vmem:[%s4 + $0x8c] sm:$0xf]
        %v1306 = vld [vmem:[%s4 + $0x90] sm:$0xf]
        %v1307 = vld [vmem:[%s4 + $0x94] sm:$0xf]
        %v1308 = vld [vmem:[%s4 + $0x98] sm:$0xf]
        %v1309 = vld [vmem:[%s4 + $0x9c] sm:$0xf]
        %v1310 = vld [vmem:[%s4 + $0xa0] sm:$0xf]
        %v1311 = vld [vmem:[%s4 + $0xa4] sm:$0xf]
        %v1312 = vld [vmem:[%s4 + $0xa8] sm:$0xf]
        %v1313 = vld [vmem:[%s4 + $0xac] sm:$0xf]
        %v1314 = vld [vmem:[%s4 + $0xb0] sm:$0xf]
        %v1315 = vld [vmem:[%s4 + $0xb4] sm:$0xf]
        %v1316 = vld [vmem:[%s4 + $0xb8] sm:$0xf]
        %v1317 = vld [vmem:[%s4 + $0xbc] sm:$0xf]
        %v1318 = vld [vmem:[%s4 + $0xc0] sm:$0xf]
        %v1319 = vld [vmem:[%s4 + $0xc4] sm:$0xf]
        %v1320 = vld [vmem:[%s4 + $0xc8] sm:$0xf]
        %v1321 = vld [vmem:[%s4 + $0xcc] sm:$0xf]
        %v1322 = vld [vmem:[%s4 + $0xd0] sm:$0xf]
        %v1323 = vld [vmem:[%s4 + $0xd4] sm:$0xf]
        %v1324 = vld [vmem:[%s4 + $0xd8] sm:$0xf]
        %v1325 = vld [vmem:[%s4 + $0xdc] sm:$0xf]
        %s1326 = scalar_lea.vmem %s363, 8 [#allocation2]
        %v1327 = vld [vmem:[%s1326] sm:$0xff]
        %s1328 = scalar_lea.vmem %s363, 120 [#allocation2]
        %v1329 = vld [vmem:[%s1328] sm:$0xff]
        %v1331 = vunpack.c.l.b16 %v1327
        %v1332 = vunpack.c.h.b16 %v1327
        %v1333 = vpack.c.b16 %v1331, %v1331
        %v1334 = vpack.c.b16 %v1332, %v1332
        %v1337 = vsel %vm684, %v1334, 0
        %1339 = vmatprep.subr.bf16.mxu0 %v605
        %1340 = vmatpush1.bf16.msra.mxu0 %v604
        %1341 = vmatprep.subr.bf16.mxu0 %v609
        %1342 = vmatpush1.bf16.msra.mxu0 %v608
        %1343 = vmatprep.subr.bf16.mxu0 %v613
        %1344 = vmatpush1.bf16.msra.mxu0 %v612
        %1345 = vmatprep.subr.bf16.mxu0 %v617
        %1346 = vmatpush1.bf16.msra.mxu0 %v616
        %1347 = vmatprep.subr.bf16.mxu0 %v621
        %1348 = vmatpush1.bf16.msra.mxu0 %v620
        %1349 = vmatprep.subr.bf16.mxu0 %v625
        %1350 = vmatpush1.bf16.msra.mxu0 %v624
        %1351 = vmatprep.subr.bf16.mxu0 %v629
        %1352 = vmatpush1.bf16.msra.mxu0 %v628
        %1353 = vmatprep.subr.bf16.mxu0 %v633
        %1354 = vmatpush1.bf16.msra.mxu0 %v632
        %1355 = vmatprep.subr.bf16.mxu0 %v637
        %1356 = vmatpush1.bf16.msra.mxu0 %v636
        %1357 = vmatprep.subr.bf16.mxu0 %v641
        %1358 = vmatpush1.bf16.msra.mxu0 %v640
        %1359 = vmatprep.subr.bf16.mxu0 0
        %1360 = vmatpush1.bf16.msra.mxu0 0
        %1361 = vmatprep.subr.bf16.mxu0 0
        %1362 = vmatpush1.bf16.msra.mxu0 0
        %1363 = vmatprep.subr.bf16.mxu0 0
        %1364 = vmatpush1.bf16.msra.mxu0 0
        %1365 = vmatprep.subr.bf16.mxu0 0
        %1366 = vmatpush1.bf16.msra.mxu0 0
        %1367 = vmatprep.subr.bf16.mxu0 0
        %1368 = vmatpush1.bf16.msra.mxu0 0
        %1369 = vmatprep.subr.bf16.mxu0 0
        %1370 = vmatpush1.bf16.msra.mxu0 0
        %1371 = vmatprep.mubr.bf16.mxu0 %v1337
        %1372 = vmatmul.mubr.bf16.gmra.mrb[0].mxu0 %v1333
        %v1373 = vpop.f32.mrb[0].mxu0
        %v1374 = vadd.f32 0.0, %v1373
        %v1375 = vpop.f32.mrb[0].mxu0
        %v1376 = vadd.f32 0.0, %v1375
        %v1377 = vpop.f32.mrb[0].mxu0
        %v1378 = vpop.f32.mrb[0].mxu0
        %1379 = vdwg.mxu0
        %1380 = vmatprep.subr.bf16.mxu0 %v607
        %1381 = vmatpush1.bf16.msra.mxu0 %v606
        %1382 = vmatprep.subr.bf16.mxu0 %v611
        %1383 = vmatpush1.bf16.msra.mxu0 %v610
        %1384 = vmatprep.subr.bf16.mxu0 %v615
        %1385 = vmatpush1.bf16.msra.mxu0 %v614
        %1386 = vmatprep.subr.bf16.mxu0 %v619
        %1387 = vmatpush1.bf16.msra.mxu0 %v618
        %1388 = vmatprep.subr.bf16.mxu0 %v623
        %1389 = vmatpush1.bf16.msra.mxu0 %v622
        %1390 = vmatprep.subr.bf16.mxu0 %v627
        %1391 = vmatpush1.bf16.msra.mxu0 %v626
        %1392 = vmatprep.subr.bf16.mxu0 %v631
        %1393 = vmatpush1.bf16.msra.mxu0 %v630
        %1394 = vmatprep.subr.bf16.mxu0 %v635
        %1395 = vmatpush1.bf16.msra.mxu0 %v634
        %1396 = vmatprep.subr.bf16.mxu0 %v639
        %1397 = vmatpush1.bf16.msra.mxu0 %v638
        %1398 = vmatprep.subr.bf16.mxu0 %v643
        %1399 = vmatpush1.bf16.msra.mxu0 %v642
        %1400 = vmatprep.subr.bf16.mxu0 0
        %1401 = vmatpush1.bf16.msra.mxu0 0
        %1402 = vmatprep.subr.bf16.mxu0 0
        %1403 = vmatpush1.bf16.msra.mxu0 0
        %1404 = vmatprep.subr.bf16.mxu0 0
        %1405 = vmatpush1.bf16.msra.mxu0 0
        %1406 = vmatprep.subr.bf16.mxu0 0
        %1407 = vmatpush1.bf16.msra.mxu0 0
        %1408 = vmatprep.subr.bf16.mxu0 0
        %1409 = vmatpush1.bf16.msra.mxu0 0
        %1410 = vmatprep.subr.bf16.mxu0 0
        %1411 = vmatpush1.bf16.msra.mxu0 0
        %1412 = vmatprep.mubr.bf16.mxu0 %v1337
        %1413 = vmatmul.mubr.bf16.gmra.mrb[0].mxu0 %v1333
        %v1414 = vpop.f32.mrb[0].mxu0
        %v1415 = vadd.f32 0.0, %v1414
        %v1416 = vpop.f32.mrb[0].mxu0
        %v1417 = vadd.f32 0.0, %v1416
        %v1418 = vpop.f32.mrb[0].mxu0
        %v1419 = vpop.f32.mrb[0].mxu0
        %1420 = vdwg.mxu0
        %1421 = vmatprep.subr.bf16.mxu0 %v891
        %1422 = vmatpush1.bf16.msra.mxu0 %v890
        %1423 = vmatprep.subr.bf16.mxu0 %v895
        %1424 = vmatpush1.bf16.msra.mxu0 %v894
        %1425 = vmatprep.subr.bf16.mxu0 %v899
        %1426 = vmatpush1.bf16.msra.mxu0 %v898
        %1427 = vmatprep.subr.bf16.mxu0 %v903
        %1428 = vmatpush1.bf16.msra.mxu0 %v902
        %1429 = vmatprep.subr.bf16.mxu0 %v907
        %1430 = vmatpush1.bf16.msra.mxu0 %v906
        %1431 = vmatprep.subr.bf16.mxu0 %v911
        %1432 = vmatpush1.bf16.msra.mxu0 %v910
        %1433 = vmatprep.subr.bf16.mxu0 %v915
        %1434 = vmatpush1.bf16.msra.mxu0 %v914
        %1435 = vmatprep.subr.bf16.mxu0 %v919
        %1436 = vmatpush1.bf16.msra.mxu0 %v918
        %1437 = vmatprep.subr.bf16.mxu0 %v923
        %1438 = vmatpush1.bf16.msra.mxu0 %v922
        %1439 = vmatprep.subr.bf16.mxu0 %v927
        %1440 = vmatpush1.bf16.msra.mxu0 %v926
        %1441 = vmatprep.subr.bf16.mxu0 0
        %1442 = vmatpush1.bf16.msra.mxu0 0
        %1443 = vmatprep.subr.bf16.mxu0 0
        %1444 = vmatpush1.bf16.msra.mxu0 0
        %1445 = vmatprep.subr.bf16.mxu0 0
        %1446 = vmatpush1.bf16.msra.mxu0 0
        %1447 = vmatprep.subr.bf16.mxu0 0
        %1448 = vmatpush1.bf16.msra.mxu0 0
        %1449 = vmatprep.subr.bf16.mxu0 0
        %1450 = vmatpush1.bf16.msra.mxu0 0
        %1451 = vmatprep.subr.bf16.mxu0 0
        %1452 = vmatpush1.bf16.msra.mxu0 0
        %1453 = vmatprep.mubr.bf16.mxu0 %v1337
        %1454 = vmatmul.mubr.bf16.gmra.mrb[0].mxu0 %v1333
        %v1455 = vpop.f32.mrb[0].mxu0
        %v1456 = vadd.f32 0.0, %v1455
        %v1457 = vpop.f32.mrb[0].mxu0
        %v1458 = vadd.f32 0.0, %v1457
        %v1459 = vpop.f32.mrb[0].mxu0
        %v1460 = vpop.f32.mrb[0].mxu0
        %1461 = vdwg.mxu0
        %1462 = vmatprep.subr.bf16.mxu0 %v893
        %1463 = vmatpush1.bf16.msra.mxu0 %v892
        %1464 = vmatprep.subr.bf16.mxu0 %v897
        %1465 = vmatpush1.bf16.msra.mxu0 %v896
        %1466 = vmatprep.subr.bf16.mxu0 %v901
        %1467 = vmatpush1.bf16.msra.mxu0 %v900
        %1468 = vmatprep.subr.bf16.mxu0 %v905
        %1469 = vmatpush1.bf16.msra.mxu0 %v904
        %1470 = vmatprep.subr.bf16.mxu0 %v909
        %1471 = vmatpush1.bf16.msra.mxu0 %v908
        %1472 = vmatprep.subr.bf16.mxu0 %v913
        %1473 = vmatpush1.bf16.msra.mxu0 %v912
        %1474 = vmatprep.subr.bf16.mxu0 %v917
        %1475 = vmatpush1.bf16.msra.mxu0 %v916
        %1476 = vmatprep.subr.bf16.mxu0 %v921
        %1477 = vmatpush1.bf16.msra.mxu0 %v920
        %1478 = vmatprep.subr.bf16.mxu0 %v925
        %1479 = vmatpush1.bf16.msra.mxu0 %v924
        %1480 = vmatprep.subr.bf16.mxu0 %v929
        %1481 = vmatpush1.bf16.msra.mxu0 %v928
        %1482 = vmatprep.subr.bf16.mxu0 0
        %1483 = vmatpush1.bf16.msra.mxu0 0
        %1484 = vmatprep.subr.bf16.mxu0 0
        %1485 = vmatpush1.bf16.msra.mxu0 0
        %1486 = vmatprep.subr.bf16.mxu0 0
        %1487 = vmatpush1.bf16.msra.mxu0 0
        %1488 = vmatprep.subr.bf16.mxu0 0
        %1489 = vmatpush1.bf16.msra.mxu0 0
        %1490 = vmatprep.subr.bf16.mxu0 0
        %1491 = vmatpush1.bf16.msra.mxu0 0
        %1492 = vmatprep.subr.bf16.mxu0 0
        %1493 = vmatpush1.bf16.msra.mxu0 0
        %1494 = vmatprep.mubr.bf16.mxu0 %v1337
        %1495 = vmatmul.mubr.bf16.gmra.mrb[0].mxu0 %v1333
        %v1496 = vpop.f32.mrb[0].mxu0
        %v1497 = vadd.f32 0.0, %v1496
        %v1498 = vpop.f32.mrb[0].mxu0
        %v1499 = vadd.f32 0.0, %v1498
        %v1500 = vpop.f32.mrb[0].mxu0
        %v1501 = vpop.f32.mrb[0].mxu0
        %1502 = vdwg.mxu0
        %v1503 = vmax.f32 %v1374, %v1456
        %v1504 = vmax.f32 %v1376, %v1458
        %v1505 = vmax.f32 %v1415, %v1497
        %v1506 = vmax.f32 %v1417, %v1499
        %v1508 = vunpack.c.l.b16 %v1329
        %v1509 = vunpack.c.h.b16 %v1329
        %v1510 = vpack.c.b16 %v1508, %v1508
        %v1511 = vpack.c.b16 %v1509, %v1509
        %v1514 = vsel %vm684, %v1511, 0
        %1516 = vmatprep.subr.bf16.mxu0 %v605
        %1517 = vmatpush1.bf16.msra.mxu0 %v604
        %1518 = vmatprep.subr.bf16.mxu0 %v609
        %1519 = vmatpush1.bf16.msra.mxu0 %v608
        %1520 = vmatprep.subr.bf16.mxu0 %v613
        %1521 = vmatpush1.bf16.msra.mxu0 %v612
        %1522 = vmatprep.subr.bf16.mxu0 %v617
        %1523 = vmatpush1.bf16.msra.mxu0 %v616
        %1524 = vmatprep.subr.bf16.mxu0 %v621
        %1525 = vmatpush1.bf16.msra.mxu0 %v620
        %1526 = vmatprep.subr.bf16.mxu0 %v625
        %1527 = vmatpush1.bf16.msra.mxu0 %v624
        %1528 = vmatprep.subr.bf16.mxu0 %v629
        %1529 = vmatpush1.bf16.msra.mxu0 %v628
        %1530 = vmatprep.subr.bf16.mxu0 %v633
        %1531 = vmatpush1.bf16.msra.mxu0 %v632
        %1532 = vmatprep.subr.bf16.mxu0 %v637
        %1533 = vmatpush1.bf16.msra.mxu0 %v636
        %1534 = vmatprep.subr.bf16.mxu0 %v641
        %1535 = vmatpush1.bf16.msra.mxu0 %v640
        %1536 = vmatprep.subr.bf16.mxu0 0
        %1537 = vmatpush1.bf16.msra.mxu0 0
        %1538 = vmatprep.subr.bf16.mxu0 0
        %1539 = vmatpush1.bf16.msra.mxu0 0
        %1540 = vmatprep.subr.bf16.mxu0 0
        %1541 = vmatpush1.bf16.msra.mxu0 0
        %1542 = vmatprep.subr.bf16.mxu0 0
        %1543 = vmatpush1.bf16.msra.mxu0 0
        %1544 = vmatprep.subr.bf16.mxu0 0
        %1545 = vmatpush1.bf16.msra.mxu0 0
        %1546 = vmatprep.subr.bf16.mxu0 0
        %1547 = vmatpush1.bf16.msra.mxu0 0
        %1548 = vmatprep.mubr.bf16.mxu0 %v1514
        %1549 = vmatmul.mubr.bf16.gmra.mrb[0].mxu0 %v1510
        %v1550 = vpop.f32.mrb[0].mxu0
        %v1551 = vadd.f32 0.0, %v1550
        %v1552 = vpop.f32.mrb[0].mxu0
        %v1553 = vadd.f32 0.0, %v1552
        %v1554 = vpop.f32.mrb[0].mxu0
        %v1555 = vpop.f32.mrb[0].mxu0
        %1556 = vdwg.mxu0
        %1557 = vmatprep.subr.bf16.mxu0 %v607
        %1558 = vmatpush1.bf16.msra.mxu0 %v606
        %1559 = vmatprep.subr.bf16.mxu0 %v611
        %1560 = vmatpush1.bf16.msra.mxu0 %v610
        %1561 = vmatprep.subr.bf16.mxu0 %v615
        %1562 = vmatpush1.bf16.msra.mxu0 %v614
        %1563 = vmatprep.subr.bf16.mxu0 %v619
        %1564 = vmatpush1.bf16.msra.mxu0 %v618
        %1565 = vmatprep.subr.bf16.mxu0 %v623
        %1566 = vmatpush1.bf16.msra.mxu0 %v622
        %1567 = vmatprep.subr.bf16.mxu0 %v627
        %1568 = vmatpush1.bf16.msra.mxu0 %v626
        %1569 = vmatprep.subr.bf16.mxu0 %v631
        %1570 = vmatpush1.bf16.msra.mxu0 %v630
        %1571 = vmatprep.subr.bf16.mxu0 %v635
        %1572 = vmatpush1.bf16.msra.mxu0 %v634
        %1573 = vmatprep.subr.bf16.mxu0 %v639
        %1574 = vmatpush1.bf16.msra.mxu0 %v638
        %1575 = vmatprep.subr.bf16.mxu0 %v643
        %1576 = vmatpush1.bf16.msra.mxu0 %v642
        %1577 = vmatprep.subr.bf16.mxu0 0
        %1578 = vmatpush1.bf16.msra.mxu0 0
        %1579 = vmatprep.subr.bf16.mxu0 0
        %1580 = vmatpush1.bf16.msra.mxu0 0
        %1581 = vmatprep.subr.bf16.mxu0 0
        %1582 = vmatpush1.bf16.msra.mxu0 0
        %1583 = vmatprep.subr.bf16.mxu0 0
        %1584 = vmatpush1.bf16.msra.mxu0 0
        %1585 = vmatprep.subr.bf16.mxu0 0
        %1586 = vmatpush1.bf16.msra.mxu0 0
        %1587 = vmatprep.subr.bf16.mxu0 0
        %1588 = vmatpush1.bf16.msra.mxu0 0
        %1589 = vmatprep.mubr.bf16.mxu0 %v1514
        %1590 = vmatmul.mubr.bf16.gmra.mrb[0].mxu0 %v1510
        %v1591 = vpop.f32.mrb[0].mxu0
        %v1592 = vadd.f32 0.0, %v1591
        %v1593 = vpop.f32.mrb[0].mxu0
        %v1594 = vadd.f32 0.0, %v1593
        %v1595 = vpop.f32.mrb[0].mxu0
        %v1596 = vpop.f32.mrb[0].mxu0
        %1597 = vdwg.mxu0
        %1598 = vmatprep.subr.bf16.mxu0 %v891
        %1599 = vmatpush1.bf16.msra.mxu0 %v890
        %1600 = vmatprep.subr.bf16.mxu0 %v895
        %1601 = vmatpush1.bf16.msra.mxu0 %v894
        %1602 = vmatprep.subr.bf16.mxu0 %v899
        %1603 = vmatpush1.bf16.msra.mxu0 %v898
        %1604 = vmatprep.subr.bf16.mxu0 %v903
        %1605 = vmatpush1.bf16.msra.mxu0 %v902
        %1606 = vmatprep.subr.bf16.mxu0 %v907
        %1607 = vmatpush1.bf16.msra.mxu0 %v906
        %1608 = vmatprep.subr.bf16.mxu0 %v911
        %1609 = vmatpush1.bf16.msra.mxu0 %v910
        %1610 = vmatprep.subr.bf16.mxu0 %v915
        %1611 = vmatpush1.bf16.msra.mxu0 %v914
        %1612 = vmatprep.subr.bf16.mxu0 %v919
        %1613 = vmatpush1.bf16.msra.mxu0 %v918
        %1614 = vmatprep.subr.bf16.mxu0 %v923
        %1615 = vmatpush1.bf16.msra.mxu0 %v922
        %1616 = vmatprep.subr.bf16.mxu0 %v927
        %1617 = vmatpush1.bf16.msra.mxu0 %v926
        %1618 = vmatprep.subr.bf16.mxu0 0
        %1619 = vmatpush1.bf16.msra.mxu0 0
        %1620 = vmatprep.subr.bf16.mxu0 0
        %1621 = vmatpush1.bf16.msra.mxu0 0
        %1622 = vmatprep.subr.bf16.mxu0 0
        %1623 = vmatpush1.bf16.msra.mxu0 0
        %1624 = vmatprep.subr.bf16.mxu0 0
        %1625 = vmatpush1.bf16.msra.mxu0 0
        %1626 = vmatprep.subr.bf16.mxu0 0
        %1627 = vmatpush1.bf16.msra.mxu0 0
        %1628 = vmatprep.subr.bf16.mxu0 0
        %1629 = vmatpush1.bf16.msra.mxu0 0
        %1630 = vmatprep.mubr.bf16.mxu0 %v1514
        %1631 = vmatmul.mubr.bf16.gmra.mrb[0].mxu0 %v1510
        %v1632 = vpop.f32.mrb[0].mxu0
        %v1633 = vadd.f32 0.0, %v1632
        %v1634 = vpop.f32.mrb[0].mxu0
        %v1635 = vadd.f32 0.0, %v1634
        %v1636 = vpop.f32.mrb[0].mxu0
        %v1637 = vpop.f32.mrb[0].mxu0
        %1638 = vdwg.mxu0
        %1639 = vmatprep.subr.bf16.mxu0 %v893
        %1640 = vmatpush1.bf16.msra.mxu0 %v892
        %1641 = vmatprep.subr.bf16.mxu0 %v897
        %1642 = vmatpush1.bf16.msra.mxu0 %v896
        %1643 = vmatprep.subr.bf16.mxu0 %v901
        %1644 = vmatpush1.bf16.msra.mxu0 %v900
        %1645 = vmatprep.subr.bf16.mxu0 %v905
        %1646 = vmatpush1.bf16.msra.mxu0 %v904
        %1647 = vmatprep.subr.bf16.mxu0 %v909
        %1648 = vmatpush1.bf16.msra.mxu0 %v908
        %1649 = vmatprep.subr.bf16.mxu0 %v913
        %1650 = vmatpush1.bf16.msra.mxu0 %v912
        %1651 = vmatprep.subr.bf16.mxu0 %v917
        %1652 = vmatpush1.bf16.msra.mxu0 %v916
        %1653 = vmatprep.subr.bf16.mxu0 %v921
        %1654 = vmatpush1.bf16.msra.mxu0 %v920
        %1655 = vmatprep.subr.bf16.mxu0 %v925
        %1656 = vmatpush1.bf16.msra.mxu0 %v924
        %1657 = vmatprep.subr.bf16.mxu0 %v929
        %1658 = vmatpush1.bf16.msra.mxu0 %v928
        %1659 = vmatprep.subr.bf16.mxu0 0
        %1660 = vmatpush1.bf16.msra.mxu0 0
        %1661 = vmatprep.subr.bf16.mxu0 0
        %1662 = vmatpush1.bf16.msra.mxu0 0
        %1663 = vmatprep.subr.bf16.mxu0 0
        %1664 = vmatpush1.bf16.msra.mxu0 0
        %1665 = vmatprep.subr.bf16.mxu0 0
        %1666 = vmatpush1.bf16.msra.mxu0 0
        %1667 = vmatprep.subr.bf16.mxu0 0
        %1668 = vmatpush1.bf16.msra.mxu0 0
        %1669 = vmatprep.subr.bf16.mxu0 0
        %1670 = vmatpush1.bf16.msra.mxu0 0
        %1671 = vmatprep.mubr.bf16.mxu0 %v1514
        %1672 = vmatmul.mubr.bf16.gmra.mrb[0].mxu0 %v1510
        %v1673 = vpop.f32.mrb[0].mxu0
        %v1674 = vadd.f32 0.0, %v1673
        %v1675 = vpop.f32.mrb[0].mxu0
        %v1676 = vadd.f32 0.0, %v1675
        %v1677 = vpop.f32.mrb[0].mxu0
        %v1678 = vpop.f32.mrb[0].mxu0
        %1679 = vdwg.mxu0
        %v1680 = vmax.f32 %v1551, %v1633
        %v1681 = vmax.f32 %v1553, %v1635
        %v1682 = vmax.f32 %v1592, %v1674
        %v1683 = vmax.f32 %v1594, %v1676
        %v1684 = vmax.f32 %v1503, %v1680
        %v1685 = vmax.f32 %v1504, %v1681
        %v1686 = vmax.f32 %v1505, %v1682
        %v1687 = vmax.f32 %v1506, %v1683
        %v1688 = vadd.f32 %v1684, %v1241
        %v1689 = vadd.f32 %v1685, %v1245
        %v1690 = vadd.f32 %v1686, %v1249
        %v1691 = vadd.f32 %v1687, %v1253
        %v1692 = vmax.f32 %v1688, 0.0
        %v1693 = vmax.f32 %v1689, 0.0
        %v1694 = vmax.f32 %v1690, 0.0
        %v1695 = vmax.f32 %v1691, 0.0
        %v1696 = vpack.c.bf16 %v1692, %v1692
        %v1697 = vpack.c.bf16 %v1693, %v1693
        %v1698 = vpack.c.bf16 %v1694, %v1694
        %v1699 = vpack.c.bf16 %v1695, %v1695
        %s1700 = scalar_lea.vmem %s4, 224
        %v1701 = vld [vmem:[%s1700] sm:$0xf]
        %v1702 = vld [vmem:[%s1700 + $0x4] sm:$0xf]
        %v1703 = vld [vmem:[%s1700 + $0x8] sm:$0xf]
        %v1704 = vld [vmem:[%s1700 + $0xc] sm:$0xf]
        %v1705 = vld [vmem:[%s1700 + $0x10] sm:$0xf]
        %v1706 = vld [vmem:[%s1700 + $0x14] sm:$0xf]
        %v1707 = vld [vmem:[%s1700 + $0x18] sm:$0xf]
        %v1708 = vld [vmem:[%s1700 + $0x1c] sm:$0xf]
        %v1709 = vld [vmem:[%s1700 + $0x20] sm:$0xf]
        %v1710 = vld [vmem:[%s1700 + $0x24] sm:$0xf]
        %v1711 = vld [vmem:[%s1700 + $0x28] sm:$0xf]
        %v1712 = vld [vmem:[%s1700 + $0x2c] sm:$0xf]
        %v1713 = vld [vmem:[%s1700 + $0x30] sm:$0xf]
        %v1714 = vld [vmem:[%s1700 + $0x34] sm:$0xf]
        %v1715 = vld [vmem:[%s1700 + $0x38] sm:$0xf]
        %v1716 = vld [vmem:[%s1700 + $0x3c] sm:$0xf]
        %v1717 = vld [vmem:[%s1700 + $0x40] sm:$0xf]
        %v1718 = vld [vmem:[%s1700 + $0x44] sm:$0xf]
        %v1719 = vld [vmem:[%s1700 + $0x48] sm:$0xf]
        %v1720 = vld [vmem:[%s1700 + $0x4c] sm:$0xf]
        %v1721 = vld [vmem:[%s1700 + $0x50] sm:$0xf]
        %v1722 = vld [vmem:[%s1700 + $0x54] sm:$0xf]
        %v1723 = vld [vmem:[%s1700 + $0x58] sm:$0xf]
        %v1724 = vld [vmem:[%s1700 + $0x5c] sm:$0xf]
        %v1725 = vld [vmem:[%s1700 + $0x60] sm:$0xf]
        %v1726 = vld [vmem:[%s1700 + $0x64] sm:$0xf]
        %v1727 = vld [vmem:[%s1700 + $0x68] sm:$0xf]
        %v1728 = vld [vmem:[%s1700 + $0x6c] sm:$0xf]
        %v1729 = vld [vmem:[%s1700 + $0x70] sm:$0xf]
        %v1730 = vld [vmem:[%s1700 + $0x74] sm:$0xf]
        %v1731 = vld [vmem:[%s1700 + $0x78] sm:$0xf]
        %v1732 = vld [vmem:[%s1700 + $0x7c] sm:$0xf]
        %v1733 = vld [vmem:[%s1700 + $0x80] sm:$0xf]
        %v1734 = vld [vmem:[%s1700 + $0x84] sm:$0xf]
        %v1735 = vld [vmem:[%s1700 + $0x88] sm:$0xf]
        %v1736 = vld [vmem:[%s1700 + $0x8c] sm:$0xf]
        %v1737 = vld [vmem:[%s1700 + $0x90] sm:$0xf]
        %v1738 = vld [vmem:[%s1700 + $0x94] sm:$0xf]
        %v1739 = vld [vmem:[%s1700 + $0x98] sm:$0xf]
        %v1740 = vld [vmem:[%s1700 + $0x9c] sm:$0xf]
        %v1741 = vld [vmem:[%s1700 + $0xa0] sm:$0xf]
        %v1742 = vld [vmem:[%s1700 + $0xa4] sm:$0xf]
        %v1743 = vld [vmem:[%s1700 + $0xa8] sm:$0xf]
        %v1744 = vld [vmem:[%s1700 + $0xac] sm:$0xf]
        %v1745 = vld [vmem:[%s1700 + $0xb0] sm:$0xf]
        %v1746 = vld [vmem:[%s1700 + $0xb4] sm:$0xf]
        %v1747 = vld [vmem:[%s1700 + $0xb8] sm:$0xf]
        %v1748 = vld [vmem:[%s1700 + $0xbc] sm:$0xf]
        %v1749 = vld [vmem:[%s1700 + $0xc0] sm:$0xf]
        %v1750 = vld [vmem:[%s1700 + $0xc4] sm:$0xf]
        %v1751 = vld [vmem:[%s1700 + $0xc8] sm:$0xf]
        %v1752 = vld [vmem:[%s1700 + $0xcc] sm:$0xf]
        %v1753 = vld [vmem:[%s1700 + $0xd0] sm:$0xf]
        %v1754 = vld [vmem:[%s1700 + $0xd4] sm:$0xf]
        %v1755 = vld [vmem:[%s1700 + $0xd8] sm:$0xf]
        %v1756 = vld [vmem:[%s1700 + $0xdc] sm:$0xf]
        %v1813 = vunpack.c.l.b16 %v1701
        %v1814 = vunpack.c.l.b16 %v1702
        %v1815 = vunpack.c.l.b16 %v1703
        %v1816 = vunpack.c.l.b16 %v1704
        %v1817 = vunpack.c.l.b16 %v1705
        %v1818 = vunpack.c.l.b16 %v1706
        %v1819 = vunpack.c.l.b16 %v1707
        %v1820 = vunpack.c.l.b16 %v1708
        %v1821 = vunpack.c.l.b16 %v1709
        %v1822 = vunpack.c.l.b16 %v1710
        %v1823 = vunpack.c.l.b16 %v1711
        %v1824 = vunpack.c.l.b16 %v1712
        %v1825 = vunpack.c.l.b16 %v1713
        %v1826 = vunpack.c.l.b16 %v1714
        %v1827 = vunpack.c.l.b16 %v1715
        %v1828 = vunpack.c.l.b16 %v1716
        %v1829 = vunpack.c.l.b16 %v1717
        %v1830 = vunpack.c.l.b16 %v1718
        %v1831 = vunpack.c.l.b16 %v1719
        %v1832 = vunpack.c.l.b16 %v1720
        %v1833 = vunpack.c.l.b16 %v1721
        %v1834 = vunpack.c.l.b16 %v1722
        %v1835 = vunpack.c.l.b16 %v1723
        %v1836 = vunpack.c.l.b16 %v1724
        %v1837 = vunpack.c.l.b16 %v1725
        %v1838 = vunpack.c.l.b16 %v1726
        %v1839 = vunpack.c.l.b16 %v1727
        %v1840 = vunpack.c.l.b16 %v1728
        %v1841 = vunpack.c.l.b16 %v1729
        %v1842 = vunpack.c.l.b16 %v1730
        %v1843 = vunpack.c.l.b16 %v1731
        %v1844 = vunpack.c.l.b16 %v1732
        %v1845 = vunpack.c.l.b16 %v1733
        %v1846 = vunpack.c.l.b16 %v1734
        %v1847 = vunpack.c.l.b16 %v1735
        %v1848 = vunpack.c.l.b16 %v1736
        %v1849 = vunpack.c.l.b16 %v1737
        %v1850 = vunpack.c.l.b16 %v1738
        %v1851 = vunpack.c.l.b16 %v1739
        %v1852 = vunpack.c.l.b16 %v1740
        %v1853 = vunpack.c.l.b16 %v1741
        %v1854 = vunpack.c.l.b16 %v1742
        %v1855 = vunpack.c.l.b16 %v1743
        %v1856 = vunpack.c.l.b16 %v1744
        %v1857 = vunpack.c.l.b16 %v1745
        %v1858 = vunpack.c.l.b16 %v1746
        %v1859 = vunpack.c.l.b16 %v1747
        %v1860 = vunpack.c.l.b16 %v1748
        %v1861 = vunpack.c.l.b16 %v1749
        %v1862 = vunpack.c.l.b16 %v1750
        %v1863 = vunpack.c.l.b16 %v1751
        %v1864 = vunpack.c.l.b16 %v1752
        %v1865 = vunpack.c.l.b16 %v1753
        %v1866 = vunpack.c.l.b16 %v1754
        %v1867 = vunpack.c.l.b16 %v1755
        %v1868 = vunpack.c.l.b16 %v1756
        %v1869 = vpack.c.b16 %v1814, %v1813
        %v1870 = vpack.c.b16 %v1816, %v1815
        %v1871 = vpack.c.b16 %v1818, %v1817
        %v1872 = vpack.c.b16 %v1820, %v1819
        %v1873 = vpack.c.b16 %v1822, %v1821
        %v1874 = vpack.c.b16 %v1824, %v1823
        %v1875 = vpack.c.b16 %v1826, %v1825
        %v1876 = vpack.c.b16 %v1828, %v1827
        %v1877 = vpack.c.b16 %v1830, %v1829
        %v1878 = vpack.c.b16 %v1832, %v1831
        %v1879 = vpack.c.b16 %v1834, %v1833
        %v1880 = vpack.c.b16 %v1836, %v1835
        %v1881 = vpack.c.b16 %v1838, %v1837
        %v1882 = vpack.c.b16 %v1840, %v1839
        %v1883 = vpack.c.b16 %v1842, %v1841
        %v1884 = vpack.c.b16 %v1844, %v1843
        %v1885 = vpack.c.b16 %v1846, %v1845
        %v1886 = vpack.c.b16 %v1848, %v1847
        %v1887 = vpack.c.b16 %v1850, %v1849
        %v1888 = vpack.c.b16 %v1852, %v1851
        %v1889 = vpack.c.b16 %v1854, %v1853
        %v1890 = vpack.c.b16 %v1856, %v1855
        %v1891 = vpack.c.b16 %v1858, %v1857
        %v1892 = vpack.c.b16 %v1860, %v1859
        %v1893 = vpack.c.b16 %v1862, %v1861
        %v1894 = vpack.c.b16 %v1864, %v1863
        %v1895 = vpack.c.b16 %v1866, %v1865
        %v1896 = vpack.c.b16 %v1868, %v1867
        %vm1925 = vcmask 523264
        %v1927 = vsel %vm1925, %v1699, 0
        %1929 = vmatprep.subr.bf16.mxu0 0
        %1930 = vmatpush1.bf16.msra.mxu0 %v1869
        %1931 = vmatprep.subr.bf16.mxu0 0
        %1932 = vmatpush1.bf16.msra.mxu0 %v1870
        %1933 = vmatprep.subr.bf16.mxu0 0
        %1934 = vmatpush1.bf16.msra.mxu0 %v1871
        %1935 = vmatprep.subr.bf16.mxu0 0
        %1936 = vmatpush1.bf16.msra.mxu0 %v1872
        %1937 = vmatprep.subr.bf16.mxu0 0
        %1938 = vmatpush1.bf16.msra.mxu0 %v1873
        %1939 = vmatprep.subr.bf16.mxu0 0
        %1940 = vmatpush1.bf16.msra.mxu0 %v1874
        %1941 = vmatprep.subr.bf16.mxu0 0
        %1942 = vmatpush1.bf16.msra.mxu0 %v1875
        %1943 = vmatprep.subr.bf16.mxu0 0
        %1944 = vmatpush1.bf16.msra.mxu0 %v1876
        %1945 = vmatprep.subr.bf16.mxu0 0
        %1946 = vmatpush1.bf16.msra.mxu0 %v1877
        %1947 = vmatprep.subr.bf16.mxu0 0
        %1948 = vmatpush1.bf16.msra.mxu0 %v1878
        %1949 = vmatprep.subr.bf16.mxu0 0
        %1950 = vmatpush1.bf16.msra.mxu0 %v1879
        %1951 = vmatprep.subr.bf16.mxu0 0
        %1952 = vmatpush1.bf16.msra.mxu0 %v1880
        %1953 = vmatprep.subr.bf16.mxu0 0
        %1954 = vmatpush1.bf16.msra.mxu0 %v1881
        %1955 = vmatprep.subr.bf16.mxu0 0
        %1956 = vmatpush1.bf16.msra.mxu0 %v1882
        %1957 = vmatprep.subr.bf16.mxu0 0
        %1958 = vmatpush1.bf16.msra.mxu0 %v1883
        %1959 = vmatprep.subr.bf16.mxu0 0
        %1960 = vmatpush1.bf16.msra.mxu0 %v1884
        %1961 = vmatprep.mubr.bf16.mxu0 %v1697
        %1962 = vmatmul.mubr.bf16.gmra.mrb[0].mxu0 %v1696
        %v1963 = vpop.f32.mrb[0].mxu0
        %v1964 = vadd.f32 0.0, %v1963
        %v1965 = vpop.f32.mrb[0].mxu0
        %v1966 = vpop.f32.mrb[0].mxu0
        %v1967 = vpop.f32.mrb[0].mxu0
        %1968 = vdwg.mxu0
        %1969 = vmatprep.subr.bf16.mxu0 0
        %1970 = vmatpush1.bf16.msra.mxu0 %v1885
        %1971 = vmatprep.subr.bf16.mxu0 0
        %1972 = vmatpush1.bf16.msra.mxu0 %v1886
        %1973 = vmatprep.subr.bf16.mxu0 0
        %1974 = vmatpush1.bf16.msra.mxu0 %v1887
        %1975 = vmatprep.subr.bf16.mxu0 0
        %1976 = vmatpush1.bf16.msra.mxu0 %v1888
        %1977 = vmatprep.subr.bf16.mxu0 0
        %1978 = vmatpush1.bf16.msra.mxu0 %v1889
        %1979 = vmatprep.subr.bf16.mxu0 0
        %1980 = vmatpush1.bf16.msra.mxu0 %v1890
        %1981 = vmatprep.subr.bf16.mxu0 0
        %1982 = vmatpush1.bf16.msra.mxu0 %v1891
        %1983 = vmatprep.subr.bf16.mxu0 0
        %1984 = vmatpush1.bf16.msra.mxu0 %v1892
        %1985 = vmatprep.subr.bf16.mxu0 0
        %1986 = vmatpush1.bf16.msra.mxu0 %v1893
        %1987 = vmatprep.subr.bf16.mxu0 0
        %1988 = vmatpush1.bf16.msra.mxu0 %v1894
        %1989 = vmatprep.subr.bf16.mxu0 0
        %1990 = vmatpush1.bf16.msra.mxu0 %v1895
        %1991 = vmatprep.subr.bf16.mxu0 0
        %1992 = vmatpush1.bf16.msra.mxu0 %v1896
        %1993 = vmatprep.subr.bf16.mxu0 0
        %1994 = vmatpush1.bf16.msra.mxu0 0
        %1995 = vmatprep.subr.bf16.mxu0 0
        %1996 = vmatpush1.bf16.msra.mxu0 0
        %1997 = vmatprep.subr.bf16.mxu0 0
        %1998 = vmatpush1.bf16.msra.mxu0 0
        %1999 = vmatprep.subr.bf16.mxu0 0
        %2000 = vmatpush1.bf16.msra.mxu0 0
        %2001 = vmatprep.mubr.bf16.mxu0 %v1927
        %2002 = vmatmul.mubr.bf16.gmra.mrb[0].mxu0 %v1698
        %v2003 = vpop.f32.mrb[0].mxu0
        %v2004 = vadd.f32 %v1964, %v2003
        %v2005 = vpop.f32.mrb[0].mxu0
        %v2006 = vpop.f32.mrb[0].mxu0
        %v2007 = vpop.f32.mrb[0].mxu0
        %2008 = vdwg.mxu0
        %v2065 = vunpack.c.l.b16 %v1270
        %v2066 = vunpack.c.l.b16 %v1271
        %v2067 = vunpack.c.l.b16 %v1272
        %v2068 = vunpack.c.l.b16 %v1273
        %v2069 = vunpack.c.l.b16 %v1274
        %v2070 = vunpack.c.l.b16 %v1275
        %v2071 = vunpack.c.l.b16 %v1276
        %v2072 = vunpack.c.l.b16 %v1277
        %v2073 = vunpack.c.l.b16 %v1278
        %v2074 = vunpack.c.l.b16 %v1279
        %v2075 = vunpack.c.l.b16 %v1280
        %v2076 = vunpack.c.l.b16 %v1281
        %v2077 = vunpack.c.l.b16 %v1282
        %v2078 = vunpack.c.l.b16 %v1283
        %v2079 = vunpack.c.l.b16 %v1284
        %v2080 = vunpack.c.l.b16 %v1285
        %v2081 = vunpack.c.l.b16 %v1286
        %v2082 = vunpack.c.l.b16 %v1287
        %v2083 = vunpack.c.l.b16 %v1288
        %v2084 = vunpack.c.l.b16 %v1289
        %v2085 = vunpack.c.l.b16 %v1290
        %v2086 = vunpack.c.l.b16 %v1291
        %v2087 = vunpack.c.l.b16 %v1292
        %v2088 = vunpack.c.l.b16 %v1293
        %v2089 = vunpack.c.l.b16 %v1294
        %v2090 = vunpack.c.l.b16 %v1295
        %v2091 = vunpack.c.l.b16 %v1296
        %v2092 = vunpack.c.l.b16 %v1297
        %v2093 = vunpack.c.l.b16 %v1298
        %v2094 = vunpack.c.l.b16 %v1299
        %v2095 = vunpack.c.l.b16 %v1300
        %v2096 = vunpack.c.l.b16 %v1301
        %v2097 = vunpack.c.l.b16 %v1302
        %v2098 = vunpack.c.l.b16 %v1303
        %v2099 = vunpack.c.l.b16 %v1304
        %v2100 = vunpack.c.l.b16 %v1305
        %v2101 = vunpack.c.l.b16 %v1306
        %v2102 = vunpack.c.l.b16 %v1307
        %v2103 = vunpack.c.l.b16 %v1308
        %v2104 = vunpack.c.l.b16 %v1309
        %v2105 = vunpack.c.l.b16 %v1310
        %v2106 = vunpack.c.l.b16 %v1311
        %v2107 = vunpack.c.l.b16 %v1312
        %v2108 = vunpack.c.l.b16 %v1313
        %v2109 = vunpack.c.l.b16 %v1314
        %v2110 = vunpack.c.l.b16 %v1315
        %v2111 = vunpack.c.l.b16 %v1316
        %v2112 = vunpack.c.l.b16 %v1317
        %v2113 = vunpack.c.l.b16 %v1318
        %v2114 = vunpack.c.l.b16 %v1319
        %v2115 = vunpack.c.l.b16 %v1320
        %v2116 = vunpack.c.l.b16 %v1321
        %v2117 = vunpack.c.l.b16 %v1322
        %v2118 = vunpack.c.l.b16 %v1323
        %v2119 = vunpack.c.l.b16 %v1324
        %v2120 = vunpack.c.l.b16 %v1325
        %v2121 = vpack.c.b16 %v2066, %v2065
        %v2122 = vpack.c.b16 %v2068, %v2067
        %v2123 = vpack.c.b16 %v2070, %v2069
        %v2124 = vpack.c.b16 %v2072, %v2071
        %v2125 = vpack.c.b16 %v2074, %v2073
        %v2126 = vpack.c.b16 %v2076, %v2075
        %v2127 = vpack.c.b16 %v2078, %v2077
        %v2128 = vpack.c.b16 %v2080, %v2079
        %v2129 = vpack.c.b16 %v2082, %v2081
        %v2130 = vpack.c.b16 %v2084, %v2083
        %v2131 = vpack.c.b16 %v2086, %v2085
        %v2132 = vpack.c.b16 %v2088, %v2087
        %v2133 = vpack.c.b16 %v2090, %v2089
        %v2134 = vpack.c.b16 %v2092, %v2091
        %v2135 = vpack.c.b16 %v2094, %v2093
        %v2136 = vpack.c.b16 %v2096, %v2095
        %v2137 = vpack.c.b16 %v2098, %v2097
        %v2138 = vpack.c.b16 %v2100, %v2099
        %v2139 = vpack.c.b16 %v2102, %v2101
        %v2140 = vpack.c.b16 %v2104, %v2103
        %v2141 = vpack.c.b16 %v2106, %v2105
        %v2142 = vpack.c.b16 %v2108, %v2107
        %v2143 = vpack.c.b16 %v2110, %v2109
        %v2144 = vpack.c.b16 %v2112, %v2111
        %v2145 = vpack.c.b16 %v2114, %v2113
        %v2146 = vpack.c.b16 %v2116, %v2115
        %v2147 = vpack.c.b16 %v2118, %v2117
        %v2148 = vpack.c.b16 %v2120, %v2119
        %v2178 = vsel %vm1925, %v1269, 0
        %2180 = vmatprep.subr.bf16.mxu0 0
        %2181 = vmatpush1.bf16.msra.mxu0 %v2121
        %2182 = vmatprep.subr.bf16.mxu0 0
        %2183 = vmatpush1.bf16.msra.mxu0 %v2122
        %2184 = vmatprep.subr.bf16.mxu0 0
        %2185 = vmatpush1.bf16.msra.mxu0 %v2123
        %2186 = vmatprep.subr.bf16.mxu0 0
        %2187 = vmatpush1.bf16.msra.mxu0 %v2124
        %2188 = vmatprep.subr.bf16.mxu0 0
        %2189 = vmatpush1.bf16.msra.mxu0 %v2125
        %2190 = vmatprep.subr.bf16.mxu0 0
        %2191 = vmatpush1.bf16.msra.mxu0 %v2126
        %2192 = vmatprep.subr.bf16.mxu0 0
        %2193 = vmatpush1.bf16.msra.mxu0 %v2127
        %2194 = vmatprep.subr.bf16.mxu0 0
        %2195 = vmatpush1.bf16.msra.mxu0 %v2128
        %2196 = vmatprep.subr.bf16.mxu0 0
        %2197 = vmatpush1.bf16.msra.mxu0 %v2129
        %2198 = vmatprep.subr.bf16.mxu0 0
        %2199 = vmatpush1.bf16.msra.mxu0 %v2130
        %2200 = vmatprep.subr.bf16.mxu0 0
        %2201 = vmatpush1.bf16.msra.mxu0 %v2131
        %2202 = vmatprep.subr.bf16.mxu0 0
        %2203 = vmatpush1.bf16.msra.mxu0 %v2132
        %2204 = vmatprep.subr.bf16.mxu0 0
        %2205 = vmatpush1.bf16.msra.mxu0 %v2133
        %2206 = vmatprep.subr.bf16.mxu0 0
        %2207 = vmatpush1.bf16.msra.mxu0 %v2134
        %2208 = vmatprep.subr.bf16.mxu0 0
        %2209 = vmatpush1.bf16.msra.mxu0 %v2135
        %2210 = vmatprep.subr.bf16.mxu0 0
        %2211 = vmatpush1.bf16.msra.mxu0 %v2136
        %2212 = vmatprep.mubr.bf16.mxu0 %v1267
        %2213 = vmatmul.mubr.bf16.gmra.mrb[0].mxu0 %v1266
        %v2214 = vpop.f32.mrb[0].mxu0
        %v2215 = vadd.f32 %v2004, %v2214
        %v2216 = vpop.f32.mrb[0].mxu0
        %v2217 = vpop.f32.mrb[0].mxu0
        %v2218 = vpop.f32.mrb[0].mxu0
        %2219 = vdwg.mxu0
        %2220 = vmatprep.subr.bf16.mxu0 0
        %2221 = vmatpush1.bf16.msra.mxu0 %v2137
        %2222 = vmatprep.subr.bf16.mxu0 0
        %2223 = vmatpush1.bf16.msra.mxu0 %v2138
        %2224 = vmatprep.subr.bf16.mxu0 0
        %2225 = vmatpush1.bf16.msra.mxu0 %v2139
        %2226 = vmatprep.subr.bf16.mxu0 0
        %2227 = vmatpush1.bf16.msra.mxu0 %v2140
        %2228 = vmatprep.subr.bf16.mxu0 0
        %2229 = vmatpush1.bf16.msra.mxu0 %v2141
        %2230 = vmatprep.subr.bf16.mxu0 0
        %2231 = vmatpush1.bf16.msra.mxu0 %v2142
        %2232 = vmatprep.subr.bf16.mxu0 0
        %2233 = vmatpush1.bf16.msra.mxu0 %v2143
        %2234 = vmatprep.subr.bf16.mxu0 0
        %2235 = vmatpush1.bf16.msra.mxu0 %v2144
        %2236 = vmatprep.subr.bf16.mxu0 0
        %2237 = vmatpush1.bf16.msra.mxu0 %v2145
        %2238 = vmatprep.subr.bf16.mxu0 0
        %2239 = vmatpush1.bf16.msra.mxu0 %v2146
        %2240 = vmatprep.subr.bf16.mxu0 0
        %2241 = vmatpush1.bf16.msra.mxu0 %v2147
        %2242 = vmatprep.subr.bf16.mxu0 0
        %2243 = vmatpush1.bf16.msra.mxu0 %v2148
        %2244 = vmatprep.subr.bf16.mxu0 0
        %2245 = vmatpush1.bf16.msra.mxu0 0
        %2246 = vmatprep.subr.bf16.mxu0 0
        %2247 = vmatpush1.bf16.msra.mxu0 0
        %2248 = vmatprep.subr.bf16.mxu0 0
        %2249 = vmatpush1.bf16.msra.mxu0 0
        %2250 = vmatprep.subr.bf16.mxu0 0
        %2251 = vmatpush1.bf16.msra.mxu0 0
        %2252 = vmatprep.mubr.bf16.mxu0 %v2178
        %2253 = vmatmul.mubr.bf16.gmra.mrb[0].mxu0 %v1268
        %v2254 = vpop.f32.mrb[0].mxu0
        %v2255 = vadd.f32 %v2215, %v2254
        %v2256 = vpop.f32.mrb[0].mxu0
        %v2257 = vpop.f32.mrb[0].mxu0
        %v2258 = vpop.f32.mrb[0].mxu0
        %2259 = vdwg.mxu0
        %s2260 = scalar_lea.vmem %s363, 16 [#allocation2]
        %v2261 = vld [vmem:[%s2260] sm:$0xff]
        %s2262 = scalar_lea.vmem %s363, 128 [#allocation2]
        %v2263 = vld [vmem:[%s2262] sm:$0xff]
        %v2265 = vunpack.c.l.b16 %v2261
        %v2266 = vunpack.c.h.b16 %v2261
        %v2267 = vpack.c.b16 %v2265, %v2265
        %v2268 = vpack.c.b16 %v2266, %v2266
        %v2271 = vsel %vm684, %v2268, 0
        %2273 = vmatprep.subr.bf16.mxu0 %v605
        %2274 = vmatpush1.bf16.msra.mxu0 %v604
        %2275 = vmatprep.subr.bf16.mxu0 %v609
        %2276 = vmatpush1.bf16.msra.mxu0 %v608
        %2277 = vmatprep.subr.bf16.mxu0 %v613
        %2278 = vmatpush1.bf16.msra.mxu0 %v612
        %2279 = vmatprep.subr.bf16.mxu0 %v617
        %2280 = vmatpush1.bf16.msra.mxu0 %v616
        %2281 = vmatprep.subr.bf16.mxu0 %v621
        %2282 = vmatpush1.bf16.msra.mxu0 %v620
        %2283 = vmatprep.subr.bf16.mxu0 %v625
        %2284 = vmatpush1.bf16.msra.mxu0 %v624
        %2285 = vmatprep.subr.bf16.mxu0 %v629
        %2286 = vmatpush1.bf16.msra.mxu0 %v628
        %2287 = vmatprep.subr.bf16.mxu0 %v633
        %2288 = vmatpush1.bf16.msra.mxu0 %v632
        %2289 = vmatprep.subr.bf16.mxu0 %v637
        %2290 = vmatpush1.bf16.msra.mxu0 %v636
        %2291 = vmatprep.subr.bf16.mxu0 %v641
        %2292 = vmatpush1.bf16.msra.mxu0 %v640
        %2293 = vmatprep.subr.bf16.mxu0 0
        %2294 = vmatpush1.bf16.msra.mxu0 0
        %2295 = vmatprep.subr.bf16.mxu0 0
        %2296 = vmatpush1.bf16.msra.mxu0 0
        %2297 = vmatprep.subr.bf16.mxu0 0
        %2298 = vmatpush1.bf16.msra.mxu0 0
        %2299 = vmatprep.subr.bf16.mxu0 0
        %2300 = vmatpush1.bf16.msra.mxu0 0
        %2301 = vmatprep.subr.bf16.mxu0 0
        %2302 = vmatpush1.bf16.msra.mxu0 0
        %2303 = vmatprep.subr.bf16.mxu0 0
        %2304 = vmatpush1.bf16.msra.mxu0 0
        %2305 = vmatprep.mubr.bf16.mxu0 %v2271
        %2306 = vmatmul.mubr.bf16.gmra.mrb[0].mxu0 %v2267
        %v2307 = vpop.f32.mrb[0].mxu0
        %v2308 = vadd.f32 0.0, %v2307
        %v2309 = vpop.f32.mrb[0].mxu0
        %v2310 = vadd.f32 0.0, %v2309
        %v2311 = vpop.f32.mrb[0].mxu0
        %v2312 = vpop.f32.mrb[0].mxu0
        %2313 = vdwg.mxu0
        %2314 = vmatprep.subr.bf16.mxu0 %v607
        %2315 = vmatpush1.bf16.msra.mxu0 %v606
        %2316 = vmatprep.subr.bf16.mxu0 %v611
        %2317 = vmatpush1.bf16.msra.mxu0 %v610
        %2318 = vmatprep.subr.bf16.mxu0 %v615
        %2319 = vmatpush1.bf16.msra.mxu0 %v614
        %2320 = vmatprep.subr.bf16.mxu0 %v619
        %2321 = vmatpush1.bf16.msra.mxu0 %v618
        %2322 = vmatprep.subr.bf16.mxu0 %v623
        %2323 = vmatpush1.bf16.msra.mxu0 %v622
        %2324 = vmatprep.subr.bf16.mxu0 %v627
        %2325 = vmatpush1.bf16.msra.mxu0 %v626
        %2326 = vmatprep.subr.bf16.mxu0 %v631
        %2327 = vmatpush1.bf16.msra.mxu0 %v630
        %2328 = vmatprep.subr.bf16.mxu0 %v635
        %2329 = vmatpush1.bf16.msra.mxu0 %v634
        %2330 = vmatprep.subr.bf16.mxu0 %v639
        %2331 = vmatpush1.bf16.msra.mxu0 %v638
        %2332 = vmatprep.subr.bf16.mxu0 %v643
        %2333 = vmatpush1.bf16.msra.mxu0 %v642
        %2334 = vmatprep.subr.bf16.mxu0 0
        %2335 = vmatpush1.bf16.msra.mxu0 0
        %2336 = vmatprep.subr.bf16.mxu0 0
        %2337 = vmatpush1.bf16.msra.mxu0 0
        %2338 = vmatprep.subr.bf16.mxu0 0
        %2339 = vmatpush1.bf16.msra.mxu0 0
        %2340 = vmatprep.subr.bf16.mxu0 0
        %2341 = vmatpush1.bf16.msra.mxu0 0
        %2342 = vmatprep.subr.bf16.mxu0 0
        %2343 = vmatpush1.bf16.msra.mxu0 0
        %2344 = vmatprep.subr.bf16.mxu0 0
        %2345 = vmatpush1.bf16.msra.mxu0 0
        %2346 = vmatprep.mubr.bf16.mxu0 %v2271
        %2347 = vmatmul.mubr.bf16.gmra.mrb[0].mxu0 %v2267
        %v2348 = vpop.f32.mrb[0].mxu0
        %v2349 = vadd.f32 0.0, %v2348
        %v2350 = vpop.f32.mrb[0].mxu0
        %v2351 = vadd.f32 0.0, %v2350
        %v2352 = vpop.f32.mrb[0].mxu0
        %v2353 = vpop.f32.mrb[0].mxu0
        %2354 = vdwg.mxu0
        %2355 = vmatprep.subr.bf16.mxu0 %v891
        %2356 = vmatpush1.bf16.msra.mxu0 %v890
        %2357 = vmatprep.subr.bf16.mxu0 %v895
        %2358 = vmatpush1.bf16.msra.mxu0 %v894
        %2359 = vmatprep.subr.bf16.mxu0 %v899
        %2360 = vmatpush1.bf16.msra.mxu0 %v898
        %2361 = vmatprep.subr.bf16.mxu0 %v903
        %2362 = vmatpush1.bf16.msra.mxu0 %v902
        %2363 = vmatprep.subr.bf16.mxu0 %v907
        %2364 = vmatpush1.bf16.msra.mxu0 %v906
        %2365 = vmatprep.subr.bf16.mxu0 %v911
        %2366 = vmatpush1.bf16.msra.mxu0 %v910
        %2367 = vmatprep.subr.bf16.mxu0 %v915
        %2368 = vmatpush1.bf16.msra.mxu0 %v914
        %2369 = vmatprep.subr.bf16.mxu0 %v919
        %2370 = vmatpush1.bf16.msra.mxu0 %v918
        %2371 = vmatprep.subr.bf16.mxu0 %v923
        %2372 = vmatpush1.bf16.msra.mxu0 %v922
        %2373 = vmatprep.subr.bf16.mxu0 %v927
        %2374 = vmatpush1.bf16.msra.mxu0 %v926
        %2375 = vmatprep.subr.bf16.mxu0 0
        %2376 = vmatpush1.bf16.msra.mxu0 0
        %2377 = vmatprep.subr.bf16.mxu0 0
        %2378 = vmatpush1.bf16.msra.mxu0 0
        %2379 = vmatprep.subr.bf16.mxu0 0
        %2380 = vmatpush1.bf16.msra.mxu0 0
        %2381 = vmatprep.subr.bf16.mxu0 0
        %2382 = vmatpush1.bf16.msra.mxu0 0
        %2383 = vmatprep.subr.bf16.mxu0 0
        %2384 = vmatpush1.bf16.msra.mxu0 0
        %2385 = vmatprep.subr.bf16.mxu0 0
        %2386 = vmatpush1.bf16.msra.mxu0 0
        %2387 = vmatprep.mubr.bf16.mxu0 %v2271
        %2388 = vmatmul.mubr.bf16.gmra.mrb[0].mxu0 %v2267
        %v2389 = vpop.f32.mrb[0].mxu0
        %v2390 = vadd.f32 0.0, %v2389
        %v2391 = vpop.f32.mrb[0].mxu0
        %v2392 = vadd.f32 0.0, %v2391
        %v2393 = vpop.f32.mrb[0].mxu0
        %v2394 = vpop.f32.mrb[0].mxu0
        %2395 = vdwg.mxu0
        %2396 = vmatprep.subr.bf16.mxu0 %v893
        %2397 = vmatpush1.bf16.msra.mxu0 %v892
        %2398 = vmatprep.subr.bf16.mxu0 %v897
        %2399 = vmatpush1.bf16.msra.mxu0 %v896
        %2400 = vmatprep.subr.bf16.mxu0 %v901
        %2401 = vmatpush1.bf16.msra.mxu0 %v900
        %2402 = vmatprep.subr.bf16.mxu0 %v905
        %2403 = vmatpush1.bf16.msra.mxu0 %v904
        %2404 = vmatprep.subr.bf16.mxu0 %v909
        %2405 = vmatpush1.bf16.msra.mxu0 %v908
        %2406 = vmatprep.subr.bf16.mxu0 %v913
        %2407 = vmatpush1.bf16.msra.mxu0 %v912
        %2408 = vmatprep.subr.bf16.mxu0 %v917
        %2409 = vmatpush1.bf16.msra.mxu0 %v916
        %2410 = vmatprep.subr.bf16.mxu0 %v921
        %2411 = vmatpush1.bf16.msra.mxu0 %v920
        %2412 = vmatprep.subr.bf16.mxu0 %v925
        %2413 = vmatpush1.bf16.msra.mxu0 %v924
        %2414 = vmatprep.subr.bf16.mxu0 %v929
        %2415 = vmatpush1.bf16.msra.mxu0 %v928
        %2416 = vmatprep.subr.bf16.mxu0 0
        %2417 = vmatpush1.bf16.msra.mxu0 0
        %2418 = vmatprep.subr.bf16.mxu0 0
        %2419 = vmatpush1.bf16.msra.mxu0 0
        %2420 = vmatprep.subr.bf16.mxu0 0
        %2421 = vmatpush1.bf16.msra.mxu0 0
        %2422 = vmatprep.subr.bf16.mxu0 0
        %2423 = vmatpush1.bf16.msra.mxu0 0
        %2424 = vmatprep.subr.bf16.mxu0 0
        %2425 = vmatpush1.bf16.msra.mxu0 0
        %2426 = vmatprep.subr.bf16.mxu0 0
        %2427 = vmatpush1.bf16.msra.mxu0 0
        %2428 = vmatprep.mubr.bf16.mxu0 %v2271
        %2429 = vmatmul.mubr.bf16.gmra.mrb[0].mxu0 %v2267
        %v2430 = vpop.f32.mrb[0].mxu0
        %v2431 = vadd.f32 0.0, %v2430
        %v2432 = vpop.f32.mrb[0].mxu0
        %v2433 = vadd.f32 0.0, %v2432
        %v2434 = vpop.f32.mrb[0].mxu0
        %v2435 = vpop.f32.mrb[0].mxu0
        %2436 = vdwg.mxu0
        %v2437 = vmax.f32 %v2308, %v2390
        %v2438 = vmax.f32 %v2310, %v2392
        %v2439 = vmax.f32 %v2349, %v2431
        %v2440 = vmax.f32 %v2351, %v2433
        %v2442 = vunpack.c.l.b16 %v2263
        %v2443 = vunpack.c.h.b16 %v2263
        %v2444 = vpack.c.b16 %v2442, %v2442
        %v2445 = vpack.c.b16 %v2443, %v2443
        %v2448 = vsel %vm684, %v2445, 0
        %2450 = vmatprep.subr.bf16.mxu0 %v605
        %2451 = vmatpush1.bf16.msra.mxu0 %v604
        %2452 = vmatprep.subr.bf16.mxu0 %v609
        %2453 = vmatpush1.bf16.msra.mxu0 %v608
        %2454 = vmatprep.subr.bf16.mxu0 %v613
        %2455 = vmatpush1.bf16.msra.mxu0 %v612
        %2456 = vmatprep.subr.bf16.mxu0 %v617
        %2457 = vmatpush1.bf16.msra.mxu0 %v616
        %2458 = vmatprep.subr.bf16.mxu0 %v621
        %2459 = vmatpush1.bf16.msra.mxu0 %v620
        %2460 = vmatprep.subr.bf16.mxu0 %v625
        %2461 = vmatpush1.bf16.msra.mxu0 %v624
        %2462 = vmatprep.subr.bf16.mxu0 %v629
        %2463 = vmatpush1.bf16.msra.mxu0 %v628
        %2464 = vmatprep.subr.bf16.mxu0 %v633
        %2465 = vmatpush1.bf16.msra.mxu0 %v632
        %2466 = vmatprep.subr.bf16.mxu0 %v637
        %2467 = vmatpush1.bf16.msra.mxu0 %v636
        %2468 = vmatprep.subr.bf16.mxu0 %v641
        %2469 = vmatpush1.bf16.msra.mxu0 %v640
        %2470 = vmatprep.subr.bf16.mxu0 0
        %2471 = vmatpush1.bf16.msra.mxu0 0
        %2472 = vmatprep.subr.bf16.mxu0 0
        %2473 = vmatpush1.bf16.msra.mxu0 0
        %2474 = vmatprep.subr.bf16.mxu0 0
        %2475 = vmatpush1.bf16.msra.mxu0 0
        %2476 = vmatprep.subr.bf16.mxu0 0
        %2477 = vmatpush1.bf16.msra.mxu0 0
        %2478 = vmatprep.subr.bf16.mxu0 0
        %2479 = vmatpush1.bf16.msra.mxu0 0
        %2480 = vmatprep.subr.bf16.mxu0 0
        %2481 = vmatpush1.bf16.msra.mxu0 0
        %2482 = vmatprep.mubr.bf16.mxu0 %v2448
        %2483 = vmatmul.mubr.bf16.gmra.mrb[0].mxu0 %v2444
        %v2484 = vpop.f32.mrb[0].mxu0
        %v2485 = vadd.f32 0.0, %v2484
        %v2486 = vpop.f32.mrb[0].mxu0
        %v2487 = vadd.f32 0.0, %v2486
        %v2488 = vpop.f32.mrb[0].mxu0
        %v2489 = vpop.f32.mrb[0].mxu0
        %2490 = vdwg.mxu0
        %2491 = vmatprep.subr.bf16.mxu0 %v607
        %2492 = vmatpush1.bf16.msra.mxu0 %v606
        %2493 = vmatprep.subr.bf16.mxu0 %v611
        %2494 = vmatpush1.bf16.msra.mxu0 %v610
        %2495 = vmatprep.subr.bf16.mxu0 %v615
        %2496 = vmatpush1.bf16.msra.mxu0 %v614
        %2497 = vmatprep.subr.bf16.mxu0 %v619
        %2498 = vmatpush1.bf16.msra.mxu0 %v618
        %2499 = vmatprep.subr.bf16.mxu0 %v623
        %2500 = vmatpush1.bf16.msra.mxu0 %v622
        %2501 = vmatprep.subr.bf16.mxu0 %v627
        %2502 = vmatpush1.bf16.msra.mxu0 %v626
        %2503 = vmatprep.subr.bf16.mxu0 %v631
        %2504 = vmatpush1.bf16.msra.mxu0 %v630
        %2505 = vmatprep.subr.bf16.mxu0 %v635
        %2506 = vmatpush1.bf16.msra.mxu0 %v634
        %2507 = vmatprep.subr.bf16.mxu0 %v639
        %2508 = vmatpush1.bf16.msra.mxu0 %v638
        %2509 = vmatprep.subr.bf16.mxu0 %v643
        %2510 = vmatpush1.bf16.msra.mxu0 %v642
        %2511 = vmatprep.subr.bf16.mxu0 0
        %2512 = vmatpush1.bf16.msra.mxu0 0
        %2513 = vmatprep.subr.bf16.mxu0 0
        %2514 = vmatpush1.bf16.msra.mxu0 0
        %2515 = vmatprep.subr.bf16.mxu0 0
        %2516 = vmatpush1.bf16.msra.mxu0 0
        %2517 = vmatprep.subr.bf16.mxu0 0
        %2518 = vmatpush1.bf16.msra.mxu0 0
        %2519 = vmatprep.subr.bf16.mxu0 0
        %2520 = vmatpush1.bf16.msra.mxu0 0
        %2521 = vmatprep.subr.bf16.mxu0 0
        %2522 = vmatpush1.bf16.msra.mxu0 0
        %2523 = vmatprep.mubr.bf16.mxu0 %v2448
        %2524 = vmatmul.mubr.bf16.gmra.mrb[0].mxu0 %v2444
        %v2525 = vpop.f32.mrb[0].mxu0
        %v2526 = vadd.f32 0.0, %v2525
        %v2527 = vpop.f32.mrb[0].mxu0
        %v2528 = vadd.f32 0.0, %v2527
        %v2529 = vpop.f32.mrb[0].mxu0
        %v2530 = vpop.f32.mrb[0].mxu0
        %2531 = vdwg.mxu0
        %2532 = vmatprep.subr.bf16.mxu0 %v891
        %2533 = vmatpush1.bf16.msra.mxu0 %v890
        %2534 = vmatprep.subr.bf16.mxu0 %v895
        %2535 = vmatpush1.bf16.msra.mxu0 %v894
        %2536 = vmatprep.subr.bf16.mxu0 %v899
        %2537 = vmatpush1.bf16.msra.mxu0 %v898
        %2538 = vmatprep.subr.bf16.mxu0 %v903
        %2539 = vmatpush1.bf16.msra.mxu0 %v902
        %2540 = vmatprep.subr.bf16.mxu0 %v907
        %2541 = vmatpush1.bf16.msra.mxu0 %v906
        %2542 = vmatprep.subr.bf16.mxu0 %v911
        %2543 = vmatpush1.bf16.msra.mxu0 %v910
        %2544 = vmatprep.subr.bf16.mxu0 %v915
        %2545 = vmatpush1.bf16.msra.mxu0 %v914
        %2546 = vmatprep.subr.bf16.mxu0 %v919
        %2547 = vmatpush1.bf16.msra.mxu0 %v918
        %2548 = vmatprep.subr.bf16.mxu0 %v923
        %2549 = vmatpush1.bf16.msra.mxu0 %v922
        %2550 = vmatprep.subr.bf16.mxu0 %v927
        %2551 = vmatpush1.bf16.msra.mxu0 %v926
        %2552 = vmatprep.subr.bf16.mxu0 0
        %2553 = vmatpush1.bf16.msra.mxu0 0
        %2554 = vmatprep.subr.bf16.mxu0 0
        %2555 = vmatpush1.bf16.msra.mxu0 0
        %2556 = vmatprep.subr.bf16.mxu0 0
        %2557 = vmatpush1.bf16.msra.mxu0 0
        %2558 = vmatprep.subr.bf16.mxu0 0
        %2559 = vmatpush1.bf16.msra.mxu0 0
        %2560 = vmatprep.subr.bf16.mxu0 0
        %2561 = vmatpush1.bf16.msra.mxu0 0
        %2562 = vmatprep.subr.bf16.mxu0 0
        %2563 = vmatpush1.bf16.msra.mxu0 0
        %2564 = vmatprep.mubr.bf16.mxu0 %v2448
        %2565 = vmatmul.mubr.bf16.gmra.mrb[0].mxu0 %v2444
        %v2566 = vpop.f32.mrb[0].mxu0
        %v2567 = vadd.f32 0.0, %v2566
        %v2568 = vpop.f32.mrb[0].mxu0
        %v2569 = vadd.f32 0.0, %v2568
        %v2570 = vpop.f32.mrb[0].mxu0
        %v2571 = vpop.f32.mrb[0].mxu0
        %2572 = vdwg.mxu0
        %2573 = vmatprep.subr.bf16.mxu0 %v893
        %2574 = vmatpush1.bf16.msra.mxu0 %v892
        %2575 = vmatprep.subr.bf16.mxu0 %v897
        %2576 = vmatpush1.bf16.msra.mxu0 %v896
        %2577 = vmatprep.subr.bf16.mxu0 %v901
        %2578 = vmatpush1.bf16.msra.mxu0 %v900
        %2579 = vmatprep.subr.bf16.mxu0 %v905
        %2580 = vmatpush1.bf16.msra.mxu0 %v904
        %2581 = vmatprep.subr.bf16.mxu0 %v909
        %2582 = vmatpush1.bf16.msra.mxu0 %v908
        %2583 = vmatprep.subr.bf16.mxu0 %v913
        %2584 = vmatpush1.bf16.msra.mxu0 %v912
        %2585 = vmatprep.subr.bf16.mxu0 %v917
        %2586 = vmatpush1.bf16.msra.mxu0 %v916
        %2587 = vmatprep.subr.bf16.mxu0 %v921
        %2588 = vmatpush1.bf16.msra.mxu0 %v920
        %2589 = vmatprep.subr.bf16.mxu0 %v925
        %2590 = vmatpush1.bf16.msra.mxu0 %v924
        %2591 = vmatprep.subr.bf16.mxu0 %v929
        %2592 = vmatpush1.bf16.msra.mxu0 %v928
        %2593 = vmatprep.subr.bf16.mxu0 0
        %2594 = vmatpush1.bf16.msra.mxu0 0
        %2595 = vmatprep.subr.bf16.mxu0 0
        %2596 = vmatpush1.bf16.msra.mxu0 0
        %2597 = vmatprep.subr.bf16.mxu0 0
        %2598 = vmatpush1.bf16.msra.mxu0 0
        %2599 = vmatprep.subr.bf16.mxu0 0
        %2600 = vmatpush1.bf16.msra.mxu0 0
        %2601 = vmatprep.subr.bf16.mxu0 0
        %2602 = vmatpush1.bf16.msra.mxu0 0
        %2603 = vmatprep.subr.bf16.mxu0 0
        %2604 = vmatpush1.bf16.msra.mxu0 0
        %2605 = vmatprep.mubr.bf16.mxu0 %v2448
        %2606 = vmatmul.mubr.bf16.gmra.mrb[0].mxu0 %v2444
        %v2607 = vpop.f32.mrb[0].mxu0
        %v2608 = vadd.f32 0.0, %v2607
        %v2609 = vpop.f32.mrb[0].mxu0
        %v2610 = vadd.f32 0.0, %v2609
        %v2611 = vpop.f32.mrb[0].mxu0
        %v2612 = vpop.f32.mrb[0].mxu0
        %2613 = vdwg.mxu0
        %v2614 = vmax.f32 %v2485, %v2567
        %v2615 = vmax.f32 %v2487, %v2569
        %v2616 = vmax.f32 %v2526, %v2608
        %v2617 = vmax.f32 %v2528, %v2610
        %v2618 = vmax.f32 %v2437, %v2614
        %v2619 = vmax.f32 %v2438, %v2615
        %v2620 = vmax.f32 %v2439, %v2616
        %v2621 = vmax.f32 %v2440, %v2617
        %v2622 = vadd.f32 %v2618, %v1241
        %v2623 = vadd.f32 %v2619, %v1245
        %v2624 = vadd.f32 %v2620, %v1249
        %v2625 = vadd.f32 %v2621, %v1253
        %v2626 = vmax.f32 %v2622, 0.0
        %v2627 = vmax.f32 %v2623, 0.0
        %v2628 = vmax.f32 %v2624, 0.0
        %v2629 = vmax.f32 %v2625, 0.0
        %v2630 = vpack.c.bf16 %v2626, %v2626
        %v2631 = vpack.c.bf16 %v2627, %v2627
        %v2632 = vpack.c.bf16 %v2628, %v2628
        %v2633 = vpack.c.bf16 %v2629, %v2629
        %s2634 = scalar_lea.vmem %s4, 448
        %v2635 = vld [vmem:[%s2634] sm:$0xf]
        %v2636 = vld [vmem:[%s2634 + $0x4] sm:$0xf]
        %v2637 = vld [vmem:[%s2634 + $0x8] sm:$0xf]
        %v2638 = vld [vmem:[%s2634 + $0xc] sm:$0xf]
        %v2639 = vld [vmem:[%s2634 + $0x10] sm:$0xf]
        %v2640 = vld [vmem:[%s2634 + $0x14] sm:$0xf]
        %v2641 = vld [vmem:[%s2634 + $0x18] sm:$0xf]
        %v2642 = vld [vmem:[%s2634 + $0x1c] sm:$0xf]
        %v2643 = vld [vmem:[%s2634 + $0x20] sm:$0xf]
        %v2644 = vld [vmem:[%s2634 + $0x24] sm:$0xf]
        %v2645 = vld [vmem:[%s2634 + $0x28] sm:$0xf]
        %v2646 = vld [vmem:[%s2634 + $0x2c] sm:$0xf]
        %v2647 = vld [vmem:[%s2634 + $0x30] sm:$0xf]
        %v2648 = vld [vmem:[%s2634 + $0x34] sm:$0xf]
        %v2649 = vld [vmem:[%s2634 + $0x38] sm:$0xf]
        %v2650 = vld [vmem:[%s2634 + $0x3c] sm:$0xf]
        %v2651 = vld [vmem:[%s2634 + $0x40] sm:$0xf]
        %v2652 = vld [vmem:[%s2634 + $0x44] sm:$0xf]
        %v2653 = vld [vmem:[%s2634 + $0x48] sm:$0xf]
        %v2654 = vld [vmem:[%s2634 + $0x4c] sm:$0xf]
        %v2655 = vld [vmem:[%s2634 + $0x50] sm:$0xf]
        %v2656 = vld [vmem:[%s2634 + $0x54] sm:$0xf]
        %v2657 = vld [vmem:[%s2634 + $0x58] sm:$0xf]
        %v2658 = vld [vmem:[%s2634 + $0x5c] sm:$0xf]
        %v2659 = vld [vmem:[%s2634 + $0x60] sm:$0xf]
        %v2660 = vld [vmem:[%s2634 + $0x64] sm:$0xf]
        %v2661 = vld [vmem:[%s2634 + $0x68] sm:$0xf]
        %v2662 = vld [vmem:[%s2634 + $0x6c] sm:$0xf]
        %v2663 = vld [vmem:[%s2634 + $0x70] sm:$0xf]
        %v2664 = vld [vmem:[%s2634 + $0x74] sm:$0xf]
        %v2665 = vld [vmem:[%s2634 + $0x78] sm:$0xf]
        %v2666 = vld [vmem:[%s2634 + $0x7c] sm:$0xf]
        %v2667 = vld [vmem:[%s2634 + $0x80] sm:$0xf]
        %v2668 = vld [vmem:[%s2634 + $0x84] sm:$0xf]
        %v2669 = vld [vmem:[%s2634 + $0x88] sm:$0xf]
        %v2670 = vld [vmem:[%s2634 + $0x8c] sm:$0xf]
        %v2671 = vld [vmem:[%s2634 + $0x90] sm:$0xf]
        %v2672 = vld [vmem:[%s2634 + $0x94] sm:$0xf]
        %v2673 = vld [vmem:[%s2634 + $0x98] sm:$0xf]
        %v2674 = vld [vmem:[%s2634 + $0x9c] sm:$0xf]
        %v2675 = vld [vmem:[%s2634 + $0xa0] sm:$0xf]
        %v2676 = vld [vmem:[%s2634 + $0xa4] sm:$0xf]
        %v2677 = vld [vmem:[%s2634 + $0xa8] sm:$0xf]
        %v2678 = vld [vmem:[%s2634 + $0xac] sm:$0xf]
        %v2679 = vld [vmem:[%s2634 + $0xb0] sm:$0xf]
        %v2680 = vld [vmem:[%s2634 + $0xb4] sm:$0xf]
        %v2681 = vld [vmem:[%s2634 + $0xb8] sm:$0xf]
        %v2682 = vld [vmem:[%s2634 + $0xbc] sm:$0xf]
        %v2683 = vld [vmem:[%s2634 + $0xc0] sm:$0xf]
        %v2684 = vld [vmem:[%s2634 + $0xc4] sm:$0xf]
        %v2685 = vld [vmem:[%s2634 + $0xc8] sm:$0xf]
        %v2686 = vld [vmem:[%s2634 + $0xcc] sm:$0xf]
        %v2687 = vld [vmem:[%s2634 + $0xd0] sm:$0xf]
        %v2688 = vld [vmem:[%s2634 + $0xd4] sm:$0xf]
        %v2689 = vld [vmem:[%s2634 + $0xd8] sm:$0xf]
        %v2690 = vld [vmem:[%s2634 + $0xdc] sm:$0xf]
        %v2747 = vunpack.c.l.b16 %v2635
        %v2748 = vunpack.c.l.b16 %v2636
        %v2749 = vunpack.c.l.b16 %v2637
        %v2750 = vunpack.c.l.b16 %v2638
        %v2751 = vunpack.c.l.b16 %v2639
        %v2752 = vunpack.c.l.b16 %v2640
        %v2753 = vunpack.c.l.b16 %v2641
        %v2754 = vunpack.c.l.b16 %v2642
        %v2755 = vunpack.c.l.b16 %v2643
        %v2756 = vunpack.c.l.b16 %v2644
        %v2757 = vunpack.c.l.b16 %v2645
        %v2758 = vunpack.c.l.b16 %v2646
        %v2759 = vunpack.c.l.b16 %v2647
        %v2760 = vunpack.c.l.b16 %v2648
        %v2761 = vunpack.c.l.b16 %v2649
        %v2762 = vunpack.c.l.b16 %v2650
        %v2763 = vunpack.c.l.b16 %v2651
        %v2764 = vunpack.c.l.b16 %v2652
        %v2765 = vunpack.c.l.b16 %v2653
        %v2766 = vunpack.c.l.b16 %v2654
        %v2767 = vunpack.c.l.b16 %v2655
        %v2768 = vunpack.c.l.b16 %v2656
        %v2769 = vunpack.c.l.b16 %v2657
        %v2770 = vunpack.c.l.b16 %v2658
        %v2771 = vunpack.c.l.b16 %v2659
        %v2772 = vunpack.c.l.b16 %v2660
        %v2773 = vunpack.c.l.b16 %v2661
        %v2774 = vunpack.c.l.b16 %v2662
        %v2775 = vunpack.c.l.b16 %v2663
        %v2776 = vunpack.c.l.b16 %v2664
        %v2777 = vunpack.c.l.b16 %v2665
        %v2778 = vunpack.c.l.b16 %v2666
        %v2779 = vunpack.c.l.b16 %v2667
        %v2780 = vunpack.c.l.b16 %v2668
        %v2781 = vunpack.c.l.b16 %v2669
        %v2782 = vunpack.c.l.b16 %v2670
        %v2783 = vunpack.c.l.b16 %v2671
        %v2784 = vunpack.c.l.b16 %v2672
        %v2785 = vunpack.c.l.b16 %v2673
        %v2786 = vunpack.c.l.b16 %v2674
        %v2787 = vunpack.c.l.b16 %v2675
        %v2788 = vunpack.c.l.b16 %v2676
        %v2789 = vunpack.c.l.b16 %v2677
        %v2790 = vunpack.c.l.b16 %v2678
        %v2791 = vunpack.c.l.b16 %v2679
        %v2792 = vunpack.c.l.b16 %v2680
        %v2793 = vunpack.c.l.b16 %v2681
        %v2794 = vunpack.c.l.b16 %v2682
        %v2795 = vunpack.c.l.b16 %v2683
        %v2796 = vunpack.c.l.b16 %v2684
        %v2797 = vunpack.c.l.b16 %v2685
        %v2798 = vunpack.c.l.b16 %v2686
        %v2799 = vunpack.c.l.b16 %v2687
        %v2800 = vunpack.c.l.b16 %v2688
        %v2801 = vunpack.c.l.b16 %v2689
        %v2802 = vunpack.c.l.b16 %v2690
        %v2803 = vpack.c.b16 %v2748, %v2747
        %v2804 = vpack.c.b16 %v2750, %v2749
        %v2805 = vpack.c.b16 %v2752, %v2751
        %v2806 = vpack.c.b16 %v2754, %v2753
        %v2807 = vpack.c.b16 %v2756, %v2755
        %v2808 = vpack.c.b16 %v2758, %v2757
        %v2809 = vpack.c.b16 %v2760, %v2759
        %v2810 = vpack.c.b16 %v2762, %v2761
        %v2811 = vpack.c.b16 %v2764, %v2763
        %v2812 = vpack.c.b16 %v2766, %v2765
        %v2813 = vpack.c.b16 %v2768, %v2767
        %v2814 = vpack.c.b16 %v2770, %v2769
        %v2815 = vpack.c.b16 %v2772, %v2771
        %v2816 = vpack.c.b16 %v2774, %v2773
        %v2817 = vpack.c.b16 %v2776, %v2775
        %v2818 = vpack.c.b16 %v2778, %v2777
        %v2819 = vpack.c.b16 %v2780, %v2779
        %v2820 = vpack.c.b16 %v2782, %v2781
        %v2821 = vpack.c.b16 %v2784, %v2783
        %v2822 = vpack.c.b16 %v2786, %v2785
        %v2823 = vpack.c.b16 %v2788, %v2787
        %v2824 = vpack.c.b16 %v2790, %v2789
        %v2825 = vpack.c.b16 %v2792, %v2791
        %v2826 = vpack.c.b16 %v2794, %v2793
        %v2827 = vpack.c.b16 %v2796, %v2795
        %v2828 = vpack.c.b16 %v2798, %v2797
        %v2829 = vpack.c.b16 %v2800, %v2799
        %v2830 = vpack.c.b16 %v2802, %v2801
        %v2860 = vsel %vm1925, %v2633, 0
        %2862 = vmatprep.subr.bf16.mxu0 0
        %2863 = vmatpush1.bf16.msra.mxu0 %v2803
        %2864 = vmatprep.subr.bf16.mxu0 0
        %2865 = vmatpush1.bf16.msra.mxu0 %v2804
        %2866 = vmatprep.subr.bf16.mxu0 0
        %2867 = vmatpush1.bf16.msra.mxu0 %v2805
        %2868 = vmatprep.subr.bf16.mxu0 0
        %2869 = vmatpush1.bf16.msra.mxu0 %v2806
        %2870 = vmatprep.subr.bf16.mxu0 0
        %2871 = vmatpush1.bf16.msra.mxu0 %v2807
        %2872 = vmatprep.subr.bf16.mxu0 0
        %2873 = vmatpush1.bf16.msra.mxu0 %v2808
        %2874 = vmatprep.subr.bf16.mxu0 0
        %2875 = vmatpush1.bf16.msra.mxu0 %v2809
        %2876 = vmatprep.subr.bf16.mxu0 0
        %2877 = vmatpush1.bf16.msra.mxu0 %v2810
        %2878 = vmatprep.subr.bf16.mxu0 0
        %2879 = vmatpush1.bf16.msra.mxu0 %v2811
        %2880 = vmatprep.subr.bf16.mxu0 0
        %2881 = vmatpush1.bf16.msra.mxu0 %v2812
        %2882 = vmatprep.subr.bf16.mxu0 0
        %2883 = vmatpush1.bf16.msra.mxu0 %v2813
        %2884 = vmatprep.subr.bf16.mxu0 0
        %2885 = vmatpush1.bf16.msra.mxu0 %v2814
        %2886 = vmatprep.subr.bf16.mxu0 0
        %2887 = vmatpush1.bf16.msra.mxu0 %v2815
        %2888 = vmatprep.subr.bf16.mxu0 0
        %2889 = vmatpush1.bf16.msra.mxu0 %v2816
        %2890 = vmatprep.subr.bf16.mxu0 0
        %2891 = vmatpush1.bf16.msra.mxu0 %v2817
        %2892 = vmatprep.subr.bf16.mxu0 0
        %2893 = vmatpush1.bf16.msra.mxu0 %v2818
        %2894 = vmatprep.mubr.bf16.mxu0 %v2631
        %2895 = vmatmul.mubr.bf16.gmra.mrb[0].mxu0 %v2630
        %v2896 = vpop.f32.mrb[0].mxu0
        %v2897 = vadd.f32 0.0, %v2896
        %v2898 = vpop.f32.mrb[0].mxu0
        %v2899 = vpop.f32.mrb[0].mxu0
        %v2900 = vpop.f32.mrb[0].mxu0
        %2901 = vdwg.mxu0
        %2902 = vmatprep.subr.bf16.mxu0 0
        %2903 = vmatpush1.bf16.msra.mxu0 %v2819
        %2904 = vmatprep.subr.bf16.mxu0 0
        %2905 = vmatpush1.bf16.msra.mxu0 %v2820
        %2906 = vmatprep.subr.bf16.mxu0 0
        %2907 = vmatpush1.bf16.msra.mxu0 %v2821
        %2908 = vmatprep.subr.bf16.mxu0 0
        %2909 = vmatpush1.bf16.msra.mxu0 %v2822
        %2910 = vmatprep.subr.bf16.mxu0 0
        %2911 = vmatpush1.bf16.msra.mxu0 %v2823
        %2912 = vmatprep.subr.bf16.mxu0 0
        %2913 = vmatpush1.bf16.msra.mxu0 %v2824
        %2914 = vmatprep.subr.bf16.mxu0 0
        %2915 = vmatpush1.bf16.msra.mxu0 %v2825
        %2916 = vmatprep.subr.bf16.mxu0 0
        %2917 = vmatpush1.bf16.msra.mxu0 %v2826
        %2918 = vmatprep.subr.bf16.mxu0 0
        %2919 = vmatpush1.bf16.msra.mxu0 %v2827
        %2920 = vmatprep.subr.bf16.mxu0 0
        %2921 = vmatpush1.bf16.msra.mxu0 %v2828
        %2922 = vmatprep.subr.bf16.mxu0 0
        %2923 = vmatpush1.bf16.msra.mxu0 %v2829
        %2924 = vmatprep.subr.bf16.mxu0 0
        %2925 = vmatpush1.bf16.msra.mxu0 %v2830
        %2926 = vmatprep.subr.bf16.mxu0 0
        %2927 = vmatpush1.bf16.msra.mxu0 0
        %2928 = vmatprep.subr.bf16.mxu0 0
        %2929 = vmatpush1.bf16.msra.mxu0 0
        %2930 = vmatprep.subr.bf16.mxu0 0
        %2931 = vmatpush1.bf16.msra.mxu0 0
        %2932 = vmatprep.subr.bf16.mxu0 0
        %2933 = vmatpush1.bf16.msra.mxu0 0
        %2934 = vmatprep.mubr.bf16.mxu0 %v2860
        %2935 = vmatmul.mubr.bf16.gmra.mrb[0].mxu0 %v2632
        %v2936 = vpop.f32.mrb[0].mxu0
        %v2937 = vadd.f32 %v2897, %v2936
        %v2938 = vpop.f32.mrb[0].mxu0
        %v2939 = vpop.f32.mrb[0].mxu0
        %v2940 = vpop.f32.mrb[0].mxu0
        %2941 = vdwg.mxu0
        %v2942 = vadd.f32 %v2255, %v2937
        %s2943 = scalar_lea.vmem %s363, 24 [#allocation2]
        %v2944 = vld [vmem:[%s2943] sm:$0xff]
        %s2945 = scalar_lea.vmem %s363, 136 [#allocation2]
        %v2946 = vld [vmem:[%s2945] sm:$0xff]
        %v2948 = vunpack.c.l.b16 %v2944
        %v2949 = vunpack.c.h.b16 %v2944
        %v2950 = vpack.c.b16 %v2948, %v2948
        %v2951 = vpack.c.b16 %v2949, %v2949
        %v2954 = vsel %vm684, %v2951, 0
        %2956 = vmatprep.subr.bf16.mxu0 %v605
        %2957 = vmatpush1.bf16.msra.mxu0 %v604
        %2958 = vmatprep.subr.bf16.mxu0 %v609
        %2959 = vmatpush1.bf16.msra.mxu0 %v608
        %2960 = vmatprep.subr.bf16.mxu0 %v613
        %2961 = vmatpush1.bf16.msra.mxu0 %v612
        %2962 = vmatprep.subr.bf16.mxu0 %v617
        %2963 = vmatpush1.bf16.msra.mxu0 %v616
        %2964 = vmatprep.subr.bf16.mxu0 %v621
        %2965 = vmatpush1.bf16.msra.mxu0 %v620
        %2966 = vmatprep.subr.bf16.mxu0 %v625
        %2967 = vmatpush1.bf16.msra.mxu0 %v624
        %2968 = vmatprep.subr.bf16.mxu0 %v629
        %2969 = vmatpush1.bf16.msra.mxu0 %v628
        %2970 = vmatprep.subr.bf16.mxu0 %v633
        %2971 = vmatpush1.bf16.msra.mxu0 %v632
        %2972 = vmatprep.subr.bf16.mxu0 %v637
        %2973 = vmatpush1.bf16.msra.mxu0 %v636
        %2974 = vmatprep.subr.bf16.mxu0 %v641
        %2975 = vmatpush1.bf16.msra.mxu0 %v640
        %2976 = vmatprep.subr.bf16.mxu0 0
        %2977 = vmatpush1.bf16.msra.mxu0 0
        %2978 = vmatprep.subr.bf16.mxu0 0
        %2979 = vmatpush1.bf16.msra.mxu0 0
        %2980 = vmatprep.subr.bf16.mxu0 0
        %2981 = vmatpush1.bf16.msra.mxu0 0
        %2982 = vmatprep.subr.bf16.mxu0 0
        %2983 = vmatpush1.bf16.msra.mxu0 0
        %2984 = vmatprep.subr.bf16.mxu0 0
        %2985 = vmatpush1.bf16.msra.mxu0 0
        %2986 = vmatprep.subr.bf16.mxu0 0
        %2987 = vmatpush1.bf16.msra.mxu0 0
        %2988 = vmatprep.mubr.bf16.mxu0 %v2954
        %2989 = vmatmul.mubr.bf16.gmra.mrb[0].mxu0 %v2950
        %v2990 = vpop.f32.mrb[0].mxu0
        %v2991 = vadd.f32 0.0, %v2990
        %v2992 = vpop.f32.mrb[0].mxu0
        %v2993 = vadd.f32 0.0, %v2992
        %v2994 = vpop.f32.mrb[0].mxu0
        %v2995 = vpop.f32.mrb[0].mxu0
        %2996 = vdwg.mxu0
        %2997 = vmatprep.subr.bf16.mxu0 %v607
        %2998 = vmatpush1.bf16.msra.mxu0 %v606
        %2999 = vmatprep.subr.bf16.mxu0 %v611
        %3000 = vmatpush1.bf16.msra.mxu0 %v610
        %3001 = vmatprep.subr.bf16.mxu0 %v615
        %3002 = vmatpush1.bf16.msra.mxu0 %v614
        %3003 = vmatprep.subr.bf16.mxu0 %v619
        %3004 = vmatpush1.bf16.msra.mxu0 %v618
        %3005 = vmatprep.subr.bf16.mxu0 %v623
        %3006 = vmatpush1.bf16.msra.mxu0 %v622
        %3007 = vmatprep.subr.bf16.mxu0 %v627
        %3008 = vmatpush1.bf16.msra.mxu0 %v626
        %3009 = vmatprep.subr.bf16.mxu0 %v631
        %3010 = vmatpush1.bf16.msra.mxu0 %v630
        %3011 = vmatprep.subr.bf16.mxu0 %v635
        %3012 = vmatpush1.bf16.msra.mxu0 %v634
        %3013 = vmatprep.subr.bf16.mxu0 %v639
        %3014 = vmatpush1.bf16.msra.mxu0 %v638
        %3015 = vmatprep.subr.bf16.mxu0 %v643
        %3016 = vmatpush1.bf16.msra.mxu0 %v642
        %3017 = vmatprep.subr.bf16.mxu0 0
        %3018 = vmatpush1.bf16.msra.mxu0 0
        %3019 = vmatprep.subr.bf16.mxu0 0
        %3020 = vmatpush1.bf16.msra.mxu0 0
        %3021 = vmatprep.subr.bf16.mxu0 0
        %3022 = vmatpush1.bf16.msra.mxu0 0
        %3023 = vmatprep.subr.bf16.mxu0 0
        %3024 = vmatpush1.bf16.msra.mxu0 0
        %3025 = vmatprep.subr.bf16.mxu0 0
        %3026 = vmatpush1.bf16.msra.mxu0 0
        %3027 = vmatprep.subr.bf16.mxu0 0
        %3028 = vmatpush1.bf16.msra.mxu0 0
        %3029 = vmatprep.mubr.bf16.mxu0 %v2954
        %3030 = vmatmul.mubr.bf16.gmra.mrb[0].mxu0 %v2950
        %v3031 = vpop.f32.mrb[0].mxu0
        %v3032 = vadd.f32 0.0, %v3031
        %v3033 = vpop.f32.mrb[0].mxu0
        %v3034 = vadd.f32 0.0, %v3033
        %v3035 = vpop.f32.mrb[0].mxu0
        %v3036 = vpop.f32.mrb[0].mxu0
        %3037 = vdwg.mxu0
        %3038 = vmatprep.subr.bf16.mxu0 %v891
        %3039 = vmatpush1.bf16.msra.mxu0 %v890
        %3040 = vmatprep.subr.bf16.mxu0 %v895
        %3041 = vmatpush1.bf16.msra.mxu0 %v894
        %3042 = vmatprep.subr.bf16.mxu0 %v899
        %3043 = vmatpush1.bf16.msra.mxu0 %v898
        %3044 = vmatprep.subr.bf16.mxu0 %v903
        %3045 = vmatpush1.bf16.msra.mxu0 %v902
        %3046 = vmatprep.subr.bf16.mxu0 %v907
        %3047 = vmatpush1.bf16.msra.mxu0 %v906
        %3048 = vmatprep.subr.bf16.mxu0 %v911
        %3049 = vmatpush1.bf16.msra.mxu0 %v910
        %3050 = vmatprep.subr.bf16.mxu0 %v915
        %3051 = vmatpush1.bf16.msra.mxu0 %v914
        %3052 = vmatprep.subr.bf16.mxu0 %v919
        %3053 = vmatpush1.bf16.msra.mxu0 %v918
        %3054 = vmatprep.subr.bf16.mxu0 %v923
        %3055 = vmatpush1.bf16.msra.mxu0 %v922
        %3056 = vmatprep.subr.bf16.mxu0 %v927
        %3057 = vmatpush1.bf16.msra.mxu0 %v926
        %3058 = vmatprep.subr.bf16.mxu0 0
        %3059 = vmatpush1.bf16.msra.mxu0 0
        %3060 = vmatprep.subr.bf16.mxu0 0
        %3061 = vmatpush1.bf16.msra.mxu0 0
        %3062 = vmatprep.subr.bf16.mxu0 0
        %3063 = vmatpush1.bf16.msra.mxu0 0
        %3064 = vmatprep.subr.bf16.mxu0 0
        %3065 = vmatpush1.bf16.msra.mxu0 0
        %3066 = vmatprep.subr.bf16.mxu0 0
        %3067 = vmatpush1.bf16.msra.mxu0 0
        %3068 = vmatprep.subr.bf16.mxu0 0
        %3069 = vmatpush1.bf16.msra.mxu0 0
        %3070 = vmatprep.mubr.bf16.mxu0 %v2954
        %3071 = vmatmul.mubr.bf16.gmra.mrb[0].mxu0 %v2950
        %v3072 = vpop.f32.mrb[0].mxu0
        %v3073 = vadd.f32 0.0, %v3072
        %v3074 = vpop.f32.mrb[0].mxu0
        %v3075 = vadd.f32 0.0, %v3074
        %v3076 = vpop.f32.mrb[0].mxu0
        %v3077 = vpop.f32.mrb[0].mxu0
        %3078 = vdwg.mxu0
        %3079 = vmatprep.subr.bf16.mxu0 %v893
        %3080 = vmatpush1.bf16.msra.mxu0 %v892
        %3081 = vmatprep.subr.bf16.mxu0 %v897
        %3082 = vmatpush1.bf16.msra.mxu0 %v896
        %3083 = vmatprep.subr.bf16.mxu0 %v901
        %3084 = vmatpush1.bf16.msra.mxu0 %v900
        %3085 = vmatprep.subr.bf16.mxu0 %v905
        %3086 = vmatpush1.bf16.msra.mxu0 %v904
        %3087 = vmatprep.subr.bf16.mxu0 %v909
        %3088 = vmatpush1.bf16.msra.mxu0 %v908
        %3089 = vmatprep.subr.bf16.mxu0 %v913
        %3090 = vmatpush1.bf16.msra.mxu0 %v912
        %3091 = vmatprep.subr.bf16.mxu0 %v917
        %3092 = vmatpush1.bf16.msra.mxu0 %v916
        %3093 = vmatprep.subr.bf16.mxu0 %v921
        %3094 = vmatpush1.bf16.msra.mxu0 %v920
        %3095 = vmatprep.subr.bf16.mxu0 %v925
        %3096 = vmatpush1.bf16.msra.mxu0 %v924
        %3097 = vmatprep.subr.bf16.mxu0 %v929
        %3098 = vmatpush1.bf16.msra.mxu0 %v928
        %3099 = vmatprep.subr.bf16.mxu0 0
        %3100 = vmatpush1.bf16.msra.mxu0 0
        %3101 = vmatprep.subr.bf16.mxu0 0
        %3102 = vmatpush1.bf16.msra.mxu0 0
        %3103 = vmatprep.subr.bf16.mxu0 0
        %3104 = vmatpush1.bf16.msra.mxu0 0
        %3105 = vmatprep.subr.bf16.mxu0 0
        %3106 = vmatpush1.bf16.msra.mxu0 0
        %3107 = vmatprep.subr.bf16.mxu0 0
        %3108 = vmatpush1.bf16.msra.mxu0 0
        %3109 = vmatprep.subr.bf16.mxu0 0
        %3110 = vmatpush1.bf16.msra.mxu0 0
        %3111 = vmatprep.mubr.bf16.mxu0 %v2954
        %3112 = vmatmul.mubr.bf16.gmra.mrb[0].mxu0 %v2950
        %v3113 = vpop.f32.mrb[0].mxu0
        %v3114 = vadd.f32 0.0, %v3113
        %v3115 = vpop.f32.mrb[0].mxu0
        %v3116 = vadd.f32 0.0, %v3115
        %v3117 = vpop.f32.mrb[0].mxu0
        %v3118 = vpop.f32.mrb[0].mxu0
        %3119 = vdwg.mxu0
        %v3120 = vmax.f32 %v2991, %v3073
        %v3121 = vmax.f32 %v2993, %v3075
        %v3122 = vmax.f32 %v3032, %v3114
        %v3123 = vmax.f32 %v3034, %v3116
        %v3125 = vunpack.c.l.b16 %v2946
        %v3126 = vunpack.c.h.b16 %v2946
        %v3127 = vpack.c.b16 %v3125, %v3125
        %v3128 = vpack.c.b16 %v3126, %v3126
        %v3131 = vsel %vm684, %v3128, 0
        %3133 = vmatprep.subr.bf16.mxu0 %v605
        %3134 = vmatpush1.bf16.msra.mxu0 %v604
        %3135 = vmatprep.subr.bf16.mxu0 %v609
        %3136 = vmatpush1.bf16.msra.mxu0 %v608
        %3137 = vmatprep.subr.bf16.mxu0 %v613
        %3138 = vmatpush1.bf16.msra.mxu0 %v612
        %3139 = vmatprep.subr.bf16.mxu0 %v617
        %3140 = vmatpush1.bf16.msra.mxu0 %v616
        %3141 = vmatprep.subr.bf16.mxu0 %v621
        %3142 = vmatpush1.bf16.msra.mxu0 %v620
        %3143 = vmatprep.subr.bf16.mxu0 %v625
        %3144 = vmatpush1.bf16.msra.mxu0 %v624
        %3145 = vmatprep.subr.bf16.mxu0 %v629
        %3146 = vmatpush1.bf16.msra.mxu0 %v628
        %3147 = vmatprep.subr.bf16.mxu0 %v633
        %3148 = vmatpush1.bf16.msra.mxu0 %v632
        %3149 = vmatprep.subr.bf16.mxu0 %v637
        %3150 = vmatpush1.bf16.msra.mxu0 %v636
        %3151 = vmatprep.subr.bf16.mxu0 %v641
        %3152 = vmatpush1.bf16.msra.mxu0 %v640
        %3153 = vmatprep.subr.bf16.mxu0 0
        %3154 = vmatpush1.bf16.msra.mxu0 0
        %3155 = vmatprep.subr.bf16.mxu0 0
        %3156 = vmatpush1.bf16.msra.mxu0 0
        %3157 = vmatprep.subr.bf16.mxu0 0
        %3158 = vmatpush1.bf16.msra.mxu0 0
        %3159 = vmatprep.subr.bf16.mxu0 0
        %3160 = vmatpush1.bf16.msra.mxu0 0
        %3161 = vmatprep.subr.bf16.mxu0 0
        %3162 = vmatpush1.bf16.msra.mxu0 0
        %3163 = vmatprep.subr.bf16.mxu0 0
        %3164 = vmatpush1.bf16.msra.mxu0 0
        %3165 = vmatprep.mubr.bf16.mxu0 %v3131
        %3166 = vmatmul.mubr.bf16.gmra.mrb[0].mxu0 %v3127
        %v3167 = vpop.f32.mrb[0].mxu0
        %v3168 = vadd.f32 0.0, %v3167
        %v3169 = vpop.f32.mrb[0].mxu0
        %v3170 = vadd.f32 0.0, %v3169
        %v3171 = vpop.f32.mrb[0].mxu0
        %v3172 = vpop.f32.mrb[0].mxu0
        %3173 = vdwg.mxu0
        %3174 = vmatprep.subr.bf16.mxu0 %v607
        %3175 = vmatpush1.bf16.msra.mxu0 %v606
        %3176 = vmatprep.subr.bf16.mxu0 %v611
        %3177 = vmatpush1.bf16.msra.mxu0 %v610
        %3178 = vmatprep.subr.bf16.mxu0 %v615
        %3179 = vmatpush1.bf16.msra.mxu0 %v614
        %3180 = vmatprep.subr.bf16.mxu0 %v619
        %3181 = vmatpush1.bf16.msra.mxu0 %v618
        %3182 = vmatprep.subr.bf16.mxu0 %v623
        %3183 = vmatpush1.bf16.msra.mxu0 %v622
        %3184 = vmatprep.subr.bf16.mxu0 %v627
        %3185 = vmatpush1.bf16.msra.mxu0 %v626
        %3186 = vmatprep.subr.bf16.mxu0 %v631
        %3187 = vmatpush1.bf16.msra.mxu0 %v630
        %3188 = vmatprep.subr.bf16.mxu0 %v635
        %3189 = vmatpush1.bf16.msra.mxu0 %v634
        %3190 = vmatprep.subr.bf16.mxu0 %v639
        %3191 = vmatpush1.bf16.msra.mxu0 %v638
        %3192 = vmatprep.subr.bf16.mxu0 %v643
        %3193 = vmatpush1.bf16.msra.mxu0 %v642
        %3194 = vmatprep.subr.bf16.mxu0 0
        %3195 = vmatpush1.bf16.msra.mxu0 0
        %3196 = vmatprep.subr.bf16.mxu0 0
        %3197 = vmatpush1.bf16.msra.mxu0 0
        %3198 = vmatprep.subr.bf16.mxu0 0
        %3199 = vmatpush1.bf16.msra.mxu0 0
        %3200 = vmatprep.subr.bf16.mxu0 0
        %3201 = vmatpush1.bf16.msra.mxu0 0
        %3202 = vmatprep.subr.bf16.mxu0 0
        %3203 = vmatpush1.bf16.msra.mxu0 0
        %3204 = vmatprep.subr.bf16.mxu0 0
        %3205 = vmatpush1.bf16.msra.mxu0 0
        %3206 = vmatprep.mubr.bf16.mxu0 %v3131
        %3207 = vmatmul.mubr.bf16.gmra.mrb[0].mxu0 %v3127
        %v3208 = vpop.f32.mrb[0].mxu0
        %v3209 = vadd.f32 0.0, %v3208
        %v3210 = vpop.f32.mrb[0].mxu0
        %v3211 = vadd.f32 0.0, %v3210
        %v3212 = vpop.f32.mrb[0].mxu0
        %v3213 = vpop.f32.mrb[0].mxu0
        %3214 = vdwg.mxu0
        %3215 = vmatprep.subr.bf16.mxu0 %v891
        %3216 = vmatpush1.bf16.msra.mxu0 %v890
        %3217 = vmatprep.subr.bf16.mxu0 %v895
        %3218 = vmatpush1.bf16.msra.mxu0 %v894
        %3219 = vmatprep.subr.bf16.mxu0 %v899
        %3220 = vmatpush1.bf16.msra.mxu0 %v898
        %3221 = vmatprep.subr.bf16.mxu0 %v903
        %3222 = vmatpush1.bf16.msra.mxu0 %v902
        %3223 = vmatprep.subr.bf16.mxu0 %v907
        %3224 = vmatpush1.bf16.msra.mxu0 %v906
        %3225 = vmatprep.subr.bf16.mxu0 %v911
        %3226 = vmatpush1.bf16.msra.mxu0 %v910
        %3227 = vmatprep.subr.bf16.mxu0 %v915
        %3228 = vmatpush1.bf16.msra.mxu0 %v914
        %3229 = vmatprep.subr.bf16.mxu0 %v919
        %3230 = vmatpush1.bf16.msra.mxu0 %v918
        %3231 = vmatprep.subr.bf16.mxu0 %v923
        %3232 = vmatpush1.bf16.msra.mxu0 %v922
        %3233 = vmatprep.subr.bf16.mxu0 %v927
        %3234 = vmatpush1.bf16.msra.mxu0 %v926
        %3235 = vmatprep.subr.bf16.mxu0 0
        %3236 = vmatpush1.bf16.msra.mxu0 0
        %3237 = vmatprep.subr.bf16.mxu0 0
        %3238 = vmatpush1.bf16.msra.mxu0 0
        %3239 = vmatprep.subr.bf16.mxu0 0
        %3240 = vmatpush1.bf16.msra.mxu0 0
        %3241 = vmatprep.subr.bf16.mxu0 0
        %3242 = vmatpush1.bf16.msra.mxu0 0
        %3243 = vmatprep.subr.bf16.mxu0 0
        %3244 = vmatpush1.bf16.msra.mxu0 0
        %3245 = vmatprep.subr.bf16.mxu0 0
        %3246 = vmatpush1.bf16.msra.mxu0 0
        %3247 = vmatprep.mubr.bf16.mxu0 %v3131
        %3248 = vmatmul.mubr.bf16.gmra.mrb[0].mxu0 %v3127
        %v3249 = vpop.f32.mrb[0].mxu0
        %v3250 = vadd.f32 0.0, %v3249
        %v3251 = vpop.f32.mrb[0].mxu0
        %v3252 = vadd.f32 0.0, %v3251
        %v3253 = vpop.f32.mrb[0].mxu0
        %v3254 = vpop.f32.mrb[0].mxu0
        %3255 = vdwg.mxu0
        %3256 = vmatprep.subr.bf16.mxu0 %v893
        %3257 = vmatpush1.bf16.msra.mxu0 %v892
        %3258 = vmatprep.subr.bf16.mxu0 %v897
        %3259 = vmatpush1.bf16.msra.mxu0 %v896
        %3260 = vmatprep.subr.bf16.mxu0 %v901
        %3261 = vmatpush1.bf16.msra.mxu0 %v900
        %3262 = vmatprep.subr.bf16.mxu0 %v905
        %3263 = vmatpush1.bf16.msra.mxu0 %v904
        %3264 = vmatprep.subr.bf16.mxu0 %v909
        %3265 = vmatpush1.bf16.msra.mxu0 %v908
        %3266 = vmatprep.subr.bf16.mxu0 %v913
        %3267 = vmatpush1.bf16.msra.mxu0 %v912
        %3268 = vmatprep.subr.bf16.mxu0 %v917
        %3269 = vmatpush1.bf16.msra.mxu0 %v916
        %3270 = vmatprep.subr.bf16.mxu0 %v921
        %3271 = vmatpush1.bf16.msra.mxu0 %v920
        %3272 = vmatprep.subr.bf16.mxu0 %v925
        %3273 = vmatpush1.bf16.msra.mxu0 %v924
        %3274 = vmatprep.subr.bf16.mxu0 %v929
        %3275 = vmatpush1.bf16.msra.mxu0 %v928
        %3276 = vmatprep.subr.bf16.mxu0 0
        %3277 = vmatpush1.bf16.msra.mxu0 0
        %3278 = vmatprep.subr.bf16.mxu0 0
        %3279 = vmatpush1.bf16.msra.mxu0 0
        %3280 = vmatprep.subr.bf16.mxu0 0
        %3281 = vmatpush1.bf16.msra.mxu0 0
        %3282 = vmatprep.subr.bf16.mxu0 0
        %3283 = vmatpush1.bf16.msra.mxu0 0
        %3284 = vmatprep.subr.bf16.mxu0 0
        %3285 = vmatpush1.bf16.msra.mxu0 0
        %3286 = vmatprep.subr.bf16.mxu0 0
        %3287 = vmatpush1.bf16.msra.mxu0 0
        %3288 = vmatprep.mubr.bf16.mxu0 %v3131
        %3289 = vmatmul.mubr.bf16.gmra.mrb[0].mxu0 %v3127
        %v3290 = vpop.f32.mrb[0].mxu0
        %v3291 = vadd.f32 0.0, %v3290
        %v3292 = vpop.f32.mrb[0].mxu0
        %v3293 = vadd.f32 0.0, %v3292
        %v3294 = vpop.f32.mrb[0].mxu0
        %v3295 = vpop.f32.mrb[0].mxu0
        %3296 = vdwg.mxu0
        %v3297 = vmax.f32 %v3168, %v3250
        %v3298 = vmax.f32 %v3170, %v3252
        %v3299 = vmax.f32 %v3209, %v3291
        %v3300 = vmax.f32 %v3211, %v3293
        %v3301 = vmax.f32 %v3120, %v3297
        %v3302 = vmax.f32 %v3121, %v3298
        %v3303 = vmax.f32 %v3122, %v3299
        %v3304 = vmax.f32 %v3123, %v3300
        %v3305 = vadd.f32 %v3301, %v1241
        %v3306 = vadd.f32 %v3302, %v1245
        %v3307 = vadd.f32 %v3303, %v1249
        %v3308 = vadd.f32 %v3304, %v1253
        %v3309 = vmax.f32 %v3305, 0.0
        %v3310 = vmax.f32 %v3306, 0.0
        %v3311 = vmax.f32 %v3307, 0.0
        %v3312 = vmax.f32 %v3308, 0.0
        %v3313 = vpack.c.bf16 %v3309, %v3309
        %v3314 = vpack.c.bf16 %v3310, %v3310
        %v3315 = vpack.c.bf16 %v3311, %v3311
        %v3316 = vpack.c.bf16 %v3312, %v3312
        %s3317 = scalar_lea.vmem %s4, 672
        %v3318 = vld [vmem:[%s3317] sm:$0xf]
        %v3319 = vld [vmem:[%s3317 + $0x4] sm:$0xf]
        %v3320 = vld [vmem:[%s3317 + $0x8] sm:$0xf]
        %v3321 = vld [vmem:[%s3317 + $0xc] sm:$0xf]
        %v3322 = vld [vmem:[%s3317 + $0x10] sm:$0xf]
        %v3323 = vld [vmem:[%s3317 + $0x14] sm:$0xf]
        %v3324 = vld [vmem:[%s3317 + $0x18] sm:$0xf]
        %v3325 = vld [vmem:[%s3317 + $0x1c] sm:$0xf]
        %v3326 = vld [vmem:[%s3317 + $0x20] sm:$0xf]
        %v3327 = vld [vmem:[%s3317 + $0x24] sm:$0xf]
        %v3328 = vld [vmem:[%s3317 + $0x28] sm:$0xf]
        %v3329 = vld [vmem:[%s3317 + $0x2c] sm:$0xf]
        %v3330 = vld [vmem:[%s3317 + $0x30] sm:$0xf]
        %v3331 = vld [vmem:[%s3317 + $0x34] sm:$0xf]
        %v3332 = vld [vmem:[%s3317 + $0x38] sm:$0xf]
        %v3333 = vld [vmem:[%s3317 + $0x3c] sm:$0xf]
        %v3334 = vld [vmem:[%s3317 + $0x40] sm:$0xf]
        %v3335 = vld [vmem:[%s3317 + $0x44] sm:$0xf]
        %v3336 = vld [vmem:[%s3317 + $0x48] sm:$0xf]
        %v3337 = vld [vmem:[%s3317 + $0x4c] sm:$0xf]
        %v3338 = vld [vmem:[%s3317 + $0x50] sm:$0xf]
        %v3339 = vld [vmem:[%s3317 + $0x54] sm:$0xf]
        %v3340 = vld [vmem:[%s3317 + $0x58] sm:$0xf]
        %v3341 = vld [vmem:[%s3317 + $0x5c] sm:$0xf]
        %v3342 = vld [vmem:[%s3317 + $0x60] sm:$0xf]
        %v3343 = vld [vmem:[%s3317 + $0x64] sm:$0xf]
        %v3344 = vld [vmem:[%s3317 + $0x68] sm:$0xf]
        %v3345 = vld [vmem:[%s3317 + $0x6c] sm:$0xf]
        %v3346 = vld [vmem:[%s3317 + $0x70] sm:$0xf]
        %v3347 = vld [vmem:[%s3317 + $0x74] sm:$0xf]
        %v3348 = vld [vmem:[%s3317 + $0x78] sm:$0xf]
        %v3349 = vld [vmem:[%s3317 + $0x7c] sm:$0xf]
        %v3350 = vld [vmem:[%s3317 + $0x80] sm:$0xf]
        %v3351 = vld [vmem:[%s3317 + $0x84] sm:$0xf]
        %v3352 = vld [vmem:[%s3317 + $0x88] sm:$0xf]
        %v3353 = vld [vmem:[%s3317 + $0x8c] sm:$0xf]
        %v3354 = vld [vmem:[%s3317 + $0x90] sm:$0xf]
        %v3355 = vld [vmem:[%s3317 + $0x94] sm:$0xf]
        %v3356 = vld [vmem:[%s3317 + $0x98] sm:$0xf]
        %v3357 = vld [vmem:[%s3317 + $0x9c] sm:$0xf]
        %v3358 = vld [vmem:[%s3317 + $0xa0] sm:$0xf]
        %v3359 = vld [vmem:[%s3317 + $0xa4] sm:$0xf]
        %v3360 = vld [vmem:[%s3317 + $0xa8] sm:$0xf]
        %v3361 = vld [vmem:[%s3317 + $0xac] sm:$0xf]
        %v3362 = vld [vmem:[%s3317 + $0xb0] sm:$0xf]
        %v3363 = vld [vmem:[%s3317 + $0xb4] sm:$0xf]
        %v3364 = vld [vmem:[%s3317 + $0xb8] sm:$0xf]
        %v3365 = vld [vmem:[%s3317 + $0xbc] sm:$0xf]
        %v3366 = vld [vmem:[%s3317 + $0xc0] sm:$0xf]
        %v3367 = vld [vmem:[%s3317 + $0xc4] sm:$0xf]
        %v3368 = vld [vmem:[%s3317 + $0xc8] sm:$0xf]
        %v3369 = vld [vmem:[%s3317 + $0xcc] sm:$0xf]
        %v3370 = vld [vmem:[%s3317 + $0xd0] sm:$0xf]
        %v3371 = vld [vmem:[%s3317 + $0xd4] sm:$0xf]
        %v3372 = vld [vmem:[%s3317 + $0xd8] sm:$0xf]
        %v3373 = vld [vmem:[%s3317 + $0xdc] sm:$0xf]
        %v3430 = vunpack.c.l.b16 %v3318
        %v3431 = vunpack.c.l.b16 %v3319
        %v3432 = vunpack.c.l.b16 %v3320
        %v3433 = vunpack.c.l.b16 %v3321
        %v3434 = vunpack.c.l.b16 %v3322
        %v3435 = vunpack.c.l.b16 %v3323
        %v3436 = vunpack.c.l.b16 %v3324
        %v3437 = vunpack.c.l.b16 %v3325
        %v3438 = vunpack.c.l.b16 %v3326
        %v3439 = vunpack.c.l.b16 %v3327
        %v3440 = vunpack.c.l.b16 %v3328
        %v3441 = vunpack.c.l.b16 %v3329
        %v3442 = vunpack.c.l.b16 %v3330
        %v3443 = vunpack.c.l.b16 %v3331
        %v3444 = vunpack.c.l.b16 %v3332
        %v3445 = vunpack.c.l.b16 %v3333
        %v3446 = vunpack.c.l.b16 %v3334
        %v3447 = vunpack.c.l.b16 %v3335
        %v3448 = vunpack.c.l.b16 %v3336
        %v3449 = vunpack.c.l.b16 %v3337
        %v3450 = vunpack.c.l.b16 %v3338
        %v3451 = vunpack.c.l.b16 %v3339
        %v3452 = vunpack.c.l.b16 %v3340
        %v3453 = vunpack.c.l.b16 %v3341
        %v3454 = vunpack.c.l.b16 %v3342
        %v3455 = vunpack.c.l.b16 %v3343
        %v3456 = vunpack.c.l.b16 %v3344
        %v3457 = vunpack.c.l.b16 %v3345
        %v3458 = vunpack.c.l.b16 %v3346
        %v3459 = vunpack.c.l.b16 %v3347
        %v3460 = vunpack.c.l.b16 %v3348
        %v3461 = vunpack.c.l.b16 %v3349
        %v3462 = vunpack.c.l.b16 %v3350
        %v3463 = vunpack.c.l.b16 %v3351
        %v3464 = vunpack.c.l.b16 %v3352
        %v3465 = vunpack.c.l.b16 %v3353
        %v3466 = vunpack.c.l.b16 %v3354
        %v3467 = vunpack.c.l.b16 %v3355
        %v3468 = vunpack.c.l.b16 %v3356
        %v3469 = vunpack.c.l.b16 %v3357
        %v3470 = vunpack.c.l.b16 %v3358
        %v3471 = vunpack.c.l.b16 %v3359
        %v3472 = vunpack.c.l.b16 %v3360
        %v3473 = vunpack.c.l.b16 %v3361
        %v3474 = vunpack.c.l.b16 %v3362
        %v3475 = vunpack.c.l.b16 %v3363
        %v3476 = vunpack.c.l.b16 %v3364
        %v3477 = vunpack.c.l.b16 %v3365
        %v3478 = vunpack.c.l.b16 %v3366
        %v3479 = vunpack.c.l.b16 %v3367
        %v3480 = vunpack.c.l.b16 %v3368
        %v3481 = vunpack.c.l.b16 %v3369
        %v3482 = vunpack.c.l.b16 %v3370
        %v3483 = vunpack.c.l.b16 %v3371
        %v3484 = vunpack.c.l.b16 %v3372
        %v3485 = vunpack.c.l.b16 %v3373
        %v3486 = vpack.c.b16 %v3431, %v3430
        %v3487 = vpack.c.b16 %v3433, %v3432
        %v3488 = vpack.c.b16 %v3435, %v3434
        %v3489 = vpack.c.b16 %v3437, %v3436
        %v3490 = vpack.c.b16 %v3439, %v3438
        %v3491 = vpack.c.b16 %v3441, %v3440
        %v3492 = vpack.c.b16 %v3443, %v3442
        %v3493 = vpack.c.b16 %v3445, %v3444
        %v3494 = vpack.c.b16 %v3447, %v3446
        %v3495 = vpack.c.b16 %v3449, %v3448
        %v3496 = vpack.c.b16 %v3451, %v3450
        %v3497 = vpack.c.b16 %v3453, %v3452
        %v3498 = vpack.c.b16 %v3455, %v3454
        %v3499 = vpack.c.b16 %v3457, %v3456
        %v3500 = vpack.c.b16 %v3459, %v3458
        %v3501 = vpack.c.b16 %v3461, %v3460
        %v3502 = vpack.c.b16 %v3463, %v3462
        %v3503 = vpack.c.b16 %v3465, %v3464
        %v3504 = vpack.c.b16 %v3467, %v3466
        %v3505 = vpack.c.b16 %v3469, %v3468
        %v3506 = vpack.c.b16 %v3471, %v3470
        %v3507 = vpack.c.b16 %v3473, %v3472
        %v3508 = vpack.c.b16 %v3475, %v3474
        %v3509 = vpack.c.b16 %v3477, %v3476
        %v3510 = vpack.c.b16 %v3479, %v3478
        %v3511 = vpack.c.b16 %v3481, %v3480
        %v3512 = vpack.c.b16 %v3483, %v3482
        %v3513 = vpack.c.b16 %v3485, %v3484
        %v3543 = vsel %vm1925, %v3316, 0
        %3545 = vmatprep.subr.bf16.mxu0 0
        %3546 = vmatpush1.bf16.msra.mxu0 %v3486
        %3547 = vmatprep.subr.bf16.mxu0 0
        %3548 = vmatpush1.bf16.msra.mxu0 %v3487
        %3549 = vmatprep.subr.bf16.mxu0 0
        %3550 = vmatpush1.bf16.msra.mxu0 %v3488
        %3551 = vmatprep.subr.bf16.mxu0 0
        %3552 = vmatpush1.bf16.msra.mxu0 %v3489
        %3553 = vmatprep.subr.bf16.mxu0 0
        %3554 = vmatpush1.bf16.msra.mxu0 %v3490
        %3555 = vmatprep.subr.bf16.mxu0 0
        %3556 = vmatpush1.bf16.msra.mxu0 %v3491
        %3557 = vmatprep.subr.bf16.mxu0 0
        %3558 = vmatpush1.bf16.msra.mxu0 %v3492
        %3559 = vmatprep.subr.bf16.mxu0 0
        %3560 = vmatpush1.bf16.msra.mxu0 %v3493
        %3561 = vmatprep.subr.bf16.mxu0 0
        %3562 = vmatpush1.bf16.msra.mxu0 %v3494
        %3563 = vmatprep.subr.bf16.mxu0 0
        %3564 = vmatpush1.bf16.msra.mxu0 %v3495
        %3565 = vmatprep.subr.bf16.mxu0 0
        %3566 = vmatpush1.bf16.msra.mxu0 %v3496
        %3567 = vmatprep.subr.bf16.mxu0 0
        %3568 = vmatpush1.bf16.msra.mxu0 %v3497
        %3569 = vmatprep.subr.bf16.mxu0 0
        %3570 = vmatpush1.bf16.msra.mxu0 %v3498
        %3571 = vmatprep.subr.bf16.mxu0 0
        %3572 = vmatpush1.bf16.msra.mxu0 %v3499
        %3573 = vmatprep.subr.bf16.mxu0 0
        %3574 = vmatpush1.bf16.msra.mxu0 %v3500
        %3575 = vmatprep.subr.bf16.mxu0 0
        %3576 = vmatpush1.bf16.msra.mxu0 %v3501
        %3577 = vmatprep.mubr.bf16.mxu0 %v3314
        %3578 = vmatmul.mubr.bf16.gmra.mrb[0].mxu0 %v3313
        %v3579 = vpop.f32.mrb[0].mxu0
        %v3580 = vadd.f32 0.0, %v3579
        %v3581 = vpop.f32.mrb[0].mxu0
        %v3582 = vpop.f32.mrb[0].mxu0
        %v3583 = vpop.f32.mrb[0].mxu0
        %3584 = vdwg.mxu0
        %3585 = vmatprep.subr.bf16.mxu0 0
        %3586 = vmatpush1.bf16.msra.mxu0 %v3502
        %3587 = vmatprep.subr.bf16.mxu0 0
        %3588 = vmatpush1.bf16.msra.mxu0 %v3503
        %3589 = vmatprep.subr.bf16.mxu0 0
        %3590 = vmatpush1.bf16.msra.mxu0 %v3504
        %3591 = vmatprep.subr.bf16.mxu0 0
        %3592 = vmatpush1.bf16.msra.mxu0 %v3505
        %3593 = vmatprep.subr.bf16.mxu0 0
        %3594 = vmatpush1.bf16.msra.mxu0 %v3506
        %3595 = vmatprep.subr.bf16.mxu0 0
        %3596 = vmatpush1.bf16.msra.mxu0 %v3507
        %3597 = vmatprep.subr.bf16.mxu0 0
        %3598 = vmatpush1.bf16.msra.mxu0 %v3508
        %3599 = vmatprep.subr.bf16.mxu0 0
        %3600 = vmatpush1.bf16.msra.mxu0 %v3509
        %3601 = vmatprep.subr.bf16.mxu0 0
        %3602 = vmatpush1.bf16.msra.mxu0 %v3510
        %3603 = vmatprep.subr.bf16.mxu0 0
        %3604 = vmatpush1.bf16.msra.mxu0 %v3511
        %3605 = vmatprep.subr.bf16.mxu0 0
        %3606 = vmatpush1.bf16.msra.mxu0 %v3512
        %3607 = vmatprep.subr.bf16.mxu0 0
        %3608 = vmatpush1.bf16.msra.mxu0 %v3513
        %3609 = vmatprep.subr.bf16.mxu0 0
        %3610 = vmatpush1.bf16.msra.mxu0 0
        %3611 = vmatprep.subr.bf16.mxu0 0
        %3612 = vmatpush1.bf16.msra.mxu0 0
        %3613 = vmatprep.subr.bf16.mxu0 0
        %3614 = vmatpush1.bf16.msra.mxu0 0
        %3615 = vmatprep.subr.bf16.mxu0 0
        %3616 = vmatpush1.bf16.msra.mxu0 0
        %3617 = vmatprep.mubr.bf16.mxu0 %v3543
        %3618 = vmatmul.mubr.bf16.gmra.mrb[0].mxu0 %v3315
        %v3619 = vpop.f32.mrb[0].mxu0
        %v3620 = vadd.f32 %v3580, %v3619
        %v3621 = vpop.f32.mrb[0].mxu0
        %v3622 = vpop.f32.mrb[0].mxu0
        %v3623 = vpop.f32.mrb[0].mxu0
        %3624 = vdwg.mxu0
        %v3625 = vadd.f32 %v2942, %v3620
        %s3626 = scalar_lea.vmem %s363, 32 [#allocation2]
        %v3627 = vld [vmem:[%s3626] sm:$0xff]
        %s3628 = scalar_lea.vmem %s363, 144 [#allocation2]
        %v3629 = vld [vmem:[%s3628] sm:$0xff]
        %v3631 = vunpack.c.l.b16 %v3627
        %v3632 = vunpack.c.h.b16 %v3627
        %v3633 = vpack.c.b16 %v3631, %v3631
        %v3634 = vpack.c.b16 %v3632, %v3632
        %v3637 = vsel %vm684, %v3634, 0
        %3639 = vmatprep.subr.bf16.mxu0 %v605
        %3640 = vmatpush1.bf16.msra.mxu0 %v604
        %3641 = vmatprep.subr.bf16.mxu0 %v609
        %3642 = vmatpush1.bf16.msra.mxu0 %v608
        %3643 = vmatprep.subr.bf16.mxu0 %v613
        %3644 = vmatpush1.bf16.msra.mxu0 %v612
        %3645 = vmatprep.subr.bf16.mxu0 %v617
        %3646 = vmatpush1.bf16.msra.mxu0 %v616
        %3647 = vmatprep.subr.bf16.mxu0 %v621
        %3648 = vmatpush1.bf16.msra.mxu0 %v620
        %3649 = vmatprep.subr.bf16.mxu0 %v625
        %3650 = vmatpush1.bf16.msra.mxu0 %v624
        %3651 = vmatprep.subr.bf16.mxu0 %v629
        %3652 = vmatpush1.bf16.msra.mxu0 %v628
        %3653 = vmatprep.subr.bf16.mxu0 %v633
        %3654 = vmatpush1.bf16.msra.mxu0 %v632
        %3655 = vmatprep.subr.bf16.mxu0 %v637
        %3656 = vmatpush1.bf16.msra.mxu0 %v636
        %3657 = vmatprep.subr.bf16.mxu0 %v641
        %3658 = vmatpush1.bf16.msra.mxu0 %v640
        %3659 = vmatprep.subr.bf16.mxu0 0
        %3660 = vmatpush1.bf16.msra.mxu0 0
        %3661 = vmatprep.subr.bf16.mxu0 0
        %3662 = vmatpush1.bf16.msra.mxu0 0
        %3663 = vmatprep.subr.bf16.mxu0 0
        %3664 = vmatpush1.bf16.msra.mxu0 0
        %3665 = vmatprep.subr.bf16.mxu0 0
        %3666 = vmatpush1.bf16.msra.mxu0 0
        %3667 = vmatprep.subr.bf16.mxu0 0
        %3668 = vmatpush1.bf16.msra.mxu0 0
        %3669 = vmatprep.subr.bf16.mxu0 0
        %3670 = vmatpush1.bf16.msra.mxu0 0
        %3671 = vmatprep.mubr.bf16.mxu0 %v3637
        %3672 = vmatmul.mubr.bf16.gmra.mrb[0].mxu0 %v3633
        %v3673 = vpop.f32.mrb[0].mxu0
        %v3674 = vadd.f32 0.0, %v3673
        %v3675 = vpop.f32.mrb[0].mxu0
        %v3676 = vadd.f32 0.0, %v3675
        %v3677 = vpop.f32.mrb[0].mxu0
        %v3678 = vpop.f32.mrb[0].mxu0
        %3679 = vdwg.mxu0
        %3680 = vmatprep.subr.bf16.mxu0 %v607
        %3681 = vmatpush1.bf16.msra.mxu0 %v606
        %3682 = vmatprep.subr.bf16.mxu0 %v611
        %3683 = vmatpush1.bf16.msra.mxu0 %v610
        %3684 = vmatprep.subr.bf16.mxu0 %v615
        %3685 = vmatpush1.bf16.msra.mxu0 %v614
        %3686 = vmatprep.subr.bf16.mxu0 %v619
        %3687 = vmatpush1.bf16.msra.mxu0 %v618
        %3688 = vmatprep.subr.bf16.mxu0 %v623
        %3689 = vmatpush1.bf16.msra.mxu0 %v622
        %3690 = vmatprep.subr.bf16.mxu0 %v627
        %3691 = vmatpush1.bf16.msra.mxu0 %v626
        %3692 = vmatprep.subr.bf16.mxu0 %v631
        %3693 = vmatpush1.bf16.msra.mxu0 %v630
        %3694 = vmatprep.subr.bf16.mxu0 %v635
        %3695 = vmatpush1.bf16.msra.mxu0 %v634
        %3696 = vmatprep.subr.bf16.mxu0 %v639
        %3697 = vmatpush1.bf16.msra.mxu0 %v638
        %3698 = vmatprep.subr.bf16.mxu0 %v643
        %3699 = vmatpush1.bf16.msra.mxu0 %v642
        %3700 = vmatprep.subr.bf16.mxu0 0
        %3701 = vmatpush1.bf16.msra.mxu0 0
        %3702 = vmatprep.subr.bf16.mxu0 0
        %3703 = vmatpush1.bf16.msra.mxu0 0
        %3704 = vmatprep.subr.bf16.mxu0 0
        %3705 = vmatpush1.bf16.msra.mxu0 0
        %3706 = vmatprep.subr.bf16.mxu0 0
        %3707 = vmatpush1.bf16.msra.mxu0 0
        %3708 = vmatprep.subr.bf16.mxu0 0
        %3709 = vmatpush1.bf16.msra.mxu0 0
        %3710 = vmatprep.subr.bf16.mxu0 0
        %3711 = vmatpush1.bf16.msra.mxu0 0
        %3712 = vmatprep.mubr.bf16.mxu0 %v3637
        %3713 = vmatmul.mubr.bf16.gmra.mrb[0].mxu0 %v3633
        %v3714 = vpop.f32.mrb[0].mxu0
        %v3715 = vadd.f32 0.0, %v3714
        %v3716 = vpop.f32.mrb[0].mxu0
        %v3717 = vadd.f32 0.0, %v3716
        %v3718 = vpop.f32.mrb[0].mxu0
        %v3719 = vpop.f32.mrb[0].mxu0
        %3720 = vdwg.mxu0
        %3721 = vmatprep.subr.bf16.mxu0 %v891
        %3722 = vmatpush1.bf16.msra.mxu0 %v890
        %3723 = vmatprep.subr.bf16.mxu0 %v895
        %3724 = vmatpush1.bf16.msra.mxu0 %v894
        %3725 = vmatprep.subr.bf16.mxu0 %v899
        %3726 = vmatpush1.bf16.msra.mxu0 %v898
        %3727 = vmatprep.subr.bf16.mxu0 %v903
        %3728 = vmatpush1.bf16.msra.mxu0 %v902
        %3729 = vmatprep.subr.bf16.mxu0 %v907
        %3730 = vmatpush1.bf16.msra.mxu0 %v906
        %3731 = vmatprep.subr.bf16.mxu0 %v911
        %3732 = vmatpush1.bf16.msra.mxu0 %v910
        %3733 = vmatprep.subr.bf16.mxu0 %v915
        %3734 = vmatpush1.bf16.msra.mxu0 %v914
        %3735 = vmatprep.subr.bf16.mxu0 %v919
        %3736 = vmatpush1.bf16.msra.mxu0 %v918
        %3737 = vmatprep.subr.bf16.mxu0 %v923
        %3738 = vmatpush1.bf16.msra.mxu0 %v922
        %3739 = vmatprep.subr.bf16.mxu0 %v927
        %3740 = vmatpush1.bf16.msra.mxu0 %v926
        %3741 = vmatprep.subr.bf16.mxu0 0
        %3742 = vmatpush1.bf16.msra.mxu0 0
        %3743 = vmatprep.subr.bf16.mxu0 0
        %3744 = vmatpush1.bf16.msra.mxu0 0
        %3745 = vmatprep.subr.bf16.mxu0 0
        %3746 = vmatpush1.bf16.msra.mxu0 0
        %3747 = vmatprep.subr.bf16.mxu0 0
        %3748 = vmatpush1.bf16.msra.mxu0 0
        %3749 = vmatprep.subr.bf16.mxu0 0
        %3750 = vmatpush1.bf16.msra.mxu0 0
        %3751 = vmatprep.subr.bf16.mxu0 0
        %3752 = vmatpush1.bf16.msra.mxu0 0
        %3753 = vmatprep.mubr.bf16.mxu0 %v3637
        %3754 = vmatmul.mubr.bf16.gmra.mrb[0].mxu0 %v3633
        %v3755 = vpop.f32.mrb[0].mxu0
        %v3756 = vadd.f32 0.0, %v3755
        %v3757 = vpop.f32.mrb[0].mxu0
        %v3758 = vadd.f32 0.0, %v3757
        %v3759 = vpop.f32.mrb[0].mxu0
        %v3760 = vpop.f32.mrb[0].mxu0
        %3761 = vdwg.mxu0
        %3762 = vmatprep.subr.bf16.mxu0 %v893
        %3763 = vmatpush1.bf16.msra.mxu0 %v892
        %3764 = vmatprep.subr.bf16.mxu0 %v897
        %3765 = vmatpush1.bf16.msra.mxu0 %v896
        %3766 = vmatprep.subr.bf16.mxu0 %v901
        %3767 = vmatpush1.bf16.msra.mxu0 %v900
        %3768 = vmatprep.subr.bf16.mxu0 %v905
        %3769 = vmatpush1.bf16.msra.mxu0 %v904
        %3770 = vmatprep.subr.bf16.mxu0 %v909
        %3771 = vmatpush1.bf16.msra.mxu0 %v908
        %3772 = vmatprep.subr.bf16.mxu0 %v913
        %3773 = vmatpush1.bf16.msra.mxu0 %v912
        %3774 = vmatprep.subr.bf16.mxu0 %v917
        %3775 = vmatpush1.bf16.msra.mxu0 %v916
        %3776 = vmatprep.subr.bf16.mxu0 %v921
        %3777 = vmatpush1.bf16.msra.mxu0 %v920
        %3778 = vmatprep.subr.bf16.mxu0 %v925
        %3779 = vmatpush1.bf16.msra.mxu0 %v924
        %3780 = vmatprep.subr.bf16.mxu0 %v929
        %3781 = vmatpush1.bf16.msra.mxu0 %v928
        %3782 = vmatprep.subr.bf16.mxu0 0
        %3783 = vmatpush1.bf16.msra.mxu0 0
        %3784 = vmatprep.subr.bf16.mxu0 0
        %3785 = vmatpush1.bf16.msra.mxu0 0
        %3786 = vmatprep.subr.bf16.mxu0 0
        %3787 = vmatpush1.bf16.msra.mxu0 0
        %3788 = vmatprep.subr.bf16.mxu0 0
        %3789 = vmatpush1.bf16.msra.mxu0 0
        %3790 = vmatprep.subr.bf16.mxu0 0
        %3791 = vmatpush1.bf16.msra.mxu0 0
        %3792 = vmatprep.subr.bf16.mxu0 0
        %3793 = vmatpush1.bf16.msra.mxu0 0
        %3794 = vmatprep.mubr.bf16.mxu0 %v3637
        %3795 = vmatmul.mubr.bf16.gmra.mrb[0].mxu0 %v3633
        %v3796 = vpop.f32.mrb[0].mxu0
        %v3797 = vadd.f32 0.0, %v3796
        %v3798 = vpop.f32.mrb[0].mxu0
        %v3799 = vadd.f32 0.0, %v3798
        %v3800 = vpop.f32.mrb[0].mxu0
        %v3801 = vpop.f32.mrb[0].mxu0
        %3802 = vdwg.mxu0
        %v3803 = vmax.f32 %v3674, %v3756
        %v3804 = vmax.f32 %v3676, %v3758
        %v3805 = vmax.f32 %v3715, %v3797
        %v3806 = vmax.f32 %v3717, %v3799
        %v3808 = vunpack.c.l.b16 %v3629
        %v3809 = vunpack.c.h.b16 %v3629
        %v3810 = vpack.c.b16 %v3808, %v3808
        %v3811 = vpack.c.b16 %v3809, %v3809
        %v3814 = vsel %vm684, %v3811, 0
        %3816 = vmatprep.subr.bf16.mxu0 %v605
        %3817 = vmatpush1.bf16.msra.mxu0 %v604
        %3818 = vmatprep.subr.bf16.mxu0 %v609
        %3819 = vmatpush1.bf16.msra.mxu0 %v608
        %3820 = vmatprep.subr.bf16.mxu0 %v613
        %3821 = vmatpush1.bf16.msra.mxu0 %v612
        %3822 = vmatprep.subr.bf16.mxu0 %v617
        %3823 = vmatpush1.bf16.msra.mxu0 %v616
        %3824 = vmatprep.subr.bf16.mxu0 %v621
        %3825 = vmatpush1.bf16.msra.mxu0 %v620
        %3826 = vmatprep.subr.bf16.mxu0 %v625
        %3827 = vmatpush1.bf16.msra.mxu0 %v624
        %3828 = vmatprep.subr.bf16.mxu0 %v629
        %3829 = vmatpush1.bf16.msra.mxu0 %v628
        %3830 = vmatprep.subr.bf16.mxu0 %v633
        %3831 = vmatpush1.bf16.msra.mxu0 %v632
        %3832 = vmatprep.subr.bf16.mxu0 %v637
        %3833 = vmatpush1.bf16.msra.mxu0 %v636
        %3834 = vmatprep.subr.bf16.mxu0 %v641
        %3835 = vmatpush1.bf16.msra.mxu0 %v640
        %3836 = vmatprep.subr.bf16.mxu0 0
        %3837 = vmatpush1.bf16.msra.mxu0 0
        %3838 = vmatprep.subr.bf16.mxu0 0
        %3839 = vmatpush1.bf16.msra.mxu0 0
        %3840 = vmatprep.subr.bf16.mxu0 0
        %3841 = vmatpush1.bf16.msra.mxu0 0
        %3842 = vmatprep.subr.bf16.mxu0 0
        %3843 = vmatpush1.bf16.msra.mxu0 0
        %3844 = vmatprep.subr.bf16.mxu0 0
        %3845 = vmatpush1.bf16.msra.mxu0 0
        %3846 = vmatprep.subr.bf16.mxu0 0
        %3847 = vmatpush1.bf16.msra.mxu0 0
        %3848 = vmatprep.mubr.bf16.mxu0 %v3814
        %3849 = vmatmul.mubr.bf16.gmra.mrb[0].mxu0 %v3810
        %v3850 = vpop.f32.mrb[0].mxu0
        %v3851 = vadd.f32 0.0, %v3850
        %v3852 = vpop.f32.mrb[0].mxu0
        %v3853 = vadd.f32 0.0, %v3852
        %v3854 = vpop.f32.mrb[0].mxu0
        %v3855 = vpop.f32.mrb[0].mxu0
        %3856 = vdwg.mxu0
        %3857 = vmatprep.subr.bf16.mxu0 %v607
        %3858 = vmatpush1.bf16.msra.mxu0 %v606
        %3859 = vmatprep.subr.bf16.mxu0 %v611
        %3860 = vmatpush1.bf16.msra.mxu0 %v610
        %3861 = vmatprep.subr.bf16.mxu0 %v615
        %3862 = vmatpush1.bf16.msra.mxu0 %v614
        %3863 = vmatprep.subr.bf16.mxu0 %v619
        %3864 = vmatpush1.bf16.msra.mxu0 %v618
        %3865 = vmatprep.subr.bf16.mxu0 %v623
        %3866 = vmatpush1.bf16.msra.mxu0 %v622
        %3867 = vmatprep.subr.bf16.mxu0 %v627
        %3868 = vmatpush1.bf16.msra.mxu0 %v626
        %3869 = vmatprep.subr.bf16.mxu0 %v631
        %3870 = vmatpush1.bf16.msra.mxu0 %v630
        %3871 = vmatprep.subr.bf16.mxu0 %v635
        %3872 = vmatpush1.bf16.msra.mxu0 %v634
        %3873 = vmatprep.subr.bf16.mxu0 %v639
        %3874 = vmatpush1.bf16.msra.mxu0 %v638
        %3875 = vmatprep.subr.bf16.mxu0 %v643
        %3876 = vmatpush1.bf16.msra.mxu0 %v642
        %3877 = vmatprep.subr.bf16.mxu0 0
        %3878 = vmatpush1.bf16.msra.mxu0 0
        %3879 = vmatprep.subr.bf16.mxu0 0
        %3880 = vmatpush1.bf16.msra.mxu0 0
        %3881 = vmatprep.subr.bf16.mxu0 0
        %3882 = vmatpush1.bf16.msra.mxu0 0
        %3883 = vmatprep.subr.bf16.mxu0 0
        %3884 = vmatpush1.bf16.msra.mxu0 0
        %3885 = vmatprep.subr.bf16.mxu0 0
        %3886 = vmatpush1.bf16.msra.mxu0 0
        %3887 = vmatprep.subr.bf16.mxu0 0
        %3888 = vmatpush1.bf16.msra.mxu0 0
        %3889 = vmatprep.mubr.bf16.mxu0 %v3814
        %3890 = vmatmul.mubr.bf16.gmra.mrb[0].mxu0 %v3810
        %v3891 = vpop.f32.mrb[0].mxu0
        %v3892 = vadd.f32 0.0, %v3891
        %v3893 = vpop.f32.mrb[0].mxu0
        %v3894 = vadd.f32 0.0, %v3893
        %v3895 = vpop.f32.mrb[0].mxu0
        %v3896 = vpop.f32.mrb[0].mxu0
        %3897 = vdwg.mxu0
        %3898 = vmatprep.subr.bf16.mxu0 %v891
        %3899 = vmatpush1.bf16.msra.mxu0 %v890
        %3900 = vmatprep.subr.bf16.mxu0 %v895
        %3901 = vmatpush1.bf16.msra.mxu0 %v894
        %3902 = vmatprep.subr.bf16.mxu0 %v899
        %3903 = vmatpush1.bf16.msra.mxu0 %v898
        %3904 = vmatprep.subr.bf16.mxu0 %v903
        %3905 = vmatpush1.bf16.msra.mxu0 %v902
        %3906 = vmatprep.subr.bf16.mxu0 %v907
        %3907 = vmatpush1.bf16.msra.mxu0 %v906
        %3908 = vmatprep.subr.bf16.mxu0 %v911
        %3909 = vmatpush1.bf16.msra.mxu0 %v910
        %3910 = vmatprep.subr.bf16.mxu0 %v915
        %3911 = vmatpush1.bf16.msra.mxu0 %v914
        %3912 = vmatprep.subr.bf16.mxu0 %v919
        %3913 = vmatpush1.bf16.msra.mxu0 %v918
        %3914 = vmatprep.subr.bf16.mxu0 %v923
        %3915 = vmatpush1.bf16.msra.mxu0 %v922
        %3916 = vmatprep.subr.bf16.mxu0 %v927
        %3917 = vmatpush1.bf16.msra.mxu0 %v926
        %3918 = vmatprep.subr.bf16.mxu0 0
        %3919 = vmatpush1.bf16.msra.mxu0 0
        %3920 = vmatprep.subr.bf16.mxu0 0
        %3921 = vmatpush1.bf16.msra.mxu0 0
        %3922 = vmatprep.subr.bf16.mxu0 0
        %3923 = vmatpush1.bf16.msra.mxu0 0
        %3924 = vmatprep.subr.bf16.mxu0 0
        %3925 = vmatpush1.bf16.msra.mxu0 0
        %3926 = vmatprep.subr.bf16.mxu0 0
        %3927 = vmatpush1.bf16.msra.mxu0 0
        %3928 = vmatprep.subr.bf16.mxu0 0
        %3929 = vmatpush1.bf16.msra.mxu0 0
        %3930 = vmatprep.mubr.bf16.mxu0 %v3814
        %3931 = vmatmul.mubr.bf16.gmra.mrb[0].mxu0 %v3810
        %v3932 = vpop.f32.mrb[0].mxu0
        %v3933 = vadd.f32 0.0, %v3932
        %v3934 = vpop.f32.mrb[0].mxu0
        %v3935 = vadd.f32 0.0, %v3934
        %v3936 = vpop.f32.mrb[0].mxu0
        %v3937 = vpop.f32.mrb[0].mxu0
        %3938 = vdwg.mxu0
        %3939 = vmatprep.subr.bf16.mxu0 %v893
        %3940 = vmatpush1.bf16.msra.mxu0 %v892
        %3941 = vmatprep.subr.bf16.mxu0 %v897
        %3942 = vmatpush1.bf16.msra.mxu0 %v896
        %3943 = vmatprep.subr.bf16.mxu0 %v901
        %3944 = vmatpush1.bf16.msra.mxu0 %v900
        %3945 = vmatprep.subr.bf16.mxu0 %v905
        %3946 = vmatpush1.bf16.msra.mxu0 %v904
        %3947 = vmatprep.subr.bf16.mxu0 %v909
        %3948 = vmatpush1.bf16.msra.mxu0 %v908
        %3949 = vmatprep.subr.bf16.mxu0 %v913
        %3950 = vmatpush1.bf16.msra.mxu0 %v912
        %3951 = vmatprep.subr.bf16.mxu0 %v917
        %3952 = vmatpush1.bf16.msra.mxu0 %v916
        %3953 = vmatprep.subr.bf16.mxu0 %v921
        %3954 = vmatpush1.bf16.msra.mxu0 %v920
        %3955 = vmatprep.subr.bf16.mxu0 %v925
        %3956 = vmatpush1.bf16.msra.mxu0 %v924
        %3957 = vmatprep.subr.bf16.mxu0 %v929
        %3958 = vmatpush1.bf16.msra.mxu0 %v928
        %3959 = vmatprep.subr.bf16.mxu0 0
        %3960 = vmatpush1.bf16.msra.mxu0 0
        %3961 = vmatprep.subr.bf16.mxu0 0
        %3962 = vmatpush1.bf16.msra.mxu0 0
        %3963 = vmatprep.subr.bf16.mxu0 0
        %3964 = vmatpush1.bf16.msra.mxu0 0
        %3965 = vmatprep.subr.bf16.mxu0 0
        %3966 = vmatpush1.bf16.msra.mxu0 0
        %3967 = vmatprep.subr.bf16.mxu0 0
        %3968 = vmatpush1.bf16.msra.mxu0 0
        %3969 = vmatprep.subr.bf16.mxu0 0
        %3970 = vmatpush1.bf16.msra.mxu0 0
        %3971 = vmatprep.mubr.bf16.mxu0 %v3814
        %3972 = vmatmul.mubr.bf16.gmra.mrb[0].mxu0 %v3810
        %v3973 = vpop.f32.mrb[0].mxu0
        %v3974 = vadd.f32 0.0, %v3973
        %v3975 = vpop.f32.mrb[0].mxu0
        %v3976 = vadd.f32 0.0, %v3975
        %v3977 = vpop.f32.mrb[0].mxu0
        %v3978 = vpop.f32.mrb[0].mxu0
        %3979 = vdwg.mxu0
        %v3980 = vmax.f32 %v3851, %v3933
        %v3981 = vmax.f32 %v3853, %v3935
        %v3982 = vmax.f32 %v3892, %v3974
        %v3983 = vmax.f32 %v3894, %v3976
        %v3984 = vmax.f32 %v3803, %v3980
        %v3985 = vmax.f32 %v3804, %v3981
        %v3986 = vmax.f32 %v3805, %v3982
        %v3987 = vmax.f32 %v3806, %v3983
        %v3988 = vadd.f32 %v3984, %v1241
        %v3989 = vadd.f32 %v3985, %v1245
        %v3990 = vadd.f32 %v3986, %v1249
        %v3991 = vadd.f32 %v3987, %v1253
        %v3992 = vmax.f32 %v3988, 0.0
        %v3993 = vmax.f32 %v3989, 0.0
        %v3994 = vmax.f32 %v3990, 0.0
        %v3995 = vmax.f32 %v3991, 0.0
        %v3996 = vpack.c.bf16 %v3992, %v3992
        %v3997 = vpack.c.bf16 %v3993, %v3993
        %v3998 = vpack.c.bf16 %v3994, %v3994
        %v3999 = vpack.c.bf16 %v3995, %v3995
        %s4000 = scalar_lea.vmem %s4, 896
        %v4001 = vld [vmem:[%s4000] sm:$0xf]
        %v4002 = vld [vmem:[%s4000 + $0x4] sm:$0xf]
        %v4003 = vld [vmem:[%s4000 + $0x8] sm:$0xf]
        %v4004 = vld [vmem:[%s4000 + $0xc] sm:$0xf]
        %v4005 = vld [vmem:[%s4000 + $0x10] sm:$0xf]
        %v4006 = vld [vmem:[%s4000 + $0x14] sm:$0xf]
        %v4007 = vld [vmem:[%s4000 + $0x18] sm:$0xf]
        %v4008 = vld [vmem:[%s4000 + $0x1c] sm:$0xf]
        %v4009 = vld [vmem:[%s4000 + $0x20] sm:$0xf]
        %v4010 = vld [vmem:[%s4000 + $0x24] sm:$0xf]
        %v4011 = vld [vmem:[%s4000 + $0x28] sm:$0xf]
        %v4012 = vld [vmem:[%s4000 + $0x2c] sm:$0xf]
        %v4013 = vld [vmem:[%s4000 + $0x30] sm:$0xf]
        %v4014 = vld [vmem:[%s4000 + $0x34] sm:$0xf]
        %v4015 = vld [vmem:[%s4000 + $0x38] sm:$0xf]
        %v4016 = vld [vmem:[%s4000 + $0x3c] sm:$0xf]
        %v4017 = vld [vmem:[%s4000 + $0x40] sm:$0xf]
        %v4018 = vld [vmem:[%s4000 + $0x44] sm:$0xf]
        %v4019 = vld [vmem:[%s4000 + $0x48] sm:$0xf]
        %v4020 = vld [vmem:[%s4000 + $0x4c] sm:$0xf]
        %v4021 = vld [vmem:[%s4000 + $0x50] sm:$0xf]
        %v4022 = vld [vmem:[%s4000 + $0x54] sm:$0xf]
        %v4023 = vld [vmem:[%s4000 + $0x58] sm:$0xf]
        %v4024 = vld [vmem:[%s4000 + $0x5c] sm:$0xf]
        %v4025 = vld [vmem:[%s4000 + $0x60] sm:$0xf]
        %v4026 = vld [vmem:[%s4000 + $0x64] sm:$0xf]
        %v4027 = vld [vmem:[%s4000 + $0x68] sm:$0xf]
        %v4028 = vld [vmem:[%s4000 + $0x6c] sm:$0xf]
        %v4029 = vld [vmem:[%s4000 + $0x70] sm:$0xf]
        %v4030 = vld [vmem:[%s4000 + $0x74] sm:$0xf]
        %v4031 = vld [vmem:[%s4000 + $0x78] sm:$0xf]
        %v4032 = vld [vmem:[%s4000 + $0x7c] sm:$0xf]
        %v4033 = vld [vmem:[%s4000 + $0x80] sm:$0xf]
        %v4034 = vld [vmem:[%s4000 + $0x84] sm:$0xf]
        %v4035 = vld [vmem:[%s4000 + $0x88] sm:$0xf]
        %v4036 = vld [vmem:[%s4000 + $0x8c] sm:$0xf]
        %v4037 = vld [vmem:[%s4000 + $0x90] sm:$0xf]
        %v4038 = vld [vmem:[%s4000 + $0x94] sm:$0xf]
        %v4039 = vld [vmem:[%s4000 + $0x98] sm:$0xf]
        %v4040 = vld [vmem:[%s4000 + $0x9c] sm:$0xf]
        %v4041 = vld [vmem:[%s4000 + $0xa0] sm:$0xf]
        %v4042 = vld [vmem:[%s4000 + $0xa4] sm:$0xf]
        %v4043 = vld [vmem:[%s4000 + $0xa8] sm:$0xf]
        %v4044 = vld [vmem:[%s4000 + $0xac] sm:$0xf]
        %v4045 = vld [vmem:[%s4000 + $0xb0] sm:$0xf]
        %v4046 = vld [vmem:[%s4000 + $0xb4] sm:$0xf]
        %v4047 = vld [vmem:[%s4000 + $0xb8] sm:$0xf]
        %v4048 = vld [vmem:[%s4000 + $0xbc] sm:$0xf]
        %v4049 = vld [vmem:[%s4000 + $0xc0] sm:$0xf]
        %v4050 = vld [vmem:[%s4000 + $0xc4] sm:$0xf]
        %v4051 = vld [vmem:[%s4000 + $0xc8] sm:$0xf]
        %v4052 = vld [vmem:[%s4000 + $0xcc] sm:$0xf]
        %v4053 = vld [vmem:[%s4000 + $0xd0] sm:$0xf]
        %v4054 = vld [vmem:[%s4000 + $0xd4] sm:$0xf]
        %v4055 = vld [vmem:[%s4000 + $0xd8] sm:$0xf]
        %v4056 = vld [vmem:[%s4000 + $0xdc] sm:$0xf]
        %v4113 = vunpack.c.l.b16 %v4001
        %v4114 = vunpack.c.l.b16 %v4002
        %v4115 = vunpack.c.l.b16 %v4003
        %v4116 = vunpack.c.l.b16 %v4004
        %v4117 = vunpack.c.l.b16 %v4005
        %v4118 = vunpack.c.l.b16 %v4006
        %v4119 = vunpack.c.l.b16 %v4007
        %v4120 = vunpack.c.l.b16 %v4008
        %v4121 = vunpack.c.l.b16 %v4009
        %v4122 = vunpack.c.l.b16 %v4010
        %v4123 = vunpack.c.l.b16 %v4011
        %v4124 = vunpack.c.l.b16 %v4012
        %v4125 = vunpack.c.l.b16 %v4013
        %v4126 = vunpack.c.l.b16 %v4014
        %v4127 = vunpack.c.l.b16 %v4015
        %v4128 = vunpack.c.l.b16 %v4016
        %v4129 = vunpack.c.l.b16 %v4017
        %v4130 = vunpack.c.l.b16 %v4018
        %v4131 = vunpack.c.l.b16 %v4019
        %v4132 = vunpack.c.l.b16 %v4020
        %v4133 = vunpack.c.l.b16 %v4021
        %v4134 = vunpack.c.l.b16 %v4022
        %v4135 = vunpack.c.l.b16 %v4023
        %v4136 = vunpack.c.l.b16 %v4024
        %v4137 = vunpack.c.l.b16 %v4025
        %v4138 = vunpack.c.l.b16 %v4026
        %v4139 = vunpack.c.l.b16 %v4027
        %v4140 = vunpack.c.l.b16 %v4028
        %v4141 = vunpack.c.l.b16 %v4029
        %v4142 = vunpack.c.l.b16 %v4030
        %v4143 = vunpack.c.l.b16 %v4031
        %v4144 = vunpack.c.l.b16 %v4032
        %v4145 = vunpack.c.l.b16 %v4033
        %v4146 = vunpack.c.l.b16 %v4034
        %v4147 = vunpack.c.l.b16 %v4035
        %v4148 = vunpack.c.l.b16 %v4036
        %v4149 = vunpack.c.l.b16 %v4037
        %v4150 = vunpack.c.l.b16 %v4038
        %v4151 = vunpack.c.l.b16 %v4039
        %v4152 = vunpack.c.l.b16 %v4040
        %v4153 = vunpack.c.l.b16 %v4041
        %v4154 = vunpack.c.l.b16 %v4042
        %v4155 = vunpack.c.l.b16 %v4043
        %v4156 = vunpack.c.l.b16 %v4044
        %v4157 = vunpack.c.l.b16 %v4045
        %v4158 = vunpack.c.l.b16 %v4046
        %v4159 = vunpack.c.l.b16 %v4047
        %v4160 = vunpack.c.l.b16 %v4048
        %v4161 = vunpack.c.l.b16 %v4049
        %v4162 = vunpack.c.l.b16 %v4050
        %v4163 = vunpack.c.l.b16 %v4051
        %v4164 = vunpack.c.l.b16 %v4052
        %v4165 = vunpack.c.l.b16 %v4053
        %v4166 = vunpack.c.l.b16 %v4054
        %v4167 = vunpack.c.l.b16 %v4055
        %v4168 = vunpack.c.l.b16 %v4056
        %v4169 = vpack.c.b16 %v4114, %v4113
        %v4170 = vpack.c.b16 %v4116, %v4115
        %v4171 = vpack.c.b16 %v4118, %v4117
        %v4172 = vpack.c.b16 %v4120, %v4119
        %v4173 = vpack.c.b16 %v4122, %v4121
        %v4174 = vpack.c.b16 %v4124, %v4123
        %v4175 = vpack.c.b16 %v4126, %v4125
        %v4176 = vpack.c.b16 %v4128, %v4127
        %v4177 = vpack.c.b16 %v4130, %v4129
        %v4178 = vpack.c.b16 %v4132, %v4131
        %v4179 = vpack.c.b16 %v4134, %v4133
        %v4180 = vpack.c.b16 %v4136, %v4135
        %v4181 = vpack.c.b16 %v4138, %v4137
        %v4182 = vpack.c.b16 %v4140, %v4139
        %v4183 = vpack.c.b16 %v4142, %v4141
        %v4184 = vpack.c.b16 %v4144, %v4143
        %v4185 = vpack.c.b16 %v4146, %v4145
        %v4186 = vpack.c.b16 %v4148, %v4147
        %v4187 = vpack.c.b16 %v4150, %v4149
        %v4188 = vpack.c.b16 %v4152, %v4151
        %v4189 = vpack.c.b16 %v4154, %v4153
        %v4190 = vpack.c.b16 %v4156, %v4155
        %v4191 = vpack.c.b16 %v4158, %v4157
        %v4192 = vpack.c.b16 %v4160, %v4159
        %v4193 = vpack.c.b16 %v4162, %v4161
        %v4194 = vpack.c.b16 %v4164, %v4163
        %v4195 = vpack.c.b16 %v4166, %v4165
        %v4196 = vpack.c.b16 %v4168, %v4167
        %v4226 = vsel %vm1925, %v3999, 0
        %4228 = vmatprep.subr.bf16.mxu0 0
        %4229 = vmatpush1.bf16.msra.mxu0 %v4169
        %4230 = vmatprep.subr.bf16.mxu0 0
        %4231 = vmatpush1.bf16.msra.mxu0 %v4170
        %4232 = vmatprep.subr.bf16.mxu0 0
        %4233 = vmatpush1.bf16.msra.mxu0 %v4171
        %4234 = vmatprep.subr.bf16.mxu0 0
        %4235 = vmatpush1.bf16.msra.mxu0 %v4172
        %4236 = vmatprep.subr.bf16.mxu0 0
        %4237 = vmatpush1.bf16.msra.mxu0 %v4173
        %4238 = vmatprep.subr.bf16.mxu0 0
        %4239 = vmatpush1.bf16.msra.mxu0 %v4174
        %4240 = vmatprep.subr.bf16.mxu0 0
        %4241 = vmatpush1.bf16.msra.mxu0 %v4175
        %4242 = vmatprep.subr.bf16.mxu0 0
        %4243 = vmatpush1.bf16.msra.mxu0 %v4176
        %4244 = vmatprep.subr.bf16.mxu0 0
        %4245 = vmatpush1.bf16.msra.mxu0 %v4177
        %4246 = vmatprep.subr.bf16.mxu0 0
        %4247 = vmatpush1.bf16.msra.mxu0 %v4178
        %4248 = vmatprep.subr.bf16.mxu0 0
        %4249 = vmatpush1.bf16.msra.mxu0 %v4179
        %4250 = vmatprep.subr.bf16.mxu0 0
        %4251 = vmatpush1.bf16.msra.mxu0 %v4180
        %4252 = vmatprep.subr.bf16.mxu0 0
        %4253 = vmatpush1.bf16.msra.mxu0 %v4181
        %4254 = vmatprep.subr.bf16.mxu0 0
        %4255 = vmatpush1.bf16.msra.mxu0 %v4182
        %4256 = vmatprep.subr.bf16.mxu0 0
        %4257 = vmatpush1.bf16.msra.mxu0 %v4183
        %4258 = vmatprep.subr.bf16.mxu0 0
        %4259 = vmatpush1.bf16.msra.mxu0 %v4184
        %4260 = vmatprep.mubr.bf16.mxu0 %v3997
        %4261 = vmatmul.mubr.bf16.gmra.mrb[0].mxu0 %v3996
        %v4262 = vpop.f32.mrb[0].mxu0
        %v4263 = vadd.f32 0.0, %v4262
        %v4264 = vpop.f32.mrb[0].mxu0
        %v4265 = vpop.f32.mrb[0].mxu0
        %v4266 = vpop.f32.mrb[0].mxu0
        %4267 = vdwg.mxu0
        %4268 = vmatprep.subr.bf16.mxu0 0
        %4269 = vmatpush1.bf16.msra.mxu0 %v4185
        %4270 = vmatprep.subr.bf16.mxu0 0
        %4271 = vmatpush1.bf16.msra.mxu0 %v4186
        %4272 = vmatprep.subr.bf16.mxu0 0
        %4273 = vmatpush1.bf16.msra.mxu0 %v4187
        %4274 = vmatprep.subr.bf16.mxu0 0
        %4275 = vmatpush1.bf16.msra.mxu0 %v4188
        %4276 = vmatprep.subr.bf16.mxu0 0
        %4277 = vmatpush1.bf16.msra.mxu0 %v4189
        %4278 = vmatprep.subr.bf16.mxu0 0
        %4279 = vmatpush1.bf16.msra.mxu0 %v4190
        %4280 = vmatprep.subr.bf16.mxu0 0
        %4281 = vmatpush1.bf16.msra.mxu0 %v4191
        %4282 = vmatprep.subr.bf16.mxu0 0
        %4283 = vmatpush1.bf16.msra.mxu0 %v4192
        %4284 = vmatprep.subr.bf16.mxu0 0
        %4285 = vmatpush1.bf16.msra.mxu0 %v4193
        %4286 = vmatprep.subr.bf16.mxu0 0
        %4287 = vmatpush1.bf16.msra.mxu0 %v4194
        %4288 = vmatprep.subr.bf16.mxu0 0
        %4289 = vmatpush1.bf16.msra.mxu0 %v4195
        %4290 = vmatprep.subr.bf16.mxu0 0
        %4291 = vmatpush1.bf16.msra.mxu0 %v4196
        %4292 = vmatprep.subr.bf16.mxu0 0
        %4293 = vmatpush1.bf16.msra.mxu0 0
        %4294 = vmatprep.subr.bf16.mxu0 0
        %4295 = vmatpush1.bf16.msra.mxu0 0
        %4296 = vmatprep.subr.bf16.mxu0 0
        %4297 = vmatpush1.bf16.msra.mxu0 0
        %4298 = vmatprep.subr.bf16.mxu0 0
        %4299 = vmatpush1.bf16.msra.mxu0 0
        %4300 = vmatprep.mubr.bf16.mxu0 %v4226
        %4301 = vmatmul.mubr.bf16.gmra.mrb[0].mxu0 %v3998
        %v4302 = vpop.f32.mrb[0].mxu0
        %v4303 = vadd.f32 %v4263, %v4302
        %v4304 = vpop.f32.mrb[0].mxu0
        %v4305 = vpop.f32.mrb[0].mxu0
        %v4306 = vpop.f32.mrb[0].mxu0
        %4307 = vdwg.mxu0
        %v4308 = vadd.f32 %v3625, %v4303
        %s4309 = scalar_lea.vmem %s363, 40 [#allocation2]
        %v4310 = vld [vmem:[%s4309] sm:$0xff]
        %s4311 = scalar_lea.vmem %s363, 152 [#allocation2]
        %v4312 = vld [vmem:[%s4311] sm:$0xff]
        %v4314 = vunpack.c.l.b16 %v4310
        %v4315 = vunpack.c.h.b16 %v4310
        %v4316 = vpack.c.b16 %v4314, %v4314
        %v4317 = vpack.c.b16 %v4315, %v4315
        %v4320 = vsel %vm684, %v4317, 0
        %4322 = vmatprep.subr.bf16.mxu0 %v605
        %4323 = vmatpush1.bf16.msra.mxu0 %v604
        %4324 = vmatprep.subr.bf16.mxu0 %v609
        %4325 = vmatpush1.bf16.msra.mxu0 %v608
        %4326 = vmatprep.subr.bf16.mxu0 %v613
        %4327 = vmatpush1.bf16.msra.mxu0 %v612
        %4328 = vmatprep.subr.bf16.mxu0 %v617
        %4329 = vmatpush1.bf16.msra.mxu0 %v616
        %4330 = vmatprep.subr.bf16.mxu0 %v621
        %4331 = vmatpush1.bf16.msra.mxu0 %v620
        %4332 = vmatprep.subr.bf16.mxu0 %v625
        %4333 = vmatpush1.bf16.msra.mxu0 %v624
        %4334 = vmatprep.subr.bf16.mxu0 %v629
        %4335 = vmatpush1.bf16.msra.mxu0 %v628
        %4336 = vmatprep.subr.bf16.mxu0 %v633
        %4337 = vmatpush1.bf16.msra.mxu0 %v632
        %4338 = vmatprep.subr.bf16.mxu0 %v637
        %4339 = vmatpush1.bf16.msra.mxu0 %v636
        %4340 = vmatprep.subr.bf16.mxu0 %v641
        %4341 = vmatpush1.bf16.msra.mxu0 %v640
        %4342 = vmatprep.subr.bf16.mxu0 0
        %4343 = vmatpush1.bf16.msra.mxu0 0
        %4344 = vmatprep.subr.bf16.mxu0 0
        %4345 = vmatpush1.bf16.msra.mxu0 0
        %4346 = vmatprep.subr.bf16.mxu0 0
        %4347 = vmatpush1.bf16.msra.mxu0 0
        %4348 = vmatprep.subr.bf16.mxu0 0
        %4349 = vmatpush1.bf16.msra.mxu0 0
        %4350 = vmatprep.subr.bf16.mxu0 0
        %4351 = vmatpush1.bf16.msra.mxu0 0
        %4352 = vmatprep.subr.bf16.mxu0 0
        %4353 = vmatpush1.bf16.msra.mxu0 0
        %4354 = vmatprep.mubr.bf16.mxu0 %v4320
        %4355 = vmatmul.mubr.bf16.gmra.mrb[0].mxu0 %v4316
        %v4356 = vpop.f32.mrb[0].mxu0
        %v4357 = vadd.f32 0.0, %v4356
        %v4358 = vpop.f32.mrb[0].mxu0
        %v4359 = vadd.f32 0.0, %v4358
        %v4360 = vpop.f32.mrb[0].mxu0
        %v4361 = vpop.f32.mrb[0].mxu0
        %4362 = vdwg.mxu0
        %4363 = vmatprep.subr.bf16.mxu0 %v607
        %4364 = vmatpush1.bf16.msra.mxu0 %v606
        %4365 = vmatprep.subr.bf16.mxu0 %v611
        %4366 = vmatpush1.bf16.msra.mxu0 %v610
        %4367 = vmatprep.subr.bf16.mxu0 %v615
        %4368 = vmatpush1.bf16.msra.mxu0 %v614
        %4369 = vmatprep.subr.bf16.mxu0 %v619
        %4370 = vmatpush1.bf16.msra.mxu0 %v618
        %4371 = vmatprep.subr.bf16.mxu0 %v623
        %4372 = vmatpush1.bf16.msra.mxu0 %v622
        %4373 = vmatprep.subr.bf16.mxu0 %v627
        %4374 = vmatpush1.bf16.msra.mxu0 %v626
        %4375 = vmatprep.subr.bf16.mxu0 %v631
        %4376 = vmatpush1.bf16.msra.mxu0 %v630
        %4377 = vmatprep.subr.bf16.mxu0 %v635
        %4378 = vmatpush1.bf16.msra.mxu0 %v634
        %4379 = vmatprep.subr.bf16.mxu0 %v639
        %4380 = vmatpush1.bf16.msra.mxu0 %v638
        %4381 = vmatprep.subr.bf16.mxu0 %v643
        %4382 = vmatpush1.bf16.msra.mxu0 %v642
        %4383 = vmatprep.subr.bf16.mxu0 0
        %4384 = vmatpush1.bf16.msra.mxu0 0
        %4385 = vmatprep.subr.bf16.mxu0 0
        %4386 = vmatpush1.bf16.msra.mxu0 0
        %4387 = vmatprep.subr.bf16.mxu0 0
        %4388 = vmatpush1.bf16.msra.mxu0 0
        %4389 = vmatprep.subr.bf16.mxu0 0
        %4390 = vmatpush1.bf16.msra.mxu0 0
        %4391 = vmatprep.subr.bf16.mxu0 0
        %4392 = vmatpush1.bf16.msra.mxu0 0
        %4393 = vmatprep.subr.bf16.mxu0 0
        %4394 = vmatpush1.bf16.msra.mxu0 0
        %4395 = vmatprep.mubr.bf16.mxu0 %v4320
        %4396 = vmatmul.mubr.bf16.gmra.mrb[0].mxu0 %v4316
        %v4397 = vpop.f32.mrb[0].mxu0
        %v4398 = vadd.f32 0.0, %v4397
        %v4399 = vpop.f32.mrb[0].mxu0
        %v4400 = vadd.f32 0.0, %v4399
        %v4401 = vpop.f32.mrb[0].mxu0
        %v4402 = vpop.f32.mrb[0].mxu0
        %4403 = vdwg.mxu0
        %4404 = vmatprep.subr.bf16.mxu0 %v891
        %4405 = vmatpush1.bf16.msra.mxu0 %v890
        %4406 = vmatprep.subr.bf16.mxu0 %v895
        %4407 = vmatpush1.bf16.msra.mxu0 %v894
        %4408 = vmatprep.subr.bf16.mxu0 %v899
        %4409 = vmatpush1.bf16.msra.mxu0 %v898
        %4410 = vmatprep.subr.bf16.mxu0 %v903
        %4411 = vmatpush1.bf16.msra.mxu0 %v902
        %4412 = vmatprep.subr.bf16.mxu0 %v907
        %4413 = vmatpush1.bf16.msra.mxu0 %v906
        %4414 = vmatprep.subr.bf16.mxu0 %v911
        %4415 = vmatpush1.bf16.msra.mxu0 %v910
        %4416 = vmatprep.subr.bf16.mxu0 %v915
        %4417 = vmatpush1.bf16.msra.mxu0 %v914
        %4418 = vmatprep.subr.bf16.mxu0 %v919
        %4419 = vmatpush1.bf16.msra.mxu0 %v918
        %4420 = vmatprep.subr.bf16.mxu0 %v923
        %4421 = vmatpush1.bf16.msra.mxu0 %v922
        %4422 = vmatprep.subr.bf16.mxu0 %v927
        %4423 = vmatpush1.bf16.msra.mxu0 %v926
        %4424 = vmatprep.subr.bf16.mxu0 0
        %4425 = vmatpush1.bf16.msra.mxu0 0
        %4426 = vmatprep.subr.bf16.mxu0 0
        %4427 = vmatpush1.bf16.msra.mxu0 0
        %4428 = vmatprep.subr.bf16.mxu0 0
        %4429 = vmatpush1.bf16.msra.mxu0 0
        %4430 = vmatprep.subr.bf16.mxu0 0
        %4431 = vmatpush1.bf16.msra.mxu0 0
        %4432 = vmatprep.subr.bf16.mxu0 0
        %4433 = vmatpush1.bf16.msra.mxu0 0
        %4434 = vmatprep.subr.bf16.mxu0 0
        %4435 = vmatpush1.bf16.msra.mxu0 0
        %4436 = vmatprep.mubr.bf16.mxu0 %v4320
        %4437 = vmatmul.mubr.bf16.gmra.mrb[0].mxu0 %v4316
        %v4438 = vpop.f32.mrb[0].mxu0
        %v4439 = vadd.f32 0.0, %v4438
        %v4440 = vpop.f32.mrb[0].mxu0
        %v4441 = vadd.f32 0.0, %v4440
        %v4442 = vpop.f32.mrb[0].mxu0
        %v4443 = vpop.f32.mrb[0].mxu0
        %4444 = vdwg.mxu0
        %4445 = vmatprep.subr.bf16.mxu0 %v893
        %4446 = vmatpush1.bf16.msra.mxu0 %v892
        %4447 = vmatprep.subr.bf16.mxu0 %v897
        %4448 = vmatpush1.bf16.msra.mxu0 %v896
        %4449 = vmatprep.subr.bf16.mxu0 %v901
        %4450 = vmatpush1.bf16.msra.mxu0 %v900
        %4451 = vmatprep.subr.bf16.mxu0 %v905
        %4452 = vmatpush1.bf16.msra.mxu0 %v904
        %4453 = vmatprep.subr.bf16.mxu0 %v909
        %4454 = vmatpush1.bf16.msra.mxu0 %v908
        %4455 = vmatprep.subr.bf16.mxu0 %v913
        %4456 = vmatpush1.bf16.msra.mxu0 %v912
        %4457 = vmatprep.subr.bf16.mxu0 %v917
        %4458 = vmatpush1.bf16.msra.mxu0 %v916
        %4459 = vmatprep.subr.bf16.mxu0 %v921
        %4460 = vmatpush1.bf16.msra.mxu0 %v920
        %4461 = vmatprep.subr.bf16.mxu0 %v925
        %4462 = vmatpush1.bf16.msra.mxu0 %v924
        %4463 = vmatprep.subr.bf16.mxu0 %v929
        %4464 = vmatpush1.bf16.msra.mxu0 %v928
        %4465 = vmatprep.subr.bf16.mxu0 0
        %4466 = vmatpush1.bf16.msra.mxu0 0
        %4467 = vmatprep.subr.bf16.mxu0 0
        %4468 = vmatpush1.bf16.msra.mxu0 0
        %4469 = vmatprep.subr.bf16.mxu0 0
        %4470 = vmatpush1.bf16.msra.mxu0 0
        %4471 = vmatprep.subr.bf16.mxu0 0
        %4472 = vmatpush1.bf16.msra.mxu0 0
        %4473 = vmatprep.subr.bf16.mxu0 0
        %4474 = vmatpush1.bf16.msra.mxu0 0
        %4475 = vmatprep.subr.bf16.mxu0 0
        %4476 = vmatpush1.bf16.msra.mxu0 0
        %4477 = vmatprep.mubr.bf16.mxu0 %v4320
        %4478 = vmatmul.mubr.bf16.gmra.mrb[0].mxu0 %v4316
        %v4479 = vpop.f32.mrb[0].mxu0
        %v4480 = vadd.f32 0.0, %v4479
        %v4481 = vpop.f32.mrb[0].mxu0
        %v4482 = vadd.f32 0.0, %v4481
        %v4483 = vpop.f32.mrb[0].mxu0
        %v4484 = vpop.f32.mrb[0].mxu0
        %4485 = vdwg.mxu0
        %v4486 = vmax.f32 %v4357, %v4439
        %v4487 = vmax.f32 %v4359, %v4441
        %v4488 = vmax.f32 %v4398, %v4480
        %v4489 = vmax.f32 %v4400, %v4482
        %v4491 = vunpack.c.l.b16 %v4312
        %v4492 = vunpack.c.h.b16 %v4312
        %v4493 = vpack.c.b16 %v4491, %v4491
        %v4494 = vpack.c.b16 %v4492, %v4492
        %v4497 = vsel %vm684, %v4494, 0
        %4499 = vmatprep.subr.bf16.mxu0 %v605
        %4500 = vmatpush1.bf16.msra.mxu0 %v604
        %4501 = vmatprep.subr.bf16.mxu0 %v609
        %4502 = vmatpush1.bf16.msra.mxu0 %v608
        %4503 = vmatprep.subr.bf16.mxu0 %v613
        %4504 = vmatpush1.bf16.msra.mxu0 %v612
        %4505 = vmatprep.subr.bf16.mxu0 %v617
        %4506 = vmatpush1.bf16.msra.mxu0 %v616
        %4507 = vmatprep.subr.bf16.mxu0 %v621
        %4508 = vmatpush1.bf16.msra.mxu0 %v620
        %4509 = vmatprep.subr.bf16.mxu0 %v625
        %4510 = vmatpush1.bf16.msra.mxu0 %v624
        %4511 = vmatprep.subr.bf16.mxu0 %v629
        %4512 = vmatpush1.bf16.msra.mxu0 %v628
        %4513 = vmatprep.subr.bf16.mxu0 %v633
        %4514 = vmatpush1.bf16.msra.mxu0 %v632
        %4515 = vmatprep.subr.bf16.mxu0 %v637
        %4516 = vmatpush1.bf16.msra.mxu0 %v636
        %4517 = vmatprep.subr.bf16.mxu0 %v641
        %4518 = vmatpush1.bf16.msra.mxu0 %v640
        %4519 = vmatprep.subr.bf16.mxu0 0
        %4520 = vmatpush1.bf16.msra.mxu0 0
        %4521 = vmatprep.subr.bf16.mxu0 0
        %4522 = vmatpush1.bf16.msra.mxu0 0
        %4523 = vmatprep.subr.bf16.mxu0 0
        %4524 = vmatpush1.bf16.msra.mxu0 0
        %4525 = vmatprep.subr.bf16.mxu0 0
        %4526 = vmatpush1.bf16.msra.mxu0 0
        %4527 = vmatprep.subr.bf16.mxu0 0
        %4528 = vmatpush1.bf16.msra.mxu0 0
        %4529 = vmatprep.subr.bf16.mxu0 0
        %4530 = vmatpush1.bf16.msra.mxu0 0
        %4531 = vmatprep.mubr.bf16.mxu0 %v4497
        %4532 = vmatmul.mubr.bf16.gmra.mrb[0].mxu0 %v4493
        %v4533 = vpop.f32.mrb[0].mxu0
        %v4534 = vadd.f32 0.0, %v4533
        %v4535 = vpop.f32.mrb[0].mxu0
        %v4536 = vadd.f32 0.0, %v4535
        %v4537 = vpop.f32.mrb[0].mxu0
        %v4538 = vpop.f32.mrb[0].mxu0
        %4539 = vdwg.mxu0
        %4540 = vmatprep.subr.bf16.mxu0 %v607
        %4541 = vmatpush1.bf16.msra.mxu0 %v606
        %4542 = vmatprep.subr.bf16.mxu0 %v611
        %4543 = vmatpush1.bf16.msra.mxu0 %v610
        %4544 = vmatprep.subr.bf16.mxu0 %v615
        %4545 = vmatpush1.bf16.msra.mxu0 %v614
        %4546 = vmatprep.subr.bf16.mxu0 %v619
        %4547 = vmatpush1.bf16.msra.mxu0 %v618
        %4548 = vmatprep.subr.bf16.mxu0 %v623
        %4549 = vmatpush1.bf16.msra.mxu0 %v622
        %4550 = vmatprep.subr.bf16.mxu0 %v627
        %4551 = vmatpush1.bf16.msra.mxu0 %v626
        %4552 = vmatprep.subr.bf16.mxu0 %v631
        %4553 = vmatpush1.bf16.msra.mxu0 %v630
        %4554 = vmatprep.subr.bf16.mxu0 %v635
        %4555 = vmatpush1.bf16.msra.mxu0 %v634
        %4556 = vmatprep.subr.bf16.mxu0 %v639
        %4557 = vmatpush1.bf16.msra.mxu0 %v638
        %4558 = vmatprep.subr.bf16.mxu0 %v643
        %4559 = vmatpush1.bf16.msra.mxu0 %v642
        %4560 = vmatprep.subr.bf16.mxu0 0
        %4561 = vmatpush1.bf16.msra.mxu0 0
        %4562 = vmatprep.subr.bf16.mxu0 0
        %4563 = vmatpush1.bf16.msra.mxu0 0
        %4564 = vmatprep.subr.bf16.mxu0 0
        %4565 = vmatpush1.bf16.msra.mxu0 0
        %4566 = vmatprep.subr.bf16.mxu0 0
        %4567 = vmatpush1.bf16.msra.mxu0 0
        %4568 = vmatprep.subr.bf16.mxu0 0
        %4569 = vmatpush1.bf16.msra.mxu0 0
        %4570 = vmatprep.subr.bf16.mxu0 0
        %4571 = vmatpush1.bf16.msra.mxu0 0
        %4572 = vmatprep.mubr.bf16.mxu0 %v4497
        %4573 = vmatmul.mubr.bf16.gmra.mrb[0].mxu0 %v4493
        %v4574 = vpop.f32.mrb[0].mxu0
        %v4575 = vadd.f32 0.0, %v4574
        %v4576 = vpop.f32.mrb[0].mxu0
        %v4577 = vadd.f32 0.0, %v4576
        %v4578 = vpop.f32.mrb[0].mxu0
        %v4579 = vpop.f32.mrb[0].mxu0
        %4580 = vdwg.mxu0
        %4581 = vmatprep.subr.bf16.mxu0 %v891
        %4582 = vmatpush1.bf16.msra.mxu0 %v890
        %4583 = vmatprep.subr.bf16.mxu0 %v895
        %4584 = vmatpush1.bf16.msra.mxu0 %v894
        %4585 = vmatprep.subr.bf16.mxu0 %v899
        %4586 = vmatpush1.bf16.msra.mxu0 %v898
        %4587 = vmatprep.subr.bf16.mxu0 %v903
        %4588 = vmatpush1.bf16.msra.mxu0 %v902
        %4589 = vmatprep.subr.bf16.mxu0 %v907
        %4590 = vmatpush1.bf16.msra.mxu0 %v906
        %4591 = vmatprep.subr.bf16.mxu0 %v911
        %4592 = vmatpush1.bf16.msra.mxu0 %v910
        %4593 = vmatprep.subr.bf16.mxu0 %v915
        %4594 = vmatpush1.bf16.msra.mxu0 %v914
        %4595 = vmatprep.subr.bf16.mxu0 %v919
        %4596 = vmatpush1.bf16.msra.mxu0 %v918
        %4597 = vmatprep.subr.bf16.mxu0 %v923
        %4598 = vmatpush1.bf16.msra.mxu0 %v922
        %4599 = vmatprep.subr.bf16.mxu0 %v927
        %4600 = vmatpush1.bf16.msra.mxu0 %v926
        %4601 = vmatprep.subr.bf16.mxu0 0
        %4602 = vmatpush1.bf16.msra.mxu0 0
        %4603 = vmatprep.subr.bf16.mxu0 0
        %4604 = vmatpush1.bf16.msra.mxu0 0
        %4605 = vmatprep.subr.bf16.mxu0 0
        %4606 = vmatpush1.bf16.msra.mxu0 0
        %4607 = vmatprep.subr.bf16.mxu0 0
        %4608 = vmatpush1.bf16.msra.mxu0 0
        %4609 = vmatprep.subr.bf16.mxu0 0
        %4610 = vmatpush1.bf16.msra.mxu0 0
        %4611 = vmatprep.subr.bf16.mxu0 0
        %4612 = vmatpush1.bf16.msra.mxu0 0
        %4613 = vmatprep.mubr.bf16.mxu0 %v4497
        %4614 = vmatmul.mubr.bf16.gmra.mrb[0].mxu0 %v4493
        %v4615 = vpop.f32.mrb[0].mxu0
        %v4616 = vadd.f32 0.0, %v4615
        %v4617 = vpop.f32.mrb[0].mxu0
        %v4618 = vadd.f32 0.0, %v4617
        %v4619 = vpop.f32.mrb[0].mxu0
        %v4620 = vpop.f32.mrb[0].mxu0
        %4621 = vdwg.mxu0
        %4622 = vmatprep.subr.bf16.mxu0 %v893
        %4623 = vmatpush1.bf16.msra.mxu0 %v892
        %4624 = vmatprep.subr.bf16.mxu0 %v897
        %4625 = vmatpush1.bf16.msra.mxu0 %v896
        %4626 = vmatprep.subr.bf16.mxu0 %v901
        %4627 = vmatpush1.bf16.msra.mxu0 %v900
        %4628 = vmatprep.subr.bf16.mxu0 %v905
        %4629 = vmatpush1.bf16.msra.mxu0 %v904
        %4630 = vmatprep.subr.bf16.mxu0 %v909
        %4631 = vmatpush1.bf16.msra.mxu0 %v908
        %4632 = vmatprep.subr.bf16.mxu0 %v913
        %4633 = vmatpush1.bf16.msra.mxu0 %v912
        %4634 = vmatprep.subr.bf16.mxu0 %v917
        %4635 = vmatpush1.bf16.msra.mxu0 %v916
        %4636 = vmatprep.subr.bf16.mxu0 %v921
        %4637 = vmatpush1.bf16.msra.mxu0 %v920
        %4638 = vmatprep.subr.bf16.mxu0 %v925
        %4639 = vmatpush1.bf16.msra.mxu0 %v924
        %4640 = vmatprep.subr.bf16.mxu0 %v929
        %4641 = vmatpush1.bf16.msra.mxu0 %v928
        %4642 = vmatprep.subr.bf16.mxu0 0
        %4643 = vmatpush1.bf16.msra.mxu0 0
        %4644 = vmatprep.subr.bf16.mxu0 0
        %4645 = vmatpush1.bf16.msra.mxu0 0
        %4646 = vmatprep.subr.bf16.mxu0 0
        %4647 = vmatpush1.bf16.msra.mxu0 0
        %4648 = vmatprep.subr.bf16.mxu0 0
        %4649 = vmatpush1.bf16.msra.mxu0 0
        %4650 = vmatprep.subr.bf16.mxu0 0
        %4651 = vmatpush1.bf16.msra.mxu0 0
        %4652 = vmatprep.subr.bf16.mxu0 0
        %4653 = vmatpush1.bf16.msra.mxu0 0
        %4654 = vmatprep.mubr.bf16.mxu0 %v4497
        %4655 = vmatmul.mubr.bf16.gmra.mrb[0].mxu0 %v4493
        %v4656 = vpop.f32.mrb[0].mxu0
        %v4657 = vadd.f32 0.0, %v4656
        %v4658 = vpop.f32.mrb[0].mxu0
        %v4659 = vadd.f32 0.0, %v4658
        %v4660 = vpop.f32.mrb[0].mxu0
        %v4661 = vpop.f32.mrb[0].mxu0
        %4662 = vdwg.mxu0
        %v4663 = vmax.f32 %v4534, %v4616
        %v4664 = vmax.f32 %v4536, %v4618
        %v4665 = vmax.f32 %v4575, %v4657
        %v4666 = vmax.f32 %v4577, %v4659
        %v4667 = vmax.f32 %v4486, %v4663
        %v4668 = vmax.f32 %v4487, %v4664
        %v4669 = vmax.f32 %v4488, %v4665
        %v4670 = vmax.f32 %v4489, %v4666
        %v4671 = vadd.f32 %v4667, %v1241
        %v4672 = vadd.f32 %v4668, %v1245
        %v4673 = vadd.f32 %v4669, %v1249
        %v4674 = vadd.f32 %v4670, %v1253
        %v4675 = vmax.f32 %v4671, 0.0
        %v4676 = vmax.f32 %v4672, 0.0
        %v4677 = vmax.f32 %v4673, 0.0
        %v4678 = vmax.f32 %v4674, 0.0
        %v4679 = vpack.c.bf16 %v4675, %v4675
        %v4680 = vpack.c.bf16 %v4676, %v4676
        %v4681 = vpack.c.bf16 %v4677, %v4677
        %v4682 = vpack.c.bf16 %v4678, %v4678
        %s4683 = scalar_lea.vmem %s4, 1120
        %v4684 = vld [vmem:[%s4683] sm:$0xf]
        %v4685 = vld [vmem:[%s4683 + $0x4] sm:$0xf]
        %v4686 = vld [vmem:[%s4683 + $0x8] sm:$0xf]
        %v4687 = vld [vmem:[%s4683 + $0xc] sm:$0xf]
        %v4688 = vld [vmem:[%s4683 + $0x10] sm:$0xf]
        %v4689 = vld [vmem:[%s4683 + $0x14] sm:$0xf]
        %v4690 = vld [vmem:[%s4683 + $0x18] sm:$0xf]
        %v4691 = vld [vmem:[%s4683 + $0x1c] sm:$0xf]
        %v4692 = vld [vmem:[%s4683 + $0x20] sm:$0xf]
        %v4693 = vld [vmem:[%s4683 + $0x24] sm:$0xf]
        %v4694 = vld [vmem:[%s4683 + $0x28] sm:$0xf]
        %v4695 = vld [vmem:[%s4683 + $0x2c] sm:$0xf]
        %v4696 = vld [vmem:[%s4683 + $0x30] sm:$0xf]
        %v4697 = vld [vmem:[%s4683 + $0x34] sm:$0xf]
        %v4698 = vld [vmem:[%s4683 + $0x38] sm:$0xf]
        %v4699 = vld [vmem:[%s4683 + $0x3c] sm:$0xf]
        %v4700 = vld [vmem:[%s4683 + $0x40] sm:$0xf]
        %v4701 = vld [vmem:[%s4683 + $0x44] sm:$0xf]
        %v4702 = vld [vmem:[%s4683 + $0x48] sm:$0xf]
        %v4703 = vld [vmem:[%s4683 + $0x4c] sm:$0xf]
        %v4704 = vld [vmem:[%s4683 + $0x50] sm:$0xf]
        %v4705 = vld [vmem:[%s4683 + $0x54] sm:$0xf]
        %v4706 = vld [vmem:[%s4683 + $0x58] sm:$0xf]
        %v4707 = vld [vmem:[%s4683 + $0x5c] sm:$0xf]
        %v4708 = vld [vmem:[%s4683 + $0x60] sm:$0xf]
        %v4709 = vld [vmem:[%s4683 + $0x64] sm:$0xf]
        %v4710 = vld [vmem:[%s4683 + $0x68] sm:$0xf]
        %v4711 = vld [vmem:[%s4683 + $0x6c] sm:$0xf]
        %v4712 = vld [vmem:[%s4683 + $0x70] sm:$0xf]
        %v4713 = vld [vmem:[%s4683 + $0x74] sm:$0xf]
        %v4714 = vld [vmem:[%s4683 + $0x78] sm:$0xf]
        %v4715 = vld [vmem:[%s4683 + $0x7c] sm:$0xf]
        %v4716 = vld [vmem:[%s4683 + $0x80] sm:$0xf]
        %v4717 = vld [vmem:[%s4683 + $0x84] sm:$0xf]
        %v4718 = vld [vmem:[%s4683 + $0x88] sm:$0xf]
        %v4719 = vld [vmem:[%s4683 + $0x8c] sm:$0xf]
        %v4720 = vld [vmem:[%s4683 + $0x90] sm:$0xf]
        %v4721 = vld [vmem:[%s4683 + $0x94] sm:$0xf]
        %v4722 = vld [vmem:[%s4683 + $0x98] sm:$0xf]
        %v4723 = vld [vmem:[%s4683 + $0x9c] sm:$0xf]
        %v4724 = vld [vmem:[%s4683 + $0xa0] sm:$0xf]
        %v4725 = vld [vmem:[%s4683 + $0xa4] sm:$0xf]
        %v4726 = vld [vmem:[%s4683 + $0xa8] sm:$0xf]
        %v4727 = vld [vmem:[%s4683 + $0xac] sm:$0xf]
        %v4728 = vld [vmem:[%s4683 + $0xb0] sm:$0xf]
        %v4729 = vld [vmem:[%s4683 + $0xb4] sm:$0xf]
        %v4730 = vld [vmem:[%s4683 + $0xb8] sm:$0xf]
        %v4731 = vld [vmem:[%s4683 + $0xbc] sm:$0xf]
        %v4732 = vld [vmem:[%s4683 + $0xc0] sm:$0xf]
        %v4733 = vld [vmem:[%s4683 + $0xc4] sm:$0xf]
        %v4734 = vld [vmem:[%s4683 + $0xc8] sm:$0xf]
        %v4735 = vld [vmem:[%s4683 + $0xcc] sm:$0xf]
        %v4736 = vld [vmem:[%s4683 + $0xd0] sm:$0xf]
        %v4737 = vld [vmem:[%s4683 + $0xd4] sm:$0xf]
        %v4738 = vld [vmem:[%s4683 + $0xd8] sm:$0xf]
        %v4739 = vld [vmem:[%s4683 + $0xdc] sm:$0xf]
        %v4796 = vunpack.c.l.b16 %v4684
        %v4797 = vunpack.c.l.b16 %v4685
        %v4798 = vunpack.c.l.b16 %v4686
        %v4799 = vunpack.c.l.b16 %v4687
        %v4800 = vunpack.c.l.b16 %v4688
        %v4801 = vunpack.c.l.b16 %v4689
        %v4802 = vunpack.c.l.b16 %v4690
        %v4803 = vunpack.c.l.b16 %v4691
        %v4804 = vunpack.c.l.b16 %v4692
        %v4805 = vunpack.c.l.b16 %v4693
        %v4806 = vunpack.c.l.b16 %v4694
        %v4807 = vunpack.c.l.b16 %v4695
        %v4808 = vunpack.c.l.b16 %v4696
        %v4809 = vunpack.c.l.b16 %v4697
        %v4810 = vunpack.c.l.b16 %v4698
        %v4811 = vunpack.c.l.b16 %v4699
        %v4812 = vunpack.c.l.b16 %v4700
        %v4813 = vunpack.c.l.b16 %v4701
        %v4814 = vunpack.c.l.b16 %v4702
        %v4815 = vunpack.c.l.b16 %v4703
        %v4816 = vunpack.c.l.b16 %v4704
        %v4817 = vunpack.c.l.b16 %v4705
        %v4818 = vunpack.c.l.b16 %v4706
        %v4819 = vunpack.c.l.b16 %v4707
        %v4820 = vunpack.c.l.b16 %v4708
        %v4821 = vunpack.c.l.b16 %v4709
        %v4822 = vunpack.c.l.b16 %v4710
        %v4823 = vunpack.c.l.b16 %v4711
        %v4824 = vunpack.c.l.b16 %v4712
        %v4825 = vunpack.c.l.b16 %v4713
        %v4826 = vunpack.c.l.b16 %v4714
        %v4827 = vunpack.c.l.b16 %v4715
        %v4828 = vunpack.c.l.b16 %v4716
        %v4829 = vunpack.c.l.b16 %v4717
        %v4830 = vunpack.c.l.b16 %v4718
        %v4831 = vunpack.c.l.b16 %v4719
        %v4832 = vunpack.c.l.b16 %v4720
        %v4833 = vunpack.c.l.b16 %v4721
        %v4834 = vunpack.c.l.b16 %v4722
        %v4835 = vunpack.c.l.b16 %v4723
        %v4836 = vunpack.c.l.b16 %v4724
        %v4837 = vunpack.c.l.b16 %v4725
        %v4838 = vunpack.c.l.b16 %v4726
        %v4839 = vunpack.c.l.b16 %v4727
        %v4840 = vunpack.c.l.b16 %v4728
        %v4841 = vunpack.c.l.b16 %v4729
        %v4842 = vunpack.c.l.b16 %v4730
        %v4843 = vunpack.c.l.b16 %v4731
        %v4844 = vunpack.c.l.b16 %v4732
        %v4845 = vunpack.c.l.b16 %v4733
        %v4846 = vunpack.c.l.b16 %v4734
        %v4847 = vunpack.c.l.b16 %v4735
        %v4848 = vunpack.c.l.b16 %v4736
        %v4849 = vunpack.c.l.b16 %v4737
        %v4850 = vunpack.c.l.b16 %v4738
        %v4851 = vunpack.c.l.b16 %v4739
        %v4852 = vpack.c.b16 %v4797, %v4796
        %v4853 = vpack.c.b16 %v4799, %v4798
        %v4854 = vpack.c.b16 %v4801, %v4800
        %v4855 = vpack.c.b16 %v4803, %v4802
        %v4856 = vpack.c.b16 %v4805, %v4804
        %v4857 = vpack.c.b16 %v4807, %v4806
        %v4858 = vpack.c.b16 %v4809, %v4808
        %v4859 = vpack.c.b16 %v4811, %v4810
        %v4860 = vpack.c.b16 %v4813, %v4812
        %v4861 = vpack.c.b16 %v4815, %v4814
        %v4862 = vpack.c.b16 %v4817, %v4816
        %v4863 = vpack.c.b16 %v4819, %v4818
        %v4864 = vpack.c.b16 %v4821, %v4820
        %v4865 = vpack.c.b16 %v4823, %v4822
        %v4866 = vpack.c.b16 %v4825, %v4824
        %v4867 = vpack.c.b16 %v4827, %v4826
        %v4868 = vpack.c.b16 %v4829, %v4828
        %v4869 = vpack.c.b16 %v4831, %v4830
        %v4870 = vpack.c.b16 %v4833, %v4832
        %v4871 = vpack.c.b16 %v4835, %v4834
        %v4872 = vpack.c.b16 %v4837, %v4836
        %v4873 = vpack.c.b16 %v4839, %v4838
        %v4874 = vpack.c.b16 %v4841, %v4840
        %v4875 = vpack.c.b16 %v4843, %v4842
        %v4876 = vpack.c.b16 %v4845, %v4844
        %v4877 = vpack.c.b16 %v4847, %v4846
        %v4878 = vpack.c.b16 %v4849, %v4848
        %v4879 = vpack.c.b16 %v4851, %v4850
        %v4909 = vsel %vm1925, %v4682, 0
        %4911 = vmatprep.subr.bf16.mxu0 0
        %4912 = vmatpush1.bf16.msra.mxu0 %v4852
        %4913 = vmatprep.subr.bf16.mxu0 0
        %4914 = vmatpush1.bf16.msra.mxu0 %v4853
        %4915 = vmatprep.subr.bf16.mxu0 0
        %4916 = vmatpush1.bf16.msra.mxu0 %v4854
        %4917 = vmatprep.subr.bf16.mxu0 0
        %4918 = vmatpush1.bf16.msra.mxu0 %v4855
        %4919 = vmatprep.subr.bf16.mxu0 0
        %4920 = vmatpush1.bf16.msra.mxu0 %v4856
        %4921 = vmatprep.subr.bf16.mxu0 0
        %4922 = vmatpush1.bf16.msra.mxu0 %v4857
        %4923 = vmatprep.subr.bf16.mxu0 0
        %4924 = vmatpush1.bf16.msra.mxu0 %v4858
        %4925 = vmatprep.subr.bf16.mxu0 0
        %4926 = vmatpush1.bf16.msra.mxu0 %v4859
        %4927 = vmatprep.subr.bf16.mxu0 0
        %4928 = vmatpush1.bf16.msra.mxu0 %v4860
        %4929 = vmatprep.subr.bf16.mxu0 0
        %4930 = vmatpush1.bf16.msra.mxu0 %v4861
        %4931 = vmatprep.subr.bf16.mxu0 0
        %4932 = vmatpush1.bf16.msra.mxu0 %v4862
        %4933 = vmatprep.subr.bf16.mxu0 0
        %4934 = vmatpush1.bf16.msra.mxu0 %v4863
        %4935 = vmatprep.subr.bf16.mxu0 0
        %4936 = vmatpush1.bf16.msra.mxu0 %v4864
        %4937 = vmatprep.subr.bf16.mxu0 0
        %4938 = vmatpush1.bf16.msra.mxu0 %v4865
        %4939 = vmatprep.subr.bf16.mxu0 0
        %4940 = vmatpush1.bf16.msra.mxu0 %v4866
        %4941 = vmatprep.subr.bf16.mxu0 0
        %4942 = vmatpush1.bf16.msra.mxu0 %v4867
        %4943 = vmatprep.mubr.bf16.mxu0 %v4680
        %4944 = vmatmul.mubr.bf16.gmra.mrb[0].mxu0 %v4679
        %v4945 = vpop.f32.mrb[0].mxu0
        %v4946 = vadd.f32 0.0, %v4945
        %v4947 = vpop.f32.mrb[0].mxu0
        %v4948 = vpop.f32.mrb[0].mxu0
        %v4949 = vpop.f32.mrb[0].mxu0
        %4950 = vdwg.mxu0
        %4951 = vmatprep.subr.bf16.mxu0 0
        %4952 = vmatpush1.bf16.msra.mxu0 %v4868
        %4953 = vmatprep.subr.bf16.mxu0 0
        %4954 = vmatpush1.bf16.msra.mxu0 %v4869
        %4955 = vmatprep.subr.bf16.mxu0 0
        %4956 = vmatpush1.bf16.msra.mxu0 %v4870
        %4957 = vmatprep.subr.bf16.mxu0 0
        %4958 = vmatpush1.bf16.msra.mxu0 %v4871
        %4959 = vmatprep.subr.bf16.mxu0 0
        %4960 = vmatpush1.bf16.msra.mxu0 %v4872
        %4961 = vmatprep.subr.bf16.mxu0 0
        %4962 = vmatpush1.bf16.msra.mxu0 %v4873
        %4963 = vmatprep.subr.bf16.mxu0 0
        %4964 = vmatpush1.bf16.msra.mxu0 %v4874
        %4965 = vmatprep.subr.bf16.mxu0 0
        %4966 = vmatpush1.bf16.msra.mxu0 %v4875
        %4967 = vmatprep.subr.bf16.mxu0 0
        %4968 = vmatpush1.bf16.msra.mxu0 %v4876
        %4969 = vmatprep.subr.bf16.mxu0 0
        %4970 = vmatpush1.bf16.msra.mxu0 %v4877
        %4971 = vmatprep.subr.bf16.mxu0 0
        %4972 = vmatpush1.bf16.msra.mxu0 %v4878
        %4973 = vmatprep.subr.bf16.mxu0 0
        %4974 = vmatpush1.bf16.msra.mxu0 %v4879
        %4975 = vmatprep.subr.bf16.mxu0 0
        %4976 = vmatpush1.bf16.msra.mxu0 0
        %4977 = vmatprep.subr.bf16.mxu0 0
        %4978 = vmatpush1.bf16.msra.mxu0 0
        %4979 = vmatprep.subr.bf16.mxu0 0
        %4980 = vmatpush1.bf16.msra.mxu0 0
        %4981 = vmatprep.subr.bf16.mxu0 0
        %4982 = vmatpush1.bf16.msra.mxu0 0
        %4983 = vmatprep.mubr.bf16.mxu0 %v4909
        %4984 = vmatmul.mubr.bf16.gmra.mrb[0].mxu0 %v4681
        %v4985 = vpop.f32.mrb[0].mxu0
        %v4986 = vadd.f32 %v4946, %v4985
        %v4987 = vpop.f32.mrb[0].mxu0
        %v4988 = vpop.f32.mrb[0].mxu0
        %v4989 = vpop.f32.mrb[0].mxu0
        %4990 = vdwg.mxu0
        %v4991 = vadd.f32 %v4308, %v4986
        %s4992 = scalar_lea.vmem %s363, 48 [#allocation2]
        %v4993 = vld [vmem:[%s4992] sm:$0xff]
        %s4994 = scalar_lea.vmem %s363, 160 [#allocation2]
        %v4995 = vld [vmem:[%s4994] sm:$0xff]
        %v4997 = vunpack.c.l.b16 %v4993
        %v4998 = vunpack.c.h.b16 %v4993
        %v4999 = vpack.c.b16 %v4997, %v4997
        %v5000 = vpack.c.b16 %v4998, %v4998
        %v5003 = vsel %vm684, %v5000, 0
        %5005 = vmatprep.subr.bf16.mxu0 %v605
        %5006 = vmatpush1.bf16.msra.mxu0 %v604
        %5007 = vmatprep.subr.bf16.mxu0 %v609
        %5008 = vmatpush1.bf16.msra.mxu0 %v608
        %5009 = vmatprep.subr.bf16.mxu0 %v613
        %5010 = vmatpush1.bf16.msra.mxu0 %v612
        %5011 = vmatprep.subr.bf16.mxu0 %v617
        %5012 = vmatpush1.bf16.msra.mxu0 %v616
        %5013 = vmatprep.subr.bf16.mxu0 %v621
        %5014 = vmatpush1.bf16.msra.mxu0 %v620
        %5015 = vmatprep.subr.bf16.mxu0 %v625
        %5016 = vmatpush1.bf16.msra.mxu0 %v624
        %5017 = vmatprep.subr.bf16.mxu0 %v629
        %5018 = vmatpush1.bf16.msra.mxu0 %v628
        %5019 = vmatprep.subr.bf16.mxu0 %v633
        %5020 = vmatpush1.bf16.msra.mxu0 %v632
        %5021 = vmatprep.subr.bf16.mxu0 %v637
        %5022 = vmatpush1.bf16.msra.mxu0 %v636
        %5023 = vmatprep.subr.bf16.mxu0 %v641
        %5024 = vmatpush1.bf16.msra.mxu0 %v640
        %5025 = vmatprep.subr.bf16.mxu0 0
        %5026 = vmatpush1.bf16.msra.mxu0 0
        %5027 = vmatprep.subr.bf16.mxu0 0
        %5028 = vmatpush1.bf16.msra.mxu0 0
        %5029 = vmatprep.subr.bf16.mxu0 0
        %5030 = vmatpush1.bf16.msra.mxu0 0
        %5031 = vmatprep.subr.bf16.mxu0 0
        %5032 = vmatpush1.bf16.msra.mxu0 0
        %5033 = vmatprep.subr.bf16.mxu0 0
        %5034 = vmatpush1.bf16.msra.mxu0 0
        %5035 = vmatprep.subr.bf16.mxu0 0
        %5036 = vmatpush1.bf16.msra.mxu0 0
        %5037 = vmatprep.mubr.bf16.mxu0 %v5003
        %5038 = vmatmul.mubr.bf16.gmra.mrb[0].mxu0 %v4999
        %v5039 = vpop.f32.mrb[0].mxu0
        %v5040 = vadd.f32 0.0, %v5039
        %v5041 = vpop.f32.mrb[0].mxu0
        %v5042 = vadd.f32 0.0, %v5041
        %v5043 = vpop.f32.mrb[0].mxu0
        %v5044 = vpop.f32.mrb[0].mxu0
        %5045 = vdwg.mxu0
        %5046 = vmatprep.subr.bf16.mxu0 %v607
        %5047 = vmatpush1.bf16.msra.mxu0 %v606
        %5048 = vmatprep.subr.bf16.mxu0 %v611
        %5049 = vmatpush1.bf16.msra.mxu0 %v610
        %5050 = vmatprep.subr.bf16.mxu0 %v615
        %5051 = vmatpush1.bf16.msra.mxu0 %v614
        %5052 = vmatprep.subr.bf16.mxu0 %v619
        %5053 = vmatpush1.bf16.msra.mxu0 %v618
        %5054 = vmatprep.subr.bf16.mxu0 %v623
        %5055 = vmatpush1.bf16.msra.mxu0 %v622
        %5056 = vmatprep.subr.bf16.mxu0 %v627
        %5057 = vmatpush1.bf16.msra.mxu0 %v626
        %5058 = vmatprep.subr.bf16.mxu0 %v631
        %5059 = vmatpush1.bf16.msra.mxu0 %v630
        %5060 = vmatprep.subr.bf16.mxu0 %v635
        %5061 = vmatpush1.bf16.msra.mxu0 %v634
        %5062 = vmatprep.subr.bf16.mxu0 %v639
        %5063 = vmatpush1.bf16.msra.mxu0 %v638
        %5064 = vmatprep.subr.bf16.mxu0 %v643
        %5065 = vmatpush1.bf16.msra.mxu0 %v642
        %5066 = vmatprep.subr.bf16.mxu0 0
        %5067 = vmatpush1.bf16.msra.mxu0 0
        %5068 = vmatprep.subr.bf16.mxu0 0
        %5069 = vmatpush1.bf16.msra.mxu0 0
        %5070 = vmatprep.subr.bf16.mxu0 0
        %5071 = vmatpush1.bf16.msra.mxu0 0
        %5072 = vmatprep.subr.bf16.mxu0 0
        %5073 = vmatpush1.bf16.msra.mxu0 0
        %5074 = vmatprep.subr.bf16.mxu0 0
        %5075 = vmatpush1.bf16.msra.mxu0 0
        %5076 = vmatprep.subr.bf16.mxu0 0
        %5077 = vmatpush1.bf16.msra.mxu0 0
        %5078 = vmatprep.mubr.bf16.mxu0 %v5003
        %5079 = vmatmul.mubr.bf16.gmra.mrb[0].mxu0 %v4999
        %v5080 = vpop.f32.mrb[0].mxu0
        %v5081 = vadd.f32 0.0, %v5080
        %v5082 = vpop.f32.mrb[0].mxu0
        %v5083 = vadd.f32 0.0, %v5082
        %v5084 = vpop.f32.mrb[0].mxu0
        %v5085 = vpop.f32.mrb[0].mxu0
        %5086 = vdwg.mxu0
        %5087 = vmatprep.subr.bf16.mxu0 %v891
        %5088 = vmatpush1.bf16.msra.mxu0 %v890
        %5089 = vmatprep.subr.bf16.mxu0 %v895
        %5090 = vmatpush1.bf16.msra.mxu0 %v894
        %5091 = vmatprep.subr.bf16.mxu0 %v899
        %5092 = vmatpush1.bf16.msra.mxu0 %v898
        %5093 = vmatprep.subr.bf16.mxu0 %v903
        %5094 = vmatpush1.bf16.msra.mxu0 %v902
        %5095 = vmatprep.subr.bf16.mxu0 %v907
        %5096 = vmatpush1.bf16.msra.mxu0 %v906
        %5097 = vmatprep.subr.bf16.mxu0 %v911
        %5098 = vmatpush1.bf16.msra.mxu0 %v910
        %5099 = vmatprep.subr.bf16.mxu0 %v915
        %5100 = vmatpush1.bf16.msra.mxu0 %v914
        %5101 = vmatprep.subr.bf16.mxu0 %v919
        %5102 = vmatpush1.bf16.msra.mxu0 %v918
        %5103 = vmatprep.subr.bf16.mxu0 %v923
        %5104 = vmatpush1.bf16.msra.mxu0 %v922
        %5105 = vmatprep.subr.bf16.mxu0 %v927
        %5106 = vmatpush1.bf16.msra.mxu0 %v926
        %5107 = vmatprep.subr.bf16.mxu0 0
        %5108 = vmatpush1.bf16.msra.mxu0 0
        %5109 = vmatprep.subr.bf16.mxu0 0
        %5110 = vmatpush1.bf16.msra.mxu0 0
        %5111 = vmatprep.subr.bf16.mxu0 0
        %5112 = vmatpush1.bf16.msra.mxu0 0
        %5113 = vmatprep.subr.bf16.mxu0 0
        %5114 = vmatpush1.bf16.msra.mxu0 0
        %5115 = vmatprep.subr.bf16.mxu0 0
        %5116 = vmatpush1.bf16.msra.mxu0 0
        %5117 = vmatprep.subr.bf16.mxu0 0
        %5118 = vmatpush1.bf16.msra.mxu0 0
        %5119 = vmatprep.mubr.bf16.mxu0 %v5003
        %5120 = vmatmul.mubr.bf16.gmra.mrb[0].mxu0 %v4999
        %v5121 = vpop.f32.mrb[0].mxu0
        %v5122 = vadd.f32 0.0, %v5121
        %v5123 = vpop.f32.mrb[0].mxu0
        %v5124 = vadd.f32 0.0, %v5123
        %v5125 = vpop.f32.mrb[0].mxu0
        %v5126 = vpop.f32.mrb[0].mxu0
        %5127 = vdwg.mxu0
        %5128 = vmatprep.subr.bf16.mxu0 %v893
        %5129 = vmatpush1.bf16.msra.mxu0 %v892
        %5130 = vmatprep.subr.bf16.mxu0 %v897
        %5131 = vmatpush1.bf16.msra.mxu0 %v896
        %5132 = vmatprep.subr.bf16.mxu0 %v901
        %5133 = vmatpush1.bf16.msra.mxu0 %v900
        %5134 = vmatprep.subr.bf16.mxu0 %v905
        %5135 = vmatpush1.bf16.msra.mxu0 %v904
        %5136 = vmatprep.subr.bf16.mxu0 %v909
        %5137 = vmatpush1.bf16.msra.mxu0 %v908
        %5138 = vmatprep.subr.bf16.mxu0 %v913
        %5139 = vmatpush1.bf16.msra.mxu0 %v912
        %5140 = vmatprep.subr.bf16.mxu0 %v917
        %5141 = vmatpush1.bf16.msra.mxu0 %v916
        %5142 = vmatprep.subr.bf16.mxu0 %v921
        %5143 = vmatpush1.bf16.msra.mxu0 %v920
        %5144 = vmatprep.subr.bf16.mxu0 %v925
        %5145 = vmatpush1.bf16.msra.mxu0 %v924
        %5146 = vmatprep.subr.bf16.mxu0 %v929
        %5147 = vmatpush1.bf16.msra.mxu0 %v928
        %5148 = vmatprep.subr.bf16.mxu0 0
        %5149 = vmatpush1.bf16.msra.mxu0 0
        %5150 = vmatprep.subr.bf16.mxu0 0
        %5151 = vmatpush1.bf16.msra.mxu0 0
        %5152 = vmatprep.subr.bf16.mxu0 0
        %5153 = vmatpush1.bf16.msra.mxu0 0
        %5154 = vmatprep.subr.bf16.mxu0 0
        %5155 = vmatpush1.bf16.msra.mxu0 0
        %5156 = vmatprep.subr.bf16.mxu0 0
        %5157 = vmatpush1.bf16.msra.mxu0 0
        %5158 = vmatprep.subr.bf16.mxu0 0
        %5159 = vmatpush1.bf16.msra.mxu0 0
        %5160 = vmatprep.mubr.bf16.mxu0 %v5003
        %5161 = vmatmul.mubr.bf16.gmra.mrb[0].mxu0 %v4999
        %v5162 = vpop.f32.mrb[0].mxu0
        %v5163 = vadd.f32 0.0, %v5162
        %v5164 = vpop.f32.mrb[0].mxu0
        %v5165 = vadd.f32 0.0, %v5164
        %v5166 = vpop.f32.mrb[0].mxu0
        %v5167 = vpop.f32.mrb[0].mxu0
        %5168 = vdwg.mxu0
        %v5169 = vmax.f32 %v5040, %v5122
        %v5170 = vmax.f32 %v5042, %v5124
        %v5171 = vmax.f32 %v5081, %v5163
        %v5172 = vmax.f32 %v5083, %v5165
        %v5174 = vunpack.c.l.b16 %v4995
        %v5175 = vunpack.c.h.b16 %v4995
        %v5176 = vpack.c.b16 %v5174, %v5174
        %v5177 = vpack.c.b16 %v5175, %v5175
        %v5180 = vsel %vm684, %v5177, 0
        %5182 = vmatprep.subr.bf16.mxu0 %v605
        %5183 = vmatpush1.bf16.msra.mxu0 %v604
        %5184 = vmatprep.subr.bf16.mxu0 %v609
        %5185 = vmatpush1.bf16.msra.mxu0 %v608
        %5186 = vmatprep.subr.bf16.mxu0 %v613
        %5187 = vmatpush1.bf16.msra.mxu0 %v612
        %5188 = vmatprep.subr.bf16.mxu0 %v617
        %5189 = vmatpush1.bf16.msra.mxu0 %v616
        %5190 = vmatprep.subr.bf16.mxu0 %v621
        %5191 = vmatpush1.bf16.msra.mxu0 %v620
        %5192 = vmatprep.subr.bf16.mxu0 %v625
        %5193 = vmatpush1.bf16.msra.mxu0 %v624
        %5194 = vmatprep.subr.bf16.mxu0 %v629
        %5195 = vmatpush1.bf16.msra.mxu0 %v628
        %5196 = vmatprep.subr.bf16.mxu0 %v633
        %5197 = vmatpush1.bf16.msra.mxu0 %v632
        %5198 = vmatprep.subr.bf16.mxu0 %v637
        %5199 = vmatpush1.bf16.msra.mxu0 %v636
        %5200 = vmatprep.subr.bf16.mxu0 %v641
        %5201 = vmatpush1.bf16.msra.mxu0 %v640
        %5202 = vmatprep.subr.bf16.mxu0 0
        %5203 = vmatpush1.bf16.msra.mxu0 0
        %5204 = vmatprep.subr.bf16.mxu0 0
        %5205 = vmatpush1.bf16.msra.mxu0 0
        %5206 = vmatprep.subr.bf16.mxu0 0
        %5207 = vmatpush1.bf16.msra.mxu0 0
        %5208 = vmatprep.subr.bf16.mxu0 0
        %5209 = vmatpush1.bf16.msra.mxu0 0
        %5210 = vmatprep.subr.bf16.mxu0 0
        %5211 = vmatpush1.bf16.msra.mxu0 0
        %5212 = vmatprep.subr.bf16.mxu0 0
        %5213 = vmatpush1.bf16.msra.mxu0 0
        %5214 = vmatprep.mubr.bf16.mxu0 %v5180
        %5215 = vmatmul.mubr.bf16.gmra.mrb[0].mxu0 %v5176
        %v5216 = vpop.f32.mrb[0].mxu0
        %v5217 = vadd.f32 0.0, %v5216
        %v5218 = vpop.f32.mrb[0].mxu0
        %v5219 = vadd.f32 0.0, %v5218
        %v5220 = vpop.f32.mrb[0].mxu0
        %v5221 = vpop.f32.mrb[0].mxu0
        %5222 = vdwg.mxu0
        %5223 = vmatprep.subr.bf16.mxu0 %v607
        %5224 = vmatpush1.bf16.msra.mxu0 %v606
        %5225 = vmatprep.subr.bf16.mxu0 %v611
        %5226 = vmatpush1.bf16.msra.mxu0 %v610
        %5227 = vmatprep.subr.bf16.mxu0 %v615
        %5228 = vmatpush1.bf16.msra.mxu0 %v614
        %5229 = vmatprep.subr.bf16.mxu0 %v619
        %5230 = vmatpush1.bf16.msra.mxu0 %v618
        %5231 = vmatprep.subr.bf16.mxu0 %v623
        %5232 = vmatpush1.bf16.msra.mxu0 %v622
        %5233 = vmatprep.subr.bf16.mxu0 %v627
        %5234 = vmatpush1.bf16.msra.mxu0 %v626
        %5235 = vmatprep.subr.bf16.mxu0 %v631
        %5236 = vmatpush1.bf16.msra.mxu0 %v630
        %5237 = vmatprep.subr.bf16.mxu0 %v635
        %5238 = vmatpush1.bf16.msra.mxu0 %v634
        %5239 = vmatprep.subr.bf16.mxu0 %v639
        %5240 = vmatpush1.bf16.msra.mxu0 %v638
        %5241 = vmatprep.subr.bf16.mxu0 %v643
        %5242 = vmatpush1.bf16.msra.mxu0 %v642
        %5243 = vmatprep.subr.bf16.mxu0 0
        %5244 = vmatpush1.bf16.msra.mxu0 0
        %5245 = vmatprep.subr.bf16.mxu0 0
        %5246 = vmatpush1.bf16.msra.mxu0 0
        %5247 = vmatprep.subr.bf16.mxu0 0
        %5248 = vmatpush1.bf16.msra.mxu0 0
        %5249 = vmatprep.subr.bf16.mxu0 0
        %5250 = vmatpush1.bf16.msra.mxu0 0
        %5251 = vmatprep.subr.bf16.mxu0 0
        %5252 = vmatpush1.bf16.msra.mxu0 0
        %5253 = vmatprep.subr.bf16.mxu0 0
        %5254 = vmatpush1.bf16.msra.mxu0 0
        %5255 = vmatprep.mubr.bf16.mxu0 %v5180
        %5256 = vmatmul.mubr.bf16.gmra.mrb[0].mxu0 %v5176
        %v5257 = vpop.f32.mrb[0].mxu0
        %v5258 = vadd.f32 0.0, %v5257
        %v5259 = vpop.f32.mrb[0].mxu0
        %v5260 = vadd.f32 0.0, %v5259
        %v5261 = vpop.f32.mrb[0].mxu0
        %v5262 = vpop.f32.mrb[0].mxu0
        %5263 = vdwg.mxu0
        %5264 = vmatprep.subr.bf16.mxu0 %v891
        %5265 = vmatpush1.bf16.msra.mxu0 %v890
        %5266 = vmatprep.subr.bf16.mxu0 %v895
        %5267 = vmatpush1.bf16.msra.mxu0 %v894
        %5268 = vmatprep.subr.bf16.mxu0 %v899
        %5269 = vmatpush1.bf16.msra.mxu0 %v898
        %5270 = vmatprep.subr.bf16.mxu0 %v903
        %5271 = vmatpush1.bf16.msra.mxu0 %v902
        %5272 = vmatprep.subr.bf16.mxu0 %v907
        %5273 = vmatpush1.bf16.msra.mxu0 %v906
        %5274 = vmatprep.subr.bf16.mxu0 %v911
        %5275 = vmatpush1.bf16.msra.mxu0 %v910
        %5276 = vmatprep.subr.bf16.mxu0 %v915
        %5277 = vmatpush1.bf16.msra.mxu0 %v914
        %5278 = vmatprep.subr.bf16.mxu0 %v919
        %5279 = vmatpush1.bf16.msra.mxu0 %v918
        %5280 = vmatprep.subr.bf16.mxu0 %v923
        %5281 = vmatpush1.bf16.msra.mxu0 %v922
        %5282 = vmatprep.subr.bf16.mxu0 %v927
        %5283 = vmatpush1.bf16.msra.mxu0 %v926
        %5284 = vmatprep.subr.bf16.mxu0 0
        %5285 = vmatpush1.bf16.msra.mxu0 0
        %5286 = vmatprep.subr.bf16.mxu0 0
        %5287 = vmatpush1.bf16.msra.mxu0 0
        %5288 = vmatprep.subr.bf16.mxu0 0
        %5289 = vmatpush1.bf16.msra.mxu0 0
        %5290 = vmatprep.subr.bf16.mxu0 0
        %5291 = vmatpush1.bf16.msra.mxu0 0
        %5292 = vmatprep.subr.bf16.mxu0 0
        %5293 = vmatpush1.bf16.msra.mxu0 0
        %5294 = vmatprep.subr.bf16.mxu0 0
        %5295 = vmatpush1.bf16.msra.mxu0 0
        %5296 = vmatprep.mubr.bf16.mxu0 %v5180
        %5297 = vmatmul.mubr.bf16.gmra.mrb[0].mxu0 %v5176
        %v5298 = vpop.f32.mrb[0].mxu0
        %v5299 = vadd.f32 0.0, %v5298
        %v5300 = vpop.f32.mrb[0].mxu0
        %v5301 = vadd.f32 0.0, %v5300
        %v5302 = vpop.f32.mrb[0].mxu0
        %v5303 = vpop.f32.mrb[0].mxu0
        %5304 = vdwg.mxu0
        %5305 = vmatprep.subr.bf16.mxu0 %v893
        %5306 = vmatpush1.bf16.msra.mxu0 %v892
        %5307 = vmatprep.subr.bf16.mxu0 %v897
        %5308 = vmatpush1.bf16.msra.mxu0 %v896
        %5309 = vmatprep.subr.bf16.mxu0 %v901
        %5310 = vmatpush1.bf16.msra.mxu0 %v900
        %5311 = vmatprep.subr.bf16.mxu0 %v905
        %5312 = vmatpush1.bf16.msra.mxu0 %v904
        %5313 = vmatprep.subr.bf16.mxu0 %v909
        %5314 = vmatpush1.bf16.msra.mxu0 %v908
        %5315 = vmatprep.subr.bf16.mxu0 %v913
        %5316 = vmatpush1.bf16.msra.mxu0 %v912
        %5317 = vmatprep.subr.bf16.mxu0 %v917
        %5318 = vmatpush1.bf16.msra.mxu0 %v916
        %5319 = vmatprep.subr.bf16.mxu0 %v921
        %5320 = vmatpush1.bf16.msra.mxu0 %v920
        %5321 = vmatprep.subr.bf16.mxu0 %v925
        %5322 = vmatpush1.bf16.msra.mxu0 %v924
        %5323 = vmatprep.subr.bf16.mxu0 %v929
        %5324 = vmatpush1.bf16.msra.mxu0 %v928
        %5325 = vmatprep.subr.bf16.mxu0 0
        %5326 = vmatpush1.bf16.msra.mxu0 0
        %5327 = vmatprep.subr.bf16.mxu0 0
        %5328 = vmatpush1.bf16.msra.mxu0 0
        %5329 = vmatprep.subr.bf16.mxu0 0
        %5330 = vmatpush1.bf16.msra.mxu0 0
        %5331 = vmatprep.subr.bf16.mxu0 0
        %5332 = vmatpush1.bf16.msra.mxu0 0
        %5333 = vmatprep.subr.bf16.mxu0 0
        %5334 = vmatpush1.bf16.msra.mxu0 0
        %5335 = vmatprep.subr.bf16.mxu0 0
        %5336 = vmatpush1.bf16.msra.mxu0 0
        %5337 = vmatprep.mubr.bf16.mxu0 %v5180
        %5338 = vmatmul.mubr.bf16.gmra.mrb[0].mxu0 %v5176
        %v5339 = vpop.f32.mrb[0].mxu0
        %v5340 = vadd.f32 0.0, %v5339
        %v5341 = vpop.f32.mrb[0].mxu0
        %v5342 = vadd.f32 0.0, %v5341
        %v5343 = vpop.f32.mrb[0].mxu0
        %v5344 = vpop.f32.mrb[0].mxu0
        %5345 = vdwg.mxu0
        %v5346 = vmax.f32 %v5217, %v5299
        %v5347 = vmax.f32 %v5219, %v5301
        %v5348 = vmax.f32 %v5258, %v5340
        %v5349 = vmax.f32 %v5260, %v5342
        %v5350 = vmax.f32 %v5169, %v5346
        %v5351 = vmax.f32 %v5170, %v5347
        %v5352 = vmax.f32 %v5171, %v5348
        %v5353 = vmax.f32 %v5172, %v5349
        %v5354 = vadd.f32 %v5350, %v1241
        %v5355 = vadd.f32 %v5351, %v1245
        %v5356 = vadd.f32 %v5352, %v1249
        %v5357 = vadd.f32 %v5353, %v1253
        %v5358 = vmax.f32 %v5354, 0.0
        %v5359 = vmax.f32 %v5355, 0.0
        %v5360 = vmax.f32 %v5356, 0.0
        %v5361 = vmax.f32 %v5357, 0.0
        %v5362 = vpack.c.bf16 %v5358, %v5358
        %v5363 = vpack.c.bf16 %v5359, %v5359
        %v5364 = vpack.c.bf16 %v5360, %v5360
        %v5365 = vpack.c.bf16 %v5361, %v5361
        %s5366 = scalar_lea.vmem %s4, 1344
        %v5367 = vld [vmem:[%s5366] sm:$0xf]
        %v5368 = vld [vmem:[%s5366 + $0x4] sm:$0xf]
        %v5369 = vld [vmem:[%s5366 + $0x8] sm:$0xf]
        %v5370 = vld [vmem:[%s5366 + $0xc] sm:$0xf]
        %v5371 = vld [vmem:[%s5366 + $0x10] sm:$0xf]
        %v5372 = vld [vmem:[%s5366 + $0x14] sm:$0xf]
        %v5373 = vld [vmem:[%s5366 + $0x18] sm:$0xf]
        %v5374 = vld [vmem:[%s5366 + $0x1c] sm:$0xf]
        %v5375 = vld [vmem:[%s5366 + $0x20] sm:$0xf]
        %v5376 = vld [vmem:[%s5366 + $0x24] sm:$0xf]
        %v5377 = vld [vmem:[%s5366 + $0x28] sm:$0xf]
        %v5378 = vld [vmem:[%s5366 + $0x2c] sm:$0xf]
        %v5379 = vld [vmem:[%s5366 + $0x30] sm:$0xf]
        %v5380 = vld [vmem:[%s5366 + $0x34] sm:$0xf]
        %v5381 = vld [vmem:[%s5366 + $0x38] sm:$0xf]
        %v5382 = vld [vmem:[%s5366 + $0x3c] sm:$0xf]
        %v5383 = vld [vmem:[%s5366 + $0x40] sm:$0xf]
        %v5384 = vld [vmem:[%s5366 + $0x44] sm:$0xf]
        %v5385 = vld [vmem:[%s5366 + $0x48] sm:$0xf]
        %v5386 = vld [vmem:[%s5366 + $0x4c] sm:$0xf]
        %v5387 = vld [vmem:[%s5366 + $0x50] sm:$0xf]
        %v5388 = vld [vmem:[%s5366 + $0x54] sm:$0xf]
        %v5389 = vld [vmem:[%s5366 + $0x58] sm:$0xf]
        %v5390 = vld [vmem:[%s5366 + $0x5c] sm:$0xf]
        %v5391 = vld [vmem:[%s5366 + $0x60] sm:$0xf]
        %v5392 = vld [vmem:[%s5366 + $0x64] sm:$0xf]
        %v5393 = vld [vmem:[%s5366 + $0x68] sm:$0xf]
        %v5394 = vld [vmem:[%s5366 + $0x6c] sm:$0xf]
        %v5395 = vld [vmem:[%s5366 + $0x70] sm:$0xf]
        %v5396 = vld [vmem:[%s5366 + $0x74] sm:$0xf]
        %v5397 = vld [vmem:[%s5366 + $0x78] sm:$0xf]
        %v5398 = vld [vmem:[%s5366 + $0x7c] sm:$0xf]
        %v5399 = vld [vmem:[%s5366 + $0x80] sm:$0xf]
        %v5400 = vld [vmem:[%s5366 + $0x84] sm:$0xf]
        %v5401 = vld [vmem:[%s5366 + $0x88] sm:$0xf]
        %v5402 = vld [vmem:[%s5366 + $0x8c] sm:$0xf]
        %v5403 = vld [vmem:[%s5366 + $0x90] sm:$0xf]
        %v5404 = vld [vmem:[%s5366 + $0x94] sm:$0xf]
        %v5405 = vld [vmem:[%s5366 + $0x98] sm:$0xf]
        %v5406 = vld [vmem:[%s5366 + $0x9c] sm:$0xf]
        %v5407 = vld [vmem:[%s5366 + $0xa0] sm:$0xf]
        %v5408 = vld [vmem:[%s5366 + $0xa4] sm:$0xf]
        %v5409 = vld [vmem:[%s5366 + $0xa8] sm:$0xf]
        %v5410 = vld [vmem:[%s5366 + $0xac] sm:$0xf]
        %v5411 = vld [vmem:[%s5366 + $0xb0] sm:$0xf]
        %v5412 = vld [vmem:[%s5366 + $0xb4] sm:$0xf]
        %v5413 = vld [vmem:[%s5366 + $0xb8] sm:$0xf]
        %v5414 = vld [vmem:[%s5366 + $0xbc] sm:$0xf]
        %v5415 = vld [vmem:[%s5366 + $0xc0] sm:$0xf]
        %v5416 = vld [vmem:[%s5366 + $0xc4] sm:$0xf]
        %v5417 = vld [vmem:[%s5366 + $0xc8] sm:$0xf]
        %v5418 = vld [vmem:[%s5366 + $0xcc] sm:$0xf]
        %v5419 = vld [vmem:[%s5366 + $0xd0] sm:$0xf]
        %v5420 = vld [vmem:[%s5366 + $0xd4] sm:$0xf]
        %v5421 = vld [vmem:[%s5366 + $0xd8] sm:$0xf]
        %v5422 = vld [vmem:[%s5366 + $0xdc] sm:$0xf]
        %v5479 = vunpack.c.l.b16 %v5367
        %v5480 = vunpack.c.l.b16 %v5368
        %v5481 = vunpack.c.l.b16 %v5369
        %v5482 = vunpack.c.l.b16 %v5370
        %v5483 = vunpack.c.l.b16 %v5371
        %v5484 = vunpack.c.l.b16 %v5372
        %v5485 = vunpack.c.l.b16 %v5373
        %v5486 = vunpack.c.l.b16 %v5374
        %v5487 = vunpack.c.l.b16 %v5375
        %v5488 = vunpack.c.l.b16 %v5376
        %v5489 = vunpack.c.l.b16 %v5377
        %v5490 = vunpack.c.l.b16 %v5378
        %v5491 = vunpack.c.l.b16 %v5379
        %v5492 = vunpack.c.l.b16 %v5380
        %v5493 = vunpack.c.l.b16 %v5381
        %v5494 = vunpack.c.l.b16 %v5382
        %v5495 = vunpack.c.l.b16 %v5383
        %v5496 = vunpack.c.l.b16 %v5384
        %v5497 = vunpack.c.l.b16 %v5385
        %v5498 = vunpack.c.l.b16 %v5386
        %v5499 = vunpack.c.l.b16 %v5387
        %v5500 = vunpack.c.l.b16 %v5388
        %v5501 = vunpack.c.l.b16 %v5389
        %v5502 = vunpack.c.l.b16 %v5390
        %v5503 = vunpack.c.l.b16 %v5391
        %v5504 = vunpack.c.l.b16 %v5392
        %v5505 = vunpack.c.l.b16 %v5393
        %v5506 = vunpack.c.l.b16 %v5394
        %v5507 = vunpack.c.l.b16 %v5395
        %v5508 = vunpack.c.l.b16 %v5396
        %v5509 = vunpack.c.l.b16 %v5397
        %v5510 = vunpack.c.l.b16 %v5398
        %v5511 = vunpack.c.l.b16 %v5399
        %v5512 = vunpack.c.l.b16 %v5400
        %v5513 = vunpack.c.l.b16 %v5401
        %v5514 = vunpack.c.l.b16 %v5402
        %v5515 = vunpack.c.l.b16 %v5403
        %v5516 = vunpack.c.l.b16 %v5404
        %v5517 = vunpack.c.l.b16 %v5405
        %v5518 = vunpack.c.l.b16 %v5406
        %v5519 = vunpack.c.l.b16 %v5407
        %v5520 = vunpack.c.l.b16 %v5408
        %v5521 = vunpack.c.l.b16 %v5409
        %v5522 = vunpack.c.l.b16 %v5410
        %v5523 = vunpack.c.l.b16 %v5411
        %v5524 = vunpack.c.l.b16 %v5412
        %v5525 = vunpack.c.l.b16 %v5413
        %v5526 = vunpack.c.l.b16 %v5414
        %v5527 = vunpack.c.l.b16 %v5415
        %v5528 = vunpack.c.l.b16 %v5416
        %v5529 = vunpack.c.l.b16 %v5417
        %v5530 = vunpack.c.l.b16 %v5418
        %v5531 = vunpack.c.l.b16 %v5419
        %v5532 = vunpack.c.l.b16 %v5420
        %v5533 = vunpack.c.l.b16 %v5421
        %v5534 = vunpack.c.l.b16 %v5422
        %v5535 = vpack.c.b16 %v5480, %v5479
        %v5536 = vpack.c.b16 %v5482, %v5481
        %v5537 = vpack.c.b16 %v5484, %v5483
        %v5538 = vpack.c.b16 %v5486, %v5485
        %v5539 = vpack.c.b16 %v5488, %v5487
        %v5540 = vpack.c.b16 %v5490, %v5489
        %v5541 = vpack.c.b16 %v5492, %v5491
        %v5542 = vpack.c.b16 %v5494, %v5493
        %v5543 = vpack.c.b16 %v5496, %v5495
        %v5544 = vpack.c.b16 %v5498, %v5497
        %v5545 = vpack.c.b16 %v5500, %v5499
        %v5546 = vpack.c.b16 %v5502, %v5501
        %v5547 = vpack.c.b16 %v5504, %v5503
        %v5548 = vpack.c.b16 %v5506, %v5505
        %v5549 = vpack.c.b16 %v5508, %v5507
        %v5550 = vpack.c.b16 %v5510, %v5509
        %v5551 = vpack.c.b16 %v5512, %v5511
        %v5552 = vpack.c.b16 %v5514, %v5513
        %v5553 = vpack.c.b16 %v5516, %v5515
        %v5554 = vpack.c.b16 %v5518, %v5517
        %v5555 = vpack.c.b16 %v5520, %v5519
        %v5556 = vpack.c.b16 %v5522, %v5521
        %v5557 = vpack.c.b16 %v5524, %v5523
        %v5558 = vpack.c.b16 %v5526, %v5525
        %v5559 = vpack.c.b16 %v5528, %v5527
        %v5560 = vpack.c.b16 %v5530, %v5529
        %v5561 = vpack.c.b16 %v5532, %v5531
        %v5562 = vpack.c.b16 %v5534, %v5533
        %v5592 = vsel %vm1925, %v5365, 0
        %5594 = vmatprep.subr.bf16.mxu0 0
        %5595 = vmatpush1.bf16.msra.mxu0 %v5535
        %5596 = vmatprep.subr.bf16.mxu0 0
        %5597 = vmatpush1.bf16.msra.mxu0 %v5536
        %5598 = vmatprep.subr.bf16.mxu0 0
        %5599 = vmatpush1.bf16.msra.mxu0 %v5537
        %5600 = vmatprep.subr.bf16.mxu0 0
        %5601 = vmatpush1.bf16.msra.mxu0 %v5538
        %5602 = vmatprep.subr.bf16.mxu0 0
        %5603 = vmatpush1.bf16.msra.mxu0 %v5539
        %5604 = vmatprep.subr.bf16.mxu0 0
        %5605 = vmatpush1.bf16.msra.mxu0 %v5540
        %5606 = vmatprep.subr.bf16.mxu0 0
        %5607 = vmatpush1.bf16.msra.mxu0 %v5541
        %5608 = vmatprep.subr.bf16.mxu0 0
        %5609 = vmatpush1.bf16.msra.mxu0 %v5542
        %5610 = vmatprep.subr.bf16.mxu0 0
        %5611 = vmatpush1.bf16.msra.mxu0 %v5543
        %5612 = vmatprep.subr.bf16.mxu0 0
        %5613 = vmatpush1.bf16.msra.mxu0 %v5544
        %5614 = vmatprep.subr.bf16.mxu0 0
        %5615 = vmatpush1.bf16.msra.mxu0 %v5545
        %5616 = vmatprep.subr.bf16.mxu0 0
        %5617 = vmatpush1.bf16.msra.mxu0 %v5546
        %5618 = vmatprep.subr.bf16.mxu0 0
        %5619 = vmatpush1.bf16.msra.mxu0 %v5547
        %5620 = vmatprep.subr.bf16.mxu0 0
        %5621 = vmatpush1.bf16.msra.mxu0 %v5548
        %5622 = vmatprep.subr.bf16.mxu0 0
        %5623 = vmatpush1.bf16.msra.mxu0 %v5549
        %5624 = vmatprep.subr.bf16.mxu0 0
        %5625 = vmatpush1.bf16.msra.mxu0 %v5550
        %5626 = vmatprep.mubr.bf16.mxu0 %v5363
        %5627 = vmatmul.mubr.bf16.gmra.mrb[0].mxu0 %v5362
        %v5628 = vpop.f32.mrb[0].mxu0
        %v5629 = vadd.f32 0.0, %v5628
        %v5630 = vpop.f32.mrb[0].mxu0
        %v5631 = vpop.f32.mrb[0].mxu0
        %v5632 = vpop.f32.mrb[0].mxu0
        %5633 = vdwg.mxu0
        %5634 = vmatprep.subr.bf16.mxu0 0
        %5635 = vmatpush1.bf16.msra.mxu0 %v5551
        %5636 = vmatprep.subr.bf16.mxu0 0
        %5637 = vmatpush1.bf16.msra.mxu0 %v5552
        %5638 = vmatprep.subr.bf16.mxu0 0
        %5639 = vmatpush1.bf16.msra.mxu0 %v5553
        %5640 = vmatprep.subr.bf16.mxu0 0
        %5641 = vmatpush1.bf16.msra.mxu0 %v5554
        %5642 = vmatprep.subr.bf16.mxu0 0
        %5643 = vmatpush1.bf16.msra.mxu0 %v5555
        %5644 = vmatprep.subr.bf16.mxu0 0
        %5645 = vmatpush1.bf16.msra.mxu0 %v5556
        %5646 = vmatprep.subr.bf16.mxu0 0
        %5647 = vmatpush1.bf16.msra.mxu0 %v5557
        %5648 = vmatprep.subr.bf16.mxu0 0
        %5649 = vmatpush1.bf16.msra.mxu0 %v5558
        %5650 = vmatprep.subr.bf16.mxu0 0
        %5651 = vmatpush1.bf16.msra.mxu0 %v5559
        %5652 = vmatprep.subr.bf16.mxu0 0
        %5653 = vmatpush1.bf16.msra.mxu0 %v5560
        %5654 = vmatprep.subr.bf16.mxu0 0
        %5655 = vmatpush1.bf16.msra.mxu0 %v5561
        %5656 = vmatprep.subr.bf16.mxu0 0
        %5657 = vmatpush1.bf16.msra.mxu0 %v5562
        %5658 = vmatprep.subr.bf16.mxu0 0
        %5659 = vmatpush1.bf16.msra.mxu0 0
        %5660 = vmatprep.subr.bf16.mxu0 0
        %5661 = vmatpush1.bf16.msra.mxu0 0
        %5662 = vmatprep.subr.bf16.mxu0 0
        %5663 = vmatpush1.bf16.msra.mxu0 0
        %5664 = vmatprep.subr.bf16.mxu0 0
        %5665 = vmatpush1.bf16.msra.mxu0 0
        %5666 = vmatprep.mubr.bf16.mxu0 %v5592
        %5667 = vmatmul.mubr.bf16.gmra.mrb[0].mxu0 %v5364
        %v5668 = vpop.f32.mrb[0].mxu0
        %v5669 = vadd.f32 %v5629, %v5668
        %v5670 = vpop.f32.mrb[0].mxu0
        %v5671 = vpop.f32.mrb[0].mxu0
        %v5672 = vpop.f32.mrb[0].mxu0
        %5673 = vdwg.mxu0
        %v5674 = vadd.f32 %v4991, %v5669
        %s5675 = scalar_lea.vmem %s363, 56 [#allocation2]
        %v5676 = vld [vmem:[%s5675] sm:$0xff]
        %s5677 = scalar_lea.vmem %s363, 168 [#allocation2]
        %v5678 = vld [vmem:[%s5677] sm:$0xff]
        %v5680 = vunpack.c.l.b16 %v5676
        %v5681 = vunpack.c.h.b16 %v5676
        %v5682 = vpack.c.b16 %v5680, %v5680
        %v5683 = vpack.c.b16 %v5681, %v5681
        %v5686 = vsel %vm684, %v5683, 0
        %5688 = vmatprep.subr.bf16.mxu0 %v605
        %5689 = vmatpush1.bf16.msra.mxu0 %v604
        %5690 = vmatprep.subr.bf16.mxu0 %v609
        %5691 = vmatpush1.bf16.msra.mxu0 %v608
        %5692 = vmatprep.subr.bf16.mxu0 %v613
        %5693 = vmatpush1.bf16.msra.mxu0 %v612
        %5694 = vmatprep.subr.bf16.mxu0 %v617
        %5695 = vmatpush1.bf16.msra.mxu0 %v616
        %5696 = vmatprep.subr.bf16.mxu0 %v621
        %5697 = vmatpush1.bf16.msra.mxu0 %v620
        %5698 = vmatprep.subr.bf16.mxu0 %v625
        %5699 = vmatpush1.bf16.msra.mxu0 %v624
        %5700 = vmatprep.subr.bf16.mxu0 %v629
        %5701 = vmatpush1.bf16.msra.mxu0 %v628
        %5702 = vmatprep.subr.bf16.mxu0 %v633
        %5703 = vmatpush1.bf16.msra.mxu0 %v632
        %5704 = vmatprep.subr.bf16.mxu0 %v637
        %5705 = vmatpush1.bf16.msra.mxu0 %v636
        %5706 = vmatprep.subr.bf16.mxu0 %v641
        %5707 = vmatpush1.bf16.msra.mxu0 %v640
        %5708 = vmatprep.subr.bf16.mxu0 0
        %5709 = vmatpush1.bf16.msra.mxu0 0
        %5710 = vmatprep.subr.bf16.mxu0 0
        %5711 = vmatpush1.bf16.msra.mxu0 0
        %5712 = vmatprep.subr.bf16.mxu0 0
        %5713 = vmatpush1.bf16.msra.mxu0 0
        %5714 = vmatprep.subr.bf16.mxu0 0
        %5715 = vmatpush1.bf16.msra.mxu0 0
        %5716 = vmatprep.subr.bf16.mxu0 0
        %5717 = vmatpush1.bf16.msra.mxu0 0
        %5718 = vmatprep.subr.bf16.mxu0 0
        %5719 = vmatpush1.bf16.msra.mxu0 0
        %5720 = vmatprep.mubr.bf16.mxu0 %v5686
        %5721 = vmatmul.mubr.bf16.gmra.mrb[0].mxu0 %v5682
        %v5722 = vpop.f32.mrb[0].mxu0
        %v5723 = vadd.f32 0.0, %v5722
        %v5724 = vpop.f32.mrb[0].mxu0
        %v5725 = vadd.f32 0.0, %v5724
        %v5726 = vpop.f32.mrb[0].mxu0
        %v5727 = vpop.f32.mrb[0].mxu0
        %5728 = vdwg.mxu0
        %5729 = vmatprep.subr.bf16.mxu0 %v607
        %5730 = vmatpush1.bf16.msra.mxu0 %v606
        %5731 = vmatprep.subr.bf16.mxu0 %v611
        %5732 = vmatpush1.bf16.msra.mxu0 %v610
        %5733 = vmatprep.subr.bf16.mxu0 %v615
        %5734 = vmatpush1.bf16.msra.mxu0 %v614
        %5735 = vmatprep.subr.bf16.mxu0 %v619
        %5736 = vmatpush1.bf16.msra.mxu0 %v618
        %5737 = vmatprep.subr.bf16.mxu0 %v623
        %5738 = vmatpush1.bf16.msra.mxu0 %v622
        %5739 = vmatprep.subr.bf16.mxu0 %v627
        %5740 = vmatpush1.bf16.msra.mxu0 %v626
        %5741 = vmatprep.subr.bf16.mxu0 %v631
        %5742 = vmatpush1.bf16.msra.mxu0 %v630
        %5743 = vmatprep.subr.bf16.mxu0 %v635
        %5744 = vmatpush1.bf16.msra.mxu0 %v634
        %5745 = vmatprep.subr.bf16.mxu0 %v639
        %5746 = vmatpush1.bf16.msra.mxu0 %v638
        %5747 = vmatprep.subr.bf16.mxu0 %v643
        %5748 = vmatpush1.bf16.msra.mxu0 %v642
        %5749 = vmatprep.subr.bf16.mxu0 0
        %5750 = vmatpush1.bf16.msra.mxu0 0
        %5751 = vmatprep.subr.bf16.mxu0 0
        %5752 = vmatpush1.bf16.msra.mxu0 0
        %5753 = vmatprep.subr.bf16.mxu0 0
        %5754 = vmatpush1.bf16.msra.mxu0 0
        %5755 = vmatprep.subr.bf16.mxu0 0
        %5756 = vmatpush1.bf16.msra.mxu0 0
        %5757 = vmatprep.subr.bf16.mxu0 0
        %5758 = vmatpush1.bf16.msra.mxu0 0
        %5759 = vmatprep.subr.bf16.mxu0 0
        %5760 = vmatpush1.bf16.msra.mxu0 0
        %5761 = vmatprep.mubr.bf16.mxu0 %v5686
        %5762 = vmatmul.mubr.bf16.gmra.mrb[0].mxu0 %v5682
        %v5763 = vpop.f32.mrb[0].mxu0
        %v5764 = vadd.f32 0.0, %v5763
        %v5765 = vpop.f32.mrb[0].mxu0
        %v5766 = vadd.f32 0.0, %v5765
        %v5767 = vpop.f32.mrb[0].mxu0
        %v5768 = vpop.f32.mrb[0].mxu0
        %5769 = vdwg.mxu0
        %5770 = vmatprep.subr.bf16.mxu0 %v891
        %5771 = vmatpush1.bf16.msra.mxu0 %v890
        %5772 = vmatprep.subr.bf16.mxu0 %v895
        %5773 = vmatpush1.bf16.msra.mxu0 %v894
        %5774 = vmatprep.subr.bf16.mxu0 %v899
        %5775 = vmatpush1.bf16.msra.mxu0 %v898
        %5776 = vmatprep.subr.bf16.mxu0 %v903
        %5777 = vmatpush1.bf16.msra.mxu0 %v902
        %5778 = vmatprep.subr.bf16.mxu0 %v907
        %5779 = vmatpush1.bf16.msra.mxu0 %v906
        %5780 = vmatprep.subr.bf16.mxu0 %v911
        %5781 = vmatpush1.bf16.msra.mxu0 %v910
        %5782 = vmatprep.subr.bf16.mxu0 %v915
        %5783 = vmatpush1.bf16.msra.mxu0 %v914
        %5784 = vmatprep.subr.bf16.mxu0 %v919
        %5785 = vmatpush1.bf16.msra.mxu0 %v918
        %5786 = vmatprep.subr.bf16.mxu0 %v923
        %5787 = vmatpush1.bf16.msra.mxu0 %v922
        %5788 = vmatprep.subr.bf16.mxu0 %v927
        %5789 = vmatpush1.bf16.msra.mxu0 %v926
        %5790 = vmatprep.subr.bf16.mxu0 0
        %5791 = vmatpush1.bf16.msra.mxu0 0
        %5792 = vmatprep.subr.bf16.mxu0 0
        %5793 = vmatpush1.bf16.msra.mxu0 0
        %5794 = vmatprep.subr.bf16.mxu0 0
        %5795 = vmatpush1.bf16.msra.mxu0 0
        %5796 = vmatprep.subr.bf16.mxu0 0
        %5797 = vmatpush1.bf16.msra.mxu0 0
        %5798 = vmatprep.subr.bf16.mxu0 0
        %5799 = vmatpush1.bf16.msra.mxu0 0
        %5800 = vmatprep.subr.bf16.mxu0 0
        %5801 = vmatpush1.bf16.msra.mxu0 0
        %5802 = vmatprep.mubr.bf16.mxu0 %v5686
        %5803 = vmatmul.mubr.bf16.gmra.mrb[0].mxu0 %v5682
        %v5804 = vpop.f32.mrb[0].mxu0
        %v5805 = vadd.f32 0.0, %v5804
        %v5806 = vpop.f32.mrb[0].mxu0
        %v5807 = vadd.f32 0.0, %v5806
        %v5808 = vpop.f32.mrb[0].mxu0
        %v5809 = vpop.f32.mrb[0].mxu0
        %5810 = vdwg.mxu0
        %5811 = vmatprep.subr.bf16.mxu0 %v893
        %5812 = vmatpush1.bf16.msra.mxu0 %v892
        %5813 = vmatprep.subr.bf16.mxu0 %v897
        %5814 = vmatpush1.bf16.msra.mxu0 %v896
        %5815 = vmatprep.subr.bf16.mxu0 %v901
        %5816 = vmatpush1.bf16.msra.mxu0 %v900
        %5817 = vmatprep.subr.bf16.mxu0 %v905
        %5818 = vmatpush1.bf16.msra.mxu0 %v904
        %5819 = vmatprep.subr.bf16.mxu0 %v909
        %5820 = vmatpush1.bf16.msra.mxu0 %v908
        %5821 = vmatprep.subr.bf16.mxu0 %v913
        %5822 = vmatpush1.bf16.msra.mxu0 %v912
        %5823 = vmatprep.subr.bf16.mxu0 %v917
        %5824 = vmatpush1.bf16.msra.mxu0 %v916
        %5825 = vmatprep.subr.bf16.mxu0 %v921
        %5826 = vmatpush1.bf16.msra.mxu0 %v920
        %5827 = vmatprep.subr.bf16.mxu0 %v925
        %5828 = vmatpush1.bf16.msra.mxu0 %v924
        %5829 = vmatprep.subr.bf16.mxu0 %v929
        %5830 = vmatpush1.bf16.msra.mxu0 %v928
        %5831 = vmatprep.subr.bf16.mxu0 0
        %5832 = vmatpush1.bf16.msra.mxu0 0
        %5833 = vmatprep.subr.bf16.mxu0 0
        %5834 = vmatpush1.bf16.msra.mxu0 0
        %5835 = vmatprep.subr.bf16.mxu0 0
        %5836 = vmatpush1.bf16.msra.mxu0 0
        %5837 = vmatprep.subr.bf16.mxu0 0
        %5838 = vmatpush1.bf16.msra.mxu0 0
        %5839 = vmatprep.subr.bf16.mxu0 0
        %5840 = vmatpush1.bf16.msra.mxu0 0
        %5841 = vmatprep.subr.bf16.mxu0 0
        %5842 = vmatpush1.bf16.msra.mxu0 0
        %5843 = vmatprep.mubr.bf16.mxu0 %v5686
        %5844 = vmatmul.mubr.bf16.gmra.mrb[0].mxu0 %v5682
        %v5845 = vpop.f32.mrb[0].mxu0
        %v5846 = vadd.f32 0.0, %v5845
        %v5847 = vpop.f32.mrb[0].mxu0
        %v5848 = vadd.f32 0.0, %v5847
        %v5849 = vpop.f32.mrb[0].mxu0
        %v5850 = vpop.f32.mrb[0].mxu0
        %5851 = vdwg.mxu0
        %v5852 = vmax.f32 %v5723, %v5805
        %v5853 = vmax.f32 %v5725, %v5807
        %v5854 = vmax.f32 %v5764, %v5846
        %v5855 = vmax.f32 %v5766, %v5848
        %v5857 = vunpack.c.l.b16 %v5678
        %v5858 = vunpack.c.h.b16 %v5678
        %v5859 = vpack.c.b16 %v5857, %v5857
        %v5860 = vpack.c.b16 %v5858, %v5858
        %v5863 = vsel %vm684, %v5860, 0
        %5865 = vmatprep.subr.bf16.mxu0 %v605
        %5866 = vmatpush1.bf16.msra.mxu0 %v604
        %5867 = vmatprep.subr.bf16.mxu0 %v609
        %5868 = vmatpush1.bf16.msra.mxu0 %v608
        %5869 = vmatprep.subr.bf16.mxu0 %v613
        %5870 = vmatpush1.bf16.msra.mxu0 %v612
        %5871 = vmatprep.subr.bf16.mxu0 %v617
        %5872 = vmatpush1.bf16.msra.mxu0 %v616
        %5873 = vmatprep.subr.bf16.mxu0 %v621
        %5874 = vmatpush1.bf16.msra.mxu0 %v620
        %5875 = vmatprep.subr.bf16.mxu0 %v625
        %5876 = vmatpush1.bf16.msra.mxu0 %v624
        %5877 = vmatprep.subr.bf16.mxu0 %v629
        %5878 = vmatpush1.bf16.msra.mxu0 %v628
        %5879 = vmatprep.subr.bf16.mxu0 %v633
        %5880 = vmatpush1.bf16.msra.mxu0 %v632
        %5881 = vmatprep.subr.bf16.mxu0 %v637
        %5882 = vmatpush1.bf16.msra.mxu0 %v636
        %5883 = vmatprep.subr.bf16.mxu0 %v641
        %5884 = vmatpush1.bf16.msra.mxu0 %v640
        %5885 = vmatprep.subr.bf16.mxu0 0
        %5886 = vmatpush1.bf16.msra.mxu0 0
        %5887 = vmatprep.subr.bf16.mxu0 0
        %5888 = vmatpush1.bf16.msra.mxu0 0
        %5889 = vmatprep.subr.bf16.mxu0 0
        %5890 = vmatpush1.bf16.msra.mxu0 0
        %5891 = vmatprep.subr.bf16.mxu0 0
        %5892 = vmatpush1.bf16.msra.mxu0 0
        %5893 = vmatprep.subr.bf16.mxu0 0
        %5894 = vmatpush1.bf16.msra.mxu0 0
        %5895 = vmatprep.subr.bf16.mxu0 0
        %5896 = vmatpush1.bf16.msra.mxu0 0
        %5897 = vmatprep.mubr.bf16.mxu0 %v5863
        %5898 = vmatmul.mubr.bf16.gmra.mrb[0].mxu0 %v5859
        %v5899 = vpop.f32.mrb[0].mxu0
        %v5900 = vadd.f32 0.0, %v5899
        %v5901 = vpop.f32.mrb[0].mxu0
        %v5902 = vadd.f32 0.0, %v5901
        %v5903 = vpop.f32.mrb[0].mxu0
        %v5904 = vpop.f32.mrb[0].mxu0
        %5905 = vdwg.mxu0
        %5906 = vmatprep.subr.bf16.mxu0 %v607
        %5907 = vmatpush1.bf16.msra.mxu0 %v606
        %5908 = vmatprep.subr.bf16.mxu0 %v611
        %5909 = vmatpush1.bf16.msra.mxu0 %v610
        %5910 = vmatprep.subr.bf16.mxu0 %v615
        %5911 = vmatpush1.bf16.msra.mxu0 %v614
        %5912 = vmatprep.subr.bf16.mxu0 %v619
        %5913 = vmatpush1.bf16.msra.mxu0 %v618
        %5914 = vmatprep.subr.bf16.mxu0 %v623
        %5915 = vmatpush1.bf16.msra.mxu0 %v622
        %5916 = vmatprep.subr.bf16.mxu0 %v627
        %5917 = vmatpush1.bf16.msra.mxu0 %v626
        %5918 = vmatprep.subr.bf16.mxu0 %v631
        %5919 = vmatpush1.bf16.msra.mxu0 %v630
        %5920 = vmatprep.subr.bf16.mxu0 %v635
        %5921 = vmatpush1.bf16.msra.mxu0 %v634
        %5922 = vmatprep.subr.bf16.mxu0 %v639
        %5923 = vmatpush1.bf16.msra.mxu0 %v638
        %5924 = vmatprep.subr.bf16.mxu0 %v643
        %5925 = vmatpush1.bf16.msra.mxu0 %v642
        %5926 = vmatprep.subr.bf16.mxu0 0
        %5927 = vmatpush1.bf16.msra.mxu0 0
        %5928 = vmatprep.subr.bf16.mxu0 0
        %5929 = vmatpush1.bf16.msra.mxu0 0
        %5930 = vmatprep.subr.bf16.mxu0 0
        %5931 = vmatpush1.bf16.msra.mxu0 0
        %5932 = vmatprep.subr.bf16.mxu0 0
        %5933 = vmatpush1.bf16.msra.mxu0 0
        %5934 = vmatprep.subr.bf16.mxu0 0
        %5935 = vmatpush1.bf16.msra.mxu0 0
        %5936 = vmatprep.subr.bf16.mxu0 0
        %5937 = vmatpush1.bf16.msra.mxu0 0
        %5938 = vmatprep.mubr.bf16.mxu0 %v5863
        %5939 = vmatmul.mubr.bf16.gmra.mrb[0].mxu0 %v5859
        %v5940 = vpop.f32.mrb[0].mxu0
        %v5941 = vadd.f32 0.0, %v5940
        %v5942 = vpop.f32.mrb[0].mxu0
        %v5943 = vadd.f32 0.0, %v5942
        %v5944 = vpop.f32.mrb[0].mxu0
        %v5945 = vpop.f32.mrb[0].mxu0
        %5946 = vdwg.mxu0
        %5947 = vmatprep.subr.bf16.mxu0 %v891
        %5948 = vmatpush1.bf16.msra.mxu0 %v890
        %5949 = vmatprep.subr.bf16.mxu0 %v895
        %5950 = vmatpush1.bf16.msra.mxu0 %v894
        %5951 = vmatprep.subr.bf16.mxu0 %v899
        %5952 = vmatpush1.bf16.msra.mxu0 %v898
        %5953 = vmatprep.subr.bf16.mxu0 %v903
        %5954 = vmatpush1.bf16.msra.mxu0 %v902
        %5955 = vmatprep.subr.bf16.mxu0 %v907
        %5956 = vmatpush1.bf16.msra.mxu0 %v906
        %5957 = vmatprep.subr.bf16.mxu0 %v911
        %5958 = vmatpush1.bf16.msra.mxu0 %v910
        %5959 = vmatprep.subr.bf16.mxu0 %v915
        %5960 = vmatpush1.bf16.msra.mxu0 %v914
        %5961 = vmatprep.subr.bf16.mxu0 %v919
        %5962 = vmatpush1.bf16.msra.mxu0 %v918
        %5963 = vmatprep.subr.bf16.mxu0 %v923
        %5964 = vmatpush1.bf16.msra.mxu0 %v922
        %5965 = vmatprep.subr.bf16.mxu0 %v927
        %5966 = vmatpush1.bf16.msra.mxu0 %v926
        %5967 = vmatprep.subr.bf16.mxu0 0
        %5968 = vmatpush1.bf16.msra.mxu0 0
        %5969 = vmatprep.subr.bf16.mxu0 0
        %5970 = vmatpush1.bf16.msra.mxu0 0
        %5971 = vmatprep.subr.bf16.mxu0 0
        %5972 = vmatpush1.bf16.msra.mxu0 0
        %5973 = vmatprep.subr.bf16.mxu0 0
        %5974 = vmatpush1.bf16.msra.mxu0 0
        %5975 = vmatprep.subr.bf16.mxu0 0
        %5976 = vmatpush1.bf16.msra.mxu0 0
        %5977 = vmatprep.subr.bf16.mxu0 0
        %5978 = vmatpush1.bf16.msra.mxu0 0
        %5979 = vmatprep.mubr.bf16.mxu0 %v5863
        %5980 = vmatmul.mubr.bf16.gmra.mrb[0].mxu0 %v5859
        %v5981 = vpop.f32.mrb[0].mxu0
        %v5982 = vadd.f32 0.0, %v5981
        %v5983 = vpop.f32.mrb[0].mxu0
        %v5984 = vadd.f32 0.0, %v5983
        %v5985 = vpop.f32.mrb[0].mxu0
        %v5986 = vpop.f32.mrb[0].mxu0
        %5987 = vdwg.mxu0
        %5988 = vmatprep.subr.bf16.mxu0 %v893
        %5989 = vmatpush1.bf16.msra.mxu0 %v892
        %5990 = vmatprep.subr.bf16.mxu0 %v897
        %5991 = vmatpush1.bf16.msra.mxu0 %v896
        %5992 = vmatprep.subr.bf16.mxu0 %v901
        %5993 = vmatpush1.bf16.msra.mxu0 %v900
        %5994 = vmatprep.subr.bf16.mxu0 %v905
        %5995 = vmatpush1.bf16.msra.mxu0 %v904
        %5996 = vmatprep.subr.bf16.mxu0 %v909
        %5997 = vmatpush1.bf16.msra.mxu0 %v908
        %5998 = vmatprep.subr.bf16.mxu0 %v913
        %5999 = vmatpush1.bf16.msra.mxu0 %v912
        %6000 = vmatprep.subr.bf16.mxu0 %v917
        %6001 = vmatpush1.bf16.msra.mxu0 %v916
        %6002 = vmatprep.subr.bf16.mxu0 %v921
        %6003 = vmatpush1.bf16.msra.mxu0 %v920
        %6004 = vmatprep.subr.bf16.mxu0 %v925
        %6005 = vmatpush1.bf16.msra.mxu0 %v924
        %6006 = vmatprep.subr.bf16.mxu0 %v929
        %6007 = vmatpush1.bf16.msra.mxu0 %v928
        %6008 = vmatprep.subr.bf16.mxu0 0
        %6009 = vmatpush1.bf16.msra.mxu0 0
        %6010 = vmatprep.subr.bf16.mxu0 0
        %6011 = vmatpush1.bf16.msra.mxu0 0
        %6012 = vmatprep.subr.bf16.mxu0 0
        %6013 = vmatpush1.bf16.msra.mxu0 0
        %6014 = vmatprep.subr.bf16.mxu0 0
        %6015 = vmatpush1.bf16.msra.mxu0 0
        %6016 = vmatprep.subr.bf16.mxu0 0
        %6017 = vmatpush1.bf16.msra.mxu0 0
        %6018 = vmatprep.subr.bf16.mxu0 0
        %6019 = vmatpush1.bf16.msra.mxu0 0
        %6020 = vmatprep.mubr.bf16.mxu0 %v5863
        %6021 = vmatmul.mubr.bf16.gmra.mrb[0].mxu0 %v5859
        %v6022 = vpop.f32.mrb[0].mxu0
        %v6023 = vadd.f32 0.0, %v6022
        %v6024 = vpop.f32.mrb[0].mxu0
        %v6025 = vadd.f32 0.0, %v6024
        %v6026 = vpop.f32.mrb[0].mxu0
        %v6027 = vpop.f32.mrb[0].mxu0
        %6028 = vdwg.mxu0
        %v6029 = vmax.f32 %v5900, %v5982
        %v6030 = vmax.f32 %v5902, %v5984
        %v6031 = vmax.f32 %v5941, %v6023
        %v6032 = vmax.f32 %v5943, %v6025
        %v6033 = vmax.f32 %v5852, %v6029
        %v6034 = vmax.f32 %v5853, %v6030
        %v6035 = vmax.f32 %v5854, %v6031
        %v6036 = vmax.f32 %v5855, %v6032
        %v6037 = vadd.f32 %v6033, %v1241
        %v6038 = vadd.f32 %v6034, %v1245
        %v6039 = vadd.f32 %v6035, %v1249
        %v6040 = vadd.f32 %v6036, %v1253
        %v6041 = vmax.f32 %v6037, 0.0
        %v6042 = vmax.f32 %v6038, 0.0
        %v6043 = vmax.f32 %v6039, 0.0
        %v6044 = vmax.f32 %v6040, 0.0
        %v6045 = vpack.c.bf16 %v6041, %v6041
        %v6046 = vpack.c.bf16 %v6042, %v6042
        %v6047 = vpack.c.bf16 %v6043, %v6043
        %v6048 = vpack.c.bf16 %v6044, %v6044
        %s6049 = scalar_lea.vmem %s4, 1568
        %v6050 = vld [vmem:[%s6049] sm:$0xf]
        %v6051 = vld [vmem:[%s6049 + $0x4] sm:$0xf]
        %v6052 = vld [vmem:[%s6049 + $0x8] sm:$0xf]
        %v6053 = vld [vmem:[%s6049 + $0xc] sm:$0xf]
        %v6054 = vld [vmem:[%s6049 + $0x10] sm:$0xf]
        %v6055 = vld [vmem:[%s6049 + $0x14] sm:$0xf]
        %v6056 = vld [vmem:[%s6049 + $0x18] sm:$0xf]
        %v6057 = vld [vmem:[%s6049 + $0x1c] sm:$0xf]
        %v6058 = vld [vmem:[%s6049 + $0x20] sm:$0xf]
        %v6059 = vld [vmem:[%s6049 + $0x24] sm:$0xf]
        %v6060 = vld [vmem:[%s6049 + $0x28] sm:$0xf]
        %v6061 = vld [vmem:[%s6049 + $0x2c] sm:$0xf]
        %v6062 = vld [vmem:[%s6049 + $0x30] sm:$0xf]
        %v6063 = vld [vmem:[%s6049 + $0x34] sm:$0xf]
        %v6064 = vld [vmem:[%s6049 + $0x38] sm:$0xf]
        %v6065 = vld [vmem:[%s6049 + $0x3c] sm:$0xf]
        %v6066 = vld [vmem:[%s6049 + $0x40] sm:$0xf]
        %v6067 = vld [vmem:[%s6049 + $0x44] sm:$0xf]
        %v6068 = vld [vmem:[%s6049 + $0x48] sm:$0xf]
        %v6069 = vld [vmem:[%s6049 + $0x4c] sm:$0xf]
        %v6070 = vld [vmem:[%s6049 + $0x50] sm:$0xf]
        %v6071 = vld [vmem:[%s6049 + $0x54] sm:$0xf]
        %v6072 = vld [vmem:[%s6049 + $0x58] sm:$0xf]
        %v6073 = vld [vmem:[%s6049 + $0x5c] sm:$0xf]
        %v6074 = vld [vmem:[%s6049 + $0x60] sm:$0xf]
        %v6075 = vld [vmem:[%s6049 + $0x64] sm:$0xf]
        %v6076 = vld [vmem:[%s6049 + $0x68] sm:$0xf]
        %v6077 = vld [vmem:[%s6049 + $0x6c] sm:$0xf]
        %v6078 = vld [vmem:[%s6049 + $0x70] sm:$0xf]
        %v6079 = vld [vmem:[%s6049 + $0x74] sm:$0xf]
        %v6080 = vld [vmem:[%s6049 + $0x78] sm:$0xf]
        %v6081 = vld [vmem:[%s6049 + $0x7c] sm:$0xf]
        %v6082 = vld [vmem:[%s6049 + $0x80] sm:$0xf]
        %v6083 = vld [vmem:[%s6049 + $0x84] sm:$0xf]
        %v6084 = vld [vmem:[%s6049 + $0x88] sm:$0xf]
        %v6085 = vld [vmem:[%s6049 + $0x8c] sm:$0xf]
        %v6086 = vld [vmem:[%s6049 + $0x90] sm:$0xf]
        %v6087 = vld [vmem:[%s6049 + $0x94] sm:$0xf]
        %v6088 = vld [vmem:[%s6049 + $0x98] sm:$0xf]
        %v6089 = vld [vmem:[%s6049 + $0x9c] sm:$0xf]
        %v6090 = vld [vmem:[%s6049 + $0xa0] sm:$0xf]
        %v6091 = vld [vmem:[%s6049 + $0xa4] sm:$0xf]
        %v6092 = vld [vmem:[%s6049 + $0xa8] sm:$0xf]
        %v6093 = vld [vmem:[%s6049 + $0xac] sm:$0xf]
        %v6094 = vld [vmem:[%s6049 + $0xb0] sm:$0xf]
        %v6095 = vld [vmem:[%s6049 + $0xb4] sm:$0xf]
        %v6096 = vld [vmem:[%s6049 + $0xb8] sm:$0xf]
        %v6097 = vld [vmem:[%s6049 + $0xbc] sm:$0xf]
        %v6098 = vld [vmem:[%s6049 + $0xc0] sm:$0xf]
        %v6099 = vld [vmem:[%s6049 + $0xc4] sm:$0xf]
        %v6100 = vld [vmem:[%s6049 + $0xc8] sm:$0xf]
        %v6101 = vld [vmem:[%s6049 + $0xcc] sm:$0xf]
        %v6102 = vld [vmem:[%s6049 + $0xd0] sm:$0xf]
        %v6103 = vld [vmem:[%s6049 + $0xd4] sm:$0xf]
        %v6104 = vld [vmem:[%s6049 + $0xd8] sm:$0xf]
        %v6105 = vld [vmem:[%s6049 + $0xdc] sm:$0xf]
        %v6162 = vunpack.c.l.b16 %v6050
        %v6163 = vunpack.c.l.b16 %v6051
        %v6164 = vunpack.c.l.b16 %v6052
        %v6165 = vunpack.c.l.b16 %v6053
        %v6166 = vunpack.c.l.b16 %v6054
        %v6167 = vunpack.c.l.b16 %v6055
        %v6168 = vunpack.c.l.b16 %v6056
        %v6169 = vunpack.c.l.b16 %v6057
        %v6170 = vunpack.c.l.b16 %v6058
        %v6171 = vunpack.c.l.b16 %v6059
        %v6172 = vunpack.c.l.b16 %v6060
        %v6173 = vunpack.c.l.b16 %v6061
        %v6174 = vunpack.c.l.b16 %v6062
        %v6175 = vunpack.c.l.b16 %v6063
        %v6176 = vunpack.c.l.b16 %v6064
        %v6177 = vunpack.c.l.b16 %v6065
        %v6178 = vunpack.c.l.b16 %v6066
        %v6179 = vunpack.c.l.b16 %v6067
        %v6180 = vunpack.c.l.b16 %v6068
        %v6181 = vunpack.c.l.b16 %v6069
        %v6182 = vunpack.c.l.b16 %v6070
        %v6183 = vunpack.c.l.b16 %v6071
        %v6184 = vunpack.c.l.b16 %v6072
        %v6185 = vunpack.c.l.b16 %v6073
        %v6186 = vunpack.c.l.b16 %v6074
        %v6187 = vunpack.c.l.b16 %v6075
        %v6188 = vunpack.c.l.b16 %v6076
        %v6189 = vunpack.c.l.b16 %v6077
        %v6190 = vunpack.c.l.b16 %v6078
        %v6191 = vunpack.c.l.b16 %v6079
        %v6192 = vunpack.c.l.b16 %v6080
        %v6193 = vunpack.c.l.b16 %v6081
        %v6194 = vunpack.c.l.b16 %v6082
        %v6195 = vunpack.c.l.b16 %v6083
        %v6196 = vunpack.c.l.b16 %v6084
        %v6197 = vunpack.c.l.b16 %v6085
        %v6198 = vunpack.c.l.b16 %v6086
        %v6199 = vunpack.c.l.b16 %v6087
        %v6200 = vunpack.c.l.b16 %v6088
        %v6201 = vunpack.c.l.b16 %v6089
        %v6202 = vunpack.c.l.b16 %v6090
        %v6203 = vunpack.c.l.b16 %v6091
        %v6204 = vunpack.c.l.b16 %v6092
        %v6205 = vunpack.c.l.b16 %v6093
        %v6206 = vunpack.c.l.b16 %v6094
        %v6207 = vunpack.c.l.b16 %v6095
        %v6208 = vunpack.c.l.b16 %v6096
        %v6209 = vunpack.c.l.b16 %v6097
        %v6210 = vunpack.c.l.b16 %v6098
        %v6211 = vunpack.c.l.b16 %v6099
        %v6212 = vunpack.c.l.b16 %v6100
        %v6213 = vunpack.c.l.b16 %v6101
        %v6214 = vunpack.c.l.b16 %v6102
        %v6215 = vunpack.c.l.b16 %v6103
        %v6216 = vunpack.c.l.b16 %v6104
        %v6217 = vunpack.c.l.b16 %v6105
        %v6218 = vpack.c.b16 %v6163, %v6162
        %v6219 = vpack.c.b16 %v6165, %v6164
        %v6220 = vpack.c.b16 %v6167, %v6166
        %v6221 = vpack.c.b16 %v6169, %v6168
        %v6222 = vpack.c.b16 %v6171, %v6170
        %v6223 = vpack.c.b16 %v6173, %v6172
        %v6224 = vpack.c.b16 %v6175, %v6174
        %v6225 = vpack.c.b16 %v6177, %v6176
        %v6226 = vpack.c.b16 %v6179, %v6178
        %v6227 = vpack.c.b16 %v6181, %v6180
        %v6228 = vpack.c.b16 %v6183, %v6182
        %v6229 = vpack.c.b16 %v6185, %v6184
        %v6230 = vpack.c.b16 %v6187, %v6186
        %v6231 = vpack.c.b16 %v6189, %v6188
        %v6232 = vpack.c.b16 %v6191, %v6190
        %v6233 = vpack.c.b16 %v6193, %v6192
        %v6234 = vpack.c.b16 %v6195, %v6194
        %v6235 = vpack.c.b16 %v6197, %v6196
        %v6236 = vpack.c.b16 %v6199, %v6198
        %v6237 = vpack.c.b16 %v6201, %v6200
        %v6238 = vpack.c.b16 %v6203, %v6202
        %v6239 = vpack.c.b16 %v6205, %v6204
        %v6240 = vpack.c.b16 %v6207, %v6206
        %v6241 = vpack.c.b16 %v6209, %v6208
        %v6242 = vpack.c.b16 %v6211, %v6210
        %v6243 = vpack.c.b16 %v6213, %v6212
        %v6244 = vpack.c.b16 %v6215, %v6214
        %v6245 = vpack.c.b16 %v6217, %v6216
        %v6275 = vsel %vm1925, %v6048, 0
        %6277 = vmatprep.subr.bf16.mxu0 0
        %6278 = vmatpush1.bf16.msra.mxu0 %v6218
        %6279 = vmatprep.subr.bf16.mxu0 0
        %6280 = vmatpush1.bf16.msra.mxu0 %v6219
        %6281 = vmatprep.subr.bf16.mxu0 0
        %6282 = vmatpush1.bf16.msra.mxu0 %v6220
        %6283 = vmatprep.subr.bf16.mxu0 0
        %6284 = vmatpush1.bf16.msra.mxu0 %v6221
        %6285 = vmatprep.subr.bf16.mxu0 0
        %6286 = vmatpush1.bf16.msra.mxu0 %v6222
        %6287 = vmatprep.subr.bf16.mxu0 0
        %6288 = vmatpush1.bf16.msra.mxu0 %v6223
        %6289 = vmatprep.subr.bf16.mxu0 0
        %6290 = vmatpush1.bf16.msra.mxu0 %v6224
        %6291 = vmatprep.subr.bf16.mxu0 0
        %6292 = vmatpush1.bf16.msra.mxu0 %v6225
        %6293 = vmatprep.subr.bf16.mxu0 0
        %6294 = vmatpush1.bf16.msra.mxu0 %v6226
        %6295 = vmatprep.subr.bf16.mxu0 0
        %6296 = vmatpush1.bf16.msra.mxu0 %v6227
        %6297 = vmatprep.subr.bf16.mxu0 0
        %6298 = vmatpush1.bf16.msra.mxu0 %v6228
        %6299 = vmatprep.subr.bf16.mxu0 0
        %6300 = vmatpush1.bf16.msra.mxu0 %v6229
        %6301 = vmatprep.subr.bf16.mxu0 0
        %6302 = vmatpush1.bf16.msra.mxu0 %v6230
        %6303 = vmatprep.subr.bf16.mxu0 0
        %6304 = vmatpush1.bf16.msra.mxu0 %v6231
        %6305 = vmatprep.subr.bf16.mxu0 0
        %6306 = vmatpush1.bf16.msra.mxu0 %v6232
        %6307 = vmatprep.subr.bf16.mxu0 0
        %6308 = vmatpush1.bf16.msra.mxu0 %v6233
        %6309 = vmatprep.mubr.bf16.mxu0 %v6046
        %6310 = vmatmul.mubr.bf16.gmra.mrb[0].mxu0 %v6045
        %v6311 = vpop.f32.mrb[0].mxu0
        %v6312 = vadd.f32 0.0, %v6311
        %v6313 = vpop.f32.mrb[0].mxu0
        %v6314 = vpop.f32.mrb[0].mxu0
        %v6315 = vpop.f32.mrb[0].mxu0
        %6316 = vdwg.mxu0
        %6317 = vmatprep.subr.bf16.mxu0 0
        %6318 = vmatpush1.bf16.msra.mxu0 %v6234
        %6319 = vmatprep.subr.bf16.mxu0 0
        %6320 = vmatpush1.bf16.msra.mxu0 %v6235
        %6321 = vmatprep.subr.bf16.mxu0 0
        %6322 = vmatpush1.bf16.msra.mxu0 %v6236
        %6323 = vmatprep.subr.bf16.mxu0 0
        %6324 = vmatpush1.bf16.msra.mxu0 %v6237
        %6325 = vmatprep.subr.bf16.mxu0 0
        %6326 = vmatpush1.bf16.msra.mxu0 %v6238
        %6327 = vmatprep.subr.bf16.mxu0 0
        %6328 = vmatpush1.bf16.msra.mxu0 %v6239
        %6329 = vmatprep.subr.bf16.mxu0 0
        %6330 = vmatpush1.bf16.msra.mxu0 %v6240
        %6331 = vmatprep.subr.bf16.mxu0 0
        %6332 = vmatpush1.bf16.msra.mxu0 %v6241
        %6333 = vmatprep.subr.bf16.mxu0 0
        %6334 = vmatpush1.bf16.msra.mxu0 %v6242
        %6335 = vmatprep.subr.bf16.mxu0 0
        %6336 = vmatpush1.bf16.msra.mxu0 %v6243
        %6337 = vmatprep.subr.bf16.mxu0 0
        %6338 = vmatpush1.bf16.msra.mxu0 %v6244
        %6339 = vmatprep.subr.bf16.mxu0 0
        %6340 = vmatpush1.bf16.msra.mxu0 %v6245
        %6341 = vmatprep.subr.bf16.mxu0 0
        %6342 = vmatpush1.bf16.msra.mxu0 0
        %6343 = vmatprep.subr.bf16.mxu0 0
        %6344 = vmatpush1.bf16.msra.mxu0 0
        %6345 = vmatprep.subr.bf16.mxu0 0
        %6346 = vmatpush1.bf16.msra.mxu0 0
        %6347 = vmatprep.subr.bf16.mxu0 0
        %6348 = vmatpush1.bf16.msra.mxu0 0
        %6349 = vmatprep.mubr.bf16.mxu0 %v6275
        %6350 = vmatmul.mubr.bf16.gmra.mrb[0].mxu0 %v6047
        %v6351 = vpop.f32.mrb[0].mxu0
        %v6352 = vadd.f32 %v6312, %v6351
        %v6353 = vpop.f32.mrb[0].mxu0
        %v6354 = vpop.f32.mrb[0].mxu0
        %v6355 = vpop.f32.mrb[0].mxu0
        %6356 = vdwg.mxu0
        %v6357 = vadd.f32 %v5674, %v6352
        %s6358 = scalar_lea.vmem %s363, 64 [#allocation2]
        %v6359 = vld [vmem:[%s6358] sm:$0xff]
        %s6360 = scalar_lea.vmem %s363, 176 [#allocation2]
        %v6361 = vld [vmem:[%s6360] sm:$0xff]
        %v6363 = vunpack.c.l.b16 %v6359
        %v6364 = vunpack.c.h.b16 %v6359
        %v6365 = vpack.c.b16 %v6363, %v6363
        %v6366 = vpack.c.b16 %v6364, %v6364
        %v6369 = vsel %vm684, %v6366, 0
        %6371 = vmatprep.subr.bf16.mxu0 %v605
        %6372 = vmatpush1.bf16.msra.mxu0 %v604
        %6373 = vmatprep.subr.bf16.mxu0 %v609
        %6374 = vmatpush1.bf16.msra.mxu0 %v608
        %6375 = vmatprep.subr.bf16.mxu0 %v613
        %6376 = vmatpush1.bf16.msra.mxu0 %v612
        %6377 = vmatprep.subr.bf16.mxu0 %v617
        %6378 = vmatpush1.bf16.msra.mxu0 %v616
        %6379 = vmatprep.subr.bf16.mxu0 %v621
        %6380 = vmatpush1.bf16.msra.mxu0 %v620
        %6381 = vmatprep.subr.bf16.mxu0 %v625
        %6382 = vmatpush1.bf16.msra.mxu0 %v624
        %6383 = vmatprep.subr.bf16.mxu0 %v629
        %6384 = vmatpush1.bf16.msra.mxu0 %v628
        %6385 = vmatprep.subr.bf16.mxu0 %v633
        %6386 = vmatpush1.bf16.msra.mxu0 %v632
        %6387 = vmatprep.subr.bf16.mxu0 %v637
        %6388 = vmatpush1.bf16.msra.mxu0 %v636
        %6389 = vmatprep.subr.bf16.mxu0 %v641
        %6390 = vmatpush1.bf16.msra.mxu0 %v640
        %6391 = vmatprep.subr.bf16.mxu0 0
        %6392 = vmatpush1.bf16.msra.mxu0 0
        %6393 = vmatprep.subr.bf16.mxu0 0
        %6394 = vmatpush1.bf16.msra.mxu0 0
        %6395 = vmatprep.subr.bf16.mxu0 0
        %6396 = vmatpush1.bf16.msra.mxu0 0
        %6397 = vmatprep.subr.bf16.mxu0 0
        %6398 = vmatpush1.bf16.msra.mxu0 0
        %6399 = vmatprep.subr.bf16.mxu0 0
        %6400 = vmatpush1.bf16.msra.mxu0 0
        %6401 = vmatprep.subr.bf16.mxu0 0
        %6402 = vmatpush1.bf16.msra.mxu0 0
        %6403 = vmatprep.mubr.bf16.mxu0 %v6369
        %6404 = vmatmul.mubr.bf16.gmra.mrb[0].mxu0 %v6365
        %v6405 = vpop.f32.mrb[0].mxu0
        %v6406 = vadd.f32 0.0, %v6405
        %v6407 = vpop.f32.mrb[0].mxu0
        %v6408 = vadd.f32 0.0, %v6407
        %v6409 = vpop.f32.mrb[0].mxu0
        %v6410 = vpop.f32.mrb[0].mxu0
        %6411 = vdwg.mxu0
        %6412 = vmatprep.subr.bf16.mxu0 %v607
        %6413 = vmatpush1.bf16.msra.mxu0 %v606
        %6414 = vmatprep.subr.bf16.mxu0 %v611
        %6415 = vmatpush1.bf16.msra.mxu0 %v610
        %6416 = vmatprep.subr.bf16.mxu0 %v615
        %6417 = vmatpush1.bf16.msra.mxu0 %v614
        %6418 = vmatprep.subr.bf16.mxu0 %v619
        %6419 = vmatpush1.bf16.msra.mxu0 %v618
        %6420 = vmatprep.subr.bf16.mxu0 %v623
        %6421 = vmatpush1.bf16.msra.mxu0 %v622
        %6422 = vmatprep.subr.bf16.mxu0 %v627
        %6423 = vmatpush1.bf16.msra.mxu0 %v626
        %6424 = vmatprep.subr.bf16.mxu0 %v631
        %6425 = vmatpush1.bf16.msra.mxu0 %v630
        %6426 = vmatprep.subr.bf16.mxu0 %v635
        %6427 = vmatpush1.bf16.msra.mxu0 %v634
        %6428 = vmatprep.subr.bf16.mxu0 %v639
        %6429 = vmatpush1.bf16.msra.mxu0 %v638
        %6430 = vmatprep.subr.bf16.mxu0 %v643
        %6431 = vmatpush1.bf16.msra.mxu0 %v642
        %6432 = vmatprep.subr.bf16.mxu0 0
        %6433 = vmatpush1.bf16.msra.mxu0 0
        %6434 = vmatprep.subr.bf16.mxu0 0
        %6435 = vmatpush1.bf16.msra.mxu0 0
        %6436 = vmatprep.subr.bf16.mxu0 0
        %6437 = vmatpush1.bf16.msra.mxu0 0
        %6438 = vmatprep.subr.bf16.mxu0 0
        %6439 = vmatpush1.bf16.msra.mxu0 0
        %6440 = vmatprep.subr.bf16.mxu0 0
        %6441 = vmatpush1.bf16.msra.mxu0 0
        %6442 = vmatprep.subr.bf16.mxu0 0
        %6443 = vmatpush1.bf16.msra.mxu0 0
        %6444 = vmatprep.mubr.bf16.mxu0 %v6369
        %6445 = vmatmul.mubr.bf16.gmra.mrb[0].mxu0 %v6365
        %v6446 = vpop.f32.mrb[0].mxu0
        %v6447 = vadd.f32 0.0, %v6446
        %v6448 = vpop.f32.mrb[0].mxu0
        %v6449 = vadd.f32 0.0, %v6448
        %v6450 = vpop.f32.mrb[0].mxu0
        %v6451 = vpop.f32.mrb[0].mxu0
        %6452 = vdwg.mxu0
        %6453 = vmatprep.subr.bf16.mxu0 %v891
        %6454 = vmatpush1.bf16.msra.mxu0 %v890
        %6455 = vmatprep.subr.bf16.mxu0 %v895
        %6456 = vmatpush1.bf16.msra.mxu0 %v894
        %6457 = vmatprep.subr.bf16.mxu0 %v899
        %6458 = vmatpush1.bf16.msra.mxu0 %v898
        %6459 = vmatprep.subr.bf16.mxu0 %v903
        %6460 = vmatpush1.bf16.msra.mxu0 %v902
        %6461 = vmatprep.subr.bf16.mxu0 %v907
        %6462 = vmatpush1.bf16.msra.mxu0 %v906
        %6463 = vmatprep.subr.bf16.mxu0 %v911
        %6464 = vmatpush1.bf16.msra.mxu0 %v910
        %6465 = vmatprep.subr.bf16.mxu0 %v915
        %6466 = vmatpush1.bf16.msra.mxu0 %v914
        %6467 = vmatprep.subr.bf16.mxu0 %v919
        %6468 = vmatpush1.bf16.msra.mxu0 %v918
        %6469 = vmatprep.subr.bf16.mxu0 %v923
        %6470 = vmatpush1.bf16.msra.mxu0 %v922
        %6471 = vmatprep.subr.bf16.mxu0 %v927
        %6472 = vmatpush1.bf16.msra.mxu0 %v926
        %6473 = vmatprep.subr.bf16.mxu0 0
        %6474 = vmatpush1.bf16.msra.mxu0 0
        %6475 = vmatprep.subr.bf16.mxu0 0
        %6476 = vmatpush1.bf16.msra.mxu0 0
        %6477 = vmatprep.subr.bf16.mxu0 0
        %6478 = vmatpush1.bf16.msra.mxu0 0
        %6479 = vmatprep.subr.bf16.mxu0 0
        %6480 = vmatpush1.bf16.msra.mxu0 0
        %6481 = vmatprep.subr.bf16.mxu0 0
        %6482 = vmatpush1.bf16.msra.mxu0 0
        %6483 = vmatprep.subr.bf16.mxu0 0
        %6484 = vmatpush1.bf16.msra.mxu0 0
        %6485 = vmatprep.mubr.bf16.mxu0 %v6369
        %6486 = vmatmul.mubr.bf16.gmra.mrb[0].mxu0 %v6365
        %v6487 = vpop.f32.mrb[0].mxu0
        %v6488 = vadd.f32 0.0, %v6487
        %v6489 = vpop.f32.mrb[0].mxu0
        %v6490 = vadd.f32 0.0, %v6489
        %v6491 = vpop.f32.mrb[0].mxu0
        %v6492 = vpop.f32.mrb[0].mxu0
        %6493 = vdwg.mxu0
        %6494 = vmatprep.subr.bf16.mxu0 %v893
        %6495 = vmatpush1.bf16.msra.mxu0 %v892
        %6496 = vmatprep.subr.bf16.mxu0 %v897
        %6497 = vmatpush1.bf16.msra.mxu0 %v896
        %6498 = vmatprep.subr.bf16.mxu0 %v901
        %6499 = vmatpush1.bf16.msra.mxu0 %v900
        %6500 = vmatprep.subr.bf16.mxu0 %v905
        %6501 = vmatpush1.bf16.msra.mxu0 %v904
        %6502 = vmatprep.subr.bf16.mxu0 %v909
        %6503 = vmatpush1.bf16.msra.mxu0 %v908
        %6504 = vmatprep.subr.bf16.mxu0 %v913
        %6505 = vmatpush1.bf16.msra.mxu0 %v912
        %6506 = vmatprep.subr.bf16.mxu0 %v917
        %6507 = vmatpush1.bf16.msra.mxu0 %v916
        %6508 = vmatprep.subr.bf16.mxu0 %v921
        %6509 = vmatpush1.bf16.msra.mxu0 %v920
        %6510 = vmatprep.subr.bf16.mxu0 %v925
        %6511 = vmatpush1.bf16.msra.mxu0 %v924
        %6512 = vmatprep.subr.bf16.mxu0 %v929
        %6513 = vmatpush1.bf16.msra.mxu0 %v928
        %6514 = vmatprep.subr.bf16.mxu0 0
        %6515 = vmatpush1.bf16.msra.mxu0 0
        %6516 = vmatprep.subr.bf16.mxu0 0
        %6517 = vmatpush1.bf16.msra.mxu0 0
        %6518 = vmatprep.subr.bf16.mxu0 0
        %6519 = vmatpush1.bf16.msra.mxu0 0
        %6520 = vmatprep.subr.bf16.mxu0 0
        %6521 = vmatpush1.bf16.msra.mxu0 0
        %6522 = vmatprep.subr.bf16.mxu0 0
        %6523 = vmatpush1.bf16.msra.mxu0 0
        %6524 = vmatprep.subr.bf16.mxu0 0
        %6525 = vmatpush1.bf16.msra.mxu0 0
        %6526 = vmatprep.mubr.bf16.mxu0 %v6369
        %6527 = vmatmul.mubr.bf16.gmra.mrb[0].mxu0 %v6365
        %v6528 = vpop.f32.mrb[0].mxu0
        %v6529 = vadd.f32 0.0, %v6528
        %v6530 = vpop.f32.mrb[0].mxu0
        %v6531 = vadd.f32 0.0, %v6530
        %v6532 = vpop.f32.mrb[0].mxu0
        %v6533 = vpop.f32.mrb[0].mxu0
        %6534 = vdwg.mxu0
        %v6535 = vmax.f32 %v6406, %v6488
        %v6536 = vmax.f32 %v6408, %v6490
        %v6537 = vmax.f32 %v6447, %v6529
        %v6538 = vmax.f32 %v6449, %v6531
        %v6540 = vunpack.c.l.b16 %v6361
        %v6541 = vunpack.c.h.b16 %v6361
        %v6542 = vpack.c.b16 %v6540, %v6540
        %v6543 = vpack.c.b16 %v6541, %v6541
        %v6546 = vsel %vm684, %v6543, 0
        %6548 = vmatprep.subr.bf16.mxu0 %v605
        %6549 = vmatpush1.bf16.msra.mxu0 %v604
        %6550 = vmatprep.subr.bf16.mxu0 %v609
        %6551 = vmatpush1.bf16.msra.mxu0 %v608
        %6552 = vmatprep.subr.bf16.mxu0 %v613
        %6553 = vmatpush1.bf16.msra.mxu0 %v612
        %6554 = vmatprep.subr.bf16.mxu0 %v617
        %6555 = vmatpush1.bf16.msra.mxu0 %v616
        %6556 = vmatprep.subr.bf16.mxu0 %v621
        %6557 = vmatpush1.bf16.msra.mxu0 %v620
        %6558 = vmatprep.subr.bf16.mxu0 %v625
        %6559 = vmatpush1.bf16.msra.mxu0 %v624
        %6560 = vmatprep.subr.bf16.mxu0 %v629
        %6561 = vmatpush1.bf16.msra.mxu0 %v628
        %6562 = vmatprep.subr.bf16.mxu0 %v633
        %6563 = vmatpush1.bf16.msra.mxu0 %v632
        %6564 = vmatprep.subr.bf16.mxu0 %v637
        %6565 = vmatpush1.bf16.msra.mxu0 %v636
        %6566 = vmatprep.subr.bf16.mxu0 %v641
        %6567 = vmatpush1.bf16.msra.mxu0 %v640
        %6568 = vmatprep.subr.bf16.mxu0 0
        %6569 = vmatpush1.bf16.msra.mxu0 0
        %6570 = vmatprep.subr.bf16.mxu0 0
        %6571 = vmatpush1.bf16.msra.mxu0 0
        %6572 = vmatprep.subr.bf16.mxu0 0
        %6573 = vmatpush1.bf16.msra.mxu0 0
        %6574 = vmatprep.subr.bf16.mxu0 0
        %6575 = vmatpush1.bf16.msra.mxu0 0
        %6576 = vmatprep.subr.bf16.mxu0 0
        %6577 = vmatpush1.bf16.msra.mxu0 0
        %6578 = vmatprep.subr.bf16.mxu0 0
        %6579 = vmatpush1.bf16.msra.mxu0 0
        %6580 = vmatprep.mubr.bf16.mxu0 %v6546
        %6581 = vmatmul.mubr.bf16.gmra.mrb[0].mxu0 %v6542
        %v6582 = vpop.f32.mrb[0].mxu0
        %v6583 = vadd.f32 0.0, %v6582
        %v6584 = vpop.f32.mrb[0].mxu0
        %v6585 = vadd.f32 0.0, %v6584
        %v6586 = vpop.f32.mrb[0].mxu0
        %v6587 = vpop.f32.mrb[0].mxu0
        %6588 = vdwg.mxu0
        %6589 = vmatprep.subr.bf16.mxu0 %v607
        %6590 = vmatpush1.bf16.msra.mxu0 %v606
        %6591 = vmatprep.subr.bf16.mxu0 %v611
        %6592 = vmatpush1.bf16.msra.mxu0 %v610
        %6593 = vmatprep.subr.bf16.mxu0 %v615
        %6594 = vmatpush1.bf16.msra.mxu0 %v614
        %6595 = vmatprep.subr.bf16.mxu0 %v619
        %6596 = vmatpush1.bf16.msra.mxu0 %v618
        %6597 = vmatprep.subr.bf16.mxu0 %v623
        %6598 = vmatpush1.bf16.msra.mxu0 %v622
        %6599 = vmatprep.subr.bf16.mxu0 %v627
        %6600 = vmatpush1.bf16.msra.mxu0 %v626
        %6601 = vmatprep.subr.bf16.mxu0 %v631
        %6602 = vmatpush1.bf16.msra.mxu0 %v630
        %6603 = vmatprep.subr.bf16.mxu0 %v635
        %6604 = vmatpush1.bf16.msra.mxu0 %v634
        %6605 = vmatprep.subr.bf16.mxu0 %v639
        %6606 = vmatpush1.bf16.msra.mxu0 %v638
        %6607 = vmatprep.subr.bf16.mxu0 %v643
        %6608 = vmatpush1.bf16.msra.mxu0 %v642
        %6609 = vmatprep.subr.bf16.mxu0 0
        %6610 = vmatpush1.bf16.msra.mxu0 0
        %6611 = vmatprep.subr.bf16.mxu0 0
        %6612 = vmatpush1.bf16.msra.mxu0 0
        %6613 = vmatprep.subr.bf16.mxu0 0
        %6614 = vmatpush1.bf16.msra.mxu0 0
        %6615 = vmatprep.subr.bf16.mxu0 0
        %6616 = vmatpush1.bf16.msra.mxu0 0
        %6617 = vmatprep.subr.bf16.mxu0 0
        %6618 = vmatpush1.bf16.msra.mxu0 0
        %6619 = vmatprep.subr.bf16.mxu0 0
        %6620 = vmatpush1.bf16.msra.mxu0 0
        %6621 = vmatprep.mubr.bf16.mxu0 %v6546
        %6622 = vmatmul.mubr.bf16.gmra.mrb[0].mxu0 %v6542
        %v6623 = vpop.f32.mrb[0].mxu0
        %v6624 = vadd.f32 0.0, %v6623
        %v6625 = vpop.f32.mrb[0].mxu0
        %v6626 = vadd.f32 0.0, %v6625
        %v6627 = vpop.f32.mrb[0].mxu0
        %v6628 = vpop.f32.mrb[0].mxu0
        %6629 = vdwg.mxu0
        %6630 = vmatprep.subr.bf16.mxu0 %v891
        %6631 = vmatpush1.bf16.msra.mxu0 %v890
        %6632 = vmatprep.subr.bf16.mxu0 %v895
        %6633 = vmatpush1.bf16.msra.mxu0 %v894
        %6634 = vmatprep.subr.bf16.mxu0 %v899
        %6635 = vmatpush1.bf16.msra.mxu0 %v898
        %6636 = vmatprep.subr.bf16.mxu0 %v903
        %6637 = vmatpush1.bf16.msra.mxu0 %v902
        %6638 = vmatprep.subr.bf16.mxu0 %v907
        %6639 = vmatpush1.bf16.msra.mxu0 %v906
        %6640 = vmatprep.subr.bf16.mxu0 %v911
        %6641 = vmatpush1.bf16.msra.mxu0 %v910
        %6642 = vmatprep.subr.bf16.mxu0 %v915
        %6643 = vmatpush1.bf16.msra.mxu0 %v914
        %6644 = vmatprep.subr.bf16.mxu0 %v919
        %6645 = vmatpush1.bf16.msra.mxu0 %v918
        %6646 = vmatprep.subr.bf16.mxu0 %v923
        %6647 = vmatpush1.bf16.msra.mxu0 %v922
        %6648 = vmatprep.subr.bf16.mxu0 %v927
        %6649 = vmatpush1.bf16.msra.mxu0 %v926
        %6650 = vmatprep.subr.bf16.mxu0 0
        %6651 = vmatpush1.bf16.msra.mxu0 0
        %6652 = vmatprep.subr.bf16.mxu0 0
        %6653 = vmatpush1.bf16.msra.mxu0 0
        %6654 = vmatprep.subr.bf16.mxu0 0
        %6655 = vmatpush1.bf16.msra.mxu0 0
        %6656 = vmatprep.subr.bf16.mxu0 0
        %6657 = vmatpush1.bf16.msra.mxu0 0
        %6658 = vmatprep.subr.bf16.mxu0 0
        %6659 = vmatpush1.bf16.msra.mxu0 0
        %6660 = vmatprep.subr.bf16.mxu0 0
        %6661 = vmatpush1.bf16.msra.mxu0 0
        %6662 = vmatprep.mubr.bf16.mxu0 %v6546
        %6663 = vmatmul.mubr.bf16.gmra.mrb[0].mxu0 %v6542
        %v6664 = vpop.f32.mrb[0].mxu0
        %v6665 = vadd.f32 0.0, %v6664
        %v6666 = vpop.f32.mrb[0].mxu0
        %v6667 = vadd.f32 0.0, %v6666
        %v6668 = vpop.f32.mrb[0].mxu0
        %v6669 = vpop.f32.mrb[0].mxu0
        %6670 = vdwg.mxu0
        %6671 = vmatprep.subr.bf16.mxu0 %v893
        %6672 = vmatpush1.bf16.msra.mxu0 %v892
        %6673 = vmatprep.subr.bf16.mxu0 %v897
        %6674 = vmatpush1.bf16.msra.mxu0 %v896
        %6675 = vmatprep.subr.bf16.mxu0 %v901
        %6676 = vmatpush1.bf16.msra.mxu0 %v900
        %6677 = vmatprep.subr.bf16.mxu0 %v905
        %6678 = vmatpush1.bf16.msra.mxu0 %v904
        %6679 = vmatprep.subr.bf16.mxu0 %v909
        %6680 = vmatpush1.bf16.msra.mxu0 %v908
        %6681 = vmatprep.subr.bf16.mxu0 %v913
        %6682 = vmatpush1.bf16.msra.mxu0 %v912
        %6683 = vmatprep.subr.bf16.mxu0 %v917
        %6684 = vmatpush1.bf16.msra.mxu0 %v916
        %6685 = vmatprep.subr.bf16.mxu0 %v921
        %6686 = vmatpush1.bf16.msra.mxu0 %v920
        %6687 = vmatprep.subr.bf16.mxu0 %v925
        %6688 = vmatpush1.bf16.msra.mxu0 %v924
        %6689 = vmatprep.subr.bf16.mxu0 %v929
        %6690 = vmatpush1.bf16.msra.mxu0 %v928
        %6691 = vmatprep.subr.bf16.mxu0 0
        %6692 = vmatpush1.bf16.msra.mxu0 0
        %6693 = vmatprep.subr.bf16.mxu0 0
        %6694 = vmatpush1.bf16.msra.mxu0 0
        %6695 = vmatprep.subr.bf16.mxu0 0
        %6696 = vmatpush1.bf16.msra.mxu0 0
        %6697 = vmatprep.subr.bf16.mxu0 0
        %6698 = vmatpush1.bf16.msra.mxu0 0
        %6699 = vmatprep.subr.bf16.mxu0 0
        %6700 = vmatpush1.bf16.msra.mxu0 0
        %6701 = vmatprep.subr.bf16.mxu0 0
        %6702 = vmatpush1.bf16.msra.mxu0 0
        %6703 = vmatprep.mubr.bf16.mxu0 %v6546
        %6704 = vmatmul.mubr.bf16.gmra.mrb[0].mxu0 %v6542
        %v6705 = vpop.f32.mrb[0].mxu0
        %v6706 = vadd.f32 0.0, %v6705
        %v6707 = vpop.f32.mrb[0].mxu0
        %v6708 = vadd.f32 0.0, %v6707
        %v6709 = vpop.f32.mrb[0].mxu0
        %v6710 = vpop.f32.mrb[0].mxu0
        %6711 = vdwg.mxu0
        %v6712 = vmax.f32 %v6583, %v6665
        %v6713 = vmax.f32 %v6585, %v6667
        %v6714 = vmax.f32 %v6624, %v6706
        %v6715 = vmax.f32 %v6626, %v6708
        %v6716 = vmax.f32 %v6535, %v6712
        %v6717 = vmax.f32 %v6536, %v6713
        %v6718 = vmax.f32 %v6537, %v6714
        %v6719 = vmax.f32 %v6538, %v6715
        %v6720 = vadd.f32 %v6716, %v1241
        %v6721 = vadd.f32 %v6717, %v1245
        %v6722 = vadd.f32 %v6718, %v1249
        %v6723 = vadd.f32 %v6719, %v1253
        %v6724 = vmax.f32 %v6720, 0.0
        %v6725 = vmax.f32 %v6721, 0.0
        %v6726 = vmax.f32 %v6722, 0.0
        %v6727 = vmax.f32 %v6723, 0.0
        %v6728 = vpack.c.bf16 %v6724, %v6724
        %v6729 = vpack.c.bf16 %v6725, %v6725
        %v6730 = vpack.c.bf16 %v6726, %v6726
        %v6731 = vpack.c.bf16 %v6727, %v6727
        %s6732 = scalar_lea.vmem %s4, 1792
        %v6733 = vld [vmem:[%s6732] sm:$0xf]
        %v6734 = vld [vmem:[%s6732 + $0x4] sm:$0xf]
        %v6735 = vld [vmem:[%s6732 + $0x8] sm:$0xf]
        %v6736 = vld [vmem:[%s6732 + $0xc] sm:$0xf]
        %v6737 = vld [vmem:[%s6732 + $0x10] sm:$0xf]
        %v6738 = vld [vmem:[%s6732 + $0x14] sm:$0xf]
        %v6739 = vld [vmem:[%s6732 + $0x18] sm:$0xf]
        %v6740 = vld [vmem:[%s6732 + $0x1c] sm:$0xf]
        %v6741 = vld [vmem:[%s6732 + $0x20] sm:$0xf]
        %v6742 = vld [vmem:[%s6732 + $0x24] sm:$0xf]
        %v6743 = vld [vmem:[%s6732 + $0x28] sm:$0xf]
        %v6744 = vld [vmem:[%s6732 + $0x2c] sm:$0xf]
        %v6745 = vld [vmem:[%s6732 + $0x30] sm:$0xf]
        %v6746 = vld [vmem:[%s6732 + $0x34] sm:$0xf]
        %v6747 = vld [vmem:[%s6732 + $0x38] sm:$0xf]
        %v6748 = vld [vmem:[%s6732 + $0x3c] sm:$0xf]
        %v6749 = vld [vmem:[%s6732 + $0x40] sm:$0xf]
        %v6750 = vld [vmem:[%s6732 + $0x44] sm:$0xf]
        %v6751 = vld [vmem:[%s6732 + $0x48] sm:$0xf]
        %v6752 = vld [vmem:[%s6732 + $0x4c] sm:$0xf]
        %v6753 = vld [vmem:[%s6732 + $0x50] sm:$0xf]
        %v6754 = vld [vmem:[%s6732 + $0x54] sm:$0xf]
        %v6755 = vld [vmem:[%s6732 + $0x58] sm:$0xf]
        %v6756 = vld [vmem:[%s6732 + $0x5c] sm:$0xf]
        %v6757 = vld [vmem:[%s6732 + $0x60] sm:$0xf]
        %v6758 = vld [vmem:[%s6732 + $0x64] sm:$0xf]
        %v6759 = vld [vmem:[%s6732 + $0x68] sm:$0xf]
        %v6760 = vld [vmem:[%s6732 + $0x6c] sm:$0xf]
        %v6761 = vld [vmem:[%s6732 + $0x70] sm:$0xf]
        %v6762 = vld [vmem:[%s6732 + $0x74] sm:$0xf]
        %v6763 = vld [vmem:[%s6732 + $0x78] sm:$0xf]
        %v6764 = vld [vmem:[%s6732 + $0x7c] sm:$0xf]
        %v6765 = vld [vmem:[%s6732 + $0x80] sm:$0xf]
        %v6766 = vld [vmem:[%s6732 + $0x84] sm:$0xf]
        %v6767 = vld [vmem:[%s6732 + $0x88] sm:$0xf]
        %v6768 = vld [vmem:[%s6732 + $0x8c] sm:$0xf]
        %v6769 = vld [vmem:[%s6732 + $0x90] sm:$0xf]
        %v6770 = vld [vmem:[%s6732 + $0x94] sm:$0xf]
        %v6771 = vld [vmem:[%s6732 + $0x98] sm:$0xf]
        %v6772 = vld [vmem:[%s6732 + $0x9c] sm:$0xf]
        %v6773 = vld [vmem:[%s6732 + $0xa0] sm:$0xf]
        %v6774 = vld [vmem:[%s6732 + $0xa4] sm:$0xf]
        %v6775 = vld [vmem:[%s6732 + $0xa8] sm:$0xf]
        %v6776 = vld [vmem:[%s6732 + $0xac] sm:$0xf]
        %v6777 = vld [vmem:[%s6732 + $0xb0] sm:$0xf]
        %v6778 = vld [vmem:[%s6732 + $0xb4] sm:$0xf]
        %v6779 = vld [vmem:[%s6732 + $0xb8] sm:$0xf]
        %v6780 = vld [vmem:[%s6732 + $0xbc] sm:$0xf]
        %v6781 = vld [vmem:[%s6732 + $0xc0] sm:$0xf]
        %v6782 = vld [vmem:[%s6732 + $0xc4] sm:$0xf]
        %v6783 = vld [vmem:[%s6732 + $0xc8] sm:$0xf]
        %v6784 = vld [vmem:[%s6732 + $0xcc] sm:$0xf]
        %v6785 = vld [vmem:[%s6732 + $0xd0] sm:$0xf]
        %v6786 = vld [vmem:[%s6732 + $0xd4] sm:$0xf]
        %v6787 = vld [vmem:[%s6732 + $0xd8] sm:$0xf]
        %v6788 = vld [vmem:[%s6732 + $0xdc] sm:$0xf]
        %v6845 = vunpack.c.l.b16 %v6733
        %v6846 = vunpack.c.l.b16 %v6734
        %v6847 = vunpack.c.l.b16 %v6735
        %v6848 = vunpack.c.l.b16 %v6736
        %v6849 = vunpack.c.l.b16 %v6737
        %v6850 = vunpack.c.l.b16 %v6738
        %v6851 = vunpack.c.l.b16 %v6739
        %v6852 = vunpack.c.l.b16 %v6740
        %v6853 = vunpack.c.l.b16 %v6741
        %v6854 = vunpack.c.l.b16 %v6742
        %v6855 = vunpack.c.l.b16 %v6743
        %v6856 = vunpack.c.l.b16 %v6744
        %v6857 = vunpack.c.l.b16 %v6745
        %v6858 = vunpack.c.l.b16 %v6746
        %v6859 = vunpack.c.l.b16 %v6747
        %v6860 = vunpack.c.l.b16 %v6748
        %v6861 = vunpack.c.l.b16 %v6749
        %v6862 = vunpack.c.l.b16 %v6750
        %v6863 = vunpack.c.l.b16 %v6751
        %v6864 = vunpack.c.l.b16 %v6752
        %v6865 = vunpack.c.l.b16 %v6753
        %v6866 = vunpack.c.l.b16 %v6754
        %v6867 = vunpack.c.l.b16 %v6755
        %v6868 = vunpack.c.l.b16 %v6756
        %v6869 = vunpack.c.l.b16 %v6757
        %v6870 = vunpack.c.l.b16 %v6758
        %v6871 = vunpack.c.l.b16 %v6759
        %v6872 = vunpack.c.l.b16 %v6760
        %v6873 = vunpack.c.l.b16 %v6761
        %v6874 = vunpack.c.l.b16 %v6762
        %v6875 = vunpack.c.l.b16 %v6763
        %v6876 = vunpack.c.l.b16 %v6764
        %v6877 = vunpack.c.l.b16 %v6765
        %v6878 = vunpack.c.l.b16 %v6766
        %v6879 = vunpack.c.l.b16 %v6767
        %v6880 = vunpack.c.l.b16 %v6768
        %v6881 = vunpack.c.l.b16 %v6769
        %v6882 = vunpack.c.l.b16 %v6770
        %v6883 = vunpack.c.l.b16 %v6771
        %v6884 = vunpack.c.l.b16 %v6772
        %v6885 = vunpack.c.l.b16 %v6773
        %v6886 = vunpack.c.l.b16 %v6774
        %v6887 = vunpack.c.l.b16 %v6775
        %v6888 = vunpack.c.l.b16 %v6776
        %v6889 = vunpack.c.l.b16 %v6777
        %v6890 = vunpack.c.l.b16 %v6778
        %v6891 = vunpack.c.l.b16 %v6779
        %v6892 = vunpack.c.l.b16 %v6780
        %v6893 = vunpack.c.l.b16 %v6781
        %v6894 = vunpack.c.l.b16 %v6782
        %v6895 = vunpack.c.l.b16 %v6783
        %v6896 = vunpack.c.l.b16 %v6784
        %v6897 = vunpack.c.l.b16 %v6785
        %v6898 = vunpack.c.l.b16 %v6786
        %v6899 = vunpack.c.l.b16 %v6787
        %v6900 = vunpack.c.l.b16 %v6788
        %v6901 = vpack.c.b16 %v6846, %v6845
        %v6902 = vpack.c.b16 %v6848, %v6847
        %v6903 = vpack.c.b16 %v6850, %v6849
        %v6904 = vpack.c.b16 %v6852, %v6851
        %v6905 = vpack.c.b16 %v6854, %v6853
        %v6906 = vpack.c.b16 %v6856, %v6855
        %v6907 = vpack.c.b16 %v6858, %v6857
        %v6908 = vpack.c.b16 %v6860, %v6859
        %v6909 = vpack.c.b16 %v6862, %v6861
        %v6910 = vpack.c.b16 %v6864, %v6863
        %v6911 = vpack.c.b16 %v6866, %v6865
        %v6912 = vpack.c.b16 %v6868, %v6867
        %v6913 = vpack.c.b16 %v6870, %v6869
        %v6914 = vpack.c.b16 %v6872, %v6871
        %v6915 = vpack.c.b16 %v6874, %v6873
        %v6916 = vpack.c.b16 %v6876, %v6875
        %v6917 = vpack.c.b16 %v6878, %v6877
        %v6918 = vpack.c.b16 %v6880, %v6879
        %v6919 = vpack.c.b16 %v6882, %v6881
        %v6920 = vpack.c.b16 %v6884, %v6883
        %v6921 = vpack.c.b16 %v6886, %v6885
        %v6922 = vpack.c.b16 %v6888, %v6887
        %v6923 = vpack.c.b16 %v6890, %v6889
        %v6924 = vpack.c.b16 %v6892, %v6891
        %v6925 = vpack.c.b16 %v6894, %v6893
        %v6926 = vpack.c.b16 %v6896, %v6895
        %v6927 = vpack.c.b16 %v6898, %v6897
        %v6928 = vpack.c.b16 %v6900, %v6899
        %v6958 = vsel %vm1925, %v6731, 0
        %6960 = vmatprep.subr.bf16.mxu0 0
        %6961 = vmatpush1.bf16.msra.mxu0 %v6901
        %6962 = vmatprep.subr.bf16.mxu0 0
        %6963 = vmatpush1.bf16.msra.mxu0 %v6902
        %6964 = vmatprep.subr.bf16.mxu0 0
        %6965 = vmatpush1.bf16.msra.mxu0 %v6903
        %6966 = vmatprep.subr.bf16.mxu0 0
        %6967 = vmatpush1.bf16.msra.mxu0 %v6904
        %6968 = vmatprep.subr.bf16.mxu0 0
        %6969 = vmatpush1.bf16.msra.mxu0 %v6905
        %6970 = vmatprep.subr.bf16.mxu0 0
        %6971 = vmatpush1.bf16.msra.mxu0 %v6906
        %6972 = vmatprep.subr.bf16.mxu0 0
        %6973 = vmatpush1.bf16.msra.mxu0 %v6907
        %6974 = vmatprep.subr.bf16.mxu0 0
        %6975 = vmatpush1.bf16.msra.mxu0 %v6908
        %6976 = vmatprep.subr.bf16.mxu0 0
        %6977 = vmatpush1.bf16.msra.mxu0 %v6909
        %6978 = vmatprep.subr.bf16.mxu0 0
        %6979 = vmatpush1.bf16.msra.mxu0 %v6910
        %6980 = vmatprep.subr.bf16.mxu0 0
        %6981 = vmatpush1.bf16.msra.mxu0 %v6911
        %6982 = vmatprep.subr.bf16.mxu0 0
        %6983 = vmatpush1.bf16.msra.mxu0 %v6912
        %6984 = vmatprep.subr.bf16.mxu0 0
        %6985 = vmatpush1.bf16.msra.mxu0 %v6913
        %6986 = vmatprep.subr.bf16.mxu0 0
        %6987 = vmatpush1.bf16.msra.mxu0 %v6914
        %6988 = vmatprep.subr.bf16.mxu0 0
        %6989 = vmatpush1.bf16.msra.mxu0 %v6915
        %6990 = vmatprep.subr.bf16.mxu0 0
        %6991 = vmatpush1.bf16.msra.mxu0 %v6916
        %6992 = vmatprep.mubr.bf16.mxu0 %v6729
        %6993 = vmatmul.mubr.bf16.gmra.mrb[0].mxu0 %v6728
        %v6994 = vpop.f32.mrb[0].mxu0
        %v6995 = vadd.f32 0.0, %v6994
        %v6996 = vpop.f32.mrb[0].mxu0
        %v6997 = vpop.f32.mrb[0].mxu0
        %v6998 = vpop.f32.mrb[0].mxu0
        %6999 = vdwg.mxu0
        %7000 = vmatprep.subr.bf16.mxu0 0
        %7001 = vmatpush1.bf16.msra.mxu0 %v6917
        %7002 = vmatprep.subr.bf16.mxu0 0
        %7003 = vmatpush1.bf16.msra.mxu0 %v6918
        %7004 = vmatprep.subr.bf16.mxu0 0
        %7005 = vmatpush1.bf16.msra.mxu0 %v6919
        %7006 = vmatprep.subr.bf16.mxu0 0
        %7007 = vmatpush1.bf16.msra.mxu0 %v6920
        %7008 = vmatprep.subr.bf16.mxu0 0
        %7009 = vmatpush1.bf16.msra.mxu0 %v6921
        %7010 = vmatprep.subr.bf16.mxu0 0
        %7011 = vmatpush1.bf16.msra.mxu0 %v6922
        %7012 = vmatprep.subr.bf16.mxu0 0
        %7013 = vmatpush1.bf16.msra.mxu0 %v6923
        %7014 = vmatprep.subr.bf16.mxu0 0
        %7015 = vmatpush1.bf16.msra.mxu0 %v6924
        %7016 = vmatprep.subr.bf16.mxu0 0
        %7017 = vmatpush1.bf16.msra.mxu0 %v6925
        %7018 = vmatprep.subr.bf16.mxu0 0
        %7019 = vmatpush1.bf16.msra.mxu0 %v6926
        %7020 = vmatprep.subr.bf16.mxu0 0
        %7021 = vmatpush1.bf16.msra.mxu0 %v6927
        %7022 = vmatprep.subr.bf16.mxu0 0
        %7023 = vmatpush1.bf16.msra.mxu0 %v6928
        %7024 = vmatprep.subr.bf16.mxu0 0
        %7025 = vmatpush1.bf16.msra.mxu0 0
        %7026 = vmatprep.subr.bf16.mxu0 0
        %7027 = vmatpush1.bf16.msra.mxu0 0
        %7028 = vmatprep.subr.bf16.mxu0 0
        %7029 = vmatpush1.bf16.msra.mxu0 0
        %7030 = vmatprep.subr.bf16.mxu0 0
        %7031 = vmatpush1.bf16.msra.mxu0 0
        %7032 = vmatprep.mubr.bf16.mxu0 %v6958
        %7033 = vmatmul.mubr.bf16.gmra.mrb[0].mxu0 %v6730
        %v7034 = vpop.f32.mrb[0].mxu0
        %v7035 = vadd.f32 %v6995, %v7034
        %v7036 = vpop.f32.mrb[0].mxu0
        %v7037 = vpop.f32.mrb[0].mxu0
        %v7038 = vpop.f32.mrb[0].mxu0
        %7039 = vdwg.mxu0
        %v7040 = vadd.f32 %v6357, %v7035
        %s7041 = scalar_lea.vmem %s363, 72 [#allocation2]
        %v7042 = vld [vmem:[%s7041] sm:$0xff]
        %s7043 = scalar_lea.vmem %s363, 184 [#allocation2]
        %v7044 = vld [vmem:[%s7043] sm:$0xff]
        %v7046 = vunpack.c.l.b16 %v7042
        %v7047 = vunpack.c.h.b16 %v7042
        %v7048 = vpack.c.b16 %v7046, %v7046
        %v7049 = vpack.c.b16 %v7047, %v7047
        %v7052 = vsel %vm684, %v7049, 0
        %7054 = vmatprep.subr.bf16.mxu0 %v605
        %7055 = vmatpush1.bf16.msra.mxu0 %v604
        %7056 = vmatprep.subr.bf16.mxu0 %v609
        %7057 = vmatpush1.bf16.msra.mxu0 %v608
        %7058 = vmatprep.subr.bf16.mxu0 %v613
        %7059 = vmatpush1.bf16.msra.mxu0 %v612
        %7060 = vmatprep.subr.bf16.mxu0 %v617
        %7061 = vmatpush1.bf16.msra.mxu0 %v616
        %7062 = vmatprep.subr.bf16.mxu0 %v621
        %7063 = vmatpush1.bf16.msra.mxu0 %v620
        %7064 = vmatprep.subr.bf16.mxu0 %v625
        %7065 = vmatpush1.bf16.msra.mxu0 %v624
        %7066 = vmatprep.subr.bf16.mxu0 %v629
        %7067 = vmatpush1.bf16.msra.mxu0 %v628
        %7068 = vmatprep.subr.bf16.mxu0 %v633
        %7069 = vmatpush1.bf16.msra.mxu0 %v632
        %7070 = vmatprep.subr.bf16.mxu0 %v637
        %7071 = vmatpush1.bf16.msra.mxu0 %v636
        %7072 = vmatprep.subr.bf16.mxu0 %v641
        %7073 = vmatpush1.bf16.msra.mxu0 %v640
        %7074 = vmatprep.subr.bf16.mxu0 0
        %7075 = vmatpush1.bf16.msra.mxu0 0
        %7076 = vmatprep.subr.bf16.mxu0 0
        %7077 = vmatpush1.bf16.msra.mxu0 0
        %7078 = vmatprep.subr.bf16.mxu0 0
        %7079 = vmatpush1.bf16.msra.mxu0 0
        %7080 = vmatprep.subr.bf16.mxu0 0
        %7081 = vmatpush1.bf16.msra.mxu0 0
        %7082 = vmatprep.subr.bf16.mxu0 0
        %7083 = vmatpush1.bf16.msra.mxu0 0
        %7084 = vmatprep.subr.bf16.mxu0 0
        %7085 = vmatpush1.bf16.msra.mxu0 0
        %7086 = vmatprep.mubr.bf16.mxu0 %v7052
        %7087 = vmatmul.mubr.bf16.gmra.mrb[0].mxu0 %v7048
        %v7088 = vpop.f32.mrb[0].mxu0
        %v7089 = vadd.f32 0.0, %v7088
        %v7090 = vpop.f32.mrb[0].mxu0
        %v7091 = vadd.f32 0.0, %v7090
        %v7092 = vpop.f32.mrb[0].mxu0
        %v7093 = vpop.f32.mrb[0].mxu0
        %7094 = vdwg.mxu0
        %7095 = vmatprep.subr.bf16.mxu0 %v607
        %7096 = vmatpush1.bf16.msra.mxu0 %v606
        %7097 = vmatprep.subr.bf16.mxu0 %v611
        %7098 = vmatpush1.bf16.msra.mxu0 %v610
        %7099 = vmatprep.subr.bf16.mxu0 %v615
        %7100 = vmatpush1.bf16.msra.mxu0 %v614
        %7101 = vmatprep.subr.bf16.mxu0 %v619
        %7102 = vmatpush1.bf16.msra.mxu0 %v618
        %7103 = vmatprep.subr.bf16.mxu0 %v623
        %7104 = vmatpush1.bf16.msra.mxu0 %v622
        %7105 = vmatprep.subr.bf16.mxu0 %v627
        %7106 = vmatpush1.bf16.msra.mxu0 %v626
        %7107 = vmatprep.subr.bf16.mxu0 %v631
        %7108 = vmatpush1.bf16.msra.mxu0 %v630
        %7109 = vmatprep.subr.bf16.mxu0 %v635
        %7110 = vmatpush1.bf16.msra.mxu0 %v634
        %7111 = vmatprep.subr.bf16.mxu0 %v639
        %7112 = vmatpush1.bf16.msra.mxu0 %v638
        %7113 = vmatprep.subr.bf16.mxu0 %v643
        %7114 = vmatpush1.bf16.msra.mxu0 %v642
        %7115 = vmatprep.subr.bf16.mxu0 0
        %7116 = vmatpush1.bf16.msra.mxu0 0
        %7117 = vmatprep.subr.bf16.mxu0 0
        %7118 = vmatpush1.bf16.msra.mxu0 0
        %7119 = vmatprep.subr.bf16.mxu0 0
        %7120 = vmatpush1.bf16.msra.mxu0 0
        %7121 = vmatprep.subr.bf16.mxu0 0
        %7122 = vmatpush1.bf16.msra.mxu0 0
        %7123 = vmatprep.subr.bf16.mxu0 0
        %7124 = vmatpush1.bf16.msra.mxu0 0
        %7125 = vmatprep.subr.bf16.mxu0 0
        %7126 = vmatpush1.bf16.msra.mxu0 0
        %7127 = vmatprep.mubr.bf16.mxu0 %v7052
        %7128 = vmatmul.mubr.bf16.gmra.mrb[0].mxu0 %v7048
        %v7129 = vpop.f32.mrb[0].mxu0
        %v7130 = vadd.f32 0.0, %v7129
        %v7131 = vpop.f32.mrb[0].mxu0
        %v7132 = vadd.f32 0.0, %v7131
        %v7133 = vpop.f32.mrb[0].mxu0
        %v7134 = vpop.f32.mrb[0].mxu0
        %7135 = vdwg.mxu0
        %7136 = vmatprep.subr.bf16.mxu0 %v891
        %7137 = vmatpush1.bf16.msra.mxu0 %v890
        %7138 = vmatprep.subr.bf16.mxu0 %v895
        %7139 = vmatpush1.bf16.msra.mxu0 %v894
        %7140 = vmatprep.subr.bf16.mxu0 %v899
        %7141 = vmatpush1.bf16.msra.mxu0 %v898
        %7142 = vmatprep.subr.bf16.mxu0 %v903
        %7143 = vmatpush1.bf16.msra.mxu0 %v902
        %7144 = vmatprep.subr.bf16.mxu0 %v907
        %7145 = vmatpush1.bf16.msra.mxu0 %v906
        %7146 = vmatprep.subr.bf16.mxu0 %v911
        %7147 = vmatpush1.bf16.msra.mxu0 %v910
        %7148 = vmatprep.subr.bf16.mxu0 %v915
        %7149 = vmatpush1.bf16.msra.mxu0 %v914
        %7150 = vmatprep.subr.bf16.mxu0 %v919
        %7151 = vmatpush1.bf16.msra.mxu0 %v918
        %7152 = vmatprep.subr.bf16.mxu0 %v923
        %7153 = vmatpush1.bf16.msra.mxu0 %v922
        %7154 = vmatprep.subr.bf16.mxu0 %v927
        %7155 = vmatpush1.bf16.msra.mxu0 %v926
        %7156 = vmatprep.subr.bf16.mxu0 0
        %7157 = vmatpush1.bf16.msra.mxu0 0
        %7158 = vmatprep.subr.bf16.mxu0 0
        %7159 = vmatpush1.bf16.msra.mxu0 0
        %7160 = vmatprep.subr.bf16.mxu0 0
        %7161 = vmatpush1.bf16.msra.mxu0 0
        %7162 = vmatprep.subr.bf16.mxu0 0
        %7163 = vmatpush1.bf16.msra.mxu0 0
        %7164 = vmatprep.subr.bf16.mxu0 0
        %7165 = vmatpush1.bf16.msra.mxu0 0
        %7166 = vmatprep.subr.bf16.mxu0 0
        %7167 = vmatpush1.bf16.msra.mxu0 0
        %7168 = vmatprep.mubr.bf16.mxu0 %v7052
        %7169 = vmatmul.mubr.bf16.gmra.mrb[0].mxu0 %v7048
        %v7170 = vpop.f32.mrb[0].mxu0
        %v7171 = vadd.f32 0.0, %v7170
        %v7172 = vpop.f32.mrb[0].mxu0
        %v7173 = vadd.f32 0.0, %v7172
        %v7174 = vpop.f32.mrb[0].mxu0
        %v7175 = vpop.f32.mrb[0].mxu0
        %7176 = vdwg.mxu0
        %7177 = vmatprep.subr.bf16.mxu0 %v893
        %7178 = vmatpush1.bf16.msra.mxu0 %v892
        %7179 = vmatprep.subr.bf16.mxu0 %v897
        %7180 = vmatpush1.bf16.msra.mxu0 %v896
        %7181 = vmatprep.subr.bf16.mxu0 %v901
        %7182 = vmatpush1.bf16.msra.mxu0 %v900
        %7183 = vmatprep.subr.bf16.mxu0 %v905
        %7184 = vmatpush1.bf16.msra.mxu0 %v904
        %7185 = vmatprep.subr.bf16.mxu0 %v909
        %7186 = vmatpush1.bf16.msra.mxu0 %v908
        %7187 = vmatprep.subr.bf16.mxu0 %v913
        %7188 = vmatpush1.bf16.msra.mxu0 %v912
        %7189 = vmatprep.subr.bf16.mxu0 %v917
        %7190 = vmatpush1.bf16.msra.mxu0 %v916
        %7191 = vmatprep.subr.bf16.mxu0 %v921
        %7192 = vmatpush1.bf16.msra.mxu0 %v920
        %7193 = vmatprep.subr.bf16.mxu0 %v925
        %7194 = vmatpush1.bf16.msra.mxu0 %v924
        %7195 = vmatprep.subr.bf16.mxu0 %v929
        %7196 = vmatpush1.bf16.msra.mxu0 %v928
        %7197 = vmatprep.subr.bf16.mxu0 0
        %7198 = vmatpush1.bf16.msra.mxu0 0
        %7199 = vmatprep.subr.bf16.mxu0 0
        %7200 = vmatpush1.bf16.msra.mxu0 0
        %7201 = vmatprep.subr.bf16.mxu0 0
        %7202 = vmatpush1.bf16.msra.mxu0 0
        %7203 = vmatprep.subr.bf16.mxu0 0
        %7204 = vmatpush1.bf16.msra.mxu0 0
        %7205 = vmatprep.subr.bf16.mxu0 0
        %7206 = vmatpush1.bf16.msra.mxu0 0
        %7207 = vmatprep.subr.bf16.mxu0 0
        %7208 = vmatpush1.bf16.msra.mxu0 0
        %7209 = vmatprep.mubr.bf16.mxu0 %v7052
        %7210 = vmatmul.mubr.bf16.gmra.mrb[0].mxu0 %v7048
        %v7211 = vpop.f32.mrb[0].mxu0
        %v7212 = vadd.f32 0.0, %v7211
        %v7213 = vpop.f32.mrb[0].mxu0
        %v7214 = vadd.f32 0.0, %v7213
        %v7215 = vpop.f32.mrb[0].mxu0
        %v7216 = vpop.f32.mrb[0].mxu0
        %7217 = vdwg.mxu0
        %v7218 = vmax.f32 %v7089, %v7171
        %v7219 = vmax.f32 %v7091, %v7173
        %v7220 = vmax.f32 %v7130, %v7212
        %v7221 = vmax.f32 %v7132, %v7214
        %v7223 = vunpack.c.l.b16 %v7044
        %v7224 = vunpack.c.h.b16 %v7044
        %v7225 = vpack.c.b16 %v7223, %v7223
        %v7226 = vpack.c.b16 %v7224, %v7224
        %v7229 = vsel %vm684, %v7226, 0
        %7231 = vmatprep.subr.bf16.mxu0 %v605
        %7232 = vmatpush1.bf16.msra.mxu0 %v604
        %7233 = vmatprep.subr.bf16.mxu0 %v609
        %7234 = vmatpush1.bf16.msra.mxu0 %v608
        %7235 = vmatprep.subr.bf16.mxu0 %v613
        %7236 = vmatpush1.bf16.msra.mxu0 %v612
        %7237 = vmatprep.subr.bf16.mxu0 %v617
        %7238 = vmatpush1.bf16.msra.mxu0 %v616
        %7239 = vmatprep.subr.bf16.mxu0 %v621
        %7240 = vmatpush1.bf16.msra.mxu0 %v620
        %7241 = vmatprep.subr.bf16.mxu0 %v625
        %7242 = vmatpush1.bf16.msra.mxu0 %v624
        %7243 = vmatprep.subr.bf16.mxu0 %v629
        %7244 = vmatpush1.bf16.msra.mxu0 %v628
        %7245 = vmatprep.subr.bf16.mxu0 %v633
        %7246 = vmatpush1.bf16.msra.mxu0 %v632
        %7247 = vmatprep.subr.bf16.mxu0 %v637
        %7248 = vmatpush1.bf16.msra.mxu0 %v636
        %7249 = vmatprep.subr.bf16.mxu0 %v641
        %7250 = vmatpush1.bf16.msra.mxu0 %v640
        %7251 = vmatprep.subr.bf16.mxu0 0
        %7252 = vmatpush1.bf16.msra.mxu0 0
        %7253 = vmatprep.subr.bf16.mxu0 0
        %7254 = vmatpush1.bf16.msra.mxu0 0
        %7255 = vmatprep.subr.bf16.mxu0 0
        %7256 = vmatpush1.bf16.msra.mxu0 0
        %7257 = vmatprep.subr.bf16.mxu0 0
        %7258 = vmatpush1.bf16.msra.mxu0 0
        %7259 = vmatprep.subr.bf16.mxu0 0
        %7260 = vmatpush1.bf16.msra.mxu0 0
        %7261 = vmatprep.subr.bf16.mxu0 0
        %7262 = vmatpush1.bf16.msra.mxu0 0
        %7263 = vmatprep.mubr.bf16.mxu0 %v7229
        %7264 = vmatmul.mubr.bf16.gmra.mrb[0].mxu0 %v7225
        %v7265 = vpop.f32.mrb[0].mxu0
        %v7266 = vadd.f32 0.0, %v7265
        %v7267 = vpop.f32.mrb[0].mxu0
        %v7268 = vadd.f32 0.0, %v7267
        %v7269 = vpop.f32.mrb[0].mxu0
        %v7270 = vpop.f32.mrb[0].mxu0
        %7271 = vdwg.mxu0
        %7272 = vmatprep.subr.bf16.mxu0 %v607
        %7273 = vmatpush1.bf16.msra.mxu0 %v606
        %7274 = vmatprep.subr.bf16.mxu0 %v611
        %7275 = vmatpush1.bf16.msra.mxu0 %v610
        %7276 = vmatprep.subr.bf16.mxu0 %v615
        %7277 = vmatpush1.bf16.msra.mxu0 %v614
        %7278 = vmatprep.subr.bf16.mxu0 %v619
        %7279 = vmatpush1.bf16.msra.mxu0 %v618
        %7280 = vmatprep.subr.bf16.mxu0 %v623
        %7281 = vmatpush1.bf16.msra.mxu0 %v622
        %7282 = vmatprep.subr.bf16.mxu0 %v627
        %7283 = vmatpush1.bf16.msra.mxu0 %v626
        %7284 = vmatprep.subr.bf16.mxu0 %v631
        %7285 = vmatpush1.bf16.msra.mxu0 %v630
        %7286 = vmatprep.subr.bf16.mxu0 %v635
        %7287 = vmatpush1.bf16.msra.mxu0 %v634
        %7288 = vmatprep.subr.bf16.mxu0 %v639
        %7289 = vmatpush1.bf16.msra.mxu0 %v638
        %7290 = vmatprep.subr.bf16.mxu0 %v643
        %7291 = vmatpush1.bf16.msra.mxu0 %v642
        %7292 = vmatprep.subr.bf16.mxu0 0
        %7293 = vmatpush1.bf16.msra.mxu0 0
        %7294 = vmatprep.subr.bf16.mxu0 0
        %7295 = vmatpush1.bf16.msra.mxu0 0
        %7296 = vmatprep.subr.bf16.mxu0 0
        %7297 = vmatpush1.bf16.msra.mxu0 0
        %7298 = vmatprep.subr.bf16.mxu0 0
        %7299 = vmatpush1.bf16.msra.mxu0 0
        %7300 = vmatprep.subr.bf16.mxu0 0
        %7301 = vmatpush1.bf16.msra.mxu0 0
        %7302 = vmatprep.subr.bf16.mxu0 0
        %7303 = vmatpush1.bf16.msra.mxu0 0
        %7304 = vmatprep.mubr.bf16.mxu0 %v7229
        %7305 = vmatmul.mubr.bf16.gmra.mrb[0].mxu0 %v7225
        %v7306 = vpop.f32.mrb[0].mxu0
        %v7307 = vadd.f32 0.0, %v7306
        %v7308 = vpop.f32.mrb[0].mxu0
        %v7309 = vadd.f32 0.0, %v7308
        %v7310 = vpop.f32.mrb[0].mxu0
        %v7311 = vpop.f32.mrb[0].mxu0
        %7312 = vdwg.mxu0
        %7313 = vmatprep.subr.bf16.mxu0 %v891
        %7314 = vmatpush1.bf16.msra.mxu0 %v890
        %7315 = vmatprep.subr.bf16.mxu0 %v895
        %7316 = vmatpush1.bf16.msra.mxu0 %v894
        %7317 = vmatprep.subr.bf16.mxu0 %v899
        %7318 = vmatpush1.bf16.msra.mxu0 %v898
        %7319 = vmatprep.subr.bf16.mxu0 %v903
        %7320 = vmatpush1.bf16.msra.mxu0 %v902
        %7321 = vmatprep.subr.bf16.mxu0 %v907
        %7322 = vmatpush1.bf16.msra.mxu0 %v906
        %7323 = vmatprep.subr.bf16.mxu0 %v911
        %7324 = vmatpush1.bf16.msra.mxu0 %v910
        %7325 = vmatprep.subr.bf16.mxu0 %v915
        %7326 = vmatpush1.bf16.msra.mxu0 %v914
        %7327 = vmatprep.subr.bf16.mxu0 %v919
        %7328 = vmatpush1.bf16.msra.mxu0 %v918
        %7329 = vmatprep.subr.bf16.mxu0 %v923
        %7330 = vmatpush1.bf16.msra.mxu0 %v922
        %7331 = vmatprep.subr.bf16.mxu0 %v927
        %7332 = vmatpush1.bf16.msra.mxu0 %v926
        %7333 = vmatprep.subr.bf16.mxu0 0
        %7334 = vmatpush1.bf16.msra.mxu0 0
        %7335 = vmatprep.subr.bf16.mxu0 0
        %7336 = vmatpush1.bf16.msra.mxu0 0
        %7337 = vmatprep.subr.bf16.mxu0 0
        %7338 = vmatpush1.bf16.msra.mxu0 0
        %7339 = vmatprep.subr.bf16.mxu0 0
        %7340 = vmatpush1.bf16.msra.mxu0 0
        %7341 = vmatprep.subr.bf16.mxu0 0
        %7342 = vmatpush1.bf16.msra.mxu0 0
        %7343 = vmatprep.subr.bf16.mxu0 0
        %7344 = vmatpush1.bf16.msra.mxu0 0
        %7345 = vmatprep.mubr.bf16.mxu0 %v7229
        %7346 = vmatmul.mubr.bf16.gmra.mrb[0].mxu0 %v7225
        %v7347 = vpop.f32.mrb[0].mxu0
        %v7348 = vadd.f32 0.0, %v7347
        %v7349 = vpop.f32.mrb[0].mxu0
        %v7350 = vadd.f32 0.0, %v7349
        %v7351 = vpop.f32.mrb[0].mxu0
        %v7352 = vpop.f32.mrb[0].mxu0
        %7353 = vdwg.mxu0
        %7354 = vmatprep.subr.bf16.mxu0 %v893
        %7355 = vmatpush1.bf16.msra.mxu0 %v892
        %7356 = vmatprep.subr.bf16.mxu0 %v897
        %7357 = vmatpush1.bf16.msra.mxu0 %v896
        %7358 = vmatprep.subr.bf16.mxu0 %v901
        %7359 = vmatpush1.bf16.msra.mxu0 %v900
        %7360 = vmatprep.subr.bf16.mxu0 %v905
        %7361 = vmatpush1.bf16.msra.mxu0 %v904
        %7362 = vmatprep.subr.bf16.mxu0 %v909
        %7363 = vmatpush1.bf16.msra.mxu0 %v908
        %7364 = vmatprep.subr.bf16.mxu0 %v913
        %7365 = vmatpush1.bf16.msra.mxu0 %v912
        %7366 = vmatprep.subr.bf16.mxu0 %v917
        %7367 = vmatpush1.bf16.msra.mxu0 %v916
        %7368 = vmatprep.subr.bf16.mxu0 %v921
        %7369 = vmatpush1.bf16.msra.mxu0 %v920
        %7370 = vmatprep.subr.bf16.mxu0 %v925
        %7371 = vmatpush1.bf16.msra.mxu0 %v924
        %7372 = vmatprep.subr.bf16.mxu0 %v929
        %7373 = vmatpush1.bf16.msra.mxu0 %v928
        %7374 = vmatprep.subr.bf16.mxu0 0
        %7375 = vmatpush1.bf16.msra.mxu0 0
        %7376 = vmatprep.subr.bf16.mxu0 0
        %7377 = vmatpush1.bf16.msra.mxu0 0
        %7378 = vmatprep.subr.bf16.mxu0 0
        %7379 = vmatpush1.bf16.msra.mxu0 0
        %7380 = vmatprep.subr.bf16.mxu0 0
        %7381 = vmatpush1.bf16.msra.mxu0 0
        %7382 = vmatprep.subr.bf16.mxu0 0
        %7383 = vmatpush1.bf16.msra.mxu0 0
        %7384 = vmatprep.subr.bf16.mxu0 0
        %7385 = vmatpush1.bf16.msra.mxu0 0
        %7386 = vmatprep.mubr.bf16.mxu0 %v7229
        %7387 = vmatmul.mubr.bf16.gmra.mrb[0].mxu0 %v7225
        %v7388 = vpop.f32.mrb[0].mxu0
        %v7389 = vadd.f32 0.0, %v7388
        %v7390 = vpop.f32.mrb[0].mxu0
        %v7391 = vadd.f32 0.0, %v7390
        %v7392 = vpop.f32.mrb[0].mxu0
        %v7393 = vpop.f32.mrb[0].mxu0
        %7394 = vdwg.mxu0
        %v7395 = vmax.f32 %v7266, %v7348
        %v7396 = vmax.f32 %v7268, %v7350
        %v7397 = vmax.f32 %v7307, %v7389
        %v7398 = vmax.f32 %v7309, %v7391
        %v7399 = vmax.f32 %v7218, %v7395
        %v7400 = vmax.f32 %v7219, %v7396
        %v7401 = vmax.f32 %v7220, %v7397
        %v7402 = vmax.f32 %v7221, %v7398
        %v7403 = vadd.f32 %v7399, %v1241
        %v7404 = vadd.f32 %v7400, %v1245
        %v7405 = vadd.f32 %v7401, %v1249
        %v7406 = vadd.f32 %v7402, %v1253
        %v7407 = vmax.f32 %v7403, 0.0
        %v7408 = vmax.f32 %v7404, 0.0
        %v7409 = vmax.f32 %v7405, 0.0
        %v7410 = vmax.f32 %v7406, 0.0
        %v7411 = vpack.c.bf16 %v7407, %v7407
        %v7412 = vpack.c.bf16 %v7408, %v7408
        %v7413 = vpack.c.bf16 %v7409, %v7409
        %v7414 = vpack.c.bf16 %v7410, %v7410
        %s7415 = scalar_lea.vmem %s4, 2016
        %v7416 = vld [vmem:[%s7415] sm:$0xf]
        %v7417 = vld [vmem:[%s7415 + $0x4] sm:$0xf]
        %v7418 = vld [vmem:[%s7415 + $0x8] sm:$0xf]
        %v7419 = vld [vmem:[%s7415 + $0xc] sm:$0xf]
        %v7420 = vld [vmem:[%s7415 + $0x10] sm:$0xf]
        %v7421 = vld [vmem:[%s7415 + $0x14] sm:$0xf]
        %v7422 = vld [vmem:[%s7415 + $0x18] sm:$0xf]
        %v7423 = vld [vmem:[%s7415 + $0x1c] sm:$0xf]
        %v7424 = vld [vmem:[%s7415 + $0x20] sm:$0xf]
        %v7425 = vld [vmem:[%s7415 + $0x24] sm:$0xf]
        %v7426 = vld [vmem:[%s7415 + $0x28] sm:$0xf]
        %v7427 = vld [vmem:[%s7415 + $0x2c] sm:$0xf]
        %v7428 = vld [vmem:[%s7415 + $0x30] sm:$0xf]
        %v7429 = vld [vmem:[%s7415 + $0x34] sm:$0xf]
        %v7430 = vld [vmem:[%s7415 + $0x38] sm:$0xf]
        %v7431 = vld [vmem:[%s7415 + $0x3c] sm:$0xf]
        %v7432 = vld [vmem:[%s7415 + $0x40] sm:$0xf]
        %v7433 = vld [vmem:[%s7415 + $0x44] sm:$0xf]
        %v7434 = vld [vmem:[%s7415 + $0x48] sm:$0xf]
        %v7435 = vld [vmem:[%s7415 + $0x4c] sm:$0xf]
        %v7436 = vld [vmem:[%s7415 + $0x50] sm:$0xf]
        %v7437 = vld [vmem:[%s7415 + $0x54] sm:$0xf]
        %v7438 = vld [vmem:[%s7415 + $0x58] sm:$0xf]
        %v7439 = vld [vmem:[%s7415 + $0x5c] sm:$0xf]
        %v7440 = vld [vmem:[%s7415 + $0x60] sm:$0xf]
        %v7441 = vld [vmem:[%s7415 + $0x64] sm:$0xf]
        %v7442 = vld [vmem:[%s7415 + $0x68] sm:$0xf]
        %v7443 = vld [vmem:[%s7415 + $0x6c] sm:$0xf]
        %v7444 = vld [vmem:[%s7415 + $0x70] sm:$0xf]
        %v7445 = vld [vmem:[%s7415 + $0x74] sm:$0xf]
        %v7446 = vld [vmem:[%s7415 + $0x78] sm:$0xf]
        %v7447 = vld [vmem:[%s7415 + $0x7c] sm:$0xf]
        %v7448 = vld [vmem:[%s7415 + $0x80] sm:$0xf]
        %v7449 = vld [vmem:[%s7415 + $0x84] sm:$0xf]
        %v7450 = vld [vmem:[%s7415 + $0x88] sm:$0xf]
        %v7451 = vld [vmem:[%s7415 + $0x8c] sm:$0xf]
        %v7452 = vld [vmem:[%s7415 + $0x90] sm:$0xf]
        %v7453 = vld [vmem:[%s7415 + $0x94] sm:$0xf]
        %v7454 = vld [vmem:[%s7415 + $0x98] sm:$0xf]
        %v7455 = vld [vmem:[%s7415 + $0x9c] sm:$0xf]
        %v7456 = vld [vmem:[%s7415 + $0xa0] sm:$0xf]
        %v7457 = vld [vmem:[%s7415 + $0xa4] sm:$0xf]
        %v7458 = vld [vmem:[%s7415 + $0xa8] sm:$0xf]
        %v7459 = vld [vmem:[%s7415 + $0xac] sm:$0xf]
        %v7460 = vld [vmem:[%s7415 + $0xb0] sm:$0xf]
        %v7461 = vld [vmem:[%s7415 + $0xb4] sm:$0xf]
        %v7462 = vld [vmem:[%s7415 + $0xb8] sm:$0xf]
        %v7463 = vld [vmem:[%s7415 + $0xbc] sm:$0xf]
        %v7464 = vld [vmem:[%s7415 + $0xc0] sm:$0xf]
        %v7465 = vld [vmem:[%s7415 + $0xc4] sm:$0xf]
        %v7466 = vld [vmem:[%s7415 + $0xc8] sm:$0xf]
        %v7467 = vld [vmem:[%s7415 + $0xcc] sm:$0xf]
        %v7468 = vld [vmem:[%s7415 + $0xd0] sm:$0xf]
        %v7469 = vld [vmem:[%s7415 + $0xd4] sm:$0xf]
        %v7470 = vld [vmem:[%s7415 + $0xd8] sm:$0xf]
        %v7471 = vld [vmem:[%s7415 + $0xdc] sm:$0xf]
        %v7528 = vunpack.c.l.b16 %v7416
        %v7529 = vunpack.c.l.b16 %v7417
        %v7530 = vunpack.c.l.b16 %v7418
        %v7531 = vunpack.c.l.b16 %v7419
        %v7532 = vunpack.c.l.b16 %v7420
        %v7533 = vunpack.c.l.b16 %v7421
        %v7534 = vunpack.c.l.b16 %v7422
        %v7535 = vunpack.c.l.b16 %v7423
        %v7536 = vunpack.c.l.b16 %v7424
        %v7537 = vunpack.c.l.b16 %v7425
        %v7538 = vunpack.c.l.b16 %v7426
        %v7539 = vunpack.c.l.b16 %v7427
        %v7540 = vunpack.c.l.b16 %v7428
        %v7541 = vunpack.c.l.b16 %v7429
        %v7542 = vunpack.c.l.b16 %v7430
        %v7543 = vunpack.c.l.b16 %v7431
        %v7544 = vunpack.c.l.b16 %v7432
        %v7545 = vunpack.c.l.b16 %v7433
        %v7546 = vunpack.c.l.b16 %v7434
        %v7547 = vunpack.c.l.b16 %v7435
        %v7548 = vunpack.c.l.b16 %v7436
        %v7549 = vunpack.c.l.b16 %v7437
        %v7550 = vunpack.c.l.b16 %v7438
        %v7551 = vunpack.c.l.b16 %v7439
        %v7552 = vunpack.c.l.b16 %v7440
        %v7553 = vunpack.c.l.b16 %v7441
        %v7554 = vunpack.c.l.b16 %v7442
        %v7555 = vunpack.c.l.b16 %v7443
        %v7556 = vunpack.c.l.b16 %v7444
        %v7557 = vunpack.c.l.b16 %v7445
        %v7558 = vunpack.c.l.b16 %v7446
        %v7559 = vunpack.c.l.b16 %v7447
        %v7560 = vunpack.c.l.b16 %v7448
        %v7561 = vunpack.c.l.b16 %v7449
        %v7562 = vunpack.c.l.b16 %v7450
        %v7563 = vunpack.c.l.b16 %v7451
        %v7564 = vunpack.c.l.b16 %v7452
        %v7565 = vunpack.c.l.b16 %v7453
        %v7566 = vunpack.c.l.b16 %v7454
        %v7567 = vunpack.c.l.b16 %v7455
        %v7568 = vunpack.c.l.b16 %v7456
        %v7569 = vunpack.c.l.b16 %v7457
        %v7570 = vunpack.c.l.b16 %v7458
        %v7571 = vunpack.c.l.b16 %v7459
        %v7572 = vunpack.c.l.b16 %v7460
        %v7573 = vunpack.c.l.b16 %v7461
        %v7574 = vunpack.c.l.b16 %v7462
        %v7575 = vunpack.c.l.b16 %v7463
        %v7576 = vunpack.c.l.b16 %v7464
        %v7577 = vunpack.c.l.b16 %v7465
        %v7578 = vunpack.c.l.b16 %v7466
        %v7579 = vunpack.c.l.b16 %v7467
        %v7580 = vunpack.c.l.b16 %v7468
        %v7581 = vunpack.c.l.b16 %v7469
        %v7582 = vunpack.c.l.b16 %v7470
        %v7583 = vunpack.c.l.b16 %v7471
        %v7584 = vpack.c.b16 %v7529, %v7528
        %v7585 = vpack.c.b16 %v7531, %v7530
        %v7586 = vpack.c.b16 %v7533, %v7532
        %v7587 = vpack.c.b16 %v7535, %v7534
        %v7588 = vpack.c.b16 %v7537, %v7536
        %v7589 = vpack.c.b16 %v7539, %v7538
        %v7590 = vpack.c.b16 %v7541, %v7540
        %v7591 = vpack.c.b16 %v7543, %v7542
        %v7592 = vpack.c.b16 %v7545, %v7544
        %v7593 = vpack.c.b16 %v7547, %v7546
        %v7594 = vpack.c.b16 %v7549, %v7548
        %v7595 = vpack.c.b16 %v7551, %v7550
        %v7596 = vpack.c.b16 %v7553, %v7552
        %v7597 = vpack.c.b16 %v7555, %v7554
        %v7598 = vpack.c.b16 %v7557, %v7556
        %v7599 = vpack.c.b16 %v7559, %v7558
        %v7600 = vpack.c.b16 %v7561, %v7560
        %v7601 = vpack.c.b16 %v7563, %v7562
        %v7602 = vpack.c.b16 %v7565, %v7564
        %v7603 = vpack.c.b16 %v7567, %v7566
        %v7604 = vpack.c.b16 %v7569, %v7568
        %v7605 = vpack.c.b16 %v7571, %v7570
        %v7606 = vpack.c.b16 %v7573, %v7572
        %v7607 = vpack.c.b16 %v7575, %v7574
        %v7608 = vpack.c.b16 %v7577, %v7576
        %v7609 = vpack.c.b16 %v7579, %v7578
        %v7610 = vpack.c.b16 %v7581, %v7580
        %v7611 = vpack.c.b16 %v7583, %v7582
        %v7641 = vsel %vm1925, %v7414, 0
        %7643 = vmatprep.subr.bf16.mxu0 0
        %7644 = vmatpush1.bf16.msra.mxu0 %v7584
        %7645 = vmatprep.subr.bf16.mxu0 0
        %7646 = vmatpush1.bf16.msra.mxu0 %v7585
        %7647 = vmatprep.subr.bf16.mxu0 0
        %7648 = vmatpush1.bf16.msra.mxu0 %v7586
        %7649 = vmatprep.subr.bf16.mxu0 0
        %7650 = vmatpush1.bf16.msra.mxu0 %v7587
        %7651 = vmatprep.subr.bf16.mxu0 0
        %7652 = vmatpush1.bf16.msra.mxu0 %v7588
        %7653 = vmatprep.subr.bf16.mxu0 0
        %7654 = vmatpush1.bf16.msra.mxu0 %v7589
        %7655 = vmatprep.subr.bf16.mxu0 0
        %7656 = vmatpush1.bf16.msra.mxu0 %v7590
        %7657 = vmatprep.subr.bf16.mxu0 0
        %7658 = vmatpush1.bf16.msra.mxu0 %v7591
        %7659 = vmatprep.subr.bf16.mxu0 0
        %7660 = vmatpush1.bf16.msra.mxu0 %v7592
        %7661 = vmatprep.subr.bf16.mxu0 0
        %7662 = vmatpush1.bf16.msra.mxu0 %v7593
        %7663 = vmatprep.subr.bf16.mxu0 0
        %7664 = vmatpush1.bf16.msra.mxu0 %v7594
        %7665 = vmatprep.subr.bf16.mxu0 0
        %7666 = vmatpush1.bf16.msra.mxu0 %v7595
        %7667 = vmatprep.subr.bf16.mxu0 0
        %7668 = vmatpush1.bf16.msra.mxu0 %v7596
        %7669 = vmatprep.subr.bf16.mxu0 0
        %7670 = vmatpush1.bf16.msra.mxu0 %v7597
        %7671 = vmatprep.subr.bf16.mxu0 0
        %7672 = vmatpush1.bf16.msra.mxu0 %v7598
        %7673 = vmatprep.subr.bf16.mxu0 0
        %7674 = vmatpush1.bf16.msra.mxu0 %v7599
        %7675 = vmatprep.mubr.bf16.mxu0 %v7412
        %7676 = vmatmul.mubr.bf16.gmra.mrb[0].mxu0 %v7411
        %v7677 = vpop.f32.mrb[0].mxu0
        %v7678 = vadd.f32 0.0, %v7677
        %v7679 = vpop.f32.mrb[0].mxu0
        %v7680 = vpop.f32.mrb[0].mxu0
        %v7681 = vpop.f32.mrb[0].mxu0
        %7682 = vdwg.mxu0
        %7683 = vmatprep.subr.bf16.mxu0 0
        %7684 = vmatpush1.bf16.msra.mxu0 %v7600
        %7685 = vmatprep.subr.bf16.mxu0 0
        %7686 = vmatpush1.bf16.msra.mxu0 %v7601
        %7687 = vmatprep.subr.bf16.mxu0 0
        %7688 = vmatpush1.bf16.msra.mxu0 %v7602
        %7689 = vmatprep.subr.bf16.mxu0 0
        %7690 = vmatpush1.bf16.msra.mxu0 %v7603
        %7691 = vmatprep.subr.bf16.mxu0 0
        %7692 = vmatpush1.bf16.msra.mxu0 %v7604
        %7693 = vmatprep.subr.bf16.mxu0 0
        %7694 = vmatpush1.bf16.msra.mxu0 %v7605
        %7695 = vmatprep.subr.bf16.mxu0 0
        %7696 = vmatpush1.bf16.msra.mxu0 %v7606
        %7697 = vmatprep.subr.bf16.mxu0 0
        %7698 = vmatpush1.bf16.msra.mxu0 %v7607
        %7699 = vmatprep.subr.bf16.mxu0 0
        %7700 = vmatpush1.bf16.msra.mxu0 %v7608
        %7701 = vmatprep.subr.bf16.mxu0 0
        %7702 = vmatpush1.bf16.msra.mxu0 %v7609
        %7703 = vmatprep.subr.bf16.mxu0 0
        %7704 = vmatpush1.bf16.msra.mxu0 %v7610
        %7705 = vmatprep.subr.bf16.mxu0 0
        %7706 = vmatpush1.bf16.msra.mxu0 %v7611
        %7707 = vmatprep.subr.bf16.mxu0 0
        %7708 = vmatpush1.bf16.msra.mxu0 0
        %7709 = vmatprep.subr.bf16.mxu0 0
        %7710 = vmatpush1.bf16.msra.mxu0 0
        %7711 = vmatprep.subr.bf16.mxu0 0
        %7712 = vmatpush1.bf16.msra.mxu0 0
        %7713 = vmatprep.subr.bf16.mxu0 0
        %7714 = vmatpush1.bf16.msra.mxu0 0
        %7715 = vmatprep.mubr.bf16.mxu0 %v7641
        %7716 = vmatmul.mubr.bf16.gmra.mrb[0].mxu0 %v7413
        %v7717 = vpop.f32.mrb[0].mxu0
        %v7718 = vadd.f32 %v7678, %v7717
        %v7719 = vpop.f32.mrb[0].mxu0
        %v7720 = vpop.f32.mrb[0].mxu0
        %v7721 = vpop.f32.mrb[0].mxu0
        %7722 = vdwg.mxu0
        %v7723 = vadd.f32 %v7040, %v7718
        %s7724 = scalar_lea.vmem %s363, 80 [#allocation2]
        %v7725 = vld [vmem:[%s7724] sm:$0xff]
        %s7726 = scalar_lea.vmem %s363, 192 [#allocation2]
        %v7727 = vld [vmem:[%s7726] sm:$0xff]
        %v7729 = vunpack.c.l.b16 %v7725
        %v7730 = vunpack.c.h.b16 %v7725
        %v7731 = vpack.c.b16 %v7729, %v7729
        %v7732 = vpack.c.b16 %v7730, %v7730
        %v7735 = vsel %vm684, %v7732, 0
        %7737 = vmatprep.subr.bf16.mxu0 %v605
        %7738 = vmatpush1.bf16.msra.mxu0 %v604
        %7739 = vmatprep.subr.bf16.mxu0 %v609
        %7740 = vmatpush1.bf16.msra.mxu0 %v608
        %7741 = vmatprep.subr.bf16.mxu0 %v613
        %7742 = vmatpush1.bf16.msra.mxu0 %v612
        %7743 = vmatprep.subr.bf16.mxu0 %v617
        %7744 = vmatpush1.bf16.msra.mxu0 %v616
        %7745 = vmatprep.subr.bf16.mxu0 %v621
        %7746 = vmatpush1.bf16.msra.mxu0 %v620
        %7747 = vmatprep.subr.bf16.mxu0 %v625
        %7748 = vmatpush1.bf16.msra.mxu0 %v624
        %7749 = vmatprep.subr.bf16.mxu0 %v629
        %7750 = vmatpush1.bf16.msra.mxu0 %v628
        %7751 = vmatprep.subr.bf16.mxu0 %v633
        %7752 = vmatpush1.bf16.msra.mxu0 %v632
        %7753 = vmatprep.subr.bf16.mxu0 %v637
        %7754 = vmatpush1.bf16.msra.mxu0 %v636
        %7755 = vmatprep.subr.bf16.mxu0 %v641
        %7756 = vmatpush1.bf16.msra.mxu0 %v640
        %7757 = vmatprep.subr.bf16.mxu0 0
        %7758 = vmatpush1.bf16.msra.mxu0 0
        %7759 = vmatprep.subr.bf16.mxu0 0
        %7760 = vmatpush1.bf16.msra.mxu0 0
        %7761 = vmatprep.subr.bf16.mxu0 0
        %7762 = vmatpush1.bf16.msra.mxu0 0
        %7763 = vmatprep.subr.bf16.mxu0 0
        %7764 = vmatpush1.bf16.msra.mxu0 0
        %7765 = vmatprep.subr.bf16.mxu0 0
        %7766 = vmatpush1.bf16.msra.mxu0 0
        %7767 = vmatprep.subr.bf16.mxu0 0
        %7768 = vmatpush1.bf16.msra.mxu0 0
        %7769 = vmatprep.mubr.bf16.mxu0 %v7735
        %7770 = vmatmul.mubr.bf16.gmra.mrb[0].mxu0 %v7731
        %v7771 = vpop.f32.mrb[0].mxu0
        %v7772 = vadd.f32 0.0, %v7771
        %v7773 = vpop.f32.mrb[0].mxu0
        %v7774 = vadd.f32 0.0, %v7773
        %v7775 = vpop.f32.mrb[0].mxu0
        %v7776 = vpop.f32.mrb[0].mxu0
        %7777 = vdwg.mxu0
        %7778 = vmatprep.subr.bf16.mxu0 %v607
        %7779 = vmatpush1.bf16.msra.mxu0 %v606
        %7780 = vmatprep.subr.bf16.mxu0 %v611
        %7781 = vmatpush1.bf16.msra.mxu0 %v610
        %7782 = vmatprep.subr.bf16.mxu0 %v615
        %7783 = vmatpush1.bf16.msra.mxu0 %v614
        %7784 = vmatprep.subr.bf16.mxu0 %v619
        %7785 = vmatpush1.bf16.msra.mxu0 %v618
        %7786 = vmatprep.subr.bf16.mxu0 %v623
        %7787 = vmatpush1.bf16.msra.mxu0 %v622
        %7788 = vmatprep.subr.bf16.mxu0 %v627
        %7789 = vmatpush1.bf16.msra.mxu0 %v626
        %7790 = vmatprep.subr.bf16.mxu0 %v631
        %7791 = vmatpush1.bf16.msra.mxu0 %v630
        %7792 = vmatprep.subr.bf16.mxu0 %v635
        %7793 = vmatpush1.bf16.msra.mxu0 %v634
        %7794 = vmatprep.subr.bf16.mxu0 %v639
        %7795 = vmatpush1.bf16.msra.mxu0 %v638
        %7796 = vmatprep.subr.bf16.mxu0 %v643
        %7797 = vmatpush1.bf16.msra.mxu0 %v642
        %7798 = vmatprep.subr.bf16.mxu0 0
        %7799 = vmatpush1.bf16.msra.mxu0 0
        %7800 = vmatprep.subr.bf16.mxu0 0
        %7801 = vmatpush1.bf16.msra.mxu0 0
        %7802 = vmatprep.subr.bf16.mxu0 0
        %7803 = vmatpush1.bf16.msra.mxu0 0
        %7804 = vmatprep.subr.bf16.mxu0 0
        %7805 = vmatpush1.bf16.msra.mxu0 0
        %7806 = vmatprep.subr.bf16.mxu0 0
        %7807 = vmatpush1.bf16.msra.mxu0 0
        %7808 = vmatprep.subr.bf16.mxu0 0
        %7809 = vmatpush1.bf16.msra.mxu0 0
        %7810 = vmatprep.mubr.bf16.mxu0 %v7735
        %7811 = vmatmul.mubr.bf16.gmra.mrb[0].mxu0 %v7731
        %v7812 = vpop.f32.mrb[0].mxu0
        %v7813 = vadd.f32 0.0, %v7812
        %v7814 = vpop.f32.mrb[0].mxu0
        %v7815 = vadd.f32 0.0, %v7814
        %v7816 = vpop.f32.mrb[0].mxu0
        %v7817 = vpop.f32.mrb[0].mxu0
        %7818 = vdwg.mxu0
        %7819 = vmatprep.subr.bf16.mxu0 %v891
        %7820 = vmatpush1.bf16.msra.mxu0 %v890
        %7821 = vmatprep.subr.bf16.mxu0 %v895
        %7822 = vmatpush1.bf16.msra.mxu0 %v894
        %7823 = vmatprep.subr.bf16.mxu0 %v899
        %7824 = vmatpush1.bf16.msra.mxu0 %v898
        %7825 = vmatprep.subr.bf16.mxu0 %v903
        %7826 = vmatpush1.bf16.msra.mxu0 %v902
        %7827 = vmatprep.subr.bf16.mxu0 %v907
        %7828 = vmatpush1.bf16.msra.mxu0 %v906
        %7829 = vmatprep.subr.bf16.mxu0 %v911
        %7830 = vmatpush1.bf16.msra.mxu0 %v910
        %7831 = vmatprep.subr.bf16.mxu0 %v915
        %7832 = vmatpush1.bf16.msra.mxu0 %v914
        %7833 = vmatprep.subr.bf16.mxu0 %v919
        %7834 = vmatpush1.bf16.msra.mxu0 %v918
        %7835 = vmatprep.subr.bf16.mxu0 %v923
        %7836 = vmatpush1.bf16.msra.mxu0 %v922
        %7837 = vmatprep.subr.bf16.mxu0 %v927
        %7838 = vmatpush1.bf16.msra.mxu0 %v926
        %7839 = vmatprep.subr.bf16.mxu0 0
        %7840 = vmatpush1.bf16.msra.mxu0 0
        %7841 = vmatprep.subr.bf16.mxu0 0
        %7842 = vmatpush1.bf16.msra.mxu0 0
        %7843 = vmatprep.subr.bf16.mxu0 0
        %7844 = vmatpush1.bf16.msra.mxu0 0
        %7845 = vmatprep.subr.bf16.mxu0 0
        %7846 = vmatpush1.bf16.msra.mxu0 0
        %7847 = vmatprep.subr.bf16.mxu0 0
        %7848 = vmatpush1.bf16.msra.mxu0 0
        %7849 = vmatprep.subr.bf16.mxu0 0
        %7850 = vmatpush1.bf16.msra.mxu0 0
        %7851 = vmatprep.mubr.bf16.mxu0 %v7735
        %7852 = vmatmul.mubr.bf16.gmra.mrb[0].mxu0 %v7731
        %v7853 = vpop.f32.mrb[0].mxu0
        %v7854 = vadd.f32 0.0, %v7853
        %v7855 = vpop.f32.mrb[0].mxu0
        %v7856 = vadd.f32 0.0, %v7855
        %v7857 = vpop.f32.mrb[0].mxu0
        %v7858 = vpop.f32.mrb[0].mxu0
        %7859 = vdwg.mxu0
        %7860 = vmatprep.subr.bf16.mxu0 %v893
        %7861 = vmatpush1.bf16.msra.mxu0 %v892
        %7862 = vmatprep.subr.bf16.mxu0 %v897
        %7863 = vmatpush1.bf16.msra.mxu0 %v896
        %7864 = vmatprep.subr.bf16.mxu0 %v901
        %7865 = vmatpush1.bf16.msra.mxu0 %v900
        %7866 = vmatprep.subr.bf16.mxu0 %v905
        %7867 = vmatpush1.bf16.msra.mxu0 %v904
        %7868 = vmatprep.subr.bf16.mxu0 %v909
        %7869 = vmatpush1.bf16.msra.mxu0 %v908
        %7870 = vmatprep.subr.bf16.mxu0 %v913
        %7871 = vmatpush1.bf16.msra.mxu0 %v912
        %7872 = vmatprep.subr.bf16.mxu0 %v917
        %7873 = vmatpush1.bf16.msra.mxu0 %v916
        %7874 = vmatprep.subr.bf16.mxu0 %v921
        %7875 = vmatpush1.bf16.msra.mxu0 %v920
        %7876 = vmatprep.subr.bf16.mxu0 %v925
        %7877 = vmatpush1.bf16.msra.mxu0 %v924
        %7878 = vmatprep.subr.bf16.mxu0 %v929
        %7879 = vmatpush1.bf16.msra.mxu0 %v928
        %7880 = vmatprep.subr.bf16.mxu0 0
        %7881 = vmatpush1.bf16.msra.mxu0 0
        %7882 = vmatprep.subr.bf16.mxu0 0
        %7883 = vmatpush1.bf16.msra.mxu0 0
        %7884 = vmatprep.subr.bf16.mxu0 0
        %7885 = vmatpush1.bf16.msra.mxu0 0
        %7886 = vmatprep.subr.bf16.mxu0 0
        %7887 = vmatpush1.bf16.msra.mxu0 0
        %7888 = vmatprep.subr.bf16.mxu0 0
        %7889 = vmatpush1.bf16.msra.mxu0 0
        %7890 = vmatprep.subr.bf16.mxu0 0
        %7891 = vmatpush1.bf16.msra.mxu0 0
        %7892 = vmatprep.mubr.bf16.mxu0 %v7735
        %7893 = vmatmul.mubr.bf16.gmra.mrb[0].mxu0 %v7731
        %v7894 = vpop.f32.mrb[0].mxu0
        %v7895 = vadd.f32 0.0, %v7894
        %v7896 = vpop.f32.mrb[0].mxu0
        %v7897 = vadd.f32 0.0, %v7896
        %v7898 = vpop.f32.mrb[0].mxu0
        %v7899 = vpop.f32.mrb[0].mxu0
        %7900 = vdwg.mxu0
        %v7901 = vmax.f32 %v7772, %v7854
        %v7902 = vmax.f32 %v7774, %v7856
        %v7903 = vmax.f32 %v7813, %v7895
        %v7904 = vmax.f32 %v7815, %v7897
        %v7906 = vunpack.c.l.b16 %v7727
        %v7907 = vunpack.c.h.b16 %v7727
        %v7908 = vpack.c.b16 %v7906, %v7906
        %v7909 = vpack.c.b16 %v7907, %v7907
        %v7912 = vsel %vm684, %v7909, 0
        %7914 = vmatprep.subr.bf16.mxu0 %v605
        %7915 = vmatpush1.bf16.msra.mxu0 %v604
        %7916 = vmatprep.subr.bf16.mxu0 %v609
        %7917 = vmatpush1.bf16.msra.mxu0 %v608
        %7918 = vmatprep.subr.bf16.mxu0 %v613
        %7919 = vmatpush1.bf16.msra.mxu0 %v612
        %7920 = vmatprep.subr.bf16.mxu0 %v617
        %7921 = vmatpush1.bf16.msra.mxu0 %v616
        %7922 = vmatprep.subr.bf16.mxu0 %v621
        %7923 = vmatpush1.bf16.msra.mxu0 %v620
        %7924 = vmatprep.subr.bf16.mxu0 %v625
        %7925 = vmatpush1.bf16.msra.mxu0 %v624
        %7926 = vmatprep.subr.bf16.mxu0 %v629
        %7927 = vmatpush1.bf16.msra.mxu0 %v628
        %7928 = vmatprep.subr.bf16.mxu0 %v633
        %7929 = vmatpush1.bf16.msra.mxu0 %v632
        %7930 = vmatprep.subr.bf16.mxu0 %v637
        %7931 = vmatpush1.bf16.msra.mxu0 %v636
        %7932 = vmatprep.subr.bf16.mxu0 %v641
        %7933 = vmatpush1.bf16.msra.mxu0 %v640
        %7934 = vmatprep.subr.bf16.mxu0 0
        %7935 = vmatpush1.bf16.msra.mxu0 0
        %7936 = vmatprep.subr.bf16.mxu0 0
        %7937 = vmatpush1.bf16.msra.mxu0 0
        %7938 = vmatprep.subr.bf16.mxu0 0
        %7939 = vmatpush1.bf16.msra.mxu0 0
        %7940 = vmatprep.subr.bf16.mxu0 0
        %7941 = vmatpush1.bf16.msra.mxu0 0
        %7942 = vmatprep.subr.bf16.mxu0 0
        %7943 = vmatpush1.bf16.msra.mxu0 0
        %7944 = vmatprep.subr.bf16.mxu0 0
        %7945 = vmatpush1.bf16.msra.mxu0 0
        %7946 = vmatprep.mubr.bf16.mxu0 %v7912
        %7947 = vmatmul.mubr.bf16.gmra.mrb[0].mxu0 %v7908
        %v7948 = vpop.f32.mrb[0].mxu0
        %v7949 = vadd.f32 0.0, %v7948
        %v7950 = vpop.f32.mrb[0].mxu0
        %v7951 = vadd.f32 0.0, %v7950
        %v7952 = vpop.f32.mrb[0].mxu0
        %v7953 = vpop.f32.mrb[0].mxu0
        %7954 = vdwg.mxu0
        %7955 = vmatprep.subr.bf16.mxu0 %v607
        %7956 = vmatpush1.bf16.msra.mxu0 %v606
        %7957 = vmatprep.subr.bf16.mxu0 %v611
        %7958 = vmatpush1.bf16.msra.mxu0 %v610
        %7959 = vmatprep.subr.bf16.mxu0 %v615
        %7960 = vmatpush1.bf16.msra.mxu0 %v614
        %7961 = vmatprep.subr.bf16.mxu0 %v619
        %7962 = vmatpush1.bf16.msra.mxu0 %v618
        %7963 = vmatprep.subr.bf16.mxu0 %v623
        %7964 = vmatpush1.bf16.msra.mxu0 %v622
        %7965 = vmatprep.subr.bf16.mxu0 %v627
        %7966 = vmatpush1.bf16.msra.mxu0 %v626
        %7967 = vmatprep.subr.bf16.mxu0 %v631
        %7968 = vmatpush1.bf16.msra.mxu0 %v630
        %7969 = vmatprep.subr.bf16.mxu0 %v635
        %7970 = vmatpush1.bf16.msra.mxu0 %v634
        %7971 = vmatprep.subr.bf16.mxu0 %v639
        %7972 = vmatpush1.bf16.msra.mxu0 %v638
        %7973 = vmatprep.subr.bf16.mxu0 %v643
        %7974 = vmatpush1.bf16.msra.mxu0 %v642
        %7975 = vmatprep.subr.bf16.mxu0 0
        %7976 = vmatpush1.bf16.msra.mxu0 0
        %7977 = vmatprep.subr.bf16.mxu0 0
        %7978 = vmatpush1.bf16.msra.mxu0 0
        %7979 = vmatprep.subr.bf16.mxu0 0
        %7980 = vmatpush1.bf16.msra.mxu0 0
        %7981 = vmatprep.subr.bf16.mxu0 0
        %7982 = vmatpush1.bf16.msra.mxu0 0
        %7983 = vmatprep.subr.bf16.mxu0 0
        %7984 = vmatpush1.bf16.msra.mxu0 0
        %7985 = vmatprep.subr.bf16.mxu0 0
        %7986 = vmatpush1.bf16.msra.mxu0 0
        %7987 = vmatprep.mubr.bf16.mxu0 %v7912
        %7988 = vmatmul.mubr.bf16.gmra.mrb[0].mxu0 %v7908
        %v7989 = vpop.f32.mrb[0].mxu0
        %v7990 = vadd.f32 0.0, %v7989
        %v7991 = vpop.f32.mrb[0].mxu0
        %v7992 = vadd.f32 0.0, %v7991
        %v7993 = vpop.f32.mrb[0].mxu0
        %v7994 = vpop.f32.mrb[0].mxu0
        %7995 = vdwg.mxu0
        %7996 = vmatprep.subr.bf16.mxu0 %v891
        %7997 = vmatpush1.bf16.msra.mxu0 %v890
        %7998 = vmatprep.subr.bf16.mxu0 %v895
        %7999 = vmatpush1.bf16.msra.mxu0 %v894
        %8000 = vmatprep.subr.bf16.mxu0 %v899
        %8001 = vmatpush1.bf16.msra.mxu0 %v898
        %8002 = vmatprep.subr.bf16.mxu0 %v903
        %8003 = vmatpush1.bf16.msra.mxu0 %v902
        %8004 = vmatprep.subr.bf16.mxu0 %v907
        %8005 = vmatpush1.bf16.msra.mxu0 %v906
        %8006 = vmatprep.subr.bf16.mxu0 %v911
        %8007 = vmatpush1.bf16.msra.mxu0 %v910
        %8008 = vmatprep.subr.bf16.mxu0 %v915
        %8009 = vmatpush1.bf16.msra.mxu0 %v914
        %8010 = vmatprep.subr.bf16.mxu0 %v919
        %8011 = vmatpush1.bf16.msra.mxu0 %v918
        %8012 = vmatprep.subr.bf16.mxu0 %v923
        %8013 = vmatpush1.bf16.msra.mxu0 %v922
        %8014 = vmatprep.subr.bf16.mxu0 %v927
        %8015 = vmatpush1.bf16.msra.mxu0 %v926
        %8016 = vmatprep.subr.bf16.mxu0 0
        %8017 = vmatpush1.bf16.msra.mxu0 0
        %8018 = vmatprep.subr.bf16.mxu0 0
        %8019 = vmatpush1.bf16.msra.mxu0 0
        %8020 = vmatprep.subr.bf16.mxu0 0
        %8021 = vmatpush1.bf16.msra.mxu0 0
        %8022 = vmatprep.subr.bf16.mxu0 0
        %8023 = vmatpush1.bf16.msra.mxu0 0
        %8024 = vmatprep.subr.bf16.mxu0 0
        %8025 = vmatpush1.bf16.msra.mxu0 0
        %8026 = vmatprep.subr.bf16.mxu0 0
        %8027 = vmatpush1.bf16.msra.mxu0 0
        %8028 = vmatprep.mubr.bf16.mxu0 %v7912
        %8029 = vmatmul.mubr.bf16.gmra.mrb[0].mxu0 %v7908
        %v8030 = vpop.f32.mrb[0].mxu0
        %v8031 = vadd.f32 0.0, %v8030
        %v8032 = vpop.f32.mrb[0].mxu0
        %v8033 = vadd.f32 0.0, %v8032
        %v8034 = vpop.f32.mrb[0].mxu0
        %v8035 = vpop.f32.mrb[0].mxu0
        %8036 = vdwg.mxu0
        %8037 = vmatprep.subr.bf16.mxu0 %v893
        %8038 = vmatpush1.bf16.msra.mxu0 %v892
        %8039 = vmatprep.subr.bf16.mxu0 %v897
        %8040 = vmatpush1.bf16.msra.mxu0 %v896
        %8041 = vmatprep.subr.bf16.mxu0 %v901
        %8042 = vmatpush1.bf16.msra.mxu0 %v900
        %8043 = vmatprep.subr.bf16.mxu0 %v905
        %8044 = vmatpush1.bf16.msra.mxu0 %v904
        %8045 = vmatprep.subr.bf16.mxu0 %v909
        %8046 = vmatpush1.bf16.msra.mxu0 %v908
        %8047 = vmatprep.subr.bf16.mxu0 %v913
        %8048 = vmatpush1.bf16.msra.mxu0 %v912
        %8049 = vmatprep.subr.bf16.mxu0 %v917
        %8050 = vmatpush1.bf16.msra.mxu0 %v916
        %8051 = vmatprep.subr.bf16.mxu0 %v921
        %8052 = vmatpush1.bf16.msra.mxu0 %v920
        %8053 = vmatprep.subr.bf16.mxu0 %v925
        %8054 = vmatpush1.bf16.msra.mxu0 %v924
        %8055 = vmatprep.subr.bf16.mxu0 %v929
        %8056 = vmatpush1.bf16.msra.mxu0 %v928
        %8057 = vmatprep.subr.bf16.mxu0 0
        %8058 = vmatpush1.bf16.msra.mxu0 0
        %8059 = vmatprep.subr.bf16.mxu0 0
        %8060 = vmatpush1.bf16.msra.mxu0 0
        %8061 = vmatprep.subr.bf16.mxu0 0
        %8062 = vmatpush1.bf16.msra.mxu0 0
        %8063 = vmatprep.subr.bf16.mxu0 0
        %8064 = vmatpush1.bf16.msra.mxu0 0
        %8065 = vmatprep.subr.bf16.mxu0 0
        %8066 = vmatpush1.bf16.msra.mxu0 0
        %8067 = vmatprep.subr.bf16.mxu0 0
        %8068 = vmatpush1.bf16.msra.mxu0 0
        %8069 = vmatprep.mubr.bf16.mxu0 %v7912
        %8070 = vmatmul.mubr.bf16.gmra.mrb[0].mxu0 %v7908
        %v8071 = vpop.f32.mrb[0].mxu0
        %v8072 = vadd.f32 0.0, %v8071
        %v8073 = vpop.f32.mrb[0].mxu0
        %v8074 = vadd.f32 0.0, %v8073
        %v8075 = vpop.f32.mrb[0].mxu0
        %v8076 = vpop.f32.mrb[0].mxu0
        %8077 = vdwg.mxu0
        %v8078 = vmax.f32 %v7949, %v8031
        %v8079 = vmax.f32 %v7951, %v8033
        %v8080 = vmax.f32 %v7990, %v8072
        %v8081 = vmax.f32 %v7992, %v8074
        %v8082 = vmax.f32 %v7901, %v8078
        %v8083 = vmax.f32 %v7902, %v8079
        %v8084 = vmax.f32 %v7903, %v8080
        %v8085 = vmax.f32 %v7904, %v8081
        %v8086 = vadd.f32 %v8082, %v1241
        %v8087 = vadd.f32 %v8083, %v1245
        %v8088 = vadd.f32 %v8084, %v1249
        %v8089 = vadd.f32 %v8085, %v1253
        %v8090 = vmax.f32 %v8086, 0.0
        %v8091 = vmax.f32 %v8087, 0.0
        %v8092 = vmax.f32 %v8088, 0.0
        %v8093 = vmax.f32 %v8089, 0.0
        %v8094 = vpack.c.bf16 %v8090, %v8090
        %v8095 = vpack.c.bf16 %v8091, %v8091
        %v8096 = vpack.c.bf16 %v8092, %v8092
        %v8097 = vpack.c.bf16 %v8093, %v8093
        %s8098 = scalar_lea.vmem %s4, 2240
        %v8099 = vld [vmem:[%s8098] sm:$0xf]
        %v8100 = vld [vmem:[%s8098 + $0x4] sm:$0xf]
        %v8101 = vld [vmem:[%s8098 + $0x8] sm:$0xf]
        %v8102 = vld [vmem:[%s8098 + $0xc] sm:$0xf]
        %v8103 = vld [vmem:[%s8098 + $0x10] sm:$0xf]
        %v8104 = vld [vmem:[%s8098 + $0x14] sm:$0xf]
        %v8105 = vld [vmem:[%s8098 + $0x18] sm:$0xf]
        %v8106 = vld [vmem:[%s8098 + $0x1c] sm:$0xf]
        %v8107 = vld [vmem:[%s8098 + $0x20] sm:$0xf]
        %v8108 = vld [vmem:[%s8098 + $0x24] sm:$0xf]
        %v8109 = vld [vmem:[%s8098 + $0x28] sm:$0xf]
        %v8110 = vld [vmem:[%s8098 + $0x2c] sm:$0xf]
        %v8111 = vld [vmem:[%s8098 + $0x30] sm:$0xf]
        %v8112 = vld [vmem:[%s8098 + $0x34] sm:$0xf]
        %v8113 = vld [vmem:[%s8098 + $0x38] sm:$0xf]
        %v8114 = vld [vmem:[%s8098 + $0x3c] sm:$0xf]
        %v8115 = vld [vmem:[%s8098 + $0x40] sm:$0xf]
        %v8116 = vld [vmem:[%s8098 + $0x44] sm:$0xf]
        %v8117 = vld [vmem:[%s8098 + $0x48] sm:$0xf]
        %v8118 = vld [vmem:[%s8098 + $0x4c] sm:$0xf]
        %v8119 = vld [vmem:[%s8098 + $0x50] sm:$0xf]
        %v8120 = vld [vmem:[%s8098 + $0x54] sm:$0xf]
        %v8121 = vld [vmem:[%s8098 + $0x58] sm:$0xf]
        %v8122 = vld [vmem:[%s8098 + $0x5c] sm:$0xf]
        %v8123 = vld [vmem:[%s8098 + $0x60] sm:$0xf]
        %v8124 = vld [vmem:[%s8098 + $0x64] sm:$0xf]
        %v8125 = vld [vmem:[%s8098 + $0x68] sm:$0xf]
        %v8126 = vld [vmem:[%s8098 + $0x6c] sm:$0xf]
        %v8127 = vld [vmem:[%s8098 + $0x70] sm:$0xf]
        %v8128 = vld [vmem:[%s8098 + $0x74] sm:$0xf]
        %v8129 = vld [vmem:[%s8098 + $0x78] sm:$0xf]
        %v8130 = vld [vmem:[%s8098 + $0x7c] sm:$0xf]
        %v8131 = vld [vmem:[%s8098 + $0x80] sm:$0xf]
        %v8132 = vld [vmem:[%s8098 + $0x84] sm:$0xf]
        %v8133 = vld [vmem:[%s8098 + $0x88] sm:$0xf]
        %v8134 = vld [vmem:[%s8098 + $0x8c] sm:$0xf]
        %v8135 = vld [vmem:[%s8098 + $0x90] sm:$0xf]
        %v8136 = vld [vmem:[%s8098 + $0x94] sm:$0xf]
        %v8137 = vld [vmem:[%s8098 + $0x98] sm:$0xf]
        %v8138 = vld [vmem:[%s8098 + $0x9c] sm:$0xf]
        %v8139 = vld [vmem:[%s8098 + $0xa0] sm:$0xf]
        %v8140 = vld [vmem:[%s8098 + $0xa4] sm:$0xf]
        %v8141 = vld [vmem:[%s8098 + $0xa8] sm:$0xf]
        %v8142 = vld [vmem:[%s8098 + $0xac] sm:$0xf]
        %v8143 = vld [vmem:[%s8098 + $0xb0] sm:$0xf]
        %v8144 = vld [vmem:[%s8098 + $0xb4] sm:$0xf]
        %v8145 = vld [vmem:[%s8098 + $0xb8] sm:$0xf]
        %v8146 = vld [vmem:[%s8098 + $0xbc] sm:$0xf]
        %v8147 = vld [vmem:[%s8098 + $0xc0] sm:$0xf]
        %v8148 = vld [vmem:[%s8098 + $0xc4] sm:$0xf]
        %v8149 = vld [vmem:[%s8098 + $0xc8] sm:$0xf]
        %v8150 = vld [vmem:[%s8098 + $0xcc] sm:$0xf]
        %v8151 = vld [vmem:[%s8098 + $0xd0] sm:$0xf]
        %v8152 = vld [vmem:[%s8098 + $0xd4] sm:$0xf]
        %v8153 = vld [vmem:[%s8098 + $0xd8] sm:$0xf]
        %v8154 = vld [vmem:[%s8098 + $0xdc] sm:$0xf]
        %v8211 = vunpack.c.l.b16 %v8099
        %v8212 = vunpack.c.l.b16 %v8100
        %v8213 = vunpack.c.l.b16 %v8101
        %v8214 = vunpack.c.l.b16 %v8102
        %v8215 = vunpack.c.l.b16 %v8103
        %v8216 = vunpack.c.l.b16 %v8104
        %v8217 = vunpack.c.l.b16 %v8105
        %v8218 = vunpack.c.l.b16 %v8106
        %v8219 = vunpack.c.l.b16 %v8107
        %v8220 = vunpack.c.l.b16 %v8108
        %v8221 = vunpack.c.l.b16 %v8109
        %v8222 = vunpack.c.l.b16 %v8110
        %v8223 = vunpack.c.l.b16 %v8111
        %v8224 = vunpack.c.l.b16 %v8112
        %v8225 = vunpack.c.l.b16 %v8113
        %v8226 = vunpack.c.l.b16 %v8114
        %v8227 = vunpack.c.l.b16 %v8115
        %v8228 = vunpack.c.l.b16 %v8116
        %v8229 = vunpack.c.l.b16 %v8117
        %v8230 = vunpack.c.l.b16 %v8118
        %v8231 = vunpack.c.l.b16 %v8119
        %v8232 = vunpack.c.l.b16 %v8120
        %v8233 = vunpack.c.l.b16 %v8121
        %v8234 = vunpack.c.l.b16 %v8122
        %v8235 = vunpack.c.l.b16 %v8123
        %v8236 = vunpack.c.l.b16 %v8124
        %v8237 = vunpack.c.l.b16 %v8125
        %v8238 = vunpack.c.l.b16 %v8126
        %v8239 = vunpack.c.l.b16 %v8127
        %v8240 = vunpack.c.l.b16 %v8128
        %v8241 = vunpack.c.l.b16 %v8129
        %v8242 = vunpack.c.l.b16 %v8130
        %v8243 = vunpack.c.l.b16 %v8131
        %v8244 = vunpack.c.l.b16 %v8132
        %v8245 = vunpack.c.l.b16 %v8133
        %v8246 = vunpack.c.l.b16 %v8134
        %v8247 = vunpack.c.l.b16 %v8135
        %v8248 = vunpack.c.l.b16 %v8136
        %v8249 = vunpack.c.l.b16 %v8137
        %v8250 = vunpack.c.l.b16 %v8138
        %v8251 = vunpack.c.l.b16 %v8139
        %v8252 = vunpack.c.l.b16 %v8140
        %v8253 = vunpack.c.l.b16 %v8141
        %v8254 = vunpack.c.l.b16 %v8142
        %v8255 = vunpack.c.l.b16 %v8143
        %v8256 = vunpack.c.l.b16 %v8144
        %v8257 = vunpack.c.l.b16 %v8145
        %v8258 = vunpack.c.l.b16 %v8146
        %v8259 = vunpack.c.l.b16 %v8147
        %v8260 = vunpack.c.l.b16 %v8148
        %v8261 = vunpack.c.l.b16 %v8149
        %v8262 = vunpack.c.l.b16 %v8150
        %v8263 = vunpack.c.l.b16 %v8151
        %v8264 = vunpack.c.l.b16 %v8152
        %v8265 = vunpack.c.l.b16 %v8153
        %v8266 = vunpack.c.l.b16 %v8154
        %v8267 = vpack.c.b16 %v8212, %v8211
        %v8268 = vpack.c.b16 %v8214, %v8213
        %v8269 = vpack.c.b16 %v8216, %v8215
        %v8270 = vpack.c.b16 %v8218, %v8217
        %v8271 = vpack.c.b16 %v8220, %v8219
        %v8272 = vpack.c.b16 %v8222, %v8221
        %v8273 = vpack.c.b16 %v8224, %v8223
        %v8274 = vpack.c.b16 %v8226, %v8225
        %v8275 = vpack.c.b16 %v8228, %v8227
        %v8276 = vpack.c.b16 %v8230, %v8229
        %v8277 = vpack.c.b16 %v8232, %v8231
        %v8278 = vpack.c.b16 %v8234, %v8233
        %v8279 = vpack.c.b16 %v8236, %v8235
        %v8280 = vpack.c.b16 %v8238, %v8237
        %v8281 = vpack.c.b16 %v8240, %v8239
        %v8282 = vpack.c.b16 %v8242, %v8241
        %v8283 = vpack.c.b16 %v8244, %v8243
        %v8284 = vpack.c.b16 %v8246, %v8245
        %v8285 = vpack.c.b16 %v8248, %v8247
        %v8286 = vpack.c.b16 %v8250, %v8249
        %v8287 = vpack.c.b16 %v8252, %v8251
        %v8288 = vpack.c.b16 %v8254, %v8253
        %v8289 = vpack.c.b16 %v8256, %v8255
        %v8290 = vpack.c.b16 %v8258, %v8257
        %v8291 = vpack.c.b16 %v8260, %v8259
        %v8292 = vpack.c.b16 %v8262, %v8261
        %v8293 = vpack.c.b16 %v8264, %v8263
        %v8294 = vpack.c.b16 %v8266, %v8265
        %v8324 = vsel %vm1925, %v8097, 0
        %8326 = vmatprep.subr.bf16.mxu0 0
        %8327 = vmatpush1.bf16.msra.mxu0 %v8267
        %8328 = vmatprep.subr.bf16.mxu0 0
        %8329 = vmatpush1.bf16.msra.mxu0 %v8268
        %8330 = vmatprep.subr.bf16.mxu0 0
        %8331 = vmatpush1.bf16.msra.mxu0 %v8269
        %8332 = vmatprep.subr.bf16.mxu0 0
        %8333 = vmatpush1.bf16.msra.mxu0 %v8270
        %8334 = vmatprep.subr.bf16.mxu0 0
        %8335 = vmatpush1.bf16.msra.mxu0 %v8271
        %8336 = vmatprep.subr.bf16.mxu0 0
        %8337 = vmatpush1.bf16.msra.mxu0 %v8272
        %8338 = vmatprep.subr.bf16.mxu0 0
        %8339 = vmatpush1.bf16.msra.mxu0 %v8273
        %8340 = vmatprep.subr.bf16.mxu0 0
        %8341 = vmatpush1.bf16.msra.mxu0 %v8274
        %8342 = vmatprep.subr.bf16.mxu0 0
        %8343 = vmatpush1.bf16.msra.mxu0 %v8275
        %8344 = vmatprep.subr.bf16.mxu0 0
        %8345 = vmatpush1.bf16.msra.mxu0 %v8276
        %8346 = vmatprep.subr.bf16.mxu0 0
        %8347 = vmatpush1.bf16.msra.mxu0 %v8277
        %8348 = vmatprep.subr.bf16.mxu0 0
        %8349 = vmatpush1.bf16.msra.mxu0 %v8278
        %8350 = vmatprep.subr.bf16.mxu0 0
        %8351 = vmatpush1.bf16.msra.mxu0 %v8279
        %8352 = vmatprep.subr.bf16.mxu0 0
        %8353 = vmatpush1.bf16.msra.mxu0 %v8280
        %8354 = vmatprep.subr.bf16.mxu0 0
        %8355 = vmatpush1.bf16.msra.mxu0 %v8281
        %8356 = vmatprep.subr.bf16.mxu0 0
        %8357 = vmatpush1.bf16.msra.mxu0 %v8282
        %8358 = vmatprep.mubr.bf16.mxu0 %v8095
        %8359 = vmatmul.mubr.bf16.gmra.mrb[0].mxu0 %v8094
        %v8360 = vpop.f32.mrb[0].mxu0
        %v8361 = vadd.f32 0.0, %v8360
        %v8362 = vpop.f32.mrb[0].mxu0
        %v8363 = vpop.f32.mrb[0].mxu0
        %v8364 = vpop.f32.mrb[0].mxu0
        %8365 = vdwg.mxu0
        %8366 = vmatprep.subr.bf16.mxu0 0
        %8367 = vmatpush1.bf16.msra.mxu0 %v8283
        %8368 = vmatprep.subr.bf16.mxu0 0
        %8369 = vmatpush1.bf16.msra.mxu0 %v8284
        %8370 = vmatprep.subr.bf16.mxu0 0
        %8371 = vmatpush1.bf16.msra.mxu0 %v8285
        %8372 = vmatprep.subr.bf16.mxu0 0
        %8373 = vmatpush1.bf16.msra.mxu0 %v8286
        %8374 = vmatprep.subr.bf16.mxu0 0
        %8375 = vmatpush1.bf16.msra.mxu0 %v8287
        %8376 = vmatprep.subr.bf16.mxu0 0
        %8377 = vmatpush1.bf16.msra.mxu0 %v8288
        %8378 = vmatprep.subr.bf16.mxu0 0
        %8379 = vmatpush1.bf16.msra.mxu0 %v8289
        %8380 = vmatprep.subr.bf16.mxu0 0
        %8381 = vmatpush1.bf16.msra.mxu0 %v8290
        %8382 = vmatprep.subr.bf16.mxu0 0
        %8383 = vmatpush1.bf16.msra.mxu0 %v8291
        %8384 = vmatprep.subr.bf16.mxu0 0
        %8385 = vmatpush1.bf16.msra.mxu0 %v8292
        %8386 = vmatprep.subr.bf16.mxu0 0
        %8387 = vmatpush1.bf16.msra.mxu0 %v8293
        %8388 = vmatprep.subr.bf16.mxu0 0
        %8389 = vmatpush1.bf16.msra.mxu0 %v8294
        %8390 = vmatprep.subr.bf16.mxu0 0
        %8391 = vmatpush1.bf16.msra.mxu0 0
        %8392 = vmatprep.subr.bf16.mxu0 0
        %8393 = vmatpush1.bf16.msra.mxu0 0
        %8394 = vmatprep.subr.bf16.mxu0 0
        %8395 = vmatpush1.bf16.msra.mxu0 0
        %8396 = vmatprep.subr.bf16.mxu0 0
        %8397 = vmatpush1.bf16.msra.mxu0 0
        %8398 = vmatprep.mubr.bf16.mxu0 %v8324
        %8399 = vmatmul.mubr.bf16.gmra.mrb[0].mxu0 %v8096
        %v8400 = vpop.f32.mrb[0].mxu0
        %v8401 = vadd.f32 %v8361, %v8400
        %v8402 = vpop.f32.mrb[0].mxu0
        %v8403 = vpop.f32.mrb[0].mxu0
        %v8404 = vpop.f32.mrb[0].mxu0
        %8405 = vdwg.mxu0
        %v8406 = vadd.f32 %v7723, %v8401
        %s8407 = scalar_lea.vmem %s363, 88 [#allocation2]
        %v8408 = vld [vmem:[%s8407] sm:$0xff]
        %s8409 = scalar_lea.vmem %s363, 200 [#allocation2]
        %v8410 = vld [vmem:[%s8409] sm:$0xff]
        %v8412 = vunpack.c.l.b16 %v8408
        %v8413 = vunpack.c.h.b16 %v8408
        %v8414 = vpack.c.b16 %v8412, %v8412
        %v8415 = vpack.c.b16 %v8413, %v8413
        %v8418 = vsel %vm684, %v8415, 0
        %8420 = vmatprep.subr.bf16.mxu0 %v605
        %8421 = vmatpush1.bf16.msra.mxu0 %v604
        %8422 = vmatprep.subr.bf16.mxu0 %v609
        %8423 = vmatpush1.bf16.msra.mxu0 %v608
        %8424 = vmatprep.subr.bf16.mxu0 %v613
        %8425 = vmatpush1.bf16.msra.mxu0 %v612
        %8426 = vmatprep.subr.bf16.mxu0 %v617
        %8427 = vmatpush1.bf16.msra.mxu0 %v616
        %8428 = vmatprep.subr.bf16.mxu0 %v621
        %8429 = vmatpush1.bf16.msra.mxu0 %v620
        %8430 = vmatprep.subr.bf16.mxu0 %v625
        %8431 = vmatpush1.bf16.msra.mxu0 %v624
        %8432 = vmatprep.subr.bf16.mxu0 %v629
        %8433 = vmatpush1.bf16.msra.mxu0 %v628
        %8434 = vmatprep.subr.bf16.mxu0 %v633
        %8435 = vmatpush1.bf16.msra.mxu0 %v632
        %8436 = vmatprep.subr.bf16.mxu0 %v637
        %8437 = vmatpush1.bf16.msra.mxu0 %v636
        %8438 = vmatprep.subr.bf16.mxu0 %v641
        %8439 = vmatpush1.bf16.msra.mxu0 %v640
        %8440 = vmatprep.subr.bf16.mxu0 0
        %8441 = vmatpush1.bf16.msra.mxu0 0
        %8442 = vmatprep.subr.bf16.mxu0 0
        %8443 = vmatpush1.bf16.msra.mxu0 0
        %8444 = vmatprep.subr.bf16.mxu0 0
        %8445 = vmatpush1.bf16.msra.mxu0 0
        %8446 = vmatprep.subr.bf16.mxu0 0
        %8447 = vmatpush1.bf16.msra.mxu0 0
        %8448 = vmatprep.subr.bf16.mxu0 0
        %8449 = vmatpush1.bf16.msra.mxu0 0
        %8450 = vmatprep.subr.bf16.mxu0 0
        %8451 = vmatpush1.bf16.msra.mxu0 0
        %8452 = vmatprep.mubr.bf16.mxu0 %v8418
        %8453 = vmatmul.mubr.bf16.gmra.mrb[0].mxu0 %v8414
        %v8454 = vpop.f32.mrb[0].mxu0
        %v8455 = vadd.f32 0.0, %v8454
        %v8456 = vpop.f32.mrb[0].mxu0
        %v8457 = vadd.f32 0.0, %v8456
        %v8458 = vpop.f32.mrb[0].mxu0
        %v8459 = vpop.f32.mrb[0].mxu0
        %8460 = vdwg.mxu0
        %8461 = vmatprep.subr.bf16.mxu0 %v607
        %8462 = vmatpush1.bf16.msra.mxu0 %v606
        %8463 = vmatprep.subr.bf16.mxu0 %v611
        %8464 = vmatpush1.bf16.msra.mxu0 %v610
        %8465 = vmatprep.subr.bf16.mxu0 %v615
        %8466 = vmatpush1.bf16.msra.mxu0 %v614
        %8467 = vmatprep.subr.bf16.mxu0 %v619
        %8468 = vmatpush1.bf16.msra.mxu0 %v618
        %8469 = vmatprep.subr.bf16.mxu0 %v623
        %8470 = vmatpush1.bf16.msra.mxu0 %v622
        %8471 = vmatprep.subr.bf16.mxu0 %v627
        %8472 = vmatpush1.bf16.msra.mxu0 %v626
        %8473 = vmatprep.subr.bf16.mxu0 %v631
        %8474 = vmatpush1.bf16.msra.mxu0 %v630
        %8475 = vmatprep.subr.bf16.mxu0 %v635
        %8476 = vmatpush1.bf16.msra.mxu0 %v634
        %8477 = vmatprep.subr.bf16.mxu0 %v639
        %8478 = vmatpush1.bf16.msra.mxu0 %v638
        %8479 = vmatprep.subr.bf16.mxu0 %v643
        %8480 = vmatpush1.bf16.msra.mxu0 %v642
        %8481 = vmatprep.subr.bf16.mxu0 0
        %8482 = vmatpush1.bf16.msra.mxu0 0
        %8483 = vmatprep.subr.bf16.mxu0 0
        %8484 = vmatpush1.bf16.msra.mxu0 0
        %8485 = vmatprep.subr.bf16.mxu0 0
        %8486 = vmatpush1.bf16.msra.mxu0 0
        %8487 = vmatprep.subr.bf16.mxu0 0
        %8488 = vmatpush1.bf16.msra.mxu0 0
        %8489 = vmatprep.subr.bf16.mxu0 0
        %8490 = vmatpush1.bf16.msra.mxu0 0
        %8491 = vmatprep.subr.bf16.mxu0 0
        %8492 = vmatpush1.bf16.msra.mxu0 0
        %8493 = vmatprep.mubr.bf16.mxu0 %v8418
        %8494 = vmatmul.mubr.bf16.gmra.mrb[0].mxu0 %v8414
        %v8495 = vpop.f32.mrb[0].mxu0
        %v8496 = vadd.f32 0.0, %v8495
        %v8497 = vpop.f32.mrb[0].mxu0
        %v8498 = vadd.f32 0.0, %v8497
        %v8499 = vpop.f32.mrb[0].mxu0
        %v8500 = vpop.f32.mrb[0].mxu0
        %8501 = vdwg.mxu0
        %8502 = vmatprep.subr.bf16.mxu0 %v891
        %8503 = vmatpush1.bf16.msra.mxu0 %v890
        %8504 = vmatprep.subr.bf16.mxu0 %v895
        %8505 = vmatpush1.bf16.msra.mxu0 %v894
        %8506 = vmatprep.subr.bf16.mxu0 %v899
        %8507 = vmatpush1.bf16.msra.mxu0 %v898
        %8508 = vmatprep.subr.bf16.mxu0 %v903
        %8509 = vmatpush1.bf16.msra.mxu0 %v902
        %8510 = vmatprep.subr.bf16.mxu0 %v907
        %8511 = vmatpush1.bf16.msra.mxu0 %v906
        %8512 = vmatprep.subr.bf16.mxu0 %v911
        %8513 = vmatpush1.bf16.msra.mxu0 %v910
        %8514 = vmatprep.subr.bf16.mxu0 %v915
        %8515 = vmatpush1.bf16.msra.mxu0 %v914
        %8516 = vmatprep.subr.bf16.mxu0 %v919
        %8517 = vmatpush1.bf16.msra.mxu0 %v918
        %8518 = vmatprep.subr.bf16.mxu0 %v923
        %8519 = vmatpush1.bf16.msra.mxu0 %v922
        %8520 = vmatprep.subr.bf16.mxu0 %v927
        %8521 = vmatpush1.bf16.msra.mxu0 %v926
        %8522 = vmatprep.subr.bf16.mxu0 0
        %8523 = vmatpush1.bf16.msra.mxu0 0
        %8524 = vmatprep.subr.bf16.mxu0 0
        %8525 = vmatpush1.bf16.msra.mxu0 0
        %8526 = vmatprep.subr.bf16.mxu0 0
        %8527 = vmatpush1.bf16.msra.mxu0 0
        %8528 = vmatprep.subr.bf16.mxu0 0
        %8529 = vmatpush1.bf16.msra.mxu0 0
        %8530 = vmatprep.subr.bf16.mxu0 0
        %8531 = vmatpush1.bf16.msra.mxu0 0
        %8532 = vmatprep.subr.bf16.mxu0 0
        %8533 = vmatpush1.bf16.msra.mxu0 0
        %8534 = vmatprep.mubr.bf16.mxu0 %v8418
        %8535 = vmatmul.mubr.bf16.gmra.mrb[0].mxu0 %v8414
        %v8536 = vpop.f32.mrb[0].mxu0
        %v8537 = vadd.f32 0.0, %v8536
        %v8538 = vpop.f32.mrb[0].mxu0
        %v8539 = vadd.f32 0.0, %v8538
        %v8540 = vpop.f32.mrb[0].mxu0
        %v8541 = vpop.f32.mrb[0].mxu0
        %8542 = vdwg.mxu0
        %8543 = vmatprep.subr.bf16.mxu0 %v893
        %8544 = vmatpush1.bf16.msra.mxu0 %v892
        %8545 = vmatprep.subr.bf16.mxu0 %v897
        %8546 = vmatpush1.bf16.msra.mxu0 %v896
        %8547 = vmatprep.subr.bf16.mxu0 %v901
        %8548 = vmatpush1.bf16.msra.mxu0 %v900
        %8549 = vmatprep.subr.bf16.mxu0 %v905
        %8550 = vmatpush1.bf16.msra.mxu0 %v904
        %8551 = vmatprep.subr.bf16.mxu0 %v909
        %8552 = vmatpush1.bf16.msra.mxu0 %v908
        %8553 = vmatprep.subr.bf16.mxu0 %v913
        %8554 = vmatpush1.bf16.msra.mxu0 %v912
        %8555 = vmatprep.subr.bf16.mxu0 %v917
        %8556 = vmatpush1.bf16.msra.mxu0 %v916
        %8557 = vmatprep.subr.bf16.mxu0 %v921
        %8558 = vmatpush1.bf16.msra.mxu0 %v920
        %8559 = vmatprep.subr.bf16.mxu0 %v925
        %8560 = vmatpush1.bf16.msra.mxu0 %v924
        %8561 = vmatprep.subr.bf16.mxu0 %v929
        %8562 = vmatpush1.bf16.msra.mxu0 %v928
        %8563 = vmatprep.subr.bf16.mxu0 0
        %8564 = vmatpush1.bf16.msra.mxu0 0
        %8565 = vmatprep.subr.bf16.mxu0 0
        %8566 = vmatpush1.bf16.msra.mxu0 0
        %8567 = vmatprep.subr.bf16.mxu0 0
        %8568 = vmatpush1.bf16.msra.mxu0 0
        %8569 = vmatprep.subr.bf16.mxu0 0
        %8570 = vmatpush1.bf16.msra.mxu0 0
        %8571 = vmatprep.subr.bf16.mxu0 0
        %8572 = vmatpush1.bf16.msra.mxu0 0
        %8573 = vmatprep.subr.bf16.mxu0 0
        %8574 = vmatpush1.bf16.msra.mxu0 0
        %8575 = vmatprep.mubr.bf16.mxu0 %v8418
        %8576 = vmatmul.mubr.bf16.gmra.mrb[0].mxu0 %v8414
        %v8577 = vpop.f32.mrb[0].mxu0
        %v8578 = vadd.f32 0.0, %v8577
        %v8579 = vpop.f32.mrb[0].mxu0
        %v8580 = vadd.f32 0.0, %v8579
        %v8581 = vpop.f32.mrb[0].mxu0
        %v8582 = vpop.f32.mrb[0].mxu0
        %8583 = vdwg.mxu0
        %v8584 = vmax.f32 %v8455, %v8537
        %v8585 = vmax.f32 %v8457, %v8539
        %v8586 = vmax.f32 %v8496, %v8578
        %v8587 = vmax.f32 %v8498, %v8580
        %v8589 = vunpack.c.l.b16 %v8410
        %v8590 = vunpack.c.h.b16 %v8410
        %v8591 = vpack.c.b16 %v8589, %v8589
        %v8592 = vpack.c.b16 %v8590, %v8590
        %v8595 = vsel %vm684, %v8592, 0
        %8597 = vmatprep.subr.bf16.mxu0 %v605
        %8598 = vmatpush1.bf16.msra.mxu0 %v604
        %8599 = vmatprep.subr.bf16.mxu0 %v609
        %8600 = vmatpush1.bf16.msra.mxu0 %v608
        %8601 = vmatprep.subr.bf16.mxu0 %v613
        %8602 = vmatpush1.bf16.msra.mxu0 %v612
        %8603 = vmatprep.subr.bf16.mxu0 %v617
        %8604 = vmatpush1.bf16.msra.mxu0 %v616
        %8605 = vmatprep.subr.bf16.mxu0 %v621
        %8606 = vmatpush1.bf16.msra.mxu0 %v620
        %8607 = vmatprep.subr.bf16.mxu0 %v625
        %8608 = vmatpush1.bf16.msra.mxu0 %v624
        %8609 = vmatprep.subr.bf16.mxu0 %v629
        %8610 = vmatpush1.bf16.msra.mxu0 %v628
        %8611 = vmatprep.subr.bf16.mxu0 %v633
        %8612 = vmatpush1.bf16.msra.mxu0 %v632
        %8613 = vmatprep.subr.bf16.mxu0 %v637
        %8614 = vmatpush1.bf16.msra.mxu0 %v636
        %8615 = vmatprep.subr.bf16.mxu0 %v641
        %8616 = vmatpush1.bf16.msra.mxu0 %v640
        %8617 = vmatprep.subr.bf16.mxu0 0
        %8618 = vmatpush1.bf16.msra.mxu0 0
        %8619 = vmatprep.subr.bf16.mxu0 0
        %8620 = vmatpush1.bf16.msra.mxu0 0
        %8621 = vmatprep.subr.bf16.mxu0 0
        %8622 = vmatpush1.bf16.msra.mxu0 0
        %8623 = vmatprep.subr.bf16.mxu0 0
        %8624 = vmatpush1.bf16.msra.mxu0 0
        %8625 = vmatprep.subr.bf16.mxu0 0
        %8626 = vmatpush1.bf16.msra.mxu0 0
        %8627 = vmatprep.subr.bf16.mxu0 0
        %8628 = vmatpush1.bf16.msra.mxu0 0
        %8629 = vmatprep.mubr.bf16.mxu0 %v8595
        %8630 = vmatmul.mubr.bf16.gmra.mrb[0].mxu0 %v8591
        %v8631 = vpop.f32.mrb[0].mxu0
        %v8632 = vadd.f32 0.0, %v8631
        %v8633 = vpop.f32.mrb[0].mxu0
        %v8634 = vadd.f32 0.0, %v8633
        %v8635 = vpop.f32.mrb[0].mxu0
        %v8636 = vpop.f32.mrb[0].mxu0
        %8637 = vdwg.mxu0
        %8638 = vmatprep.subr.bf16.mxu0 %v607
        %8639 = vmatpush1.bf16.msra.mxu0 %v606
        %8640 = vmatprep.subr.bf16.mxu0 %v611
        %8641 = vmatpush1.bf16.msra.mxu0 %v610
        %8642 = vmatprep.subr.bf16.mxu0 %v615
        %8643 = vmatpush1.bf16.msra.mxu0 %v614
        %8644 = vmatprep.subr.bf16.mxu0 %v619
        %8645 = vmatpush1.bf16.msra.mxu0 %v618
        %8646 = vmatprep.subr.bf16.mxu0 %v623
        %8647 = vmatpush1.bf16.msra.mxu0 %v622
        %8648 = vmatprep.subr.bf16.mxu0 %v627
        %8649 = vmatpush1.bf16.msra.mxu0 %v626
        %8650 = vmatprep.subr.bf16.mxu0 %v631
        %8651 = vmatpush1.bf16.msra.mxu0 %v630
        %8652 = vmatprep.subr.bf16.mxu0 %v635
        %8653 = vmatpush1.bf16.msra.mxu0 %v634
        %8654 = vmatprep.subr.bf16.mxu0 %v639
        %8655 = vmatpush1.bf16.msra.mxu0 %v638
        %8656 = vmatprep.subr.bf16.mxu0 %v643
        %8657 = vmatpush1.bf16.msra.mxu0 %v642
        %8658 = vmatprep.subr.bf16.mxu0 0
        %8659 = vmatpush1.bf16.msra.mxu0 0
        %8660 = vmatprep.subr.bf16.mxu0 0
        %8661 = vmatpush1.bf16.msra.mxu0 0
        %8662 = vmatprep.subr.bf16.mxu0 0
        %8663 = vmatpush1.bf16.msra.mxu0 0
        %8664 = vmatprep.subr.bf16.mxu0 0
        %8665 = vmatpush1.bf16.msra.mxu0 0
        %8666 = vmatprep.subr.bf16.mxu0 0
        %8667 = vmatpush1.bf16.msra.mxu0 0
        %8668 = vmatprep.subr.bf16.mxu0 0
        %8669 = vmatpush1.bf16.msra.mxu0 0
        %8670 = vmatprep.mubr.bf16.mxu0 %v8595
        %8671 = vmatmul.mubr.bf16.gmra.mrb[0].mxu0 %v8591
        %v8672 = vpop.f32.mrb[0].mxu0
        %v8673 = vadd.f32 0.0, %v8672
        %v8674 = vpop.f32.mrb[0].mxu0
        %v8675 = vadd.f32 0.0, %v8674
        %v8676 = vpop.f32.mrb[0].mxu0
        %v8677 = vpop.f32.mrb[0].mxu0
        %8678 = vdwg.mxu0
        %8679 = vmatprep.subr.bf16.mxu0 %v891
        %8680 = vmatpush1.bf16.msra.mxu0 %v890
        %8681 = vmatprep.subr.bf16.mxu0 %v895
        %8682 = vmatpush1.bf16.msra.mxu0 %v894
        %8683 = vmatprep.subr.bf16.mxu0 %v899
        %8684 = vmatpush1.bf16.msra.mxu0 %v898
        %8685 = vmatprep.subr.bf16.mxu0 %v903
        %8686 = vmatpush1.bf16.msra.mxu0 %v902
        %8687 = vmatprep.subr.bf16.mxu0 %v907
        %8688 = vmatpush1.bf16.msra.mxu0 %v906
        %8689 = vmatprep.subr.bf16.mxu0 %v911
        %8690 = vmatpush1.bf16.msra.mxu0 %v910
        %8691 = vmatprep.subr.bf16.mxu0 %v915
        %8692 = vmatpush1.bf16.msra.mxu0 %v914
        %8693 = vmatprep.subr.bf16.mxu0 %v919
        %8694 = vmatpush1.bf16.msra.mxu0 %v918
        %8695 = vmatprep.subr.bf16.mxu0 %v923
        %8696 = vmatpush1.bf16.msra.mxu0 %v922
        %8697 = vmatprep.subr.bf16.mxu0 %v927
        %8698 = vmatpush1.bf16.msra.mxu0 %v926
        %8699 = vmatprep.subr.bf16.mxu0 0
        %8700 = vmatpush1.bf16.msra.mxu0 0
        %8701 = vmatprep.subr.bf16.mxu0 0
        %8702 = vmatpush1.bf16.msra.mxu0 0
        %8703 = vmatprep.subr.bf16.mxu0 0
        %8704 = vmatpush1.bf16.msra.mxu0 0
        %8705 = vmatprep.subr.bf16.mxu0 0
        %8706 = vmatpush1.bf16.msra.mxu0 0
        %8707 = vmatprep.subr.bf16.mxu0 0
        %8708 = vmatpush1.bf16.msra.mxu0 0
        %8709 = vmatprep.subr.bf16.mxu0 0
        %8710 = vmatpush1.bf16.msra.mxu0 0
        %8711 = vmatprep.mubr.bf16.mxu0 %v8595
        %8712 = vmatmul.mubr.bf16.gmra.mrb[0].mxu0 %v8591
        %v8713 = vpop.f32.mrb[0].mxu0
        %v8714 = vadd.f32 0.0, %v8713
        %v8715 = vpop.f32.mrb[0].mxu0
        %v8716 = vadd.f32 0.0, %v8715
        %v8717 = vpop.f32.mrb[0].mxu0
        %v8718 = vpop.f32.mrb[0].mxu0
        %8719 = vdwg.mxu0
        %8720 = vmatprep.subr.bf16.mxu0 %v893
        %8721 = vmatpush1.bf16.msra.mxu0 %v892
        %8722 = vmatprep.subr.bf16.mxu0 %v897
        %8723 = vmatpush1.bf16.msra.mxu0 %v896
        %8724 = vmatprep.subr.bf16.mxu0 %v901
        %8725 = vmatpush1.bf16.msra.mxu0 %v900
        %8726 = vmatprep.subr.bf16.mxu0 %v905
        %8727 = vmatpush1.bf16.msra.mxu0 %v904
        %8728 = vmatprep.subr.bf16.mxu0 %v909
        %8729 = vmatpush1.bf16.msra.mxu0 %v908
        %8730 = vmatprep.subr.bf16.mxu0 %v913
        %8731 = vmatpush1.bf16.msra.mxu0 %v912
        %8732 = vmatprep.subr.bf16.mxu0 %v917
        %8733 = vmatpush1.bf16.msra.mxu0 %v916
        %8734 = vmatprep.subr.bf16.mxu0 %v921
        %8735 = vmatpush1.bf16.msra.mxu0 %v920
        %8736 = vmatprep.subr.bf16.mxu0 %v925
        %8737 = vmatpush1.bf16.msra.mxu0 %v924
        %8738 = vmatprep.subr.bf16.mxu0 %v929
        %8739 = vmatpush1.bf16.msra.mxu0 %v928
        %8740 = vmatprep.subr.bf16.mxu0 0
        %8741 = vmatpush1.bf16.msra.mxu0 0
        %8742 = vmatprep.subr.bf16.mxu0 0
        %8743 = vmatpush1.bf16.msra.mxu0 0
        %8744 = vmatprep.subr.bf16.mxu0 0
        %8745 = vmatpush1.bf16.msra.mxu0 0
        %8746 = vmatprep.subr.bf16.mxu0 0
        %8747 = vmatpush1.bf16.msra.mxu0 0
        %8748 = vmatprep.subr.bf16.mxu0 0
        %8749 = vmatpush1.bf16.msra.mxu0 0
        %8750 = vmatprep.subr.bf16.mxu0 0
        %8751 = vmatpush1.bf16.msra.mxu0 0
        %8752 = vmatprep.mubr.bf16.mxu0 %v8595
        %8753 = vmatmul.mubr.bf16.gmra.mrb[0].mxu0 %v8591
        %v8754 = vpop.f32.mrb[0].mxu0
        %v8755 = vadd.f32 0.0, %v8754
        %v8756 = vpop.f32.mrb[0].mxu0
        %v8757 = vadd.f32 0.0, %v8756
        %v8758 = vpop.f32.mrb[0].mxu0
        %v8759 = vpop.f32.mrb[0].mxu0
        %8760 = vdwg.mxu0
        %v8761 = vmax.f32 %v8632, %v8714
        %v8762 = vmax.f32 %v8634, %v8716
        %v8763 = vmax.f32 %v8673, %v8755
        %v8764 = vmax.f32 %v8675, %v8757
        %v8765 = vmax.f32 %v8584, %v8761
        %v8766 = vmax.f32 %v8585, %v8762
        %v8767 = vmax.f32 %v8586, %v8763
        %v8768 = vmax.f32 %v8587, %v8764
        %v8769 = vadd.f32 %v8765, %v1241
        %v8770 = vadd.f32 %v8766, %v1245
        %v8771 = vadd.f32 %v8767, %v1249
        %v8772 = vadd.f32 %v8768, %v1253
        %v8773 = vmax.f32 %v8769, 0.0
        %v8774 = vmax.f32 %v8770, 0.0
        %v8775 = vmax.f32 %v8771, 0.0
        %v8776 = vmax.f32 %v8772, 0.0
        %v8777 = vpack.c.bf16 %v8773, %v8773
        %v8778 = vpack.c.bf16 %v8774, %v8774
        %v8779 = vpack.c.bf16 %v8775, %v8775
        %v8780 = vpack.c.bf16 %v8776, %v8776
        %s8781 = scalar_lea.vmem %s4, 2464
        %v8782 = vld [vmem:[%s8781] sm:$0xf]
        %v8783 = vld [vmem:[%s8781 + $0x4] sm:$0xf]
        %v8784 = vld [vmem:[%s8781 + $0x8] sm:$0xf]
        %v8785 = vld [vmem:[%s8781 + $0xc] sm:$0xf]
        %v8786 = vld [vmem:[%s8781 + $0x10] sm:$0xf]
        %v8787 = vld [vmem:[%s8781 + $0x14] sm:$0xf]
        %v8788 = vld [vmem:[%s8781 + $0x18] sm:$0xf]
        %v8789 = vld [vmem:[%s8781 + $0x1c] sm:$0xf]
        %v8790 = vld [vmem:[%s8781 + $0x20] sm:$0xf]
        %v8791 = vld [vmem:[%s8781 + $0x24] sm:$0xf]
        %v8792 = vld [vmem:[%s8781 + $0x28] sm:$0xf]
        %v8793 = vld [vmem:[%s8781 + $0x2c] sm:$0xf]
        %v8794 = vld [vmem:[%s8781 + $0x30] sm:$0xf]
        %v8795 = vld [vmem:[%s8781 + $0x34] sm:$0xf]
        %v8796 = vld [vmem:[%s8781 + $0x38] sm:$0xf]
        %v8797 = vld [vmem:[%s8781 + $0x3c] sm:$0xf]
        %v8798 = vld [vmem:[%s8781 + $0x40] sm:$0xf]
        %v8799 = vld [vmem:[%s8781 + $0x44] sm:$0xf]
        %v8800 = vld [vmem:[%s8781 + $0x48] sm:$0xf]
        %v8801 = vld [vmem:[%s8781 + $0x4c] sm:$0xf]
        %v8802 = vld [vmem:[%s8781 + $0x50] sm:$0xf]
        %v8803 = vld [vmem:[%s8781 + $0x54] sm:$0xf]
        %v8804 = vld [vmem:[%s8781 + $0x58] sm:$0xf]
        %v8805 = vld [vmem:[%s8781 + $0x5c] sm:$0xf]
        %v8806 = vld [vmem:[%s8781 + $0x60] sm:$0xf]
        %v8807 = vld [vmem:[%s8781 + $0x64] sm:$0xf]
        %v8808 = vld [vmem:[%s8781 + $0x68] sm:$0xf]
        %v8809 = vld [vmem:[%s8781 + $0x6c] sm:$0xf]
        %v8810 = vld [vmem:[%s8781 + $0x70] sm:$0xf]
        %v8811 = vld [vmem:[%s8781 + $0x74] sm:$0xf]
        %v8812 = vld [vmem:[%s8781 + $0x78] sm:$0xf]
        %v8813 = vld [vmem:[%s8781 + $0x7c] sm:$0xf]
        %v8814 = vld [vmem:[%s8781 + $0x80] sm:$0xf]
        %v8815 = vld [vmem:[%s8781 + $0x84] sm:$0xf]
        %v8816 = vld [vmem:[%s8781 + $0x88] sm:$0xf]
        %v8817 = vld [vmem:[%s8781 + $0x8c] sm:$0xf]
        %v8818 = vld [vmem:[%s8781 + $0x90] sm:$0xf]
        %v8819 = vld [vmem:[%s8781 + $0x94] sm:$0xf]
        %v8820 = vld [vmem:[%s8781 + $0x98] sm:$0xf]
        %v8821 = vld [vmem:[%s8781 + $0x9c] sm:$0xf]
        %v8822 = vld [vmem:[%s8781 + $0xa0] sm:$0xf]
        %v8823 = vld [vmem:[%s8781 + $0xa4] sm:$0xf]
        %v8824 = vld [vmem:[%s8781 + $0xa8] sm:$0xf]
        %v8825 = vld [vmem:[%s8781 + $0xac] sm:$0xf]
        %v8826 = vld [vmem:[%s8781 + $0xb0] sm:$0xf]
        %v8827 = vld [vmem:[%s8781 + $0xb4] sm:$0xf]
        %v8828 = vld [vmem:[%s8781 + $0xb8] sm:$0xf]
        %v8829 = vld [vmem:[%s8781 + $0xbc] sm:$0xf]
        %v8830 = vld [vmem:[%s8781 + $0xc0] sm:$0xf]
        %v8831 = vld [vmem:[%s8781 + $0xc4] sm:$0xf]
        %v8832 = vld [vmem:[%s8781 + $0xc8] sm:$0xf]
        %v8833 = vld [vmem:[%s8781 + $0xcc] sm:$0xf]
        %v8834 = vld [vmem:[%s8781 + $0xd0] sm:$0xf]
        %v8835 = vld [vmem:[%s8781 + $0xd4] sm:$0xf]
        %v8836 = vld [vmem:[%s8781 + $0xd8] sm:$0xf]
        %v8837 = vld [vmem:[%s8781 + $0xdc] sm:$0xf]
        %v8894 = vunpack.c.l.b16 %v8782
        %v8895 = vunpack.c.l.b16 %v8783
        %v8896 = vunpack.c.l.b16 %v8784
        %v8897 = vunpack.c.l.b16 %v8785
        %v8898 = vunpack.c.l.b16 %v8786
        %v8899 = vunpack.c.l.b16 %v8787
        %v8900 = vunpack.c.l.b16 %v8788
        %v8901 = vunpack.c.l.b16 %v8789
        %v8902 = vunpack.c.l.b16 %v8790
        %v8903 = vunpack.c.l.b16 %v8791
        %v8904 = vunpack.c.l.b16 %v8792
        %v8905 = vunpack.c.l.b16 %v8793
        %v8906 = vunpack.c.l.b16 %v8794
        %v8907 = vunpack.c.l.b16 %v8795
        %v8908 = vunpack.c.l.b16 %v8796
        %v8909 = vunpack.c.l.b16 %v8797
        %v8910 = vunpack.c.l.b16 %v8798
        %v8911 = vunpack.c.l.b16 %v8799
        %v8912 = vunpack.c.l.b16 %v8800
        %v8913 = vunpack.c.l.b16 %v8801
        %v8914 = vunpack.c.l.b16 %v8802
        %v8915 = vunpack.c.l.b16 %v8803
        %v8916 = vunpack.c.l.b16 %v8804
        %v8917 = vunpack.c.l.b16 %v8805
        %v8918 = vunpack.c.l.b16 %v8806
        %v8919 = vunpack.c.l.b16 %v8807
        %v8920 = vunpack.c.l.b16 %v8808
        %v8921 = vunpack.c.l.b16 %v8809
        %v8922 = vunpack.c.l.b16 %v8810
        %v8923 = vunpack.c.l.b16 %v8811
        %v8924 = vunpack.c.l.b16 %v8812
        %v8925 = vunpack.c.l.b16 %v8813
        %v8926 = vunpack.c.l.b16 %v8814
        %v8927 = vunpack.c.l.b16 %v8815
        %v8928 = vunpack.c.l.b16 %v8816
        %v8929 = vunpack.c.l.b16 %v8817
        %v8930 = vunpack.c.l.b16 %v8818
        %v8931 = vunpack.c.l.b16 %v8819
        %v8932 = vunpack.c.l.b16 %v8820
        %v8933 = vunpack.c.l.b16 %v8821
        %v8934 = vunpack.c.l.b16 %v8822
        %v8935 = vunpack.c.l.b16 %v8823
        %v8936 = vunpack.c.l.b16 %v8824
        %v8937 = vunpack.c.l.b16 %v8825
        %v8938 = vunpack.c.l.b16 %v8826
        %v8939 = vunpack.c.l.b16 %v8827
        %v8940 = vunpack.c.l.b16 %v8828
        %v8941 = vunpack.c.l.b16 %v8829
        %v8942 = vunpack.c.l.b16 %v8830
        %v8943 = vunpack.c.l.b16 %v8831
        %v8944 = vunpack.c.l.b16 %v8832
        %v8945 = vunpack.c.l.b16 %v8833
        %v8946 = vunpack.c.l.b16 %v8834
        %v8947 = vunpack.c.l.b16 %v8835
        %v8948 = vunpack.c.l.b16 %v8836
        %v8949 = vunpack.c.l.b16 %v8837
        %v8950 = vpack.c.b16 %v8895, %v8894
        %v8951 = vpack.c.b16 %v8897, %v8896
        %v8952 = vpack.c.b16 %v8899, %v8898
        %v8953 = vpack.c.b16 %v8901, %v8900
        %v8954 = vpack.c.b16 %v8903, %v8902
        %v8955 = vpack.c.b16 %v8905, %v8904
        %v8956 = vpack.c.b16 %v8907, %v8906
        %v8957 = vpack.c.b16 %v8909, %v8908
        %v8958 = vpack.c.b16 %v8911, %v8910
        %v8959 = vpack.c.b16 %v8913, %v8912
        %v8960 = vpack.c.b16 %v8915, %v8914
        %v8961 = vpack.c.b16 %v8917, %v8916
        %v8962 = vpack.c.b16 %v8919, %v8918
        %v8963 = vpack.c.b16 %v8921, %v8920
        %v8964 = vpack.c.b16 %v8923, %v8922
        %v8965 = vpack.c.b16 %v8925, %v8924
        %v8966 = vpack.c.b16 %v8927, %v8926
        %v8967 = vpack.c.b16 %v8929, %v8928
        %v8968 = vpack.c.b16 %v8931, %v8930
        %v8969 = vpack.c.b16 %v8933, %v8932
        %v8970 = vpack.c.b16 %v8935, %v8934
        %v8971 = vpack.c.b16 %v8937, %v8936
        %v8972 = vpack.c.b16 %v8939, %v8938
        %v8973 = vpack.c.b16 %v8941, %v8940
        %v8974 = vpack.c.b16 %v8943, %v8942
        %v8975 = vpack.c.b16 %v8945, %v8944
        %v8976 = vpack.c.b16 %v8947, %v8946
        %v8977 = vpack.c.b16 %v8949, %v8948
        %v9007 = vsel %vm1925, %v8780, 0
        %9009 = vmatprep.subr.bf16.mxu0 0
        %9010 = vmatpush1.bf16.msra.mxu0 %v8950
        %9011 = vmatprep.subr.bf16.mxu0 0
        %9012 = vmatpush1.bf16.msra.mxu0 %v8951
        %9013 = vmatprep.subr.bf16.mxu0 0
        %9014 = vmatpush1.bf16.msra.mxu0 %v8952
        %9015 = vmatprep.subr.bf16.mxu0 0
        %9016 = vmatpush1.bf16.msra.mxu0 %v8953
        %9017 = vmatprep.subr.bf16.mxu0 0
        %9018 = vmatpush1.bf16.msra.mxu0 %v8954
        %9019 = vmatprep.subr.bf16.mxu0 0
        %9020 = vmatpush1.bf16.msra.mxu0 %v8955
        %9021 = vmatprep.subr.bf16.mxu0 0
        %9022 = vmatpush1.bf16.msra.mxu0 %v8956
        %9023 = vmatprep.subr.bf16.mxu0 0
        %9024 = vmatpush1.bf16.msra.mxu0 %v8957
        %9025 = vmatprep.subr.bf16.mxu0 0
        %9026 = vmatpush1.bf16.msra.mxu0 %v8958
        %9027 = vmatprep.subr.bf16.mxu0 0
        %9028 = vmatpush1.bf16.msra.mxu0 %v8959
        %9029 = vmatprep.subr.bf16.mxu0 0
        %9030 = vmatpush1.bf16.msra.mxu0 %v8960
        %9031 = vmatprep.subr.bf16.mxu0 0
        %9032 = vmatpush1.bf16.msra.mxu0 %v8961
        %9033 = vmatprep.subr.bf16.mxu0 0
        %9034 = vmatpush1.bf16.msra.mxu0 %v8962
        %9035 = vmatprep.subr.bf16.mxu0 0
        %9036 = vmatpush1.bf16.msra.mxu0 %v8963
        %9037 = vmatprep.subr.bf16.mxu0 0
        %9038 = vmatpush1.bf16.msra.mxu0 %v8964
        %9039 = vmatprep.subr.bf16.mxu0 0
        %9040 = vmatpush1.bf16.msra.mxu0 %v8965
        %9041 = vmatprep.mubr.bf16.mxu0 %v8778
        %9042 = vmatmul.mubr.bf16.gmra.mrb[0].mxu0 %v8777
        %v9043 = vpop.f32.mrb[0].mxu0
        %v9044 = vadd.f32 0.0, %v9043
        %v9045 = vpop.f32.mrb[0].mxu0
        %v9046 = vpop.f32.mrb[0].mxu0
        %v9047 = vpop.f32.mrb[0].mxu0
        %9048 = vdwg.mxu0
        %9049 = vmatprep.subr.bf16.mxu0 0
        %9050 = vmatpush1.bf16.msra.mxu0 %v8966
        %9051 = vmatprep.subr.bf16.mxu0 0
        %9052 = vmatpush1.bf16.msra.mxu0 %v8967
        %9053 = vmatprep.subr.bf16.mxu0 0
        %9054 = vmatpush1.bf16.msra.mxu0 %v8968
        %9055 = vmatprep.subr.bf16.mxu0 0
        %9056 = vmatpush1.bf16.msra.mxu0 %v8969
        %9057 = vmatprep.subr.bf16.mxu0 0
        %9058 = vmatpush1.bf16.msra.mxu0 %v8970
        %9059 = vmatprep.subr.bf16.mxu0 0
        %9060 = vmatpush1.bf16.msra.mxu0 %v8971
        %9061 = vmatprep.subr.bf16.mxu0 0
        %9062 = vmatpush1.bf16.msra.mxu0 %v8972
        %9063 = vmatprep.subr.bf16.mxu0 0
        %9064 = vmatpush1.bf16.msra.mxu0 %v8973
        %9065 = vmatprep.subr.bf16.mxu0 0
        %9066 = vmatpush1.bf16.msra.mxu0 %v8974
        %9067 = vmatprep.subr.bf16.mxu0 0
        %9068 = vmatpush1.bf16.msra.mxu0 %v8975
        %9069 = vmatprep.subr.bf16.mxu0 0
        %9070 = vmatpush1.bf16.msra.mxu0 %v8976
        %9071 = vmatprep.subr.bf16.mxu0 0
        %9072 = vmatpush1.bf16.msra.mxu0 %v8977
        %9073 = vmatprep.subr.bf16.mxu0 0
        %9074 = vmatpush1.bf16.msra.mxu0 0
        %9075 = vmatprep.subr.bf16.mxu0 0
        %9076 = vmatpush1.bf16.msra.mxu0 0
        %9077 = vmatprep.subr.bf16.mxu0 0
        %9078 = vmatpush1.bf16.msra.mxu0 0
        %9079 = vmatprep.subr.bf16.mxu0 0
        %9080 = vmatpush1.bf16.msra.mxu0 0
        %9081 = vmatprep.mubr.bf16.mxu0 %v9007
        %9082 = vmatmul.mubr.bf16.gmra.mrb[0].mxu0 %v8779
        %v9083 = vpop.f32.mrb[0].mxu0
        %v9084 = vadd.f32 %v9044, %v9083
        %v9085 = vpop.f32.mrb[0].mxu0
        %v9086 = vpop.f32.mrb[0].mxu0
        %v9087 = vpop.f32.mrb[0].mxu0
        %9088 = vdwg.mxu0
        %v9089 = vadd.f32 %v8406, %v9084
        %s9090 = scalar_lea.vmem %s363, 96 [#allocation2]
        %v9091 = vld [vmem:[%s9090] sm:$0xff]
        %s9092 = scalar_lea.vmem %s363, 208 [#allocation2]
        %v9093 = vld [vmem:[%s9092] sm:$0xff]
        %v9095 = vunpack.c.l.b16 %v9091
        %v9096 = vunpack.c.h.b16 %v9091
        %v9097 = vpack.c.b16 %v9095, %v9095
        %v9098 = vpack.c.b16 %v9096, %v9096
        %v9101 = vsel %vm684, %v9098, 0
        %9103 = vmatprep.subr.bf16.mxu0 %v605
        %9104 = vmatpush1.bf16.msra.mxu0 %v604
        %9105 = vmatprep.subr.bf16.mxu0 %v609
        %9106 = vmatpush1.bf16.msra.mxu0 %v608
        %9107 = vmatprep.subr.bf16.mxu0 %v613
        %9108 = vmatpush1.bf16.msra.mxu0 %v612
        %9109 = vmatprep.subr.bf16.mxu0 %v617
        %9110 = vmatpush1.bf16.msra.mxu0 %v616
        %9111 = vmatprep.subr.bf16.mxu0 %v621
        %9112 = vmatpush1.bf16.msra.mxu0 %v620
        %9113 = vmatprep.subr.bf16.mxu0 %v625
        %9114 = vmatpush1.bf16.msra.mxu0 %v624
        %9115 = vmatprep.subr.bf16.mxu0 %v629
        %9116 = vmatpush1.bf16.msra.mxu0 %v628
        %9117 = vmatprep.subr.bf16.mxu0 %v633
        %9118 = vmatpush1.bf16.msra.mxu0 %v632
        %9119 = vmatprep.subr.bf16.mxu0 %v637
        %9120 = vmatpush1.bf16.msra.mxu0 %v636
        %9121 = vmatprep.subr.bf16.mxu0 %v641
        %9122 = vmatpush1.bf16.msra.mxu0 %v640
        %9123 = vmatprep.subr.bf16.mxu0 0
        %9124 = vmatpush1.bf16.msra.mxu0 0
        %9125 = vmatprep.subr.bf16.mxu0 0
        %9126 = vmatpush1.bf16.msra.mxu0 0
        %9127 = vmatprep.subr.bf16.mxu0 0
        %9128 = vmatpush1.bf16.msra.mxu0 0
        %9129 = vmatprep.subr.bf16.mxu0 0
        %9130 = vmatpush1.bf16.msra.mxu0 0
        %9131 = vmatprep.subr.bf16.mxu0 0
        %9132 = vmatpush1.bf16.msra.mxu0 0
        %9133 = vmatprep.subr.bf16.mxu0 0
        %9134 = vmatpush1.bf16.msra.mxu0 0
        %9135 = vmatprep.mubr.bf16.mxu0 %v9101
        %9136 = vmatmul.mubr.bf16.gmra.mrb[0].mxu0 %v9097
        %v9137 = vpop.f32.mrb[0].mxu0
        %v9138 = vadd.f32 0.0, %v9137
        %v9139 = vpop.f32.mrb[0].mxu0
        %v9140 = vadd.f32 0.0, %v9139
        %v9141 = vpop.f32.mrb[0].mxu0
        %v9142 = vpop.f32.mrb[0].mxu0
        %9143 = vdwg.mxu0
        %9144 = vmatprep.subr.bf16.mxu0 %v607
        %9145 = vmatpush1.bf16.msra.mxu0 %v606
        %9146 = vmatprep.subr.bf16.mxu0 %v611
        %9147 = vmatpush1.bf16.msra.mxu0 %v610
        %9148 = vmatprep.subr.bf16.mxu0 %v615
        %9149 = vmatpush1.bf16.msra.mxu0 %v614
        %9150 = vmatprep.subr.bf16.mxu0 %v619
        %9151 = vmatpush1.bf16.msra.mxu0 %v618
        %9152 = vmatprep.subr.bf16.mxu0 %v623
        %9153 = vmatpush1.bf16.msra.mxu0 %v622
        %9154 = vmatprep.subr.bf16.mxu0 %v627
        %9155 = vmatpush1.bf16.msra.mxu0 %v626
        %9156 = vmatprep.subr.bf16.mxu0 %v631
        %9157 = vmatpush1.bf16.msra.mxu0 %v630
        %9158 = vmatprep.subr.bf16.mxu0 %v635
        %9159 = vmatpush1.bf16.msra.mxu0 %v634
        %9160 = vmatprep.subr.bf16.mxu0 %v639
        %9161 = vmatpush1.bf16.msra.mxu0 %v638
        %9162 = vmatprep.subr.bf16.mxu0 %v643
        %9163 = vmatpush1.bf16.msra.mxu0 %v642
        %9164 = vmatprep.subr.bf16.mxu0 0
        %9165 = vmatpush1.bf16.msra.mxu0 0
        %9166 = vmatprep.subr.bf16.mxu0 0
        %9167 = vmatpush1.bf16.msra.mxu0 0
        %9168 = vmatprep.subr.bf16.mxu0 0
        %9169 = vmatpush1.bf16.msra.mxu0 0
        %9170 = vmatprep.subr.bf16.mxu0 0
        %9171 = vmatpush1.bf16.msra.mxu0 0
        %9172 = vmatprep.subr.bf16.mxu0 0
        %9173 = vmatpush1.bf16.msra.mxu0 0
        %9174 = vmatprep.subr.bf16.mxu0 0
        %9175 = vmatpush1.bf16.msra.mxu0 0
        %9176 = vmatprep.mubr.bf16.mxu0 %v9101
        %9177 = vmatmul.mubr.bf16.gmra.mrb[0].mxu0 %v9097
        %v9178 = vpop.f32.mrb[0].mxu0
        %v9179 = vadd.f32 0.0, %v9178
        %v9180 = vpop.f32.mrb[0].mxu0
        %v9181 = vadd.f32 0.0, %v9180
        %v9182 = vpop.f32.mrb[0].mxu0
        %v9183 = vpop.f32.mrb[0].mxu0
        %9184 = vdwg.mxu0
        %9185 = vmatprep.subr.bf16.mxu0 %v891
        %9186 = vmatpush1.bf16.msra.mxu0 %v890
        %9187 = vmatprep.subr.bf16.mxu0 %v895
        %9188 = vmatpush1.bf16.msra.mxu0 %v894
        %9189 = vmatprep.subr.bf16.mxu0 %v899
        %9190 = vmatpush1.bf16.msra.mxu0 %v898
        %9191 = vmatprep.subr.bf16.mxu0 %v903
        %9192 = vmatpush1.bf16.msra.mxu0 %v902
        %9193 = vmatprep.subr.bf16.mxu0 %v907
        %9194 = vmatpush1.bf16.msra.mxu0 %v906
        %9195 = vmatprep.subr.bf16.mxu0 %v911
        %9196 = vmatpush1.bf16.msra.mxu0 %v910
        %9197 = vmatprep.subr.bf16.mxu0 %v915
        %9198 = vmatpush1.bf16.msra.mxu0 %v914
        %9199 = vmatprep.subr.bf16.mxu0 %v919
        %9200 = vmatpush1.bf16.msra.mxu0 %v918
        %9201 = vmatprep.subr.bf16.mxu0 %v923
        %9202 = vmatpush1.bf16.msra.mxu0 %v922
        %9203 = vmatprep.subr.bf16.mxu0 %v927
        %9204 = vmatpush1.bf16.msra.mxu0 %v926
        %9205 = vmatprep.subr.bf16.mxu0 0
        %9206 = vmatpush1.bf16.msra.mxu0 0
        %9207 = vmatprep.subr.bf16.mxu0 0
        %9208 = vmatpush1.bf16.msra.mxu0 0
        %9209 = vmatprep.subr.bf16.mxu0 0
        %9210 = vmatpush1.bf16.msra.mxu0 0
        %9211 = vmatprep.subr.bf16.mxu0 0
        %9212 = vmatpush1.bf16.msra.mxu0 0
        %9213 = vmatprep.subr.bf16.mxu0 0
        %9214 = vmatpush1.bf16.msra.mxu0 0
        %9215 = vmatprep.subr.bf16.mxu0 0
        %9216 = vmatpush1.bf16.msra.mxu0 0
        %9217 = vmatprep.mubr.bf16.mxu0 %v9101
        %9218 = vmatmul.mubr.bf16.gmra.mrb[0].mxu0 %v9097
        %v9219 = vpop.f32.mrb[0].mxu0
        %v9220 = vadd.f32 0.0, %v9219
        %v9221 = vpop.f32.mrb[0].mxu0
        %v9222 = vadd.f32 0.0, %v9221
        %v9223 = vpop.f32.mrb[0].mxu0
        %v9224 = vpop.f32.mrb[0].mxu0
        %9225 = vdwg.mxu0
        %9226 = vmatprep.subr.bf16.mxu0 %v893
        %9227 = vmatpush1.bf16.msra.mxu0 %v892
        %9228 = vmatprep.subr.bf16.mxu0 %v897
        %9229 = vmatpush1.bf16.msra.mxu0 %v896
        %9230 = vmatprep.subr.bf16.mxu0 %v901
        %9231 = vmatpush1.bf16.msra.mxu0 %v900
        %9232 = vmatprep.subr.bf16.mxu0 %v905
        %9233 = vmatpush1.bf16.msra.mxu0 %v904
        %9234 = vmatprep.subr.bf16.mxu0 %v909
        %9235 = vmatpush1.bf16.msra.mxu0 %v908
        %9236 = vmatprep.subr.bf16.mxu0 %v913
        %9237 = vmatpush1.bf16.msra.mxu0 %v912
        %9238 = vmatprep.subr.bf16.mxu0 %v917
        %9239 = vmatpush1.bf16.msra.mxu0 %v916
        %9240 = vmatprep.subr.bf16.mxu0 %v921
        %9241 = vmatpush1.bf16.msra.mxu0 %v920
        %9242 = vmatprep.subr.bf16.mxu0 %v925
        %9243 = vmatpush1.bf16.msra.mxu0 %v924
        %9244 = vmatprep.subr.bf16.mxu0 %v929
        %9245 = vmatpush1.bf16.msra.mxu0 %v928
        %9246 = vmatprep.subr.bf16.mxu0 0
        %9247 = vmatpush1.bf16.msra.mxu0 0
        %9248 = vmatprep.subr.bf16.mxu0 0
        %9249 = vmatpush1.bf16.msra.mxu0 0
        %9250 = vmatprep.subr.bf16.mxu0 0
        %9251 = vmatpush1.bf16.msra.mxu0 0
        %9252 = vmatprep.subr.bf16.mxu0 0
        %9253 = vmatpush1.bf16.msra.mxu0 0
        %9254 = vmatprep.subr.bf16.mxu0 0
        %9255 = vmatpush1.bf16.msra.mxu0 0
        %9256 = vmatprep.subr.bf16.mxu0 0
        %9257 = vmatpush1.bf16.msra.mxu0 0
        %9258 = vmatprep.mubr.bf16.mxu0 %v9101
        %9259 = vmatmul.mubr.bf16.gmra.mrb[0].mxu0 %v9097
        %v9260 = vpop.f32.mrb[0].mxu0
        %v9261 = vadd.f32 0.0, %v9260
        %v9262 = vpop.f32.mrb[0].mxu0
        %v9263 = vadd.f32 0.0, %v9262
        %v9264 = vpop.f32.mrb[0].mxu0
        %v9265 = vpop.f32.mrb[0].mxu0
        %9266 = vdwg.mxu0
        %v9267 = vmax.f32 %v9138, %v9220
        %v9268 = vmax.f32 %v9140, %v9222
        %v9269 = vmax.f32 %v9179, %v9261
        %v9270 = vmax.f32 %v9181, %v9263
        %v9272 = vunpack.c.l.b16 %v9093
        %v9273 = vunpack.c.h.b16 %v9093
        %v9274 = vpack.c.b16 %v9272, %v9272
        %v9275 = vpack.c.b16 %v9273, %v9273
        %v9278 = vsel %vm684, %v9275, 0
        %9280 = vmatprep.subr.bf16.mxu0 %v605
        %9281 = vmatpush1.bf16.msra.mxu0 %v604
        %9282 = vmatprep.subr.bf16.mxu0 %v609
        %9283 = vmatpush1.bf16.msra.mxu0 %v608
        %9284 = vmatprep.subr.bf16.mxu0 %v613
        %9285 = vmatpush1.bf16.msra.mxu0 %v612
        %9286 = vmatprep.subr.bf16.mxu0 %v617
        %9287 = vmatpush1.bf16.msra.mxu0 %v616
        %9288 = vmatprep.subr.bf16.mxu0 %v621
        %9289 = vmatpush1.bf16.msra.mxu0 %v620
        %9290 = vmatprep.subr.bf16.mxu0 %v625
        %9291 = vmatpush1.bf16.msra.mxu0 %v624
        %9292 = vmatprep.subr.bf16.mxu0 %v629
        %9293 = vmatpush1.bf16.msra.mxu0 %v628
        %9294 = vmatprep.subr.bf16.mxu0 %v633
        %9295 = vmatpush1.bf16.msra.mxu0 %v632
        %9296 = vmatprep.subr.bf16.mxu0 %v637
        %9297 = vmatpush1.bf16.msra.mxu0 %v636
        %9298 = vmatprep.subr.bf16.mxu0 %v641
        %9299 = vmatpush1.bf16.msra.mxu0 %v640
        %9300 = vmatprep.subr.bf16.mxu0 0
        %9301 = vmatpush1.bf16.msra.mxu0 0
        %9302 = vmatprep.subr.bf16.mxu0 0
        %9303 = vmatpush1.bf16.msra.mxu0 0
        %9304 = vmatprep.subr.bf16.mxu0 0
        %9305 = vmatpush1.bf16.msra.mxu0 0
        %9306 = vmatprep.subr.bf16.mxu0 0
        %9307 = vmatpush1.bf16.msra.mxu0 0
        %9308 = vmatprep.subr.bf16.mxu0 0
        %9309 = vmatpush1.bf16.msra.mxu0 0
        %9310 = vmatprep.subr.bf16.mxu0 0
        %9311 = vmatpush1.bf16.msra.mxu0 0
        %9312 = vmatprep.mubr.bf16.mxu0 %v9278
        %9313 = vmatmul.mubr.bf16.gmra.mrb[0].mxu0 %v9274
        %v9314 = vpop.f32.mrb[0].mxu0
        %v9315 = vadd.f32 0.0, %v9314
        %v9316 = vpop.f32.mrb[0].mxu0
        %v9317 = vadd.f32 0.0, %v9316
        %v9318 = vpop.f32.mrb[0].mxu0
        %v9319 = vpop.f32.mrb[0].mxu0
        %9320 = vdwg.mxu0
        %9321 = vmatprep.subr.bf16.mxu0 %v607
        %9322 = vmatpush1.bf16.msra.mxu0 %v606
        %9323 = vmatprep.subr.bf16.mxu0 %v611
        %9324 = vmatpush1.bf16.msra.mxu0 %v610
        %9325 = vmatprep.subr.bf16.mxu0 %v615
        %9326 = vmatpush1.bf16.msra.mxu0 %v614
        %9327 = vmatprep.subr.bf16.mxu0 %v619
        %9328 = vmatpush1.bf16.msra.mxu0 %v618
        %9329 = vmatprep.subr.bf16.mxu0 %v623
        %9330 = vmatpush1.bf16.msra.mxu0 %v622
        %9331 = vmatprep.subr.bf16.mxu0 %v627
        %9332 = vmatpush1.bf16.msra.mxu0 %v626
        %9333 = vmatprep.subr.bf16.mxu0 %v631
        %9334 = vmatpush1.bf16.msra.mxu0 %v630
        %9335 = vmatprep.subr.bf16.mxu0 %v635
        %9336 = vmatpush1.bf16.msra.mxu0 %v634
        %9337 = vmatprep.subr.bf16.mxu0 %v639
        %9338 = vmatpush1.bf16.msra.mxu0 %v638
        %9339 = vmatprep.subr.bf16.mxu0 %v643
        %9340 = vmatpush1.bf16.msra.mxu0 %v642
        %9341 = vmatprep.subr.bf16.mxu0 0
        %9342 = vmatpush1.bf16.msra.mxu0 0
        %9343 = vmatprep.subr.bf16.mxu0 0
        %9344 = vmatpush1.bf16.msra.mxu0 0
        %9345 = vmatprep.subr.bf16.mxu0 0
        %9346 = vmatpush1.bf16.msra.mxu0 0
        %9347 = vmatprep.subr.bf16.mxu0 0
        %9348 = vmatpush1.bf16.msra.mxu0 0
        %9349 = vmatprep.subr.bf16.mxu0 0
        %9350 = vmatpush1.bf16.msra.mxu0 0
        %9351 = vmatprep.subr.bf16.mxu0 0
        %9352 = vmatpush1.bf16.msra.mxu0 0
        %9353 = vmatprep.mubr.bf16.mxu0 %v9278
        %9354 = vmatmul.mubr.bf16.gmra.mrb[0].mxu0 %v9274
        %v9355 = vpop.f32.mrb[0].mxu0
        %v9356 = vadd.f32 0.0, %v9355
        %v9357 = vpop.f32.mrb[0].mxu0
        %v9358 = vadd.f32 0.0, %v9357
        %v9359 = vpop.f32.mrb[0].mxu0
        %v9360 = vpop.f32.mrb[0].mxu0
        %9361 = vdwg.mxu0
        %9362 = vmatprep.subr.bf16.mxu0 %v891
        %9363 = vmatpush1.bf16.msra.mxu0 %v890
        %9364 = vmatprep.subr.bf16.mxu0 %v895
        %9365 = vmatpush1.bf16.msra.mxu0 %v894
        %9366 = vmatprep.subr.bf16.mxu0 %v899
        %9367 = vmatpush1.bf16.msra.mxu0 %v898
        %9368 = vmatprep.subr.bf16.mxu0 %v903
        %9369 = vmatpush1.bf16.msra.mxu0 %v902
        %9370 = vmatprep.subr.bf16.mxu0 %v907
        %9371 = vmatpush1.bf16.msra.mxu0 %v906
        %9372 = vmatprep.subr.bf16.mxu0 %v911
        %9373 = vmatpush1.bf16.msra.mxu0 %v910
        %9374 = vmatprep.subr.bf16.mxu0 %v915
        %9375 = vmatpush1.bf16.msra.mxu0 %v914
        %9376 = vmatprep.subr.bf16.mxu0 %v919
        %9377 = vmatpush1.bf16.msra.mxu0 %v918
        %9378 = vmatprep.subr.bf16.mxu0 %v923
        %9379 = vmatpush1.bf16.msra.mxu0 %v922
        %9380 = vmatprep.subr.bf16.mxu0 %v927
        %9381 = vmatpush1.bf16.msra.mxu0 %v926
        %9382 = vmatprep.subr.bf16.mxu0 0
        %9383 = vmatpush1.bf16.msra.mxu0 0
        %9384 = vmatprep.subr.bf16.mxu0 0
        %9385 = vmatpush1.bf16.msra.mxu0 0
        %9386 = vmatprep.subr.bf16.mxu0 0
        %9387 = vmatpush1.bf16.msra.mxu0 0
        %9388 = vmatprep.subr.bf16.mxu0 0
        %9389 = vmatpush1.bf16.msra.mxu0 0
        %9390 = vmatprep.subr.bf16.mxu0 0
        %9391 = vmatpush1.bf16.msra.mxu0 0
        %9392 = vmatprep.subr.bf16.mxu0 0
        %9393 = vmatpush1.bf16.msra.mxu0 0
        %9394 = vmatprep.mubr.bf16.mxu0 %v9278
        %9395 = vmatmul.mubr.bf16.gmra.mrb[0].mxu0 %v9274
        %v9396 = vpop.f32.mrb[0].mxu0
        %v9397 = vadd.f32 0.0, %v9396
        %v9398 = vpop.f32.mrb[0].mxu0
        %v9399 = vadd.f32 0.0, %v9398
        %v9400 = vpop.f32.mrb[0].mxu0
        %v9401 = vpop.f32.mrb[0].mxu0
        %9402 = vdwg.mxu0
        %9403 = vmatprep.subr.bf16.mxu0 %v893
        %9404 = vmatpush1.bf16.msra.mxu0 %v892
        %9405 = vmatprep.subr.bf16.mxu0 %v897
        %9406 = vmatpush1.bf16.msra.mxu0 %v896
        %9407 = vmatprep.subr.bf16.mxu0 %v901
        %9408 = vmatpush1.bf16.msra.mxu0 %v900
        %9409 = vmatprep.subr.bf16.mxu0 %v905
        %9410 = vmatpush1.bf16.msra.mxu0 %v904
        %9411 = vmatprep.subr.bf16.mxu0 %v909
        %9412 = vmatpush1.bf16.msra.mxu0 %v908
        %9413 = vmatprep.subr.bf16.mxu0 %v913
        %9414 = vmatpush1.bf16.msra.mxu0 %v912
        %9415 = vmatprep.subr.bf16.mxu0 %v917
        %9416 = vmatpush1.bf16.msra.mxu0 %v916
        %9417 = vmatprep.subr.bf16.mxu0 %v921
        %9418 = vmatpush1.bf16.msra.mxu0 %v920
        %9419 = vmatprep.subr.bf16.mxu0 %v925
        %9420 = vmatpush1.bf16.msra.mxu0 %v924
        %9421 = vmatprep.subr.bf16.mxu0 %v929
        %9422 = vmatpush1.bf16.msra.mxu0 %v928
        %9423 = vmatprep.subr.bf16.mxu0 0
        %9424 = vmatpush1.bf16.msra.mxu0 0
        %9425 = vmatprep.subr.bf16.mxu0 0
        %9426 = vmatpush1.bf16.msra.mxu0 0
        %9427 = vmatprep.subr.bf16.mxu0 0
        %9428 = vmatpush1.bf16.msra.mxu0 0
        %9429 = vmatprep.subr.bf16.mxu0 0
        %9430 = vmatpush1.bf16.msra.mxu0 0
        %9431 = vmatprep.subr.bf16.mxu0 0
        %9432 = vmatpush1.bf16.msra.mxu0 0
        %9433 = vmatprep.subr.bf16.mxu0 0
        %9434 = vmatpush1.bf16.msra.mxu0 0
        %9435 = vmatprep.mubr.bf16.mxu0 %v9278
        %9436 = vmatmul.mubr.bf16.gmra.mrb[0].mxu0 %v9274
        %v9437 = vpop.f32.mrb[0].mxu0
        %v9438 = vadd.f32 0.0, %v9437
        %v9439 = vpop.f32.mrb[0].mxu0
        %v9440 = vadd.f32 0.0, %v9439
        %v9441 = vpop.f32.mrb[0].mxu0
        %v9442 = vpop.f32.mrb[0].mxu0
        %9443 = vdwg.mxu0
        %v9444 = vmax.f32 %v9315, %v9397
        %v9445 = vmax.f32 %v9317, %v9399
        %v9446 = vmax.f32 %v9356, %v9438
        %v9447 = vmax.f32 %v9358, %v9440
        %v9448 = vmax.f32 %v9267, %v9444
        %v9449 = vmax.f32 %v9268, %v9445
        %v9450 = vmax.f32 %v9269, %v9446
        %v9451 = vmax.f32 %v9270, %v9447
        %v9452 = vadd.f32 %v9448, %v1241
        %v9453 = vadd.f32 %v9449, %v1245
        %v9454 = vadd.f32 %v9450, %v1249
        %v9455 = vadd.f32 %v9451, %v1253
        %v9456 = vmax.f32 %v9452, 0.0
        %v9457 = vmax.f32 %v9453, 0.0
        %v9458 = vmax.f32 %v9454, 0.0
        %v9459 = vmax.f32 %v9455, 0.0
        %v9460 = vpack.c.bf16 %v9456, %v9456
        %v9461 = vpack.c.bf16 %v9457, %v9457
        %v9462 = vpack.c.bf16 %v9458, %v9458
        %v9463 = vpack.c.bf16 %v9459, %v9459
        %s9464 = scalar_lea.vmem %s4, 2688
        %v9465 = vld [vmem:[%s9464] sm:$0xf]
        %v9466 = vld [vmem:[%s9464 + $0x4] sm:$0xf]
        %v9467 = vld [vmem:[%s9464 + $0x8] sm:$0xf]
        %v9468 = vld [vmem:[%s9464 + $0xc] sm:$0xf]
        %v9469 = vld [vmem:[%s9464 + $0x10] sm:$0xf]
        %v9470 = vld [vmem:[%s9464 + $0x14] sm:$0xf]
        %v9471 = vld [vmem:[%s9464 + $0x18] sm:$0xf]
        %v9472 = vld [vmem:[%s9464 + $0x1c] sm:$0xf]
        %v9473 = vld [vmem:[%s9464 + $0x20] sm:$0xf]
        %v9474 = vld [vmem:[%s9464 + $0x24] sm:$0xf]
        %v9475 = vld [vmem:[%s9464 + $0x28] sm:$0xf]
        %v9476 = vld [vmem:[%s9464 + $0x2c] sm:$0xf]
        %v9477 = vld [vmem:[%s9464 + $0x30] sm:$0xf]
        %v9478 = vld [vmem:[%s9464 + $0x34] sm:$0xf]
        %v9479 = vld [vmem:[%s9464 + $0x38] sm:$0xf]
        %v9480 = vld [vmem:[%s9464 + $0x3c] sm:$0xf]
        %v9481 = vld [vmem:[%s9464 + $0x40] sm:$0xf]
        %v9482 = vld [vmem:[%s9464 + $0x44] sm:$0xf]
        %v9483 = vld [vmem:[%s9464 + $0x48] sm:$0xf]
        %v9484 = vld [vmem:[%s9464 + $0x4c] sm:$0xf]
        %v9485 = vld [vmem:[%s9464 + $0x50] sm:$0xf]
        %v9486 = vld [vmem:[%s9464 + $0x54] sm:$0xf]
        %v9487 = vld [vmem:[%s9464 + $0x58] sm:$0xf]
        %v9488 = vld [vmem:[%s9464 + $0x5c] sm:$0xf]
        %v9489 = vld [vmem:[%s9464 + $0x60] sm:$0xf]
        %v9490 = vld [vmem:[%s9464 + $0x64] sm:$0xf]
        %v9491 = vld [vmem:[%s9464 + $0x68] sm:$0xf]
        %v9492 = vld [vmem:[%s9464 + $0x6c] sm:$0xf]
        %v9493 = vld [vmem:[%s9464 + $0x70] sm:$0xf]
        %v9494 = vld [vmem:[%s9464 + $0x74] sm:$0xf]
        %v9495 = vld [vmem:[%s9464 + $0x78] sm:$0xf]
        %v9496 = vld [vmem:[%s9464 + $0x7c] sm:$0xf]
        %v9497 = vld [vmem:[%s9464 + $0x80] sm:$0xf]
        %v9498 = vld [vmem:[%s9464 + $0x84] sm:$0xf]
        %v9499 = vld [vmem:[%s9464 + $0x88] sm:$0xf]
        %v9500 = vld [vmem:[%s9464 + $0x8c] sm:$0xf]
        %v9501 = vld [vmem:[%s9464 + $0x90] sm:$0xf]
        %v9502 = vld [vmem:[%s9464 + $0x94] sm:$0xf]
        %v9503 = vld [vmem:[%s9464 + $0x98] sm:$0xf]
        %v9504 = vld [vmem:[%s9464 + $0x9c] sm:$0xf]
        %v9505 = vld [vmem:[%s9464 + $0xa0] sm:$0xf]
        %v9506 = vld [vmem:[%s9464 + $0xa4] sm:$0xf]
        %v9507 = vld [vmem:[%s9464 + $0xa8] sm:$0xf]
        %v9508 = vld [vmem:[%s9464 + $0xac] sm:$0xf]
        %v9509 = vld [vmem:[%s9464 + $0xb0] sm:$0xf]
        %v9510 = vld [vmem:[%s9464 + $0xb4] sm:$0xf]
        %v9511 = vld [vmem:[%s9464 + $0xb8] sm:$0xf]
        %v9512 = vld [vmem:[%s9464 + $0xbc] sm:$0xf]
        %v9513 = vld [vmem:[%s9464 + $0xc0] sm:$0xf]
        %v9514 = vld [vmem:[%s9464 + $0xc4] sm:$0xf]
        %v9515 = vld [vmem:[%s9464 + $0xc8] sm:$0xf]
        %v9516 = vld [vmem:[%s9464 + $0xcc] sm:$0xf]
        %v9517 = vld [vmem:[%s9464 + $0xd0] sm:$0xf]
        %v9518 = vld [vmem:[%s9464 + $0xd4] sm:$0xf]
        %v9519 = vld [vmem:[%s9464 + $0xd8] sm:$0xf]
        %v9520 = vld [vmem:[%s9464 + $0xdc] sm:$0xf]
        %v9577 = vunpack.c.l.b16 %v9465
        %v9578 = vunpack.c.l.b16 %v9466
        %v9579 = vunpack.c.l.b16 %v9467
        %v9580 = vunpack.c.l.b16 %v9468
        %v9581 = vunpack.c.l.b16 %v9469
        %v9582 = vunpack.c.l.b16 %v9470
        %v9583 = vunpack.c.l.b16 %v9471
        %v9584 = vunpack.c.l.b16 %v9472
        %v9585 = vunpack.c.l.b16 %v9473
        %v9586 = vunpack.c.l.b16 %v9474
        %v9587 = vunpack.c.l.b16 %v9475
        %v9588 = vunpack.c.l.b16 %v9476
        %v9589 = vunpack.c.l.b16 %v9477
        %v9590 = vunpack.c.l.b16 %v9478
        %v9591 = vunpack.c.l.b16 %v9479
        %v9592 = vunpack.c.l.b16 %v9480
        %v9593 = vunpack.c.l.b16 %v9481
        %v9594 = vunpack.c.l.b16 %v9482
        %v9595 = vunpack.c.l.b16 %v9483
        %v9596 = vunpack.c.l.b16 %v9484
        %v9597 = vunpack.c.l.b16 %v9485
        %v9598 = vunpack.c.l.b16 %v9486
        %v9599 = vunpack.c.l.b16 %v9487
        %v9600 = vunpack.c.l.b16 %v9488
        %v9601 = vunpack.c.l.b16 %v9489
        %v9602 = vunpack.c.l.b16 %v9490
        %v9603 = vunpack.c.l.b16 %v9491
        %v9604 = vunpack.c.l.b16 %v9492
        %v9605 = vunpack.c.l.b16 %v9493
        %v9606 = vunpack.c.l.b16 %v9494
        %v9607 = vunpack.c.l.b16 %v9495
        %v9608 = vunpack.c.l.b16 %v9496
        %v9609 = vunpack.c.l.b16 %v9497
        %v9610 = vunpack.c.l.b16 %v9498
        %v9611 = vunpack.c.l.b16 %v9499
        %v9612 = vunpack.c.l.b16 %v9500
        %v9613 = vunpack.c.l.b16 %v9501
        %v9614 = vunpack.c.l.b16 %v9502
        %v9615 = vunpack.c.l.b16 %v9503
        %v9616 = vunpack.c.l.b16 %v9504
        %v9617 = vunpack.c.l.b16 %v9505
        %v9618 = vunpack.c.l.b16 %v9506
        %v9619 = vunpack.c.l.b16 %v9507
        %v9620 = vunpack.c.l.b16 %v9508
        %v9621 = vunpack.c.l.b16 %v9509
        %v9622 = vunpack.c.l.b16 %v9510
        %v9623 = vunpack.c.l.b16 %v9511
        %v9624 = vunpack.c.l.b16 %v9512
        %v9625 = vunpack.c.l.b16 %v9513
        %v9626 = vunpack.c.l.b16 %v9514
        %v9627 = vunpack.c.l.b16 %v9515
        %v9628 = vunpack.c.l.b16 %v9516
        %v9629 = vunpack.c.l.b16 %v9517
        %v9630 = vunpack.c.l.b16 %v9518
        %v9631 = vunpack.c.l.b16 %v9519
        %v9632 = vunpack.c.l.b16 %v9520
        %v9633 = vpack.c.b16 %v9578, %v9577
        %v9634 = vpack.c.b16 %v9580, %v9579
        %v9635 = vpack.c.b16 %v9582, %v9581
        %v9636 = vpack.c.b16 %v9584, %v9583
        %v9637 = vpack.c.b16 %v9586, %v9585
        %v9638 = vpack.c.b16 %v9588, %v9587
        %v9639 = vpack.c.b16 %v9590, %v9589
        %v9640 = vpack.c.b16 %v9592, %v9591
        %v9641 = vpack.c.b16 %v9594, %v9593
        %v9642 = vpack.c.b16 %v9596, %v9595
        %v9643 = vpack.c.b16 %v9598, %v9597
        %v9644 = vpack.c.b16 %v9600, %v9599
        %v9645 = vpack.c.b16 %v9602, %v9601
        %v9646 = vpack.c.b16 %v9604, %v9603
        %v9647 = vpack.c.b16 %v9606, %v9605
        %v9648 = vpack.c.b16 %v9608, %v9607
        %v9649 = vpack.c.b16 %v9610, %v9609
        %v9650 = vpack.c.b16 %v9612, %v9611
        %v9651 = vpack.c.b16 %v9614, %v9613
        %v9652 = vpack.c.b16 %v9616, %v9615
        %v9653 = vpack.c.b16 %v9618, %v9617
        %v9654 = vpack.c.b16 %v9620, %v9619
        %v9655 = vpack.c.b16 %v9622, %v9621
        %v9656 = vpack.c.b16 %v9624, %v9623
        %v9657 = vpack.c.b16 %v9626, %v9625
        %v9658 = vpack.c.b16 %v9628, %v9627
        %v9659 = vpack.c.b16 %v9630, %v9629
        %v9660 = vpack.c.b16 %v9632, %v9631
        %v9690 = vsel %vm1925, %v9463, 0
        %9692 = vmatprep.subr.bf16.mxu0 0
        %9693 = vmatpush1.bf16.msra.mxu0 %v9633
        %9694 = vmatprep.subr.bf16.mxu0 0
        %9695 = vmatpush1.bf16.msra.mxu0 %v9634
        %9696 = vmatprep.subr.bf16.mxu0 0
        %9697 = vmatpush1.bf16.msra.mxu0 %v9635
        %9698 = vmatprep.subr.bf16.mxu0 0
        %9699 = vmatpush1.bf16.msra.mxu0 %v9636
        %9700 = vmatprep.subr.bf16.mxu0 0
        %9701 = vmatpush1.bf16.msra.mxu0 %v9637
        %9702 = vmatprep.subr.bf16.mxu0 0
        %9703 = vmatpush1.bf16.msra.mxu0 %v9638
        %9704 = vmatprep.subr.bf16.mxu0 0
        %9705 = vmatpush1.bf16.msra.mxu0 %v9639
        %9706 = vmatprep.subr.bf16.mxu0 0
        %9707 = vmatpush1.bf16.msra.mxu0 %v9640
        %9708 = vmatprep.subr.bf16.mxu0 0
        %9709 = vmatpush1.bf16.msra.mxu0 %v9641
        %9710 = vmatprep.subr.bf16.mxu0 0
        %9711 = vmatpush1.bf16.msra.mxu0 %v9642
        %9712 = vmatprep.subr.bf16.mxu0 0
        %9713 = vmatpush1.bf16.msra.mxu0 %v9643
        %9714 = vmatprep.subr.bf16.mxu0 0
        %9715 = vmatpush1.bf16.msra.mxu0 %v9644
        %9716 = vmatprep.subr.bf16.mxu0 0
        %9717 = vmatpush1.bf16.msra.mxu0 %v9645
        %9718 = vmatprep.subr.bf16.mxu0 0
        %9719 = vmatpush1.bf16.msra.mxu0 %v9646
        %9720 = vmatprep.subr.bf16.mxu0 0
        %9721 = vmatpush1.bf16.msra.mxu0 %v9647
        %9722 = vmatprep.subr.bf16.mxu0 0
        %9723 = vmatpush1.bf16.msra.mxu0 %v9648
        %9724 = vmatprep.mubr.bf16.mxu0 %v9461
        %9725 = vmatmul.mubr.bf16.gmra.mrb[0].mxu0 %v9460
        %v9726 = vpop.f32.mrb[0].mxu0
        %v9727 = vadd.f32 0.0, %v9726
        %v9728 = vpop.f32.mrb[0].mxu0
        %v9729 = vpop.f32.mrb[0].mxu0
        %v9730 = vpop.f32.mrb[0].mxu0
        %9731 = vdwg.mxu0
        %9732 = vmatprep.subr.bf16.mxu0 0
        %9733 = vmatpush1.bf16.msra.mxu0 %v9649
        %9734 = vmatprep.subr.bf16.mxu0 0
        %9735 = vmatpush1.bf16.msra.mxu0 %v9650
        %9736 = vmatprep.subr.bf16.mxu0 0
        %9737 = vmatpush1.bf16.msra.mxu0 %v9651
        %9738 = vmatprep.subr.bf16.mxu0 0
        %9739 = vmatpush1.bf16.msra.mxu0 %v9652
        %9740 = vmatprep.subr.bf16.mxu0 0
        %9741 = vmatpush1.bf16.msra.mxu0 %v9653
        %9742 = vmatprep.subr.bf16.mxu0 0
        %9743 = vmatpush1.bf16.msra.mxu0 %v9654
        %9744 = vmatprep.subr.bf16.mxu0 0
        %9745 = vmatpush1.bf16.msra.mxu0 %v9655
        %9746 = vmatprep.subr.bf16.mxu0 0
        %9747 = vmatpush1.bf16.msra.mxu0 %v9656
        %9748 = vmatprep.subr.bf16.mxu0 0
        %9749 = vmatpush1.bf16.msra.mxu0 %v9657
        %9750 = vmatprep.subr.bf16.mxu0 0
        %9751 = vmatpush1.bf16.msra.mxu0 %v9658
        %9752 = vmatprep.subr.bf16.mxu0 0
        %9753 = vmatpush1.bf16.msra.mxu0 %v9659
        %9754 = vmatprep.subr.bf16.mxu0 0
        %9755 = vmatpush1.bf16.msra.mxu0 %v9660
        %9756 = vmatprep.subr.bf16.mxu0 0
        %9757 = vmatpush1.bf16.msra.mxu0 0
        %9758 = vmatprep.subr.bf16.mxu0 0
        %9759 = vmatpush1.bf16.msra.mxu0 0
        %9760 = vmatprep.subr.bf16.mxu0 0
        %9761 = vmatpush1.bf16.msra.mxu0 0
        %9762 = vmatprep.subr.bf16.mxu0 0
        %9763 = vmatpush1.bf16.msra.mxu0 0
        %9764 = vmatprep.mubr.bf16.mxu0 %v9690
        %9765 = vmatmul.mubr.bf16.gmra.mrb[0].mxu0 %v9462
        %v9766 = vpop.f32.mrb[0].mxu0
        %v9767 = vadd.f32 %v9727, %v9766
        %v9768 = vpop.f32.mrb[0].mxu0
        %v9769 = vpop.f32.mrb[0].mxu0
        %v9770 = vpop.f32.mrb[0].mxu0
        %9771 = vdwg.mxu0
        %v9772 = vadd.f32 %v9089, %v9767
        %s9773 = scalar_lea.vmem %s363, 104 [#allocation2]
        %v9774 = vld [vmem:[%s9773] sm:$0xff]
        %s9775 = scalar_lea.vmem %s363, 216 [#allocation2]
        %v9776 = vld [vmem:[%s9775] sm:$0xff]
        %v9778 = vunpack.c.l.b16 %v9774
        %v9779 = vunpack.c.h.b16 %v9774
        %v9780 = vpack.c.b16 %v9778, %v9778
        %v9781 = vpack.c.b16 %v9779, %v9779
        %v9784 = vsel %vm684, %v9781, 0
        %9786 = vmatprep.subr.bf16.mxu0 %v605
        %9787 = vmatpush1.bf16.msra.mxu0 %v604
        %9788 = vmatprep.subr.bf16.mxu0 %v609
        %9789 = vmatpush1.bf16.msra.mxu0 %v608
        %9790 = vmatprep.subr.bf16.mxu0 %v613
        %9791 = vmatpush1.bf16.msra.mxu0 %v612
        %9792 = vmatprep.subr.bf16.mxu0 %v617
        %9793 = vmatpush1.bf16.msra.mxu0 %v616
        %9794 = vmatprep.subr.bf16.mxu0 %v621
        %9795 = vmatpush1.bf16.msra.mxu0 %v620
        %9796 = vmatprep.subr.bf16.mxu0 %v625
        %9797 = vmatpush1.bf16.msra.mxu0 %v624
        %9798 = vmatprep.subr.bf16.mxu0 %v629
        %9799 = vmatpush1.bf16.msra.mxu0 %v628
        %9800 = vmatprep.subr.bf16.mxu0 %v633
        %9801 = vmatpush1.bf16.msra.mxu0 %v632
        %9802 = vmatprep.subr.bf16.mxu0 %v637
        %9803 = vmatpush1.bf16.msra.mxu0 %v636
        %9804 = vmatprep.subr.bf16.mxu0 %v641
        %9805 = vmatpush1.bf16.msra.mxu0 %v640
        %9806 = vmatprep.subr.bf16.mxu0 0
        %9807 = vmatpush1.bf16.msra.mxu0 0
        %9808 = vmatprep.subr.bf16.mxu0 0
        %9809 = vmatpush1.bf16.msra.mxu0 0
        %9810 = vmatprep.subr.bf16.mxu0 0
        %9811 = vmatpush1.bf16.msra.mxu0 0
        %9812 = vmatprep.subr.bf16.mxu0 0
        %9813 = vmatpush1.bf16.msra.mxu0 0
        %9814 = vmatprep.subr.bf16.mxu0 0
        %9815 = vmatpush1.bf16.msra.mxu0 0
        %9816 = vmatprep.subr.bf16.mxu0 0
        %9817 = vmatpush1.bf16.msra.mxu0 0
        %9818 = vmatprep.mubr.bf16.mxu0 %v9784
        %9819 = vmatmul.mubr.bf16.gmra.mrb[0].mxu0 %v9780
        %v9820 = vpop.f32.mrb[0].mxu0
        %v9821 = vadd.f32 0.0, %v9820
        %v9822 = vpop.f32.mrb[0].mxu0
        %v9823 = vadd.f32 0.0, %v9822
        %v9824 = vpop.f32.mrb[0].mxu0
        %v9825 = vpop.f32.mrb[0].mxu0
        %9826 = vdwg.mxu0
        %9827 = vmatprep.subr.bf16.mxu0 %v607
        %9828 = vmatpush1.bf16.msra.mxu0 %v606
        %9829 = vmatprep.subr.bf16.mxu0 %v611
        %9830 = vmatpush1.bf16.msra.mxu0 %v610
        %9831 = vmatprep.subr.bf16.mxu0 %v615
        %9832 = vmatpush1.bf16.msra.mxu0 %v614
        %9833 = vmatprep.subr.bf16.mxu0 %v619
        %9834 = vmatpush1.bf16.msra.mxu0 %v618
        %9835 = vmatprep.subr.bf16.mxu0 %v623
        %9836 = vmatpush1.bf16.msra.mxu0 %v622
        %9837 = vmatprep.subr.bf16.mxu0 %v627
        %9838 = vmatpush1.bf16.msra.mxu0 %v626
        %9839 = vmatprep.subr.bf16.mxu0 %v631
        %9840 = vmatpush1.bf16.msra.mxu0 %v630
        %9841 = vmatprep.subr.bf16.mxu0 %v635
        %9842 = vmatpush1.bf16.msra.mxu0 %v634
        %9843 = vmatprep.subr.bf16.mxu0 %v639
        %9844 = vmatpush1.bf16.msra.mxu0 %v638
        %9845 = vmatprep.subr.bf16.mxu0 %v643
        %9846 = vmatpush1.bf16.msra.mxu0 %v642
        %9847 = vmatprep.subr.bf16.mxu0 0
        %9848 = vmatpush1.bf16.msra.mxu0 0
        %9849 = vmatprep.subr.bf16.mxu0 0
        %9850 = vmatpush1.bf16.msra.mxu0 0
        %9851 = vmatprep.subr.bf16.mxu0 0
        %9852 = vmatpush1.bf16.msra.mxu0 0
        %9853 = vmatprep.subr.bf16.mxu0 0
        %9854 = vmatpush1.bf16.msra.mxu0 0
        %9855 = vmatprep.subr.bf16.mxu0 0
        %9856 = vmatpush1.bf16.msra.mxu0 0
        %9857 = vmatprep.subr.bf16.mxu0 0
        %9858 = vmatpush1.bf16.msra.mxu0 0
        %9859 = vmatprep.mubr.bf16.mxu0 %v9784
        %9860 = vmatmul.mubr.bf16.gmra.mrb[0].mxu0 %v9780
        %v9861 = vpop.f32.mrb[0].mxu0
        %v9862 = vadd.f32 0.0, %v9861
        %v9863 = vpop.f32.mrb[0].mxu0
        %v9864 = vadd.f32 0.0, %v9863
        %v9865 = vpop.f32.mrb[0].mxu0
        %v9866 = vpop.f32.mrb[0].mxu0
        %9867 = vdwg.mxu0
        %9868 = vmatprep.subr.bf16.mxu0 %v891
        %9869 = vmatpush1.bf16.msra.mxu0 %v890
        %9870 = vmatprep.subr.bf16.mxu0 %v895
        %9871 = vmatpush1.bf16.msra.mxu0 %v894
        %9872 = vmatprep.subr.bf16.mxu0 %v899
        %9873 = vmatpush1.bf16.msra.mxu0 %v898
        %9874 = vmatprep.subr.bf16.mxu0 %v903
        %9875 = vmatpush1.bf16.msra.mxu0 %v902
        %9876 = vmatprep.subr.bf16.mxu0 %v907
        %9877 = vmatpush1.bf16.msra.mxu0 %v906
        %9878 = vmatprep.subr.bf16.mxu0 %v911
        %9879 = vmatpush1.bf16.msra.mxu0 %v910
        %9880 = vmatprep.subr.bf16.mxu0 %v915
        %9881 = vmatpush1.bf16.msra.mxu0 %v914
        %9882 = vmatprep.subr.bf16.mxu0 %v919
        %9883 = vmatpush1.bf16.msra.mxu0 %v918
        %9884 = vmatprep.subr.bf16.mxu0 %v923
        %9885 = vmatpush1.bf16.msra.mxu0 %v922
        %9886 = vmatprep.subr.bf16.mxu0 %v927
        %9887 = vmatpush1.bf16.msra.mxu0 %v926
        %9888 = vmatprep.subr.bf16.mxu0 0
        %9889 = vmatpush1.bf16.msra.mxu0 0
        %9890 = vmatprep.subr.bf16.mxu0 0
        %9891 = vmatpush1.bf16.msra.mxu0 0
        %9892 = vmatprep.subr.bf16.mxu0 0
        %9893 = vmatpush1.bf16.msra.mxu0 0
        %9894 = vmatprep.subr.bf16.mxu0 0
        %9895 = vmatpush1.bf16.msra.mxu0 0
        %9896 = vmatprep.subr.bf16.mxu0 0
        %9897 = vmatpush1.bf16.msra.mxu0 0
        %9898 = vmatprep.subr.bf16.mxu0 0
        %9899 = vmatpush1.bf16.msra.mxu0 0
        %9900 = vmatprep.mubr.bf16.mxu0 %v9784
        %9901 = vmatmul.mubr.bf16.gmra.mrb[0].mxu0 %v9780
        %v9902 = vpop.f32.mrb[0].mxu0
        %v9903 = vadd.f32 0.0, %v9902
        %v9904 = vpop.f32.mrb[0].mxu0
        %v9905 = vadd.f32 0.0, %v9904
        %v9906 = vpop.f32.mrb[0].mxu0
        %v9907 = vpop.f32.mrb[0].mxu0
        %9908 = vdwg.mxu0
        %9909 = vmatprep.subr.bf16.mxu0 %v893
        %9910 = vmatpush1.bf16.msra.mxu0 %v892
        %9911 = vmatprep.subr.bf16.mxu0 %v897
        %9912 = vmatpush1.bf16.msra.mxu0 %v896
        %9913 = vmatprep.subr.bf16.mxu0 %v901
        %9914 = vmatpush1.bf16.msra.mxu0 %v900
        %9915 = vmatprep.subr.bf16.mxu0 %v905
        %9916 = vmatpush1.bf16.msra.mxu0 %v904
        %9917 = vmatprep.subr.bf16.mxu0 %v909
        %9918 = vmatpush1.bf16.msra.mxu0 %v908
        %9919 = vmatprep.subr.bf16.mxu0 %v913
        %9920 = vmatpush1.bf16.msra.mxu0 %v912
        %9921 = vmatprep.subr.bf16.mxu0 %v917
        %9922 = vmatpush1.bf16.msra.mxu0 %v916
        %9923 = vmatprep.subr.bf16.mxu0 %v921
        %9924 = vmatpush1.bf16.msra.mxu0 %v920
        %9925 = vmatprep.subr.bf16.mxu0 %v925
        %9926 = vmatpush1.bf16.msra.mxu0 %v924
        %9927 = vmatprep.subr.bf16.mxu0 %v929
        %9928 = vmatpush1.bf16.msra.mxu0 %v928
        %9929 = vmatprep.subr.bf16.mxu0 0
        %9930 = vmatpush1.bf16.msra.mxu0 0
        %9931 = vmatprep.subr.bf16.mxu0 0
        %9932 = vmatpush1.bf16.msra.mxu0 0
        %9933 = vmatprep.subr.bf16.mxu0 0
        %9934 = vmatpush1.bf16.msra.mxu0 0
        %9935 = vmatprep.subr.bf16.mxu0 0
        %9936 = vmatpush1.bf16.msra.mxu0 0
        %9937 = vmatprep.subr.bf16.mxu0 0
        %9938 = vmatpush1.bf16.msra.mxu0 0
        %9939 = vmatprep.subr.bf16.mxu0 0
        %9940 = vmatpush1.bf16.msra.mxu0 0
        %9941 = vmatprep.mubr.bf16.mxu0 %v9784
        %9942 = vmatmul.mubr.bf16.gmra.mrb[0].mxu0 %v9780
        %v9943 = vpop.f32.mrb[0].mxu0
        %v9944 = vadd.f32 0.0, %v9943
        %v9945 = vpop.f32.mrb[0].mxu0
        %v9946 = vadd.f32 0.0, %v9945
        %v9947 = vpop.f32.mrb[0].mxu0
        %v9948 = vpop.f32.mrb[0].mxu0
        %9949 = vdwg.mxu0
        %v9950 = vmax.f32 %v9821, %v9903
        %v9951 = vmax.f32 %v9823, %v9905
        %v9952 = vmax.f32 %v9862, %v9944
        %v9953 = vmax.f32 %v9864, %v9946
        %v9955 = vunpack.c.l.b16 %v9776
        %v9956 = vunpack.c.h.b16 %v9776
        %v9957 = vpack.c.b16 %v9955, %v9955
        %v9958 = vpack.c.b16 %v9956, %v9956
        %v9961 = vsel %vm684, %v9958, 0
        %9963 = vmatprep.subr.bf16.mxu0 %v605
        %9964 = vmatpush1.bf16.msra.mxu0 %v604
        %9965 = vmatprep.subr.bf16.mxu0 %v609
        %9966 = vmatpush1.bf16.msra.mxu0 %v608
        %9967 = vmatprep.subr.bf16.mxu0 %v613
        %9968 = vmatpush1.bf16.msra.mxu0 %v612
        %9969 = vmatprep.subr.bf16.mxu0 %v617
        %9970 = vmatpush1.bf16.msra.mxu0 %v616
        %9971 = vmatprep.subr.bf16.mxu0 %v621
        %9972 = vmatpush1.bf16.msra.mxu0 %v620
        %9973 = vmatprep.subr.bf16.mxu0 %v625
        %9974 = vmatpush1.bf16.msra.mxu0 %v624
        %9975 = vmatprep.subr.bf16.mxu0 %v629
        %9976 = vmatpush1.bf16.msra.mxu0 %v628
        %9977 = vmatprep.subr.bf16.mxu0 %v633
        %9978 = vmatpush1.bf16.msra.mxu0 %v632
        %9979 = vmatprep.subr.bf16.mxu0 %v637
        %9980 = vmatpush1.bf16.msra.mxu0 %v636
        %9981 = vmatprep.subr.bf16.mxu0 %v641
        %9982 = vmatpush1.bf16.msra.mxu0 %v640
        %9983 = vmatprep.subr.bf16.mxu0 0
        %9984 = vmatpush1.bf16.msra.mxu0 0
        %9985 = vmatprep.subr.bf16.mxu0 0
        %9986 = vmatpush1.bf16.msra.mxu0 0
        %9987 = vmatprep.subr.bf16.mxu0 0
        %9988 = vmatpush1.bf16.msra.mxu0 0
        %9989 = vmatprep.subr.bf16.mxu0 0
        %9990 = vmatpush1.bf16.msra.mxu0 0
        %9991 = vmatprep.subr.bf16.mxu0 0
        %9992 = vmatpush1.bf16.msra.mxu0 0
        %9993 = vmatprep.subr.bf16.mxu0 0
        %9994 = vmatpush1.bf16.msra.mxu0 0
        %9995 = vmatprep.mubr.bf16.mxu0 %v9961
        %9996 = vmatmul.mubr.bf16.gmra.mrb[0].mxu0 %v9957
        %v9997 = vpop.f32.mrb[0].mxu0
        %v9998 = vadd.f32 0.0, %v9997
        %v9999 = vpop.f32.mrb[0].mxu0
        %v10000 = vadd.f32 0.0, %v9999
        %v10001 = vpop.f32.mrb[0].mxu0
        %v10002 = vpop.f32.mrb[0].mxu0
        %10003 = vdwg.mxu0
        %10004 = vmatprep.subr.bf16.mxu0 %v607
        %10005 = vmatpush1.bf16.msra.mxu0 %v606
        %10006 = vmatprep.subr.bf16.mxu0 %v611
        %10007 = vmatpush1.bf16.msra.mxu0 %v610
        %10008 = vmatprep.subr.bf16.mxu0 %v615
        %10009 = vmatpush1.bf16.msra.mxu0 %v614
        %10010 = vmatprep.subr.bf16.mxu0 %v619
        %10011 = vmatpush1.bf16.msra.mxu0 %v618
        %10012 = vmatprep.subr.bf16.mxu0 %v623
        %10013 = vmatpush1.bf16.msra.mxu0 %v622
        %10014 = vmatprep.subr.bf16.mxu0 %v627
        %10015 = vmatpush1.bf16.msra.mxu0 %v626
        %10016 = vmatprep.subr.bf16.mxu0 %v631
        %10017 = vmatpush1.bf16.msra.mxu0 %v630
        %10018 = vmatprep.subr.bf16.mxu0 %v635
        %10019 = vmatpush1.bf16.msra.mxu0 %v634
        %10020 = vmatprep.subr.bf16.mxu0 %v639
        %10021 = vmatpush1.bf16.msra.mxu0 %v638
        %10022 = vmatprep.subr.bf16.mxu0 %v643
        %10023 = vmatpush1.bf16.msra.mxu0 %v642
        %10024 = vmatprep.subr.bf16.mxu0 0
        %10025 = vmatpush1.bf16.msra.mxu0 0
        %10026 = vmatprep.subr.bf16.mxu0 0
        %10027 = vmatpush1.bf16.msra.mxu0 0
        %10028 = vmatprep.subr.bf16.mxu0 0
        %10029 = vmatpush1.bf16.msra.mxu0 0
        %10030 = vmatprep.subr.bf16.mxu0 0
        %10031 = vmatpush1.bf16.msra.mxu0 0
        %10032 = vmatprep.subr.bf16.mxu0 0
        %10033 = vmatpush1.bf16.msra.mxu0 0
        %10034 = vmatprep.subr.bf16.mxu0 0
        %10035 = vmatpush1.bf16.msra.mxu0 0
        %10036 = vmatprep.mubr.bf16.mxu0 %v9961
        %10037 = vmatmul.mubr.bf16.gmra.mrb[0].mxu0 %v9957
        %v10038 = vpop.f32.mrb[0].mxu0
        %v10039 = vadd.f32 0.0, %v10038
        %v10040 = vpop.f32.mrb[0].mxu0
        %v10041 = vadd.f32 0.0, %v10040
        %v10042 = vpop.f32.mrb[0].mxu0
        %v10043 = vpop.f32.mrb[0].mxu0
        %10044 = vdwg.mxu0
        %10045 = vmatprep.subr.bf16.mxu0 %v891
        %10046 = vmatpush1.bf16.msra.mxu0 %v890
        %10047 = vmatprep.subr.bf16.mxu0 %v895
        %10048 = vmatpush1.bf16.msra.mxu0 %v894
        %10049 = vmatprep.subr.bf16.mxu0 %v899
        %10050 = vmatpush1.bf16.msra.mxu0 %v898
        %10051 = vmatprep.subr.bf16.mxu0 %v903
        %10052 = vmatpush1.bf16.msra.mxu0 %v902
        %10053 = vmatprep.subr.bf16.mxu0 %v907
        %10054 = vmatpush1.bf16.msra.mxu0 %v906
        %10055 = vmatprep.subr.bf16.mxu0 %v911
        %10056 = vmatpush1.bf16.msra.mxu0 %v910
        %10057 = vmatprep.subr.bf16.mxu0 %v915
        %10058 = vmatpush1.bf16.msra.mxu0 %v914
        %10059 = vmatprep.subr.bf16.mxu0 %v919
        %10060 = vmatpush1.bf16.msra.mxu0 %v918
        %10061 = vmatprep.subr.bf16.mxu0 %v923
        %10062 = vmatpush1.bf16.msra.mxu0 %v922
        %10063 = vmatprep.subr.bf16.mxu0 %v927
        %10064 = vmatpush1.bf16.msra.mxu0 %v926
        %10065 = vmatprep.subr.bf16.mxu0 0
        %10066 = vmatpush1.bf16.msra.mxu0 0
        %10067 = vmatprep.subr.bf16.mxu0 0
        %10068 = vmatpush1.bf16.msra.mxu0 0
        %10069 = vmatprep.subr.bf16.mxu0 0
        %10070 = vmatpush1.bf16.msra.mxu0 0
        %10071 = vmatprep.subr.bf16.mxu0 0
        %10072 = vmatpush1.bf16.msra.mxu0 0
        %10073 = vmatprep.subr.bf16.mxu0 0
        %10074 = vmatpush1.bf16.msra.mxu0 0
        %10075 = vmatprep.subr.bf16.mxu0 0
        %10076 = vmatpush1.bf16.msra.mxu0 0
        %10077 = vmatprep.mubr.bf16.mxu0 %v9961
        %10078 = vmatmul.mubr.bf16.gmra.mrb[0].mxu0 %v9957
        %v10079 = vpop.f32.mrb[0].mxu0
        %v10080 = vadd.f32 0.0, %v10079
        %v10081 = vpop.f32.mrb[0].mxu0
        %v10082 = vadd.f32 0.0, %v10081
        %v10083 = vpop.f32.mrb[0].mxu0
        %v10084 = vpop.f32.mrb[0].mxu0
        %10085 = vdwg.mxu0
        %10086 = vmatprep.subr.bf16.mxu0 %v893
        %10087 = vmatpush1.bf16.msra.mxu0 %v892
        %10088 = vmatprep.subr.bf16.mxu0 %v897
        %10089 = vmatpush1.bf16.msra.mxu0 %v896
        %10090 = vmatprep.subr.bf16.mxu0 %v901
        %10091 = vmatpush1.bf16.msra.mxu0 %v900
        %10092 = vmatprep.subr.bf16.mxu0 %v905
        %10093 = vmatpush1.bf16.msra.mxu0 %v904
        %10094 = vmatprep.subr.bf16.mxu0 %v909
        %10095 = vmatpush1.bf16.msra.mxu0 %v908
        %10096 = vmatprep.subr.bf16.mxu0 %v913
        %10097 = vmatpush1.bf16.msra.mxu0 %v912
        %10098 = vmatprep.subr.bf16.mxu0 %v917
        %10099 = vmatpush1.bf16.msra.mxu0 %v916
        %10100 = vmatprep.subr.bf16.mxu0 %v921
        %10101 = vmatpush1.bf16.msra.mxu0 %v920
        %10102 = vmatprep.subr.bf16.mxu0 %v925
        %10103 = vmatpush1.bf16.msra.mxu0 %v924
        %10104 = vmatprep.subr.bf16.mxu0 %v929
        %10105 = vmatpush1.bf16.msra.mxu0 %v928
        %10106 = vmatprep.subr.bf16.mxu0 0
        %10107 = vmatpush1.bf16.msra.mxu0 0
        %10108 = vmatprep.subr.bf16.mxu0 0
        %10109 = vmatpush1.bf16.msra.mxu0 0
        %10110 = vmatprep.subr.bf16.mxu0 0
        %10111 = vmatpush1.bf16.msra.mxu0 0
        %10112 = vmatprep.subr.bf16.mxu0 0
        %10113 = vmatpush1.bf16.msra.mxu0 0
        %10114 = vmatprep.subr.bf16.mxu0 0
        %10115 = vmatpush1.bf16.msra.mxu0 0
        %10116 = vmatprep.subr.bf16.mxu0 0
        %10117 = vmatpush1.bf16.msra.mxu0 0
        %10118 = vmatprep.mubr.bf16.mxu0 %v9961
        %10119 = vmatmul.mubr.bf16.gmra.mrb[0].mxu0 %v9957
        %v10120 = vpop.f32.mrb[0].mxu0
        %v10121 = vadd.f32 0.0, %v10120
        %v10122 = vpop.f32.mrb[0].mxu0
        %v10123 = vadd.f32 0.0, %v10122
        %v10124 = vpop.f32.mrb[0].mxu0
        %v10125 = vpop.f32.mrb[0].mxu0
        %10126 = vdwg.mxu0
        %v10127 = vmax.f32 %v9998, %v10080
        %v10128 = vmax.f32 %v10000, %v10082
        %v10129 = vmax.f32 %v10039, %v10121
        %v10130 = vmax.f32 %v10041, %v10123
        %v10131 = vmax.f32 %v9950, %v10127
        %v10132 = vmax.f32 %v9951, %v10128
        %v10133 = vmax.f32 %v9952, %v10129
        %v10134 = vmax.f32 %v9953, %v10130
        %v10135 = vadd.f32 %v10131, %v1241
        %v10136 = vadd.f32 %v10132, %v1245
        %v10137 = vadd.f32 %v10133, %v1249
        %v10138 = vadd.f32 %v10134, %v1253
        %v10139 = vmax.f32 %v10135, 0.0
        %v10140 = vmax.f32 %v10136, 0.0
        %v10141 = vmax.f32 %v10137, 0.0
        %v10142 = vmax.f32 %v10138, 0.0
        %v10143 = vpack.c.bf16 %v10139, %v10139
        %v10144 = vpack.c.bf16 %v10140, %v10140
        %v10145 = vpack.c.bf16 %v10141, %v10141
        %v10146 = vpack.c.bf16 %v10142, %v10142
        %s10147 = scalar_lea.vmem %s4, 2912
        %v10148 = vld [vmem:[%s10147] sm:$0xf]
        %v10149 = vld [vmem:[%s10147 + $0x4] sm:$0xf]
        %v10150 = vld [vmem:[%s10147 + $0x8] sm:$0xf]
        %v10151 = vld [vmem:[%s10147 + $0xc] sm:$0xf]
        %v10152 = vld [vmem:[%s10147 + $0x10] sm:$0xf]
        %v10153 = vld [vmem:[%s10147 + $0x14] sm:$0xf]
        %v10154 = vld [vmem:[%s10147 + $0x18] sm:$0xf]
        %v10155 = vld [vmem:[%s10147 + $0x1c] sm:$0xf]
        %v10156 = vld [vmem:[%s10147 + $0x20] sm:$0xf]
        %v10157 = vld [vmem:[%s10147 + $0x24] sm:$0xf]
        %v10158 = vld [vmem:[%s10147 + $0x28] sm:$0xf]
        %v10159 = vld [vmem:[%s10147 + $0x2c] sm:$0xf]
        %v10160 = vld [vmem:[%s10147 + $0x30] sm:$0xf]
        %v10161 = vld [vmem:[%s10147 + $0x34] sm:$0xf]
        %v10162 = vld [vmem:[%s10147 + $0x38] sm:$0xf]
        %v10163 = vld [vmem:[%s10147 + $0x3c] sm:$0xf]
        %v10164 = vld [vmem:[%s10147 + $0x40] sm:$0xf]
        %v10165 = vld [vmem:[%s10147 + $0x44] sm:$0xf]
        %v10166 = vld [vmem:[%s10147 + $0x48] sm:$0xf]
        %v10167 = vld [vmem:[%s10147 + $0x4c] sm:$0xf]
        %v10168 = vld [vmem:[%s10147 + $0x50] sm:$0xf]
        %v10169 = vld [vmem:[%s10147 + $0x54] sm:$0xf]
        %v10170 = vld [vmem:[%s10147 + $0x58] sm:$0xf]
        %v10171 = vld [vmem:[%s10147 + $0x5c] sm:$0xf]
        %v10172 = vld [vmem:[%s10147 + $0x60] sm:$0xf]
        %v10173 = vld [vmem:[%s10147 + $0x64] sm:$0xf]
        %v10174 = vld [vmem:[%s10147 + $0x68] sm:$0xf]
        %v10175 = vld [vmem:[%s10147 + $0x6c] sm:$0xf]
        %v10176 = vld [vmem:[%s10147 + $0x70] sm:$0xf]
        %v10177 = vld [vmem:[%s10147 + $0x74] sm:$0xf]
        %v10178 = vld [vmem:[%s10147 + $0x78] sm:$0xf]
        %v10179 = vld [vmem:[%s10147 + $0x7c] sm:$0xf]
        %v10180 = vld [vmem:[%s10147 + $0x80] sm:$0xf]
        %v10181 = vld [vmem:[%s10147 + $0x84] sm:$0xf]
        %v10182 = vld [vmem:[%s10147 + $0x88] sm:$0xf]
        %v10183 = vld [vmem:[%s10147 + $0x8c] sm:$0xf]
        %v10184 = vld [vmem:[%s10147 + $0x90] sm:$0xf]
        %v10185 = vld [vmem:[%s10147 + $0x94] sm:$0xf]
        %v10186 = vld [vmem:[%s10147 + $0x98] sm:$0xf]
        %v10187 = vld [vmem:[%s10147 + $0x9c] sm:$0xf]
        %v10188 = vld [vmem:[%s10147 + $0xa0] sm:$0xf]
        %v10189 = vld [vmem:[%s10147 + $0xa4] sm:$0xf]
        %v10190 = vld [vmem:[%s10147 + $0xa8] sm:$0xf]
        %v10191 = vld [vmem:[%s10147 + $0xac] sm:$0xf]
        %v10192 = vld [vmem:[%s10147 + $0xb0] sm:$0xf]
        %v10193 = vld [vmem:[%s10147 + $0xb4] sm:$0xf]
        %v10194 = vld [vmem:[%s10147 + $0xb8] sm:$0xf]
        %v10195 = vld [vmem:[%s10147 + $0xbc] sm:$0xf]
        %v10196 = vld [vmem:[%s10147 + $0xc0] sm:$0xf]
        %v10197 = vld [vmem:[%s10147 + $0xc4] sm:$0xf]
        %v10198 = vld [vmem:[%s10147 + $0xc8] sm:$0xf]
        %v10199 = vld [vmem:[%s10147 + $0xcc] sm:$0xf]
        %v10200 = vld [vmem:[%s10147 + $0xd0] sm:$0xf]
        %v10201 = vld [vmem:[%s10147 + $0xd4] sm:$0xf]
        %v10202 = vld [vmem:[%s10147 + $0xd8] sm:$0xf]
        %v10203 = vld [vmem:[%s10147 + $0xdc] sm:$0xf]
        %v10260 = vunpack.c.l.b16 %v10148
        %v10261 = vunpack.c.l.b16 %v10149
        %v10262 = vunpack.c.l.b16 %v10150
        %v10263 = vunpack.c.l.b16 %v10151
        %v10264 = vunpack.c.l.b16 %v10152
        %v10265 = vunpack.c.l.b16 %v10153
        %v10266 = vunpack.c.l.b16 %v10154
        %v10267 = vunpack.c.l.b16 %v10155
        %v10268 = vunpack.c.l.b16 %v10156
        %v10269 = vunpack.c.l.b16 %v10157
        %v10270 = vunpack.c.l.b16 %v10158
        %v10271 = vunpack.c.l.b16 %v10159
        %v10272 = vunpack.c.l.b16 %v10160
        %v10273 = vunpack.c.l.b16 %v10161
        %v10274 = vunpack.c.l.b16 %v10162
        %v10275 = vunpack.c.l.b16 %v10163
        %v10276 = vunpack.c.l.b16 %v10164
        %v10277 = vunpack.c.l.b16 %v10165
        %v10278 = vunpack.c.l.b16 %v10166
        %v10279 = vunpack.c.l.b16 %v10167
        %v10280 = vunpack.c.l.b16 %v10168
        %v10281 = vunpack.c.l.b16 %v10169
        %v10282 = vunpack.c.l.b16 %v10170
        %v10283 = vunpack.c.l.b16 %v10171
        %v10284 = vunpack.c.l.b16 %v10172
        %v10285 = vunpack.c.l.b16 %v10173
        %v10286 = vunpack.c.l.b16 %v10174
        %v10287 = vunpack.c.l.b16 %v10175
        %v10288 = vunpack.c.l.b16 %v10176
        %v10289 = vunpack.c.l.b16 %v10177
        %v10290 = vunpack.c.l.b16 %v10178
        %v10291 = vunpack.c.l.b16 %v10179
        %v10292 = vunpack.c.l.b16 %v10180
        %v10293 = vunpack.c.l.b16 %v10181
        %v10294 = vunpack.c.l.b16 %v10182
        %v10295 = vunpack.c.l.b16 %v10183
        %v10296 = vunpack.c.l.b16 %v10184
        %v10297 = vunpack.c.l.b16 %v10185
        %v10298 = vunpack.c.l.b16 %v10186
        %v10299 = vunpack.c.l.b16 %v10187
        %v10300 = vunpack.c.l.b16 %v10188
        %v10301 = vunpack.c.l.b16 %v10189
        %v10302 = vunpack.c.l.b16 %v10190
        %v10303 = vunpack.c.l.b16 %v10191
        %v10304 = vunpack.c.l.b16 %v10192
        %v10305 = vunpack.c.l.b16 %v10193
        %v10306 = vunpack.c.l.b16 %v10194
        %v10307 = vunpack.c.l.b16 %v10195
        %v10308 = vunpack.c.l.b16 %v10196
        %v10309 = vunpack.c.l.b16 %v10197
        %v10310 = vunpack.c.l.b16 %v10198
        %v10311 = vunpack.c.l.b16 %v10199
        %v10312 = vunpack.c.l.b16 %v10200
        %v10313 = vunpack.c.l.b16 %v10201
        %v10314 = vunpack.c.l.b16 %v10202
        %v10315 = vunpack.c.l.b16 %v10203
        %v10316 = vpack.c.b16 %v10261, %v10260
        %v10317 = vpack.c.b16 %v10263, %v10262
        %v10318 = vpack.c.b16 %v10265, %v10264
        %v10319 = vpack.c.b16 %v10267, %v10266
        %v10320 = vpack.c.b16 %v10269, %v10268
        %v10321 = vpack.c.b16 %v10271, %v10270
        %v10322 = vpack.c.b16 %v10273, %v10272
        %v10323 = vpack.c.b16 %v10275, %v10274
        %v10324 = vpack.c.b16 %v10277, %v10276
        %v10325 = vpack.c.b16 %v10279, %v10278
        %v10326 = vpack.c.b16 %v10281, %v10280
        %v10327 = vpack.c.b16 %v10283, %v10282
        %v10328 = vpack.c.b16 %v10285, %v10284
        %v10329 = vpack.c.b16 %v10287, %v10286
        %v10330 = vpack.c.b16 %v10289, %v10288
        %v10331 = vpack.c.b16 %v10291, %v10290
        %v10332 = vpack.c.b16 %v10293, %v10292
        %v10333 = vpack.c.b16 %v10295, %v10294
        %v10334 = vpack.c.b16 %v10297, %v10296
        %v10335 = vpack.c.b16 %v10299, %v10298
        %v10336 = vpack.c.b16 %v10301, %v10300
        %v10337 = vpack.c.b16 %v10303, %v10302
        %v10338 = vpack.c.b16 %v10305, %v10304
        %v10339 = vpack.c.b16 %v10307, %v10306
        %v10340 = vpack.c.b16 %v10309, %v10308
        %v10341 = vpack.c.b16 %v10311, %v10310
        %v10342 = vpack.c.b16 %v10313, %v10312
        %v10343 = vpack.c.b16 %v10315, %v10314
        %v10373 = vsel %vm1925, %v10146, 0
        %10375 = vmatprep.subr.bf16.mxu0 0
        %10376 = vmatpush1.bf16.msra.mxu0 %v10316
        %10377 = vmatprep.subr.bf16.mxu0 0
        %10378 = vmatpush1.bf16.msra.mxu0 %v10317
        %10379 = vmatprep.subr.bf16.mxu0 0
        %10380 = vmatpush1.bf16.msra.mxu0 %v10318
        %10381 = vmatprep.subr.bf16.mxu0 0
        %10382 = vmatpush1.bf16.msra.mxu0 %v10319
        %10383 = vmatprep.subr.bf16.mxu0 0
        %10384 = vmatpush1.bf16.msra.mxu0 %v10320
        %10385 = vmatprep.subr.bf16.mxu0 0
        %10386 = vmatpush1.bf16.msra.mxu0 %v10321
        %10387 = vmatprep.subr.bf16.mxu0 0
        %10388 = vmatpush1.bf16.msra.mxu0 %v10322
        %10389 = vmatprep.subr.bf16.mxu0 0
        %10390 = vmatpush1.bf16.msra.mxu0 %v10323
        %10391 = vmatprep.subr.bf16.mxu0 0
        %10392 = vmatpush1.bf16.msra.mxu0 %v10324
        %10393 = vmatprep.subr.bf16.mxu0 0
        %10394 = vmatpush1.bf16.msra.mxu0 %v10325
        %10395 = vmatprep.subr.bf16.mxu0 0
        %10396 = vmatpush1.bf16.msra.mxu0 %v10326
        %10397 = vmatprep.subr.bf16.mxu0 0
        %10398 = vmatpush1.bf16.msra.mxu0 %v10327
        %10399 = vmatprep.subr.bf16.mxu0 0
        %10400 = vmatpush1.bf16.msra.mxu0 %v10328
        %10401 = vmatprep.subr.bf16.mxu0 0
        %10402 = vmatpush1.bf16.msra.mxu0 %v10329
        %10403 = vmatprep.subr.bf16.mxu0 0
        %10404 = vmatpush1.bf16.msra.mxu0 %v10330
        %10405 = vmatprep.subr.bf16.mxu0 0
        %10406 = vmatpush1.bf16.msra.mxu0 %v10331
        %10407 = vmatprep.mubr.bf16.mxu0 %v10144
        %10408 = vmatmul.mubr.bf16.gmra.mrb[0].mxu0 %v10143
        %v10409 = vpop.f32.mrb[0].mxu0
        %v10410 = vadd.f32 0.0, %v10409
        %v10411 = vpop.f32.mrb[0].mxu0
        %v10412 = vpop.f32.mrb[0].mxu0
        %v10413 = vpop.f32.mrb[0].mxu0
        %10414 = vdwg.mxu0
        %10415 = vmatprep.subr.bf16.mxu0 0
        %10416 = vmatpush1.bf16.msra.mxu0 %v10332
        %10417 = vmatprep.subr.bf16.mxu0 0
        %10418 = vmatpush1.bf16.msra.mxu0 %v10333
        %10419 = vmatprep.subr.bf16.mxu0 0
        %10420 = vmatpush1.bf16.msra.mxu0 %v10334
        %10421 = vmatprep.subr.bf16.mxu0 0
        %10422 = vmatpush1.bf16.msra.mxu0 %v10335
        %10423 = vmatprep.subr.bf16.mxu0 0
        %10424 = vmatpush1.bf16.msra.mxu0 %v10336
        %10425 = vmatprep.subr.bf16.mxu0 0
        %10426 = vmatpush1.bf16.msra.mxu0 %v10337
        %10427 = vmatprep.subr.bf16.mxu0 0
        %10428 = vmatpush1.bf16.msra.mxu0 %v10338
        %10429 = vmatprep.subr.bf16.mxu0 0
        %10430 = vmatpush1.bf16.msra.mxu0 %v10339
        %10431 = vmatprep.subr.bf16.mxu0 0
        %10432 = vmatpush1.bf16.msra.mxu0 %v10340
        %10433 = vmatprep.subr.bf16.mxu0 0
        %10434 = vmatpush1.bf16.msra.mxu0 %v10341
        %10435 = vmatprep.subr.bf16.mxu0 0
        %10436 = vmatpush1.bf16.msra.mxu0 %v10342
        %10437 = vmatprep.subr.bf16.mxu0 0
        %10438 = vmatpush1.bf16.msra.mxu0 %v10343
        %10439 = vmatprep.subr.bf16.mxu0 0
        %10440 = vmatpush1.bf16.msra.mxu0 0
        %10441 = vmatprep.subr.bf16.mxu0 0
        %10442 = vmatpush1.bf16.msra.mxu0 0
        %10443 = vmatprep.subr.bf16.mxu0 0
        %10444 = vmatpush1.bf16.msra.mxu0 0
        %10445 = vmatprep.subr.bf16.mxu0 0
        %10446 = vmatpush1.bf16.msra.mxu0 0
        %10447 = vmatprep.mubr.bf16.mxu0 %v10373
        %10448 = vmatmul.mubr.bf16.gmra.mrb[0].mxu0 %v10145
        %v10449 = vpop.f32.mrb[0].mxu0
        %v10450 = vadd.f32 %v10410, %v10449
        %v10451 = vpop.f32.mrb[0].mxu0
        %v10452 = vpop.f32.mrb[0].mxu0
        %v10453 = vpop.f32.mrb[0].mxu0
        %10454 = vdwg.mxu0
        %v10455 = vadd.f32 %v9772, %v10450
        %v10456 = vld [vmem:[%s5] sm:$0x1]
        %v10458 = vlaneseq
        %v10459 = vshrl.u32 %v10458, 7
        %v10460 = vsub.s32 0, %v10459
        %v10461 = vrot.slane %v10456, %v10460
        %v10463 = vadd.f32 %v10455, %v10461
        %10464 = vst [vmem:[%s392] sm:$0xff] %v10463
        %p10465 = scmp.lt.s32.totalorder %s17, 1
        %s10466 = scalar_select %p10465, %s17, 1
        %s10467 = smul.addr %s10466, 8
        %s10468 = scalar_lea.vmem %s6, %s10467
        // Predicated region
        $region83: #{cnn_forward.1} parent=77 // pred_check
          %p10469 = pneg %p166
        $region84: #{cnn_forward.1} parent=77 // pred_check_branch
          %10471 = sbr.rel (%p10469) target = $region86
        $region85: #{cnn_forward.1} parent=77 // pred_region
          _
        $region86: #{cnn_forward.1} parent=77 // pred_fallthru
          _
      $region78: #{cnn_forward.1} parent=5 // pred_fallthru
        _
      %p10472 = scmp.le.s32.totalorder 2, %s12
      // Predicated region
      $region87: #{cnn_forward.1} parent=5 // pred_check
        %p10473 = pneg %p10472
      $region88: #{cnn_forward.1} parent=5 // pred_check_branch
        %10475 = sbr.rel (%p10473) target = $region90
      $region89: #{cnn_forward.1} parent=5 // pred_region
        %s10476 = ssub.s32 %s12, 2
        // Predicated region
        $region91: #{cnn_forward.1} parent=89 // pred_check
          %p10477 = pneg %p172
        $region92: #{cnn_forward.1} parent=89 // pred_check_branch
          %10479 = sbr.rel (%p10477) target = $region94
        $region93: #{cnn_forward.1} parent=89 // pred_region
          %p10480 = scmp.lt.s32.totalorder %s18, 1
          %s10481 = scalar_select %p10480, %s18, 1
          %s10482 = smul.addr %s10481, 8
          %s10483 = scalar_lea.vmem %s6, %s10482
        $region94: #{cnn_forward.1} parent=89 // pred_fallthru
          _
      $region90: #{cnn_forward.1} parent=5 // pred_fallthru
        _
    $region6: #{cnn_forward.1} parent=1 // loop_footer
      %s16 = sadd.s32 1, %s12
    $region7: #{cnn_forward.1} parent=1 // loop_footer_branch
      %11 = sbr.rel target = $region3
    $region8: #{cnn_forward.1} parent=1 // loop_exit
      _

</llo_original>
